<compile_context>
chip_gen: v7x
topology: tpu7x:2x2x1
jax: 0.10.0
libtpu: 0.0.40
codegen_flags: <defaults>
</compile_context>

<pallas_src>
import math

import jax
import jax.numpy as jnp
from jax.experimental import pallas as pl
from jax.experimental.pallas import tpu as pltpu

# ----------------------------- model config ---------------------------------
VOCAB = 50
TYPE_VOCAB = 2
MAX_POS = 16
HIDDEN = 32
N_HEADS = 4
HEAD_DIM = HIDDEN // N_HEADS
INTER = 64
N_LAYERS = 2
LN_EPS = 1e-12
NORM_EPS = 1e-12  # F.normalize eps


# ----------------------------- kernel helpers --------------------------------
def _layer_norm(x, g, b):
    mean = jnp.mean(x, axis=-1, keepdims=True)
    xc = x - mean
    var = jnp.mean(xc * xc, axis=-1, keepdims=True)
    return xc * jax.lax.rsqrt(var + LN_EPS) * g + b


def _gelu(x):
    # tanh approximation (EUP-friendly). HF BERT default is erf-gelu (~1e-3 rel diff).
    return 0.5 * x * (1.0 + jnp.tanh(0.7978845608028654 * (x + 0.044715 * x * x * x)))


# ----------------------------- fused kernel ----------------------------------
def _fused_bert_moco_kernel(
    emb_ref, mask_ref,
    emb_ln_ref,
    wq_ref, bq_ref, wk_ref, bk_ref, wv_ref, bv_ref,
    wo_ref, bo_ref, ln_ref,
    wi_ref, bi_ref, wo2_ref, bo2_ref,
    pool_w_ref, pool_b_ref,
    fc1_w_ref, fc1_b_ref, fc2_w_ref, fc2_b_ref,
    enc_ref, prob_ref,
):
    f32 = jnp.float32
    scale = 1.0 / math.sqrt(HEAD_DIM)

    bias = mask_ref[0]                                       # (1, S) additive key-mask bias
    x = emb_ref[0]                                           # (S, H)
    x = _layer_norm(x, emb_ln_ref[0:1, :], emb_ln_ref[1:2, :])

    for l in range(N_LAYERS):                                # static unroll (2 layers)
        lnp = ln_ref[l]                                      # (4, H): ln1_g, ln1_b, ln2_g, ln2_b

        # --- multi-head self-attention (heads unrolled; out-proj distributed) ---
        attn = None
        for h in range(N_HEADS):
            q = jnp.dot(x, wq_ref[l, h], preferred_element_type=f32) + bq_ref[l, h]   # (S, D)
            k = jnp.dot(x, wk_ref[l, h], preferred_element_type=f32) + bk_ref[l, h]
            v = jnp.dot(x, wv_ref[l, h], preferred_element_type=f32) + bv_ref[l, h]
            s = jax.lax.dot_general(q, k, (((1,), (1,)), ((), ())),
                                    preferred_element_type=f32) * scale + bias        # (S, S)
            s = s - jnp.max(s, axis=-1, keepdims=True)
            p = jnp.exp(s)
            p = p * pl.reciprocal(jnp.sum(p, axis=-1, keepdims=True), approx=True)
            ctx = jnp.dot(p, v, preferred_element_type=f32)                            # (S, D)
            contrib = jnp.dot(ctx, wo_ref[l, h], preferred_element_type=f32)           # (S, H)
            attn = contrib if attn is None else attn + contrib
        attn = attn + bo_ref[l]
        x = _layer_norm(x + attn, lnp[0:1, :], lnp[1:2, :])  # residual fused into LN

        # --- feed-forward ---
        inter = _gelu(jnp.dot(x, wi_ref[l], preferred_element_type=f32) + bi_ref[l])
        ffn = jnp.dot(inter, wo2_ref[l], preferred_element_type=f32) + bo2_ref[l]
        x = _layer_norm(x + ffn, lnp[2:3, :], lnp[3:4, :])

    # --- BERT pooler: tanh(cls @ Wp + bp) ---
    cls = x[0:1, :]                                          # (1, H)
    pooled = jnp.tanh(jnp.dot(cls, pool_w_ref[...], preferred_element_type=f32)
                      + pool_b_ref[...])

    # --- MoCo projection heads: fc2(relu(fc1(.))) + L2 normalize ---
    def proj(t):
        hid = jnp.maximum(
            jnp.dot(t, fc1_w_ref[...], preferred_element_type=f32) + fc1_b_ref[...], 0.0)
        return jnp.dot(hid, fc2_w_ref[...], preferred_element_type=f32) + fc2_b_ref[...]

    enc = proj(x)                                            # (S, H); normalize over flat (S*H)
    ss = jnp.sum(enc * enc, axis=-1, keepdims=True)          # (S, 1)
    ss = jnp.sum(ss, axis=0, keepdims=True)                  # (1, 1)
    enc_ref[0] = enc * jax.lax.rsqrt(jnp.maximum(ss, NORM_EPS * NORM_EPS))

    prob = proj(pooled)                                      # (1, H); normalize per row
    pss = jnp.sum(prob * prob, axis=-1, keepdims=True)
    prob_ref[0] = prob * jax.lax.rsqrt(jnp.maximum(pss, NORM_EPS * NORM_EPS))


# ----------------------------- wrapper ----------------------------------------
def _rep_spec(shape):
    # Grid-invariant (weight) block: whole array, same block every grid step,
    # so Pallas keeps it VMEM-resident without re-DMA.
    n = len(shape)
    return pl.BlockSpec(shape, lambda b, _n=n: (0,) * _n)


def pretrain_bert_moco_forward(params, input_ids, token_type_ids, attention_mask):
    B, S = input_ids.shape
    # Embedding gathers are thin JAX glue; everything after runs in one kernel.
    we = jnp.take(params["word_emb"], input_ids, axis=0)                  # (B, S, H)
    pe = jnp.take(params["pos_emb"], jnp.arange(S), axis=0)[None]         # (1, S, H)
    te = jnp.take(params["type_emb"], token_type_ids, axis=0)             # (B, S, H)
    emb = (we + pe + te).astype(jnp.float32)
    mask_bias = ((1.0 - attention_mask.astype(jnp.float32)) * -10000.0).reshape(B, 1, S)

    weight_names = [
        "emb_ln",
        "wq_h", "bq_h", "wk_h", "bk_h", "wv_h", "bv_h",
        "wo_h", "bo", "ln",
        "wi", "bi", "wo2", "bo2",
        "pool_w", "pool_b",
        "fc1_w", "fc1_b", "fc2_w", "fc2_b",
    ]
    weights = [params[n] for n in weight_names]

    in_specs = ([pl.BlockSpec((1, S, HIDDEN), lambda b: (b, 0, 0)),       # embeddings
                 pl.BlockSpec((1, 1, S), lambda b: (b, 0, 0))]            # mask bias (no repeat)
                + [_rep_spec(w.shape) for w in weights])
    out_specs = [pl.BlockSpec((1, S, HIDDEN), lambda b: (b, 0, 0)),
                 pl.BlockSpec((1, 1, HIDDEN), lambda b: (b, 0, 0))]
    out_shapes = [jax.ShapeDtypeStruct((B, S, HIDDEN), jnp.float32),
                  jax.ShapeDtypeStruct((B, 1, HIDDEN), jnp.float32)]

    enc, prob = pl.pallas_call(
        _fused_bert_moco_kernel,
        out_shape=out_shapes,
        grid=(B,),
        in_specs=in_specs,
        out_specs=out_specs,
        compiler_params=pltpu.CompilerParams(
            dimension_semantics=("parallel",)),  # v7x: shard batch over both TCs
    )(emb, mask_bias, *weights)

    # TODO(synk): em_dropout(p=0.5) treated as eval-mode identity.
    return enc.reshape(B, S * HIDDEN), prob.reshape(B, HIDDEN)


# ----------------------------- parameters ------------------------------------
def init_params(key):
    keys = iter(jax.random.split(key, 32))

    def nrm(shape):
        return jax.random.normal(next(keys), shape, jnp.float32) * 0.02

    def zeros(shape):
        return jnp.zeros(shape, jnp.float32)

    L, H, NH, D = N_LAYERS, HIDDEN, N_HEADS, HEAD_DIM

    wq = nrm((L, H, H))
    wk = nrm((L, H, H))
    wv = nrm((L, H, H))
    wo = nrm((L, H, H))
    ln = jnp.broadcast_to(
        jnp.stack([jnp.ones(H), jnp.zeros(H), jnp.ones(H), jnp.zeros(H)]).astype(jnp.float32),
        (L, 4, H))

    return dict(
        word_emb=nrm((VOCAB, H)),
        pos_emb=nrm((MAX_POS, H)),
        type_emb=nrm((TYPE_VOCAB, H)),
        emb_ln=jnp.stack([jnp.ones(H), jnp.zeros(H)]).astype(jnp.float32),
        # per-head slabs: (L, NH, H, D) for Q/K/V, (L, NH, D, H) for out-proj
        wq_h=wq.reshape(L, H, NH, D).transpose(0, 2, 1, 3),
        bq_h=zeros((L, NH, 1, D)),
        wk_h=wk.reshape(L, H, NH, D).transpose(0, 2, 1, 3),
        bk_h=zeros((L, NH, 1, D)),
        wv_h=wv.reshape(L, H, NH, D).transpose(0, 2, 1, 3),
        bv_h=zeros((L, NH, 1, D)),
        wo_h=wo.reshape(L, NH, D, H),
        bo=zeros((L, 1, H)),
        ln=ln,
        wi=nrm((L, H, INTER)), bi=zeros((L, 1, INTER)),
        wo2=nrm((L, INTER, H)), bo2=zeros((L, 1, H)),
        pool_w=nrm((H, H)), pool_b=zeros((1, H)),
        fc1_w=nrm((H, H)), fc1_b=zeros((1, H)),
        fc2_w=nrm((H, H)), fc2_b=zeros((1, H)),
    )


# ----------------------------- main -------------------------------------------
if __name__ == "__main__":
    B, S = 2, 8
    key = jax.random.PRNGKey(0)
    k_params, k_ids = jax.random.split(key)

    params = init_params(k_params)
    input_ids = jax.random.randint(k_ids, (B, S), 0, VOCAB, dtype=jnp.int32)
    token_type_ids = jnp.zeros((B, S), dtype=jnp.int32)
    attention_mask = jnp.ones((B, S), dtype=jnp.int32).at[1, -2:].set(0)  # pad tail of row 1

    fwd = jax.jit(pretrain_bert_moco_forward)
    enc_out, prob_out = fwd(params, input_ids, token_type_ids, attention_mask)
    jax.block_until_ready(enc_out)
    jax.block_until_ready(prob_out)

    assert enc_out.shape == (B, S * HIDDEN)
    assert prob_out.shape == (B, HIDDEN)
    assert bool(jnp.all(jnp.isfinite(enc_out))) and bool(jnp.all(jnp.isfinite(prob_out)))
    print("KERNEL_OK")
</pallas_src>

<mosaic_0001>
module attributes {stable_mosaic.version = 11 : i64} {
  func.func @_fused_bert_moco_kernel(%arg0: i32, %arg1: memref<1x8x32xf32, #tpu.memory_space<vmem>>, %arg2: memref<1x1x8xf32, #tpu.memory_space<vmem>>, %arg3: memref<2x32xf32, #tpu.memory_space<vmem>>, %arg4: memref<2x4x32x8xf32, #tpu.memory_space<vmem>>, %arg5: memref<2x4x1x8xf32, #tpu.memory_space<vmem>>, %arg6: memref<2x4x32x8xf32, #tpu.memory_space<vmem>>, %arg7: memref<2x4x1x8xf32, #tpu.memory_space<vmem>>, %arg8: memref<2x4x32x8xf32, #tpu.memory_space<vmem>>, %arg9: memref<2x4x1x8xf32, #tpu.memory_space<vmem>>, %arg10: memref<2x4x8x32xf32, #tpu.memory_space<vmem>>, %arg11: memref<2x1x32xf32, #tpu.memory_space<vmem>>, %arg12: memref<2x4x32xf32, #tpu.memory_space<vmem>>, %arg13: memref<2x32x64xf32, #tpu.memory_space<vmem>>, %arg14: memref<2x1x64xf32, #tpu.memory_space<vmem>>, %arg15: memref<2x64x32xf32, #tpu.memory_space<vmem>>, %arg16: memref<2x1x32xf32, #tpu.memory_space<vmem>>, %arg17: memref<32x32xf32, #tpu.memory_space<vmem>>, %arg18: memref<1x32xf32, #tpu.memory_space<vmem>>, %arg19: memref<32x32xf32, #tpu.memory_space<vmem>>, %arg20: memref<1x32xf32, #tpu.memory_space<vmem>>, %arg21: memref<32x32xf32, #tpu.memory_space<vmem>>, %arg22: memref<1x32xf32, #tpu.memory_space<vmem>>, %arg23: memref<1x8x32xf32, #tpu.memory_space<vmem>>, %arg24: memref<1x1x32xf32, #tpu.memory_space<vmem>>) attributes {dimension_semantics = [#tpu.dimension_semantics<parallel>], iteration_bounds = array<i64: 2>, scalar_prefetch = 0 : i64, scratch_operands = 0 : i64, tpu.core_type = #tpu.core_type<tc>, window_params = [{transform_indices = @transform_0, window_bounds = array<i64: 1, 8, 32>}, {transform_indices = @transform_1, window_bounds = array<i64: 1, 1, 8>}, {pipeline_mode = #tpu.pipeline_mode<synchronous>, transform_indices = @transform_2, window_bounds = array<i64: 2, 32>}, {pipeline_mode = #tpu.pipeline_mode<synchronous>, transform_indices = @transform_3, window_bounds = array<i64: 2, 4, 32, 8>}, {pipeline_mode = #tpu.pipeline_mode<synchronous>, transform_indices = @transform_4, window_bounds = array<i64: 2, 4, 1, 8>}, {pipeline_mode = #tpu.pipeline_mode<synchronous>, transform_indices = @transform_5, window_bounds = array<i64: 2, 4, 32, 8>}, {pipeline_mode = #tpu.pipeline_mode<synchronous>, transform_indices = @transform_6, window_bounds = array<i64: 2, 4, 1, 8>}, {pipeline_mode = #tpu.pipeline_mode<synchronous>, transform_indices = @transform_7, window_bounds = array<i64: 2, 4, 32, 8>}, {pipeline_mode = #tpu.pipeline_mode<synchronous>, transform_indices = @transform_8, window_bounds = array<i64: 2, 4, 1, 8>}, {pipeline_mode = #tpu.pipeline_mode<synchronous>, transform_indices = @transform_9, window_bounds = array<i64: 2, 4, 8, 32>}, {pipeline_mode = #tpu.pipeline_mode<synchronous>, transform_indices = @transform_10, window_bounds = array<i64: 2, 1, 32>}, {pipeline_mode = #tpu.pipeline_mode<synchronous>, transform_indices = @transform_11, window_bounds = array<i64: 2, 4, 32>}, {pipeline_mode = #tpu.pipeline_mode<synchronous>, transform_indices = @transform_12, window_bounds = array<i64: 2, 32, 64>}, {pipeline_mode = #tpu.pipeline_mode<synchronous>, transform_indices = @transform_13, window_bounds = array<i64: 2, 1, 64>}, {pipeline_mode = #tpu.pipeline_mode<synchronous>, transform_indices = @transform_14, window_bounds = array<i64: 2, 64, 32>}, {pipeline_mode = #tpu.pipeline_mode<synchronous>, transform_indices = @transform_15, window_bounds = array<i64: 2, 1, 32>}, {pipeline_mode = #tpu.pipeline_mode<synchronous>, transform_indices = @transform_16, window_bounds = array<i64: 32, 32>}, {pipeline_mode = #tpu.pipeline_mode<synchronous>, transform_indices = @transform_17, window_bounds = array<i64: 1, 32>}, {pipeline_mode = #tpu.pipeline_mode<synchronous>, transform_indices = @transform_18, window_bounds = array<i64: 32, 32>}, {pipeline_mode = #tpu.pipeline_mode<synchronous>, transform_indices = @transform_19, window_bounds = array<i64: 1, 32>}, {pipeline_mode = #tpu.pipeline_mode<synchronous>, transform_indices = @transform_20, window_bounds = array<i64: 32, 32>}, {pipeline_mode = #tpu.pipeline_mode<synchronous>, transform_indices = @transform_21, window_bounds = array<i64: 1, 32>}, {transform_indices = @transform_22, window_bounds = array<i64: 1, 8, 32>}, {transform_indices = @transform_23, window_bounds = array<i64: 1, 1, 32>}]} {
    %c0 = arith.constant 0 : index
    %c0_0 = arith.constant 0 : index
    %c0_1 = arith.constant 0 : index
    %0 = vector.load %arg2[%c0, %c0_0, %c0_1] : memref<1x1x8xf32, #tpu.memory_space<vmem>>, vector<1x1x8xf32>
    %1 = vector.shape_cast %0 : vector<1x1x8xf32> to vector<1x8xf32>
    %c0_2 = arith.constant 0 : index
    %c0_3 = arith.constant 0 : index
    %c0_4 = arith.constant 0 : index
    %2 = vector.load %arg1[%c0_2, %c0_3, %c0_4] : memref<1x8x32xf32, #tpu.memory_space<vmem>>, vector<1x8x32xf32>
    %3 = vector.shape_cast %2 : vector<1x8x32xf32> to vector<8x32xf32>
    %c0_5 = arith.constant 0 : index
    %c0_6 = arith.constant 0 : index
    %4 = vector.load %arg3[%c0_5, %c0_6] : memref<2x32xf32, #tpu.memory_space<vmem>>, vector<1x32xf32>
    %c1 = arith.constant 1 : index
    %c0_7 = arith.constant 0 : index
    %5 = vector.load %arg3[%c1, %c0_7] : memref<2x32xf32, #tpu.memory_space<vmem>>, vector<1x32xf32>
    %cst = arith.constant dense<0.000000e+00> : vector<8xf32>
    %6 = vector.multi_reduction <add>, %3, %cst [1] : vector<8x32xf32> to vector<8xf32>
    %7 = vector.shape_cast %6 : vector<8xf32> to vector<8x1xf32>
    %cst_8 = arith.constant 3.200000e+01 : f32
    %8 = vector.broadcast %cst_8 : f32 to vector<8x1xf32>
    %9 = arith.divf %7, %8 : vector<8x1xf32>
    %10 = vector.broadcast %9 : vector<8x1xf32> to vector<8x32xf32>
    %11 = arith.subf %3, %10 : vector<8x32xf32>
    %12 = arith.mulf %11, %11 : vector<8x32xf32>
    %cst_9 = arith.constant dense<0.000000e+00> : vector<8xf32>
    %13 = vector.multi_reduction <add>, %12, %cst_9 [1] : vector<8x32xf32> to vector<8xf32>
    %14 = vector.shape_cast %13 : vector<8xf32> to vector<8x1xf32>
    %cst_10 = arith.constant 3.200000e+01 : f32
    %15 = vector.broadcast %cst_10 : f32 to vector<8x1xf32>
    %16 = arith.divf %14, %15 : vector<8x1xf32>
    %cst_11 = arith.constant 9.99999996E-13 : f32
    %17 = vector.broadcast %cst_11 : f32 to vector<8x1xf32>
    %18 = arith.addf %16, %17 : vector<8x1xf32>
    %19 = math.rsqrt %18 : vector<8x1xf32>
    %20 = vector.broadcast %19 : vector<8x1xf32> to vector<8x32xf32>
    %21 = arith.mulf %11, %20 : vector<8x32xf32>
    %22 = vector.broadcast %4 : vector<1x32xf32> to vector<8x32xf32>
    %23 = arith.mulf %21, %22 : vector<8x32xf32>
    %24 = vector.broadcast %5 : vector<1x32xf32> to vector<8x32xf32>
    %25 = arith.addf %23, %24 : vector<8x32xf32>
    %c0_12 = arith.constant 0 : index
    %c0_13 = arith.constant 0 : index
    %c0_14 = arith.constant 0 : index
    %26 = vector.load %arg12[%c0_12, %c0_13, %c0_14] : memref<2x4x32xf32, #tpu.memory_space<vmem>>, vector<1x4x32xf32>
    %27 = vector.shape_cast %26 : vector<1x4x32xf32> to vector<4x32xf32>
    %c0_15 = arith.constant 0 : index
    %c0_16 = arith.constant 0 : index
    %c0_17 = arith.constant 0 : index
    %c0_18 = arith.constant 0 : index
    %28 = vector.load %arg4[%c0_15, %c0_16, %c0_17, %c0_18] : memref<2x4x32x8xf32, #tpu.memory_space<vmem>>, vector<1x1x32x8xf32>
    %29 = vector.shape_cast %28 : vector<1x1x32x8xf32> to vector<32x8xf32>
    %cst_19 = arith.constant dense<0.000000e+00> : vector<8x8xf32>
    %30 = tpu.matmul %25, %29, %cst_19 {dimension_numbers = #tpu.dot_dimension_numbers<[1], [0], [0], [1], [0, 0, 1, 1], [], []>} : vector<8x32xf32>, vector<32x8xf32>, vector<8x8xf32> -> vector<8x8xf32>
    %c0_20 = arith.constant 0 : index
    %c0_21 = arith.constant 0 : index
    %c0_22 = arith.constant 0 : index
    %c0_23 = arith.constant 0 : index
    %31 = vector.load %arg5[%c0_20, %c0_21, %c0_22, %c0_23] : memref<2x4x1x8xf32, #tpu.memory_space<vmem>>, vector<1x1x1x8xf32>
    %32 = vector.shape_cast %31 : vector<1x1x1x8xf32> to vector<1x8xf32>
    %33 = vector.broadcast %32 : vector<1x8xf32> to vector<8x8xf32>
    %34 = arith.addf %30, %33 : vector<8x8xf32>
    %c0_24 = arith.constant 0 : index
    %c0_25 = arith.constant 0 : index
    %c0_26 = arith.constant 0 : index
    %c0_27 = arith.constant 0 : index
    %35 = vector.load %arg6[%c0_24, %c0_25, %c0_26, %c0_27] : memref<2x4x32x8xf32, #tpu.memory_space<vmem>>, vector<1x1x32x8xf32>
    %36 = vector.shape_cast %35 : vector<1x1x32x8xf32> to vector<32x8xf32>
    %cst_28 = arith.constant dense<0.000000e+00> : vector<8x8xf32>
    %37 = tpu.matmul %25, %36, %cst_28 {dimension_numbers = #tpu.dot_dimension_numbers<[1], [0], [0], [1], [0, 0, 1, 1], [], []>} : vector<8x32xf32>, vector<32x8xf32>, vector<8x8xf32> -> vector<8x8xf32>
    %c0_29 = arith.constant 0 : index
    %c0_30 = arith.constant 0 : index
    %c0_31 = arith.constant 0 : index
    %c0_32 = arith.constant 0 : index
    %38 = vector.load %arg7[%c0_29, %c0_30, %c0_31, %c0_32] : memref<2x4x1x8xf32, #tpu.memory_space<vmem>>, vector<1x1x1x8xf32>
    %39 = vector.shape_cast %38 : vector<1x1x1x8xf32> to vector<1x8xf32>
    %40 = vector.broadcast %39 : vector<1x8xf32> to vector<8x8xf32>
    %41 = arith.addf %37, %40 : vector<8x8xf32>
    %c0_33 = arith.constant 0 : index
    %c0_34 = arith.constant 0 : index
    %c0_35 = arith.constant 0 : index
    %c0_36 = arith.constant 0 : index
    %42 = vector.load %arg8[%c0_33, %c0_34, %c0_35, %c0_36] : memref<2x4x32x8xf32, #tpu.memory_space<vmem>>, vector<1x1x32x8xf32>
    %43 = vector.shape_cast %42 : vector<1x1x32x8xf32> to vector<32x8xf32>
    %cst_37 = arith.constant dense<0.000000e+00> : vector<8x8xf32>
    %44 = tpu.matmul %25, %43, %cst_37 {dimension_numbers = #tpu.dot_dimension_numbers<[1], [0], [0], [1], [0, 0, 1, 1], [], []>} : vector<8x32xf32>, vector<32x8xf32>, vector<8x8xf32> -> vector<8x8xf32>
    %c0_38 = arith.constant 0 : index
    %c0_39 = arith.constant 0 : index
    %c0_40 = arith.constant 0 : index
    %c0_41 = arith.constant 0 : index
    %45 = vector.load %arg9[%c0_38, %c0_39, %c0_40, %c0_41] : memref<2x4x1x8xf32, #tpu.memory_space<vmem>>, vector<1x1x1x8xf32>
    %46 = vector.shape_cast %45 : vector<1x1x1x8xf32> to vector<1x8xf32>
    %47 = vector.broadcast %46 : vector<1x8xf32> to vector<8x8xf32>
    %48 = arith.addf %44, %47 : vector<8x8xf32>
    %cst_42 = arith.constant dense<0.000000e+00> : vector<8x8xf32>
    %49 = tpu.matmul %34, %41, %cst_42 {dimension_numbers = #tpu.dot_dimension_numbers<[1], [1], [0], [0], [0, 0, 1, 0], [], []>} : vector<8x8xf32>, vector<8x8xf32>, vector<8x8xf32> -> vector<8x8xf32>
    %cst_43 = arith.constant 0.353553385 : f32
    %50 = vector.broadcast %cst_43 : f32 to vector<8x8xf32>
    %51 = arith.mulf %49, %50 : vector<8x8xf32>
    %52 = vector.broadcast %1 : vector<1x8xf32> to vector<8x8xf32>
    %53 = arith.addf %51, %52 : vector<8x8xf32>
    %cst_44 = arith.constant dense<0xFF800000> : vector<8xf32>
    %54 = vector.multi_reduction <maximumf>, %53, %cst_44 [1] : vector<8x8xf32> to vector<8xf32>
    %55 = vector.shape_cast %54 : vector<8xf32> to vector<8x1xf32>
    %56 = vector.broadcast %55 : vector<8x1xf32> to vector<8x8xf32>
    %57 = arith.subf %53, %56 : vector<8x8xf32>
    %58 = math.exp %57 : vector<8x8xf32>
    %cst_45 = arith.constant dense<0.000000e+00> : vector<8xf32>
    %59 = vector.multi_reduction <add>, %58, %cst_45 [1] : vector<8x8xf32> to vector<8xf32>
    %60 = vector.shape_cast %59 : vector<8xf32> to vector<8x1xf32>
    %61 = tpu.reciprocal %60 {approx = true} : vector<8x1xf32> -> vector<8x1xf32>
    %62 = vector.broadcast %61 : vector<8x1xf32> to vector<8x8xf32>
    %63 = arith.mulf %58, %62 : vector<8x8xf32>
    %cst_46 = arith.constant dense<0.000000e+00> : vector<8x8xf32>
    %64 = tpu.matmul %63, %48, %cst_46 {dimension_numbers = #tpu.dot_dimension_numbers<[1], [0], [0], [1], [0, 0, 1, 1], [], []>} : vector<8x8xf32>, vector<8x8xf32>, vector<8x8xf32> -> vector<8x8xf32>
    %c0_47 = arith.constant 0 : index
    %c0_48 = arith.constant 0 : index
    %c0_49 = arith.constant 0 : index
    %c0_50 = arith.constant 0 : index
    %65 = vector.load %arg10[%c0_47, %c0_48, %c0_49, %c0_50] : memref<2x4x8x32xf32, #tpu.memory_space<vmem>>, vector<1x1x8x32xf32>
    %66 = vector.shape_cast %65 : vector<1x1x8x32xf32> to vector<8x32xf32>
    %cst_51 = arith.constant dense<0.000000e+00> : vector<8x32xf32>
    %67 = tpu.matmul %64, %66, %cst_51 {dimension_numbers = #tpu.dot_dimension_numbers<[1], [0], [0], [1], [0, 0, 1, 1], [], []>} : vector<8x8xf32>, vector<8x32xf32>, vector<8x32xf32> -> vector<8x32xf32>
    %c0_52 = arith.constant 0 : index
    %c1_53 = arith.constant 1 : index
    %c0_54 = arith.constant 0 : index
    %c0_55 = arith.constant 0 : index
    %68 = vector.load %arg4[%c0_52, %c1_53, %c0_54, %c0_55] : memref<2x4x32x8xf32, #tpu.memory_space<vmem>>, vector<1x1x32x8xf32>
    %69 = vector.shape_cast %68 : vector<1x1x32x8xf32> to vector<32x8xf32>
    %cst_56 = arith.constant dense<0.000000e+00> : vector<8x8xf32>
    %70 = tpu.matmul %25, %69, %cst_56 {dimension_numbers = #tpu.dot_dimension_numbers<[1], [0], [0], [1], [0, 0, 1, 1], [], []>} : vector<8x32xf32>, vector<32x8xf32>, vector<8x8xf32> -> vector<8x8xf32>
    %c0_57 = arith.constant 0 : index
    %c1_58 = arith.constant 1 : index
    %c0_59 = arith.constant 0 : index
    %c0_60 = arith.constant 0 : index
    %71 = vector.load %arg5[%c0_57, %c1_58, %c0_59, %c0_60] : memref<2x4x1x8xf32, #tpu.memory_space<vmem>>, vector<1x1x1x8xf32>
    %72 = vector.shape_cast %71 : vector<1x1x1x8xf32> to vector<1x8xf32>
    %73 = vector.broadcast %72 : vector<1x8xf32> to vector<8x8xf32>
    %74 = arith.addf %70, %73 : vector<8x8xf32>
    %c0_61 = arith.constant 0 : index
    %c1_62 = arith.constant 1 : index
    %c0_63 = arith.constant 0 : index
    %c0_64 = arith.constant 0 : index
    %75 = vector.load %arg6[%c0_61, %c1_62, %c0_63, %c0_64] : memref<2x4x32x8xf32, #tpu.memory_space<vmem>>, vector<1x1x32x8xf32>
    %76 = vector.shape_cast %75 : vector<1x1x32x8xf32> to vector<32x8xf32>
    %cst_65 = arith.constant dense<0.000000e+00> : vector<8x8xf32>
    %77 = tpu.matmul %25, %76, %cst_65 {dimension_numbers = #tpu.dot_dimension_numbers<[1], [0], [0], [1], [0, 0, 1, 1], [], []>} : vector<8x32xf32>, vector<32x8xf32>, vector<8x8xf32> -> vector<8x8xf32>
    %c0_66 = arith.constant 0 : index
    %c1_67 = arith.constant 1 : index
    %c0_68 = arith.constant 0 : index
    %c0_69 = arith.constant 0 : index
    %78 = vector.load %arg7[%c0_66, %c1_67, %c0_68, %c0_69] : memref<2x4x1x8xf32, #tpu.memory_space<vmem>>, vector<1x1x1x8xf32>
    %79 = vector.shape_cast %78 : vector<1x1x1x8xf32> to vector<1x8xf32>
    %80 = vector.broadcast %79 : vector<1x8xf32> to vector<8x8xf32>
    %81 = arith.addf %77, %80 : vector<8x8xf32>
    %c0_70 = arith.constant 0 : index
    %c1_71 = arith.constant 1 : index
    %c0_72 = arith.constant 0 : index
    %c0_73 = arith.constant 0 : index
    %82 = vector.load %arg8[%c0_70, %c1_71, %c0_72, %c0_73] : memref<2x4x32x8xf32, #tpu.memory_space<vmem>>, vector<1x1x32x8xf32>
    %83 = vector.shape_cast %82 : vector<1x1x32x8xf32> to vector<32x8xf32>
    %cst_74 = arith.constant dense<0.000000e+00> : vector<8x8xf32>
    %84 = tpu.matmul %25, %83, %cst_74 {dimension_numbers = #tpu.dot_dimension_numbers<[1], [0], [0], [1], [0, 0, 1, 1], [], []>} : vector<8x32xf32>, vector<32x8xf32>, vector<8x8xf32> -> vector<8x8xf32>
    %c0_75 = arith.constant 0 : index
    %c1_76 = arith.constant 1 : index
    %c0_77 = arith.constant 0 : index
    %c0_78 = arith.constant 0 : index
    %85 = vector.load %arg9[%c0_75, %c1_76, %c0_77, %c0_78] : memref<2x4x1x8xf32, #tpu.memory_space<vmem>>, vector<1x1x1x8xf32>
    %86 = vector.shape_cast %85 : vector<1x1x1x8xf32> to vector<1x8xf32>
    %87 = vector.broadcast %86 : vector<1x8xf32> to vector<8x8xf32>
    %88 = arith.addf %84, %87 : vector<8x8xf32>
    %cst_79 = arith.constant dense<0.000000e+00> : vector<8x8xf32>
    %89 = tpu.matmul %74, %81, %cst_79 {dimension_numbers = #tpu.dot_dimension_numbers<[1], [1], [0], [0], [0, 0, 1, 0], [], []>} : vector<8x8xf32>, vector<8x8xf32>, vector<8x8xf32> -> vector<8x8xf32>
    %cst_80 = arith.constant 0.353553385 : f32
    %90 = vector.broadcast %cst_80 : f32 to vector<8x8xf32>
    %91 = arith.mulf %89, %90 : vector<8x8xf32>
    %92 = vector.broadcast %1 : vector<1x8xf32> to vector<8x8xf32>
    %93 = arith.addf %91, %92 : vector<8x8xf32>
    %cst_81 = arith.constant dense<0xFF800000> : vector<8xf32>
    %94 = vector.multi_reduction <maximumf>, %93, %cst_81 [1] : vector<8x8xf32> to vector<8xf32>
    %95 = vector.shape_cast %94 : vector<8xf32> to vector<8x1xf32>
    %96 = vector.broadcast %95 : vector<8x1xf32> to vector<8x8xf32>
    %97 = arith.subf %93, %96 : vector<8x8xf32>
    %98 = math.exp %97 : vector<8x8xf32>
    %cst_82 = arith.constant dense<0.000000e+00> : vector<8xf32>
    %99 = vector.multi_reduction <add>, %98, %cst_82 [1] : vector<8x8xf32> to vector<8xf32>
    %100 = vector.shape_cast %99 : vector<8xf32> to vector<8x1xf32>
    %101 = tpu.reciprocal %100 {approx = true} : vector<8x1xf32> -> vector<8x1xf32>
    %102 = vector.broadcast %101 : vector<8x1xf32> to vector<8x8xf32>
    %103 = arith.mulf %98, %102 : vector<8x8xf32>
    %cst_83 = arith.constant dense<0.000000e+00> : vector<8x8xf32>
    %104 = tpu.matmul %103, %88, %cst_83 {dimension_numbers = #tpu.dot_dimension_numbers<[1], [0], [0], [1], [0, 0, 1, 1], [], []>} : vector<8x8xf32>, vector<8x8xf32>, vector<8x8xf32> -> vector<8x8xf32>
    %c0_84 = arith.constant 0 : index
    %c1_85 = arith.constant 1 : index
    %c0_86 = arith.constant 0 : index
    %c0_87 = arith.constant 0 : index
    %105 = vector.load %arg10[%c0_84, %c1_85, %c0_86, %c0_87] : memref<2x4x8x32xf32, #tpu.memory_space<vmem>>, vector<1x1x8x32xf32>
    %106 = vector.shape_cast %105 : vector<1x1x8x32xf32> to vector<8x32xf32>
    %cst_88 = arith.constant dense<0.000000e+00> : vector<8x32xf32>
    %107 = tpu.matmul %104, %106, %cst_88 {dimension_numbers = #tpu.dot_dimension_numbers<[1], [0], [0], [1], [0, 0, 1, 1], [], []>} : vector<8x8xf32>, vector<8x32xf32>, vector<8x32xf32> -> vector<8x32xf32>
    %108 = arith.addf %67, %107 : vector<8x32xf32>
    %c0_89 = arith.constant 0 : index
    %c2 = arith.constant 2 : index
    %c0_90 = arith.constant 0 : index
    %c0_91 = arith.constant 0 : index
    %109 = vector.load %arg4[%c0_89, %c2, %c0_90, %c0_91] : memref<2x4x32x8xf32, #tpu.memory_space<vmem>>, vector<1x1x32x8xf32>
    %110 = vector.shape_cast %109 : vector<1x1x32x8xf32> to vector<32x8xf32>
    %cst_92 = arith.constant dense<0.000000e+00> : vector<8x8xf32>
    %111 = tpu.matmul %25, %110, %cst_92 {dimension_numbers = #tpu.dot_dimension_numbers<[1], [0], [0], [1], [0, 0, 1, 1], [], []>} : vector<8x32xf32>, vector<32x8xf32>, vector<8x8xf32> -> vector<8x8xf32>
    %c0_93 = arith.constant 0 : index
    %c2_94 = arith.constant 2 : index
    %c0_95 = arith.constant 0 : index
    %c0_96 = arith.constant 0 : index
    %112 = vector.load %arg5[%c0_93, %c2_94, %c0_95, %c0_96] : memref<2x4x1x8xf32, #tpu.memory_space<vmem>>, vector<1x1x1x8xf32>
    %113 = vector.shape_cast %112 : vector<1x1x1x8xf32> to vector<1x8xf32>
    %114 = vector.broadcast %113 : vector<1x8xf32> to vector<8x8xf32>
    %115 = arith.addf %111, %114 : vector<8x8xf32>
    %c0_97 = arith.constant 0 : index
    %c2_98 = arith.constant 2 : index
    %c0_99 = arith.constant 0 : index
    %c0_100 = arith.constant 0 : index
    %116 = vector.load %arg6[%c0_97, %c2_98, %c0_99, %c0_100] : memref<2x4x32x8xf32, #tpu.memory_space<vmem>>, vector<1x1x32x8xf32>
    %117 = vector.shape_cast %116 : vector<1x1x32x8xf32> to vector<32x8xf32>
    %cst_101 = arith.constant dense<0.000000e+00> : vector<8x8xf32>
    %118 = tpu.matmul %25, %117, %cst_101 {dimension_numbers = #tpu.dot_dimension_numbers<[1], [0], [0], [1], [0, 0, 1, 1], [], []>} : vector<8x32xf32>, vector<32x8xf32>, vector<8x8xf32> -> vector<8x8xf32>
    %c0_102 = arith.constant 0 : index
    %c2_103 = arith.constant 2 : index
    %c0_104 = arith.constant 0 : index
    %c0_105 = arith.constant 0 : index
    %119 = vector.load %arg7[%c0_102, %c2_103, %c0_104, %c0_105] : memref<2x4x1x8xf32, #tpu.memory_space<vmem>>, vector<1x1x1x8xf32>
    %120 = vector.shape_cast %119 : vector<1x1x1x8xf32> to vector<1x8xf32>
    %121 = vector.broadcast %120 : vector<1x8xf32> to vector<8x8xf32>
    %122 = arith.addf %118, %121 : vector<8x8xf32>
    %c0_106 = arith.constant 0 : index
    %c2_107 = arith.constant 2 : index
    %c0_108 = arith.constant 0 : index
    %c0_109 = arith.constant 0 : index
    %123 = vector.load %arg8[%c0_106, %c2_107, %c0_108, %c0_109] : memref<2x4x32x8xf32, #tpu.memory_space<vmem>>, vector<1x1x32x8xf32>
    %124 = vector.shape_cast %123 : vector<1x1x32x8xf32> to vector<32x8xf32>
    %cst_110 = arith.constant dense<0.000000e+00> : vector<8x8xf32>
    %125 = tpu.matmul %25, %124, %cst_110 {dimension_numbers = #tpu.dot_dimension_numbers<[1], [0], [0], [1], [0, 0, 1, 1], [], []>} : vector<8x32xf32>, vector<32x8xf32>, vector<8x8xf32> -> vector<8x8xf32>
    %c0_111 = arith.constant 0 : index
    %c2_112 = arith.constant 2 : index
    %c0_113 = arith.constant 0 : index
    %c0_114 = arith.constant 0 : index
    %126 = vector.load %arg9[%c0_111, %c2_112, %c0_113, %c0_114] : memref<2x4x1x8xf32, #tpu.memory_space<vmem>>, vector<1x1x1x8xf32>
    %127 = vector.shape_cast %126 : vector<1x1x1x8xf32> to vector<1x8xf32>
    %128 = vector.broadcast %127 : vector<1x8xf32> to vector<8x8xf32>
    %129 = arith.addf %125, %128 : vector<8x8xf32>
    %cst_115 = arith.constant dense<0.000000e+00> : vector<8x8xf32>
    %130 = tpu.matmul %115, %122, %cst_115 {dimension_numbers = #tpu.dot_dimension_numbers<[1], [1], [0], [0], [0, 0, 1, 0], [], []>} : vector<8x8xf32>, vector<8x8xf32>, vector<8x8xf32> -> vector<8x8xf32>
    %cst_116 = arith.constant 0.353553385 : f32
    %131 = vector.broadcast %cst_116 : f32 to vector<8x8xf32>
    %132 = arith.mulf %130, %131 : vector<8x8xf32>
    %133 = vector.broadcast %1 : vector<1x8xf32> to vector<8x8xf32>
    %134 = arith.addf %132, %133 : vector<8x8xf32>
    %cst_117 = arith.constant dense<0xFF800000> : vector<8xf32>
    %135 = vector.multi_reduction <maximumf>, %134, %cst_117 [1] : vector<8x8xf32> to vector<8xf32>
    %136 = vector.shape_cast %135 : vector<8xf32> to vector<8x1xf32>
    %137 = vector.broadcast %136 : vector<8x1xf32> to vector<8x8xf32>
    %138 = arith.subf %134, %137 : vector<8x8xf32>
    %139 = math.exp %138 : vector<8x8xf32>
    %cst_118 = arith.constant dense<0.000000e+00> : vector<8xf32>
    %140 = vector.multi_reduction <add>, %139, %cst_118 [1] : vector<8x8xf32> to vector<8xf32>
    %141 = vector.shape_cast %140 : vector<8xf32> to vector<8x1xf32>
    %142 = tpu.reciprocal %141 {approx = true} : vector<8x1xf32> -> vector<8x1xf32>
    %143 = vector.broadcast %142 : vector<8x1xf32> to vector<8x8xf32>
    %144 = arith.mulf %139, %143 : vector<8x8xf32>
    %cst_119 = arith.constant dense<0.000000e+00> : vector<8x8xf32>
    %145 = tpu.matmul %144, %129, %cst_119 {dimension_numbers = #tpu.dot_dimension_numbers<[1], [0], [0], [1], [0, 0, 1, 1], [], []>} : vector<8x8xf32>, vector<8x8xf32>, vector<8x8xf32> -> vector<8x8xf32>
    %c0_120 = arith.constant 0 : index
    %c2_121 = arith.constant 2 : index
    %c0_122 = arith.constant 0 : index
    %c0_123 = arith.constant 0 : index
    %146 = vector.load %arg10[%c0_120, %c2_121, %c0_122, %c0_123] : memref<2x4x8x32xf32, #tpu.memory_space<vmem>>, vector<1x1x8x32xf32>
    %147 = vector.shape_cast %146 : vector<1x1x8x32xf32> to vector<8x32xf32>
    %cst_124 = arith.constant dense<0.000000e+00> : vector<8x32xf32>
    %148 = tpu.matmul %145, %147, %cst_124 {dimension_numbers = #tpu.dot_dimension_numbers<[1], [0], [0], [1], [0, 0, 1, 1], [], []>} : vector<8x8xf32>, vector<8x32xf32>, vector<8x32xf32> -> vector<8x32xf32>
    %149 = arith.addf %108, %148 : vector<8x32xf32>
    %c0_125 = arith.constant 0 : index
    %c3 = arith.constant 3 : index
    %c0_126 = arith.constant 0 : index
    %c0_127 = arith.constant 0 : index
    %150 = vector.load %arg4[%c0_125, %c3, %c0_126, %c0_127] : memref<2x4x32x8xf32, #tpu.memory_space<vmem>>, vector<1x1x32x8xf32>
    %151 = vector.shape_cast %150 : vector<1x1x32x8xf32> to vector<32x8xf32>
    %cst_128 = arith.constant dense<0.000000e+00> : vector<8x8xf32>
    %152 = tpu.matmul %25, %151, %cst_128 {dimension_numbers = #tpu.dot_dimension_numbers<[1], [0], [0], [1], [0, 0, 1, 1], [], []>} : vector<8x32xf32>, vector<32x8xf32>, vector<8x8xf32> -> vector<8x8xf32>
    %c0_129 = arith.constant 0 : index
    %c3_130 = arith.constant 3 : index
    %c0_131 = arith.constant 0 : index
    %c0_132 = arith.constant 0 : index
    %153 = vector.load %arg5[%c0_129, %c3_130, %c0_131, %c0_132] : memref<2x4x1x8xf32, #tpu.memory_space<vmem>>, vector<1x1x1x8xf32>
    %154 = vector.shape_cast %153 : vector<1x1x1x8xf32> to vector<1x8xf32>
    %155 = vector.broadcast %154 : vector<1x8xf32> to vector<8x8xf32>
    %156 = arith.addf %152, %155 : vector<8x8xf32>
    %c0_133 = arith.constant 0 : index
    %c3_134 = arith.constant 3 : index
    %c0_135 = arith.constant 0 : index
    %c0_136 = arith.constant 0 : index
    %157 = vector.load %arg6[%c0_133, %c3_134, %c0_135, %c0_136] : memref<2x4x32x8xf32, #tpu.memory_space<vmem>>, vector<1x1x32x8xf32>
    %158 = vector.shape_cast %157 : vector<1x1x32x8xf32> to vector<32x8xf32>
    %cst_137 = arith.constant dense<0.000000e+00> : vector<8x8xf32>
    %159 = tpu.matmul %25, %158, %cst_137 {dimension_numbers = #tpu.dot_dimension_numbers<[1], [0], [0], [1], [0, 0, 1, 1], [], []>} : vector<8x32xf32>, vector<32x8xf32>, vector<8x8xf32> -> vector<8x8xf32>
    %c0_138 = arith.constant 0 : index
    %c3_139 = arith.constant 3 : index
    %c0_140 = arith.constant 0 : index
    %c0_141 = arith.constant 0 : index
    %160 = vector.load %arg7[%c0_138, %c3_139, %c0_140, %c0_141] : memref<2x4x1x8xf32, #tpu.memory_space<vmem>>, vector<1x1x1x8xf32>
    %161 = vector.shape_cast %160 : vector<1x1x1x8xf32> to vector<1x8xf32>
    %162 = vector.broadcast %161 : vector<1x8xf32> to vector<8x8xf32>
    %163 = arith.addf %159, %162 : vector<8x8xf32>
    %c0_142 = arith.constant 0 : index
    %c3_143 = arith.constant 3 : index
    %c0_144 = arith.constant 0 : index
    %c0_145 = arith.constant 0 : index
    %164 = vector.load %arg8[%c0_142, %c3_143, %c0_144, %c0_145] : memref<2x4x32x8xf32, #tpu.memory_space<vmem>>, vector<1x1x32x8xf32>
    %165 = vector.shape_cast %164 : vector<1x1x32x8xf32> to vector<32x8xf32>
    %cst_146 = arith.constant dense<0.000000e+00> : vector<8x8xf32>
    %166 = tpu.matmul %25, %165, %cst_146 {dimension_numbers = #tpu.dot_dimension_numbers<[1], [0], [0], [1], [0, 0, 1, 1], [], []>} : vector<8x32xf32>, vector<32x8xf32>, vector<8x8xf32> -> vector<8x8xf32>
    %c0_147 = arith.constant 0 : index
    %c3_148 = arith.constant 3 : index
    %c0_149 = arith.constant 0 : index
    %c0_150 = arith.constant 0 : index
    %167 = vector.load %arg9[%c0_147, %c3_148, %c0_149, %c0_150] : memref<2x4x1x8xf32, #tpu.memory_space<vmem>>, vector<1x1x1x8xf32>
    %168 = vector.shape_cast %167 : vector<1x1x1x8xf32> to vector<1x8xf32>
    %169 = vector.broadcast %168 : vector<1x8xf32> to vector<8x8xf32>
    %170 = arith.addf %166, %169 : vector<8x8xf32>
    %cst_151 = arith.constant dense<0.000000e+00> : vector<8x8xf32>
    %171 = tpu.matmul %156, %163, %cst_151 {dimension_numbers = #tpu.dot_dimension_numbers<[1], [1], [0], [0], [0, 0, 1, 0], [], []>} : vector<8x8xf32>, vector<8x8xf32>, vector<8x8xf32> -> vector<8x8xf32>
    %cst_152 = arith.constant 0.353553385 : f32
    %172 = vector.broadcast %cst_152 : f32 to vector<8x8xf32>
    %173 = arith.mulf %171, %172 : vector<8x8xf32>
    %174 = vector.broadcast %1 : vector<1x8xf32> to vector<8x8xf32>
    %175 = arith.addf %173, %174 : vector<8x8xf32>
    %cst_153 = arith.constant dense<0xFF800000> : vector<8xf32>
    %176 = vector.multi_reduction <maximumf>, %175, %cst_153 [1] : vector<8x8xf32> to vector<8xf32>
    %177 = vector.shape_cast %176 : vector<8xf32> to vector<8x1xf32>
    %178 = vector.broadcast %177 : vector<8x1xf32> to vector<8x8xf32>
    %179 = arith.subf %175, %178 : vector<8x8xf32>
    %180 = math.exp %179 : vector<8x8xf32>
    %cst_154 = arith.constant dense<0.000000e+00> : vector<8xf32>
    %181 = vector.multi_reduction <add>, %180, %cst_154 [1] : vector<8x8xf32> to vector<8xf32>
    %182 = vector.shape_cast %181 : vector<8xf32> to vector<8x1xf32>
    %183 = tpu.reciprocal %182 {approx = true} : vector<8x1xf32> -> vector<8x1xf32>
    %184 = vector.broadcast %183 : vector<8x1xf32> to vector<8x8xf32>
    %185 = arith.mulf %180, %184 : vector<8x8xf32>
    %cst_155 = arith.constant dense<0.000000e+00> : vector<8x8xf32>
    %186 = tpu.matmul %185, %170, %cst_155 {dimension_numbers = #tpu.dot_dimension_numbers<[1], [0], [0], [1], [0, 0, 1, 1], [], []>} : vector<8x8xf32>, vector<8x8xf32>, vector<8x8xf32> -> vector<8x8xf32>
    %c0_156 = arith.constant 0 : index
    %c3_157 = arith.constant 3 : index
    %c0_158 = arith.constant 0 : index
    %c0_159 = arith.constant 0 : index
    %187 = vector.load %arg10[%c0_156, %c3_157, %c0_158, %c0_159] : memref<2x4x8x32xf32, #tpu.memory_space<vmem>>, vector<1x1x8x32xf32>
    %188 = vector.shape_cast %187 : vector<1x1x8x32xf32> to vector<8x32xf32>
    %cst_160 = arith.constant dense<0.000000e+00> : vector<8x32xf32>
    %189 = tpu.matmul %186, %188, %cst_160 {dimension_numbers = #tpu.dot_dimension_numbers<[1], [0], [0], [1], [0, 0, 1, 1], [], []>} : vector<8x8xf32>, vector<8x32xf32>, vector<8x32xf32> -> vector<8x32xf32>
    %190 = arith.addf %149, %189 : vector<8x32xf32>
    %c0_161 = arith.constant 0 : index
    %c0_162 = arith.constant 0 : index
    %c0_163 = arith.constant 0 : index
    %191 = vector.load %arg11[%c0_161, %c0_162, %c0_163] : memref<2x1x32xf32, #tpu.memory_space<vmem>>, vector<1x1x32xf32>
    %192 = vector.shape_cast %191 : vector<1x1x32xf32> to vector<1x32xf32>
    %193 = vector.broadcast %192 : vector<1x32xf32> to vector<8x32xf32>
    %194 = arith.addf %190, %193 : vector<8x32xf32>
    %195 = arith.addf %25, %194 : vector<8x32xf32>
    %196 = vector.extract_strided_slice %27 {offsets = [0, 0], sizes = [1, 32], strides = [1, 1]} : vector<4x32xf32> to vector<1x32xf32>
    %197 = vector.extract_strided_slice %27 {offsets = [1, 0], sizes = [1, 32], strides = [1, 1]} : vector<4x32xf32> to vector<1x32xf32>
    %cst_164 = arith.constant dense<0.000000e+00> : vector<8xf32>
    %198 = vector.multi_reduction <add>, %195, %cst_164 [1] : vector<8x32xf32> to vector<8xf32>
    %199 = vector.shape_cast %198 : vector<8xf32> to vector<8x1xf32>
    %cst_165 = arith.constant 3.200000e+01 : f32
    %200 = vector.broadcast %cst_165 : f32 to vector<8x1xf32>
    %201 = arith.divf %199, %200 : vector<8x1xf32>
    %202 = vector.broadcast %201 : vector<8x1xf32> to vector<8x32xf32>
    %203 = arith.subf %195, %202 : vector<8x32xf32>
    %204 = arith.mulf %203, %203 : vector<8x32xf32>
    %cst_166 = arith.constant dense<0.000000e+00> : vector<8xf32>
    %205 = vector.multi_reduction <add>, %204, %cst_166 [1] : vector<8x32xf32> to vector<8xf32>
    %206 = vector.shape_cast %205 : vector<8xf32> to vector<8x1xf32>
    %cst_167 = arith.constant 3.200000e+01 : f32
    %207 = vector.broadcast %cst_167 : f32 to vector<8x1xf32>
    %208 = arith.divf %206, %207 : vector<8x1xf32>
    %cst_168 = arith.constant 9.99999996E-13 : f32
    %209 = vector.broadcast %cst_168 : f32 to vector<8x1xf32>
    %210 = arith.addf %208, %209 : vector<8x1xf32>
    %211 = math.rsqrt %210 : vector<8x1xf32>
    %212 = vector.broadcast %211 : vector<8x1xf32> to vector<8x32xf32>
    %213 = arith.mulf %203, %212 : vector<8x32xf32>
    %214 = vector.broadcast %196 : vector<1x32xf32> to vector<8x32xf32>
    %215 = arith.mulf %213, %214 : vector<8x32xf32>
    %216 = vector.broadcast %197 : vector<1x32xf32> to vector<8x32xf32>
    %217 = arith.addf %215, %216 : vector<8x32xf32>
    %c0_169 = arith.constant 0 : index
    %c0_170 = arith.constant 0 : index
    %c0_171 = arith.constant 0 : index
    %218 = vector.load %arg13[%c0_169, %c0_170, %c0_171] : memref<2x32x64xf32, #tpu.memory_space<vmem>>, vector<1x32x64xf32>
    %219 = vector.shape_cast %218 : vector<1x32x64xf32> to vector<32x64xf32>
    %cst_172 = arith.constant dense<0.000000e+00> : vector<8x64xf32>
    %220 = tpu.matmul %217, %219, %cst_172 {dimension_numbers = #tpu.dot_dimension_numbers<[1], [0], [0], [1], [0, 0, 1, 1], [], []>} : vector<8x32xf32>, vector<32x64xf32>, vector<8x64xf32> -> vector<8x64xf32>
    %c0_173 = arith.constant 0 : index
    %c0_174 = arith.constant 0 : index
    %c0_175 = arith.constant 0 : index
    %221 = vector.load %arg14[%c0_173, %c0_174, %c0_175] : memref<2x1x64xf32, #tpu.memory_space<vmem>>, vector<1x1x64xf32>
    %222 = vector.shape_cast %221 : vector<1x1x64xf32> to vector<1x64xf32>
    %223 = vector.broadcast %222 : vector<1x64xf32> to vector<8x64xf32>
    %224 = arith.addf %220, %223 : vector<8x64xf32>
    %cst_176 = arith.constant 5.000000e-01 : f32
    %225 = vector.broadcast %cst_176 : f32 to vector<8x64xf32>
    %226 = arith.mulf %225, %224 : vector<8x64xf32>
    %cst_177 = arith.constant 4.471500e-02 : f32
    %227 = vector.broadcast %cst_177 : f32 to vector<8x64xf32>
    %228 = arith.mulf %227, %224 : vector<8x64xf32>
    %229 = arith.mulf %228, %224 : vector<8x64xf32>
    %230 = arith.mulf %229, %224 : vector<8x64xf32>
    %231 = arith.addf %224, %230 : vector<8x64xf32>
    %cst_178 = arith.constant 0.797884583 : f32
    %232 = vector.broadcast %cst_178 : f32 to vector<8x64xf32>
    %233 = arith.mulf %232, %231 : vector<8x64xf32>
    %234 = math.tanh %233 : vector<8x64xf32>
    %cst_179 = arith.constant 1.000000e+00 : f32
    %235 = vector.broadcast %cst_179 : f32 to vector<8x64xf32>
    %236 = arith.addf %235, %234 : vector<8x64xf32>
    %237 = arith.mulf %226, %236 : vector<8x64xf32>
    %c0_180 = arith.constant 0 : index
    %c0_181 = arith.constant 0 : index
    %c0_182 = arith.constant 0 : index
    %238 = vector.load %arg15[%c0_180, %c0_181, %c0_182] : memref<2x64x32xf32, #tpu.memory_space<vmem>>, vector<1x64x32xf32>
    %239 = vector.shape_cast %238 : vector<1x64x32xf32> to vector<64x32xf32>
    %cst_183 = arith.constant dense<0.000000e+00> : vector<8x32xf32>
    %240 = tpu.matmul %237, %239, %cst_183 {dimension_numbers = #tpu.dot_dimension_numbers<[1], [0], [0], [1], [0, 0, 1, 1], [], []>} : vector<8x64xf32>, vector<64x32xf32>, vector<8x32xf32> -> vector<8x32xf32>
    %c0_184 = arith.constant 0 : index
    %c0_185 = arith.constant 0 : index
    %c0_186 = arith.constant 0 : index
    %241 = vector.load %arg16[%c0_184, %c0_185, %c0_186] : memref<2x1x32xf32, #tpu.memory_space<vmem>>, vector<1x1x32xf32>
    %242 = vector.shape_cast %241 : vector<1x1x32xf32> to vector<1x32xf32>
    %243 = vector.broadcast %242 : vector<1x32xf32> to vector<8x32xf32>
    %244 = arith.addf %240, %243 : vector<8x32xf32>
    %245 = arith.addf %217, %244 : vector<8x32xf32>
    %246 = vector.extract_strided_slice %27 {offsets = [2, 0], sizes = [1, 32], strides = [1, 1]} : vector<4x32xf32> to vector<1x32xf32>
    %247 = vector.extract_strided_slice %27 {offsets = [3, 0], sizes = [1, 32], strides = [1, 1]} : vector<4x32xf32> to vector<1x32xf32>
    %cst_187 = arith.constant dense<0.000000e+00> : vector<8xf32>
    %248 = vector.multi_reduction <add>, %245, %cst_187 [1] : vector<8x32xf32> to vector<8xf32>
    %249 = vector.shape_cast %248 : vector<8xf32> to vector<8x1xf32>
    %cst_188 = arith.constant 3.200000e+01 : f32
    %250 = vector.broadcast %cst_188 : f32 to vector<8x1xf32>
    %251 = arith.divf %249, %250 : vector<8x1xf32>
    %252 = vector.broadcast %251 : vector<8x1xf32> to vector<8x32xf32>
    %253 = arith.subf %245, %252 : vector<8x32xf32>
    %254 = arith.mulf %253, %253 : vector<8x32xf32>
    %cst_189 = arith.constant dense<0.000000e+00> : vector<8xf32>
    %255 = vector.multi_reduction <add>, %254, %cst_189 [1] : vector<8x32xf32> to vector<8xf32>
    %256 = vector.shape_cast %255 : vector<8xf32> to vector<8x1xf32>
    %cst_190 = arith.constant 3.200000e+01 : f32
    %257 = vector.broadcast %cst_190 : f32 to vector<8x1xf32>
    %258 = arith.divf %256, %257 : vector<8x1xf32>
    %cst_191 = arith.constant 9.99999996E-13 : f32
    %259 = vector.broadcast %cst_191 : f32 to vector<8x1xf32>
    %260 = arith.addf %258, %259 : vector<8x1xf32>
    %261 = math.rsqrt %260 : vector<8x1xf32>
    %262 = vector.broadcast %261 : vector<8x1xf32> to vector<8x32xf32>
    %263 = arith.mulf %253, %262 : vector<8x32xf32>
    %264 = vector.broadcast %246 : vector<1x32xf32> to vector<8x32xf32>
    %265 = arith.mulf %263, %264 : vector<8x32xf32>
    %266 = vector.broadcast %247 : vector<1x32xf32> to vector<8x32xf32>
    %267 = arith.addf %265, %266 : vector<8x32xf32>
    %c1_192 = arith.constant 1 : index
    %c0_193 = arith.constant 0 : index
    %c0_194 = arith.constant 0 : index
    %268 = vector.load %arg12[%c1_192, %c0_193, %c0_194] : memref<2x4x32xf32, #tpu.memory_space<vmem>>, vector<1x4x32xf32>
    %269 = vector.shape_cast %268 : vector<1x4x32xf32> to vector<4x32xf32>
    %c1_195 = arith.constant 1 : index
    %c0_196 = arith.constant 0 : index
    %c0_197 = arith.constant 0 : index
    %c0_198 = arith.constant 0 : index
    %270 = vector.load %arg4[%c1_195, %c0_196, %c0_197, %c0_198] : memref<2x4x32x8xf32, #tpu.memory_space<vmem>>, vector<1x1x32x8xf32>
    %271 = vector.shape_cast %270 : vector<1x1x32x8xf32> to vector<32x8xf32>
    %cst_199 = arith.constant dense<0.000000e+00> : vector<8x8xf32>
    %272 = tpu.matmul %267, %271, %cst_199 {dimension_numbers = #tpu.dot_dimension_numbers<[1], [0], [0], [1], [0, 0, 1, 1], [], []>} : vector<8x32xf32>, vector<32x8xf32>, vector<8x8xf32> -> vector<8x8xf32>
    %c1_200 = arith.constant 1 : index
    %c0_201 = arith.constant 0 : index
    %c0_202 = arith.constant 0 : index
    %c0_203 = arith.constant 0 : index
    %273 = vector.load %arg5[%c1_200, %c0_201, %c0_202, %c0_203] : memref<2x4x1x8xf32, #tpu.memory_space<vmem>>, vector<1x1x1x8xf32>
    %274 = vector.shape_cast %273 : vector<1x1x1x8xf32> to vector<1x8xf32>
    %275 = vector.broadcast %274 : vector<1x8xf32> to vector<8x8xf32>
    %276 = arith.addf %272, %275 : vector<8x8xf32>
    %c1_204 = arith.constant 1 : index
    %c0_205 = arith.constant 0 : index
    %c0_206 = arith.constant 0 : index
    %c0_207 = arith.constant 0 : index
    %277 = vector.load %arg6[%c1_204, %c0_205, %c0_206, %c0_207] : memref<2x4x32x8xf32, #tpu.memory_space<vmem>>, vector<1x1x32x8xf32>
    %278 = vector.shape_cast %277 : vector<1x1x32x8xf32> to vector<32x8xf32>
    %cst_208 = arith.constant dense<0.000000e+00> : vector<8x8xf32>
    %279 = tpu.matmul %267, %278, %cst_208 {dimension_numbers = #tpu.dot_dimension_numbers<[1], [0], [0], [1], [0, 0, 1, 1], [], []>} : vector<8x32xf32>, vector<32x8xf32>, vector<8x8xf32> -> vector<8x8xf32>
    %c1_209 = arith.constant 1 : index
    %c0_210 = arith.constant 0 : index
    %c0_211 = arith.constant 0 : index
    %c0_212 = arith.constant 0 : index
    %280 = vector.load %arg7[%c1_209, %c0_210, %c0_211, %c0_212] : memref<2x4x1x8xf32, #tpu.memory_space<vmem>>, vector<1x1x1x8xf32>
    %281 = vector.shape_cast %280 : vector<1x1x1x8xf32> to vector<1x8xf32>
    %282 = vector.broadcast %281 : vector<1x8xf32> to vector<8x8xf32>
    %283 = arith.addf %279, %282 : vector<8x8xf32>
    %c1_213 = arith.constant 1 : index
    %c0_214 = arith.constant 0 : index
    %c0_215 = arith.constant 0 : index
    %c0_216 = arith.constant 0 : index
    %284 = vector.load %arg8[%c1_213, %c0_214, %c0_215, %c0_216] : memref<2x4x32x8xf32, #tpu.memory_space<vmem>>, vector<1x1x32x8xf32>
    %285 = vector.shape_cast %284 : vector<1x1x32x8xf32> to vector<32x8xf32>
    %cst_217 = arith.constant dense<0.000000e+00> : vector<8x8xf32>
    %286 = tpu.matmul %267, %285, %cst_217 {dimension_numbers = #tpu.dot_dimension_numbers<[1], [0], [0], [1], [0, 0, 1, 1], [], []>} : vector<8x32xf32>, vector<32x8xf32>, vector<8x8xf32> -> vector<8x8xf32>
    %c1_218 = arith.constant 1 : index
    %c0_219 = arith.constant 0 : index
    %c0_220 = arith.constant 0 : index
    %c0_221 = arith.constant 0 : index
    %287 = vector.load %arg9[%c1_218, %c0_219, %c0_220, %c0_221] : memref<2x4x1x8xf32, #tpu.memory_space<vmem>>, vector<1x1x1x8xf32>
    %288 = vector.shape_cast %287 : vector<1x1x1x8xf32> to vector<1x8xf32>
    %289 = vector.broadcast %288 : vector<1x8xf32> to vector<8x8xf32>
    %290 = arith.addf %286, %289 : vector<8x8xf32>
    %cst_222 = arith.constant dense<0.000000e+00> : vector<8x8xf32>
    %291 = tpu.matmul %276, %283, %cst_222 {dimension_numbers = #tpu.dot_dimension_numbers<[1], [1], [0], [0], [0, 0, 1, 0], [], []>} : vector<8x8xf32>, vector<8x8xf32>, vector<8x8xf32> -> vector<8x8xf32>
    %cst_223 = arith.constant 0.353553385 : f32
    %292 = vector.broadcast %cst_223 : f32 to vector<8x8xf32>
    %293 = arith.mulf %291, %292 : vector<8x8xf32>
    %294 = vector.broadcast %1 : vector<1x8xf32> to vector<8x8xf32>
    %295 = arith.addf %293, %294 : vector<8x8xf32>
    %cst_224 = arith.constant dense<0xFF800000> : vector<8xf32>
    %296 = vector.multi_reduction <maximumf>, %295, %cst_224 [1] : vector<8x8xf32> to vector<8xf32>
    %297 = vector.shape_cast %296 : vector<8xf32> to vector<8x1xf32>
    %298 = vector.broadcast %297 : vector<8x1xf32> to vector<8x8xf32>
    %299 = arith.subf %295, %298 : vector<8x8xf32>
    %300 = math.exp %299 : vector<8x8xf32>
    %cst_225 = arith.constant dense<0.000000e+00> : vector<8xf32>
    %301 = vector.multi_reduction <add>, %300, %cst_225 [1] : vector<8x8xf32> to vector<8xf32>
    %302 = vector.shape_cast %301 : vector<8xf32> to vector<8x1xf32>
    %303 = tpu.reciprocal %302 {approx = true} : vector<8x1xf32> -> vector<8x1xf32>
    %304 = vector.broadcast %303 : vector<8x1xf32> to vector<8x8xf32>
    %305 = arith.mulf %300, %304 : vector<8x8xf32>
    %cst_226 = arith.constant dense<0.000000e+00> : vector<8x8xf32>
    %306 = tpu.matmul %305, %290, %cst_226 {dimension_numbers = #tpu.dot_dimension_numbers<[1], [0], [0], [1], [0, 0, 1, 1], [], []>} : vector<8x8xf32>, vector<8x8xf32>, vector<8x8xf32> -> vector<8x8xf32>
    %c1_227 = arith.constant 1 : index
    %c0_228 = arith.constant 0 : index
    %c0_229 = arith.constant 0 : index
    %c0_230 = arith.constant 0 : index
    %307 = vector.load %arg10[%c1_227, %c0_228, %c0_229, %c0_230] : memref<2x4x8x32xf32, #tpu.memory_space<vmem>>, vector<1x1x8x32xf32>
    %308 = vector.shape_cast %307 : vector<1x1x8x32xf32> to vector<8x32xf32>
    %cst_231 = arith.constant dense<0.000000e+00> : vector<8x32xf32>
    %309 = tpu.matmul %306, %308, %cst_231 {dimension_numbers = #tpu.dot_dimension_numbers<[1], [0], [0], [1], [0, 0, 1, 1], [], []>} : vector<8x8xf32>, vector<8x32xf32>, vector<8x32xf32> -> vector<8x32xf32>
    %c1_232 = arith.constant 1 : index
    %c1_233 = arith.constant 1 : index
    %c0_234 = arith.constant 0 : index
    %c0_235 = arith.constant 0 : index
    %310 = vector.load %arg4[%c1_232, %c1_233, %c0_234, %c0_235] : memref<2x4x32x8xf32, #tpu.memory_space<vmem>>, vector<1x1x32x8xf32>
    %311 = vector.shape_cast %310 : vector<1x1x32x8xf32> to vector<32x8xf32>
    %cst_236 = arith.constant dense<0.000000e+00> : vector<8x8xf32>
    %312 = tpu.matmul %267, %311, %cst_236 {dimension_numbers = #tpu.dot_dimension_numbers<[1], [0], [0], [1], [0, 0, 1, 1], [], []>} : vector<8x32xf32>, vector<32x8xf32>, vector<8x8xf32> -> vector<8x8xf32>
    %c1_237 = arith.constant 1 : index
    %c1_238 = arith.constant 1 : index
    %c0_239 = arith.constant 0 : index
    %c0_240 = arith.constant 0 : index
    %313 = vector.load %arg5[%c1_237, %c1_238, %c0_239, %c0_240] : memref<2x4x1x8xf32, #tpu.memory_space<vmem>>, vector<1x1x1x8xf32>
    %314 = vector.shape_cast %313 : vector<1x1x1x8xf32> to vector<1x8xf32>
    %315 = vector.broadcast %314 : vector<1x8xf32> to vector<8x8xf32>
    %316 = arith.addf %312, %315 : vector<8x8xf32>
    %c1_241 = arith.constant 1 : index
    %c1_242 = arith.constant 1 : index
    %c0_243 = arith.constant 0 : index
    %c0_244 = arith.constant 0 : index
    %317 = vector.load %arg6[%c1_241, %c1_242, %c0_243, %c0_244] : memref<2x4x32x8xf32, #tpu.memory_space<vmem>>, vector<1x1x32x8xf32>
    %318 = vector.shape_cast %317 : vector<1x1x32x8xf32> to vector<32x8xf32>
    %cst_245 = arith.constant dense<0.000000e+00> : vector<8x8xf32>
    %319 = tpu.matmul %267, %318, %cst_245 {dimension_numbers = #tpu.dot_dimension_numbers<[1], [0], [0], [1], [0, 0, 1, 1], [], []>} : vector<8x32xf32>, vector<32x8xf32>, vector<8x8xf32> -> vector<8x8xf32>
    %c1_246 = arith.constant 1 : index
    %c1_247 = arith.constant 1 : index
    %c0_248 = arith.constant 0 : index
    %c0_249 = arith.constant 0 : index
    %320 = vector.load %arg7[%c1_246, %c1_247, %c0_248, %c0_249] : memref<2x4x1x8xf32, #tpu.memory_space<vmem>>, vector<1x1x1x8xf32>
    %321 = vector.shape_cast %320 : vector<1x1x1x8xf32> to vector<1x8xf32>
    %322 = vector.broadcast %321 : vector<1x8xf32> to vector<8x8xf32>
    %323 = arith.addf %319, %322 : vector<8x8xf32>
    %c1_250 = arith.constant 1 : index
    %c1_251 = arith.constant 1 : index
    %c0_252 = arith.constant 0 : index
    %c0_253 = arith.constant 0 : index
    %324 = vector.load %arg8[%c1_250, %c1_251, %c0_252, %c0_253] : memref<2x4x32x8xf32, #tpu.memory_space<vmem>>, vector<1x1x32x8xf32>
    %325 = vector.shape_cast %324 : vector<1x1x32x8xf32> to vector<32x8xf32>
    %cst_254 = arith.constant dense<0.000000e+00> : vector<8x8xf32>
    %326 = tpu.matmul %267, %325, %cst_254 {dimension_numbers = #tpu.dot_dimension_numbers<[1], [0], [0], [1], [0, 0, 1, 1], [], []>} : vector<8x32xf32>, vector<32x8xf32>, vector<8x8xf32> -> vector<8x8xf32>
    %c1_255 = arith.constant 1 : index
    %c1_256 = arith.constant 1 : index
    %c0_257 = arith.constant 0 : index
    %c0_258 = arith.constant 0 : index
    %327 = vector.load %arg9[%c1_255, %c1_256, %c0_257, %c0_258] : memref<2x4x1x8xf32, #tpu.memory_space<vmem>>, vector<1x1x1x8xf32>
    %328 = vector.shape_cast %327 : vector<1x1x1x8xf32> to vector<1x8xf32>
    %329 = vector.broadcast %328 : vector<1x8xf32> to vector<8x8xf32>
    %330 = arith.addf %326, %329 : vector<8x8xf32>
    %cst_259 = arith.constant dense<0.000000e+00> : vector<8x8xf32>
    %331 = tpu.matmul %316, %323, %cst_259 {dimension_numbers = #tpu.dot_dimension_numbers<[1], [1], [0], [0], [0, 0, 1, 0], [], []>} : vector<8x8xf32>, vector<8x8xf32>, vector<8x8xf32> -> vector<8x8xf32>
    %cst_260 = arith.constant 0.353553385 : f32
    %332 = vector.broadcast %cst_260 : f32 to vector<8x8xf32>
    %333 = arith.mulf %331, %332 : vector<8x8xf32>
    %334 = vector.broadcast %1 : vector<1x8xf32> to vector<8x8xf32>
    %335 = arith.addf %333, %334 : vector<8x8xf32>
    %cst_261 = arith.constant dense<0xFF800000> : vector<8xf32>
    %336 = vector.multi_reduction <maximumf>, %335, %cst_261 [1] : vector<8x8xf32> to vector<8xf32>
    %337 = vector.shape_cast %336 : vector<8xf32> to vector<8x1xf32>
    %338 = vector.broadcast %337 : vector<8x1xf32> to vector<8x8xf32>
    %339 = arith.subf %335, %338 : vector<8x8xf32>
    %340 = math.exp %339 : vector<8x8xf32>
    %cst_262 = arith.constant dense<0.000000e+00> : vector<8xf32>
    %341 = vector.multi_reduction <add>, %340, %cst_262 [1] : vector<8x8xf32> to vector<8xf32>
    %342 = vector.shape_cast %341 : vector<8xf32> to vector<8x1xf32>
    %343 = tpu.reciprocal %342 {approx = true} : vector<8x1xf32> -> vector<8x1xf32>
    %344 = vector.broadcast %343 : vector<8x1xf32> to vector<8x8xf32>
    %345 = arith.mulf %340, %344 : vector<8x8xf32>
    %cst_263 = arith.constant dense<0.000000e+00> : vector<8x8xf32>
    %346 = tpu.matmul %345, %330, %cst_263 {dimension_numbers = #tpu.dot_dimension_numbers<[1], [0], [0], [1], [0, 0, 1, 1], [], []>} : vector<8x8xf32>, vector<8x8xf32>, vector<8x8xf32> -> vector<8x8xf32>
    %c1_264 = arith.constant 1 : index
    %c1_265 = arith.constant 1 : index
    %c0_266 = arith.constant 0 : index
    %c0_267 = arith.constant 0 : index
    %347 = vector.load %arg10[%c1_264, %c1_265, %c0_266, %c0_267] : memref<2x4x8x32xf32, #tpu.memory_space<vmem>>, vector<1x1x8x32xf32>
    %348 = vector.shape_cast %347 : vector<1x1x8x32xf32> to vector<8x32xf32>
    %cst_268 = arith.constant dense<0.000000e+00> : vector<8x32xf32>
    %349 = tpu.matmul %346, %348, %cst_268 {dimension_numbers = #tpu.dot_dimension_numbers<[1], [0], [0], [1], [0, 0, 1, 1], [], []>} : vector<8x8xf32>, vector<8x32xf32>, vector<8x32xf32> -> vector<8x32xf32>
    %350 = arith.addf %309, %349 : vector<8x32xf32>
    %c1_269 = arith.constant 1 : index
    %c2_270 = arith.constant 2 : index
    %c0_271 = arith.constant 0 : index
    %c0_272 = arith.constant 0 : index
    %351 = vector.load %arg4[%c1_269, %c2_270, %c0_271, %c0_272] : memref<2x4x32x8xf32, #tpu.memory_space<vmem>>, vector<1x1x32x8xf32>
    %352 = vector.shape_cast %351 : vector<1x1x32x8xf32> to vector<32x8xf32>
    %cst_273 = arith.constant dense<0.000000e+00> : vector<8x8xf32>
    %353 = tpu.matmul %267, %352, %cst_273 {dimension_numbers = #tpu.dot_dimension_numbers<[1], [0], [0], [1], [0, 0, 1, 1], [], []>} : vector<8x32xf32>, vector<32x8xf32>, vector<8x8xf32> -> vector<8x8xf32>
    %c1_274 = arith.constant 1 : index
    %c2_275 = arith.constant 2 : index
    %c0_276 = arith.constant 0 : index
    %c0_277 = arith.constant 0 : index
    %354 = vector.load %arg5[%c1_274, %c2_275, %c0_276, %c0_277] : memref<2x4x1x8xf32, #tpu.memory_space<vmem>>, vector<1x1x1x8xf32>
    %355 = vector.shape_cast %354 : vector<1x1x1x8xf32> to vector<1x8xf32>
    %356 = vector.broadcast %355 : vector<1x8xf32> to vector<8x8xf32>
    %357 = arith.addf %353, %356 : vector<8x8xf32>
    %c1_278 = arith.constant 1 : index
    %c2_279 = arith.constant 2 : index
    %c0_280 = arith.constant 0 : index
    %c0_281 = arith.constant 0 : index
    %358 = vector.load %arg6[%c1_278, %c2_279, %c0_280, %c0_281] : memref<2x4x32x8xf32, #tpu.memory_space<vmem>>, vector<1x1x32x8xf32>
    %359 = vector.shape_cast %358 : vector<1x1x32x8xf32> to vector<32x8xf32>
    %cst_282 = arith.constant dense<0.000000e+00> : vector<8x8xf32>
    %360 = tpu.matmul %267, %359, %cst_282 {dimension_numbers = #tpu.dot_dimension_numbers<[1], [0], [0], [1], [0, 0, 1, 1], [], []>} : vector<8x32xf32>, vector<32x8xf32>, vector<8x8xf32> -> vector<8x8xf32>
    %c1_283 = arith.constant 1 : index
    %c2_284 = arith.constant 2 : index
    %c0_285 = arith.constant 0 : index
    %c0_286 = arith.constant 0 : index
    %361 = vector.load %arg7[%c1_283, %c2_284, %c0_285, %c0_286] : memref<2x4x1x8xf32, #tpu.memory_space<vmem>>, vector<1x1x1x8xf32>
    %362 = vector.shape_cast %361 : vector<1x1x1x8xf32> to vector<1x8xf32>
    %363 = vector.broadcast %362 : vector<1x8xf32> to vector<8x8xf32>
    %364 = arith.addf %360, %363 : vector<8x8xf32>
    %c1_287 = arith.constant 1 : index
    %c2_288 = arith.constant 2 : index
    %c0_289 = arith.constant 0 : index
    %c0_290 = arith.constant 0 : index
    %365 = vector.load %arg8[%c1_287, %c2_288, %c0_289, %c0_290] : memref<2x4x32x8xf32, #tpu.memory_space<vmem>>, vector<1x1x32x8xf32>
    %366 = vector.shape_cast %365 : vector<1x1x32x8xf32> to vector<32x8xf32>
    %cst_291 = arith.constant dense<0.000000e+00> : vector<8x8xf32>
    %367 = tpu.matmul %267, %366, %cst_291 {dimension_numbers = #tpu.dot_dimension_numbers<[1], [0], [0], [1], [0, 0, 1, 1], [], []>} : vector<8x32xf32>, vector<32x8xf32>, vector<8x8xf32> -> vector<8x8xf32>
    %c1_292 = arith.constant 1 : index
    %c2_293 = arith.constant 2 : index
    %c0_294 = arith.constant 0 : index
    %c0_295 = arith.constant 0 : index
    %368 = vector.load %arg9[%c1_292, %c2_293, %c0_294, %c0_295] : memref<2x4x1x8xf32, #tpu.memory_space<vmem>>, vector<1x1x1x8xf32>
    %369 = vector.shape_cast %368 : vector<1x1x1x8xf32> to vector<1x8xf32>
    %370 = vector.broadcast %369 : vector<1x8xf32> to vector<8x8xf32>
    %371 = arith.addf %367, %370 : vector<8x8xf32>
    %cst_296 = arith.constant dense<0.000000e+00> : vector<8x8xf32>
    %372 = tpu.matmul %357, %364, %cst_296 {dimension_numbers = #tpu.dot_dimension_numbers<[1], [1], [0], [0], [0, 0, 1, 0], [], []>} : vector<8x8xf32>, vector<8x8xf32>, vector<8x8xf32> -> vector<8x8xf32>
    %cst_297 = arith.constant 0.353553385 : f32
    %373 = vector.broadcast %cst_297 : f32 to vector<8x8xf32>
    %374 = arith.mulf %372, %373 : vector<8x8xf32>
    %375 = vector.broadcast %1 : vector<1x8xf32> to vector<8x8xf32>
    %376 = arith.addf %374, %375 : vector<8x8xf32>
    %cst_298 = arith.constant dense<0xFF800000> : vector<8xf32>
    %377 = vector.multi_reduction <maximumf>, %376, %cst_298 [1] : vector<8x8xf32> to vector<8xf32>
    %378 = vector.shape_cast %377 : vector<8xf32> to vector<8x1xf32>
    %379 = vector.broadcast %378 : vector<8x1xf32> to vector<8x8xf32>
    %380 = arith.subf %376, %379 : vector<8x8xf32>
    %381 = math.exp %380 : vector<8x8xf32>
    %cst_299 = arith.constant dense<0.000000e+00> : vector<8xf32>
    %382 = vector.multi_reduction <add>, %381, %cst_299 [1] : vector<8x8xf32> to vector<8xf32>
    %383 = vector.shape_cast %382 : vector<8xf32> to vector<8x1xf32>
    %384 = tpu.reciprocal %383 {approx = true} : vector<8x1xf32> -> vector<8x1xf32>
    %385 = vector.broadcast %384 : vector<8x1xf32> to vector<8x8xf32>
    %386 = arith.mulf %381, %385 : vector<8x8xf32>
    %cst_300 = arith.constant dense<0.000000e+00> : vector<8x8xf32>
    %387 = tpu.matmul %386, %371, %cst_300 {dimension_numbers = #tpu.dot_dimension_numbers<[1], [0], [0], [1], [0, 0, 1, 1], [], []>} : vector<8x8xf32>, vector<8x8xf32>, vector<8x8xf32> -> vector<8x8xf32>
    %c1_301 = arith.constant 1 : index
    %c2_302 = arith.constant 2 : index
    %c0_303 = arith.constant 0 : index
    %c0_304 = arith.constant 0 : index
    %388 = vector.load %arg10[%c1_301, %c2_302, %c0_303, %c0_304] : memref<2x4x8x32xf32, #tpu.memory_space<vmem>>, vector<1x1x8x32xf32>
    %389 = vector.shape_cast %388 : vector<1x1x8x32xf32> to vector<8x32xf32>
    %cst_305 = arith.constant dense<0.000000e+00> : vector<8x32xf32>
    %390 = tpu.matmul %387, %389, %cst_305 {dimension_numbers = #tpu.dot_dimension_numbers<[1], [0], [0], [1], [0, 0, 1, 1], [], []>} : vector<8x8xf32>, vector<8x32xf32>, vector<8x32xf32> -> vector<8x32xf32>
    %391 = arith.addf %350, %390 : vector<8x32xf32>
    %c1_306 = arith.constant 1 : index
    %c3_307 = arith.constant 3 : index
    %c0_308 = arith.constant 0 : index
    %c0_309 = arith.constant 0 : index
    %392 = vector.load %arg4[%c1_306, %c3_307, %c0_308, %c0_309] : memref<2x4x32x8xf32, #tpu.memory_space<vmem>>, vector<1x1x32x8xf32>
    %393 = vector.shape_cast %392 : vector<1x1x32x8xf32> to vector<32x8xf32>
    %cst_310 = arith.constant dense<0.000000e+00> : vector<8x8xf32>
    %394 = tpu.matmul %267, %393, %cst_310 {dimension_numbers = #tpu.dot_dimension_numbers<[1], [0], [0], [1], [0, 0, 1, 1], [], []>} : vector<8x32xf32>, vector<32x8xf32>, vector<8x8xf32> -> vector<8x8xf32>
    %c1_311 = arith.constant 1 : index
    %c3_312 = arith.constant 3 : index
    %c0_313 = arith.constant 0 : index
    %c0_314 = arith.constant 0 : index
    %395 = vector.load %arg5[%c1_311, %c3_312, %c0_313, %c0_314] : memref<2x4x1x8xf32, #tpu.memory_space<vmem>>, vector<1x1x1x8xf32>
    %396 = vector.shape_cast %395 : vector<1x1x1x8xf32> to vector<1x8xf32>
    %397 = vector.broadcast %396 : vector<1x8xf32> to vector<8x8xf32>
    %398 = arith.addf %394, %397 : vector<8x8xf32>
    %c1_315 = arith.constant 1 : index
    %c3_316 = arith.constant 3 : index
    %c0_317 = arith.constant 0 : index
    %c0_318 = arith.constant 0 : index
    %399 = vector.load %arg6[%c1_315, %c3_316, %c0_317, %c0_318] : memref<2x4x32x8xf32, #tpu.memory_space<vmem>>, vector<1x1x32x8xf32>
    %400 = vector.shape_cast %399 : vector<1x1x32x8xf32> to vector<32x8xf32>
    %cst_319 = arith.constant dense<0.000000e+00> : vector<8x8xf32>
    %401 = tpu.matmul %267, %400, %cst_319 {dimension_numbers = #tpu.dot_dimension_numbers<[1], [0], [0], [1], [0, 0, 1, 1], [], []>} : vector<8x32xf32>, vector<32x8xf32>, vector<8x8xf32> -> vector<8x8xf32>
    %c1_320 = arith.constant 1 : index
    %c3_321 = arith.constant 3 : index
    %c0_322 = arith.constant 0 : index
    %c0_323 = arith.constant 0 : index
    %402 = vector.load %arg7[%c1_320, %c3_321, %c0_322, %c0_323] : memref<2x4x1x8xf32, #tpu.memory_space<vmem>>, vector<1x1x1x8xf32>
    %403 = vector.shape_cast %402 : vector<1x1x1x8xf32> to vector<1x8xf32>
    %404 = vector.broadcast %403 : vector<1x8xf32> to vector<8x8xf32>
    %405 = arith.addf %401, %404 : vector<8x8xf32>
    %c1_324 = arith.constant 1 : index
    %c3_325 = arith.constant 3 : index
    %c0_326 = arith.constant 0 : index
    %c0_327 = arith.constant 0 : index
    %406 = vector.load %arg8[%c1_324, %c3_325, %c0_326, %c0_327] : memref<2x4x32x8xf32, #tpu.memory_space<vmem>>, vector<1x1x32x8xf32>
    %407 = vector.shape_cast %406 : vector<1x1x32x8xf32> to vector<32x8xf32>
    %cst_328 = arith.constant dense<0.000000e+00> : vector<8x8xf32>
    %408 = tpu.matmul %267, %407, %cst_328 {dimension_numbers = #tpu.dot_dimension_numbers<[1], [0], [0], [1], [0, 0, 1, 1], [], []>} : vector<8x32xf32>, vector<32x8xf32>, vector<8x8xf32> -> vector<8x8xf32>
    %c1_329 = arith.constant 1 : index
    %c3_330 = arith.constant 3 : index
    %c0_331 = arith.constant 0 : index
    %c0_332 = arith.constant 0 : index
    %409 = vector.load %arg9[%c1_329, %c3_330, %c0_331, %c0_332] : memref<2x4x1x8xf32, #tpu.memory_space<vmem>>, vector<1x1x1x8xf32>
    %410 = vector.shape_cast %409 : vector<1x1x1x8xf32> to vector<1x8xf32>
    %411 = vector.broadcast %410 : vector<1x8xf32> to vector<8x8xf32>
    %412 = arith.addf %408, %411 : vector<8x8xf32>
    %cst_333 = arith.constant dense<0.000000e+00> : vector<8x8xf32>
    %413 = tpu.matmul %398, %405, %cst_333 {dimension_numbers = #tpu.dot_dimension_numbers<[1], [1], [0], [0], [0, 0, 1, 0], [], []>} : vector<8x8xf32>, vector<8x8xf32>, vector<8x8xf32> -> vector<8x8xf32>
    %cst_334 = arith.constant 0.353553385 : f32
    %414 = vector.broadcast %cst_334 : f32 to vector<8x8xf32>
    %415 = arith.mulf %413, %414 : vector<8x8xf32>
    %416 = vector.broadcast %1 : vector<1x8xf32> to vector<8x8xf32>
    %417 = arith.addf %415, %416 : vector<8x8xf32>
    %cst_335 = arith.constant dense<0xFF800000> : vector<8xf32>
    %418 = vector.multi_reduction <maximumf>, %417, %cst_335 [1] : vector<8x8xf32> to vector<8xf32>
    %419 = vector.shape_cast %418 : vector<8xf32> to vector<8x1xf32>
    %420 = vector.broadcast %419 : vector<8x1xf32> to vector<8x8xf32>
    %421 = arith.subf %417, %420 : vector<8x8xf32>
    %422 = math.exp %421 : vector<8x8xf32>
    %cst_336 = arith.constant dense<0.000000e+00> : vector<8xf32>
    %423 = vector.multi_reduction <add>, %422, %cst_336 [1] : vector<8x8xf32> to vector<8xf32>
    %424 = vector.shape_cast %423 : vector<8xf32> to vector<8x1xf32>
    %425 = tpu.reciprocal %424 {approx = true} : vector<8x1xf32> -> vector<8x1xf32>
    %426 = vector.broadcast %425 : vector<8x1xf32> to vector<8x8xf32>
    %427 = arith.mulf %422, %426 : vector<8x8xf32>
    %cst_337 = arith.constant dense<0.000000e+00> : vector<8x8xf32>
    %428 = tpu.matmul %427, %412, %cst_337 {dimension_numbers = #tpu.dot_dimension_numbers<[1], [0], [0], [1], [0, 0, 1, 1], [], []>} : vector<8x8xf32>, vector<8x8xf32>, vector<8x8xf32> -> vector<8x8xf32>
    %c1_338 = arith.constant 1 : index
    %c3_339 = arith.constant 3 : index
    %c0_340 = arith.constant 0 : index
    %c0_341 = arith.constant 0 : index
    %429 = vector.load %arg10[%c1_338, %c3_339, %c0_340, %c0_341] : memref<2x4x8x32xf32, #tpu.memory_space<vmem>>, vector<1x1x8x32xf32>
    %430 = vector.shape_cast %429 : vector<1x1x8x32xf32> to vector<8x32xf32>
    %cst_342 = arith.constant dense<0.000000e+00> : vector<8x32xf32>
    %431 = tpu.matmul %428, %430, %cst_342 {dimension_numbers = #tpu.dot_dimension_numbers<[1], [0], [0], [1], [0, 0, 1, 1], [], []>} : vector<8x8xf32>, vector<8x32xf32>, vector<8x32xf32> -> vector<8x32xf32>
    %432 = arith.addf %391, %431 : vector<8x32xf32>
    %c1_343 = arith.constant 1 : index
    %c0_344 = arith.constant 0 : index
    %c0_345 = arith.constant 0 : index
    %433 = vector.load %arg11[%c1_343, %c0_344, %c0_345] : memref<2x1x32xf32, #tpu.memory_space<vmem>>, vector<1x1x32xf32>
    %434 = vector.shape_cast %433 : vector<1x1x32xf32> to vector<1x32xf32>
    %435 = vector.broadcast %434 : vector<1x32xf32> to vector<8x32xf32>
    %436 = arith.addf %432, %435 : vector<8x32xf32>
    %437 = arith.addf %267, %436 : vector<8x32xf32>
    %438 = vector.extract_strided_slice %269 {offsets = [0, 0], sizes = [1, 32], strides = [1, 1]} : vector<4x32xf32> to vector<1x32xf32>
    %439 = vector.extract_strided_slice %269 {offsets = [1, 0], sizes = [1, 32], strides = [1, 1]} : vector<4x32xf32> to vector<1x32xf32>
    %cst_346 = arith.constant dense<0.000000e+00> : vector<8xf32>
    %440 = vector.multi_reduction <add>, %437, %cst_346 [1] : vector<8x32xf32> to vector<8xf32>
    %441 = vector.shape_cast %440 : vector<8xf32> to vector<8x1xf32>
    %cst_347 = arith.constant 3.200000e+01 : f32
    %442 = vector.broadcast %cst_347 : f32 to vector<8x1xf32>
    %443 = arith.divf %441, %442 : vector<8x1xf32>
    %444 = vector.broadcast %443 : vector<8x1xf32> to vector<8x32xf32>
    %445 = arith.subf %437, %444 : vector<8x32xf32>
    %446 = arith.mulf %445, %445 : vector<8x32xf32>
    %cst_348 = arith.constant dense<0.000000e+00> : vector<8xf32>
    %447 = vector.multi_reduction <add>, %446, %cst_348 [1] : vector<8x32xf32> to vector<8xf32>
    %448 = vector.shape_cast %447 : vector<8xf32> to vector<8x1xf32>
    %cst_349 = arith.constant 3.200000e+01 : f32
    %449 = vector.broadcast %cst_349 : f32 to vector<8x1xf32>
    %450 = arith.divf %448, %449 : vector<8x1xf32>
    %cst_350 = arith.constant 9.99999996E-13 : f32
    %451 = vector.broadcast %cst_350 : f32 to vector<8x1xf32>
    %452 = arith.addf %450, %451 : vector<8x1xf32>
    %453 = math.rsqrt %452 : vector<8x1xf32>
    %454 = vector.broadcast %453 : vector<8x1xf32> to vector<8x32xf32>
    %455 = arith.mulf %445, %454 : vector<8x32xf32>
    %456 = vector.broadcast %438 : vector<1x32xf32> to vector<8x32xf32>
    %457 = arith.mulf %455, %456 : vector<8x32xf32>
    %458 = vector.broadcast %439 : vector<1x32xf32> to vector<8x32xf32>
    %459 = arith.addf %457, %458 : vector<8x32xf32>
    %c1_351 = arith.constant 1 : index
    %c0_352 = arith.constant 0 : index
    %c0_353 = arith.constant 0 : index
    %460 = vector.load %arg13[%c1_351, %c0_352, %c0_353] : memref<2x32x64xf32, #tpu.memory_space<vmem>>, vector<1x32x64xf32>
    %461 = vector.shape_cast %460 : vector<1x32x64xf32> to vector<32x64xf32>
    %cst_354 = arith.constant dense<0.000000e+00> : vector<8x64xf32>
    %462 = tpu.matmul %459, %461, %cst_354 {dimension_numbers = #tpu.dot_dimension_numbers<[1], [0], [0], [1], [0, 0, 1, 1], [], []>} : vector<8x32xf32>, vector<32x64xf32>, vector<8x64xf32> -> vector<8x64xf32>
    %c1_355 = arith.constant 1 : index
    %c0_356 = arith.constant 0 : index
    %c0_357 = arith.constant 0 : index
    %463 = vector.load %arg14[%c1_355, %c0_356, %c0_357] : memref<2x1x64xf32, #tpu.memory_space<vmem>>, vector<1x1x64xf32>
    %464 = vector.shape_cast %463 : vector<1x1x64xf32> to vector<1x64xf32>
    %465 = vector.broadcast %464 : vector<1x64xf32> to vector<8x64xf32>
    %466 = arith.addf %462, %465 : vector<8x64xf32>
    %cst_358 = arith.constant 5.000000e-01 : f32
    %467 = vector.broadcast %cst_358 : f32 to vector<8x64xf32>
    %468 = arith.mulf %467, %466 : vector<8x64xf32>
    %cst_359 = arith.constant 4.471500e-02 : f32
    %469 = vector.broadcast %cst_359 : f32 to vector<8x64xf32>
    %470 = arith.mulf %469, %466 : vector<8x64xf32>
    %471 = arith.mulf %470, %466 : vector<8x64xf32>
    %472 = arith.mulf %471, %466 : vector<8x64xf32>
    %473 = arith.addf %466, %472 : vector<8x64xf32>
    %cst_360 = arith.constant 0.797884583 : f32
    %474 = vector.broadcast %cst_360 : f32 to vector<8x64xf32>
    %475 = arith.mulf %474, %473 : vector<8x64xf32>
    %476 = math.tanh %475 : vector<8x64xf32>
    %cst_361 = arith.constant 1.000000e+00 : f32
    %477 = vector.broadcast %cst_361 : f32 to vector<8x64xf32>
    %478 = arith.addf %477, %476 : vector<8x64xf32>
    %479 = arith.mulf %468, %478 : vector<8x64xf32>
    %c1_362 = arith.constant 1 : index
    %c0_363 = arith.constant 0 : index
    %c0_364 = arith.constant 0 : index
    %480 = vector.load %arg15[%c1_362, %c0_363, %c0_364] : memref<2x64x32xf32, #tpu.memory_space<vmem>>, vector<1x64x32xf32>
    %481 = vector.shape_cast %480 : vector<1x64x32xf32> to vector<64x32xf32>
    %cst_365 = arith.constant dense<0.000000e+00> : vector<8x32xf32>
    %482 = tpu.matmul %479, %481, %cst_365 {dimension_numbers = #tpu.dot_dimension_numbers<[1], [0], [0], [1], [0, 0, 1, 1], [], []>} : vector<8x64xf32>, vector<64x32xf32>, vector<8x32xf32> -> vector<8x32xf32>
    %c1_366 = arith.constant 1 : index
    %c0_367 = arith.constant 0 : index
    %c0_368 = arith.constant 0 : index
    %483 = vector.load %arg16[%c1_366, %c0_367, %c0_368] : memref<2x1x32xf32, #tpu.memory_space<vmem>>, vector<1x1x32xf32>
    %484 = vector.shape_cast %483 : vector<1x1x32xf32> to vector<1x32xf32>
    %485 = vector.broadcast %484 : vector<1x32xf32> to vector<8x32xf32>
    %486 = arith.addf %482, %485 : vector<8x32xf32>
    %487 = arith.addf %459, %486 : vector<8x32xf32>
    %488 = vector.extract_strided_slice %269 {offsets = [2, 0], sizes = [1, 32], strides = [1, 1]} : vector<4x32xf32> to vector<1x32xf32>
    %489 = vector.extract_strided_slice %269 {offsets = [3, 0], sizes = [1, 32], strides = [1, 1]} : vector<4x32xf32> to vector<1x32xf32>
    %cst_369 = arith.constant dense<0.000000e+00> : vector<8xf32>
    %490 = vector.multi_reduction <add>, %487, %cst_369 [1] : vector<8x32xf32> to vector<8xf32>
    %491 = vector.shape_cast %490 : vector<8xf32> to vector<8x1xf32>
    %cst_370 = arith.constant 3.200000e+01 : f32
    %492 = vector.broadcast %cst_370 : f32 to vector<8x1xf32>
    %493 = arith.divf %491, %492 : vector<8x1xf32>
    %494 = vector.broadcast %493 : vector<8x1xf32> to vector<8x32xf32>
    %495 = arith.subf %487, %494 : vector<8x32xf32>
    %496 = arith.mulf %495, %495 : vector<8x32xf32>
    %cst_371 = arith.constant dense<0.000000e+00> : vector<8xf32>
    %497 = vector.multi_reduction <add>, %496, %cst_371 [1] : vector<8x32xf32> to vector<8xf32>
    %498 = vector.shape_cast %497 : vector<8xf32> to vector<8x1xf32>
    %cst_372 = arith.constant 3.200000e+01 : f32
    %499 = vector.broadcast %cst_372 : f32 to vector<8x1xf32>
    %500 = arith.divf %498, %499 : vector<8x1xf32>
    %cst_373 = arith.constant 9.99999996E-13 : f32
    %501 = vector.broadcast %cst_373 : f32 to vector<8x1xf32>
    %502 = arith.addf %500, %501 : vector<8x1xf32>
    %503 = math.rsqrt %502 : vector<8x1xf32>
    %504 = vector.broadcast %503 : vector<8x1xf32> to vector<8x32xf32>
    %505 = arith.mulf %495, %504 : vector<8x32xf32>
    %506 = vector.broadcast %488 : vector<1x32xf32> to vector<8x32xf32>
    %507 = arith.mulf %505, %506 : vector<8x32xf32>
    %508 = vector.broadcast %489 : vector<1x32xf32> to vector<8x32xf32>
    %509 = arith.addf %507, %508 : vector<8x32xf32>
    %510 = vector.extract_strided_slice %509 {offsets = [0, 0], sizes = [1, 32], strides = [1, 1]} : vector<8x32xf32> to vector<1x32xf32>
    %c0_374 = arith.constant 0 : index
    %c0_375 = arith.constant 0 : index
    %511 = vector.load %arg17[%c0_374, %c0_375] : memref<32x32xf32, #tpu.memory_space<vmem>>, vector<32x32xf32>
    %cst_376 = arith.constant dense<0.000000e+00> : vector<1x32xf32>
    %512 = tpu.matmul %510, %511, %cst_376 {dimension_numbers = #tpu.dot_dimension_numbers<[1], [0], [0], [1], [0, 0, 1, 1], [], []>} : vector<1x32xf32>, vector<32x32xf32>, vector<1x32xf32> -> vector<1x32xf32>
    %c0_377 = arith.constant 0 : index
    %c0_378 = arith.constant 0 : index
    %513 = vector.load %arg18[%c0_377, %c0_378] : memref<1x32xf32, #tpu.memory_space<vmem>>, vector<1x32xf32>
    %514 = arith.addf %512, %513 : vector<1x32xf32>
    %515 = math.tanh %514 : vector<1x32xf32>
    %c0_379 = arith.constant 0 : index
    %c0_380 = arith.constant 0 : index
    %516 = vector.load %arg19[%c0_379, %c0_380] : memref<32x32xf32, #tpu.memory_space<vmem>>, vector<32x32xf32>
    %cst_381 = arith.constant dense<0.000000e+00> : vector<8x32xf32>
    %517 = tpu.matmul %509, %516, %cst_381 {dimension_numbers = #tpu.dot_dimension_numbers<[1], [0], [0], [1], [0, 0, 1, 1], [], []>} : vector<8x32xf32>, vector<32x32xf32>, vector<8x32xf32> -> vector<8x32xf32>
    %c0_382 = arith.constant 0 : index
    %c0_383 = arith.constant 0 : index
    %518 = vector.load %arg20[%c0_382, %c0_383] : memref<1x32xf32, #tpu.memory_space<vmem>>, vector<1x32xf32>
    %519 = vector.broadcast %518 : vector<1x32xf32> to vector<8x32xf32>
    %520 = arith.addf %517, %519 : vector<8x32xf32>
    %cst_384 = arith.constant 0.000000e+00 : f32
    %521 = vector.broadcast %cst_384 : f32 to vector<8x32xf32>
    %522 = arith.maximumf %520, %521 : vector<8x32xf32>
    %c0_385 = arith.constant 0 : index
    %c0_386 = arith.constant 0 : index
    %523 = vector.load %arg21[%c0_385, %c0_386] : memref<32x32xf32, #tpu.memory_space<vmem>>, vector<32x32xf32>
    %cst_387 = arith.constant dense<0.000000e+00> : vector<8x32xf32>
    %524 = tpu.matmul %522, %523, %cst_387 {dimension_numbers = #tpu.dot_dimension_numbers<[1], [0], [0], [1], [0, 0, 1, 1], [], []>} : vector<8x32xf32>, vector<32x32xf32>, vector<8x32xf32> -> vector<8x32xf32>
    %c0_388 = arith.constant 0 : index
    %c0_389 = arith.constant 0 : index
    %525 = vector.load %arg22[%c0_388, %c0_389] : memref<1x32xf32, #tpu.memory_space<vmem>>, vector<1x32xf32>
    %526 = vector.broadcast %525 : vector<1x32xf32> to vector<8x32xf32>
    %527 = arith.addf %524, %526 : vector<8x32xf32>
    %528 = arith.mulf %527, %527 : vector<8x32xf32>
    %cst_390 = arith.constant dense<0.000000e+00> : vector<8xf32>
    %529 = vector.multi_reduction <add>, %528, %cst_390 [1] : vector<8x32xf32> to vector<8xf32>
    %530 = vector.shape_cast %529 : vector<8xf32> to vector<8x1xf32>
    %cst_391 = arith.constant dense<0.000000e+00> : vector<1xf32>
    %531 = vector.multi_reduction <add>, %530, %cst_391 [0] : vector<8x1xf32> to vector<1xf32>
    %532 = vector.shape_cast %531 : vector<1xf32> to vector<1x1xf32>
    %cst_392 = arith.constant 1.000000e-24 : f32
    %533 = vector.broadcast %cst_392 : f32 to vector<1x1xf32>
    %534 = arith.maximumf %532, %533 : vector<1x1xf32>
    %535 = math.rsqrt %534 : vector<1x1xf32>
    %536 = vector.broadcast %535 : vector<1x1xf32> to vector<8x32xf32>
    %537 = arith.mulf %527, %536 : vector<8x32xf32>
    %c0_393 = arith.constant 0 : index
    %c0_394 = arith.constant 0 : index
    %c0_395 = arith.constant 0 : index
    %538 = vector.load %arg23[%c0_393, %c0_394, %c0_395] : memref<1x8x32xf32, #tpu.memory_space<vmem>>, vector<1x8x32xf32>
    %539 = vector.shape_cast %538 : vector<1x8x32xf32> to vector<8x32xf32>
    %540 = vector.shape_cast %537 : vector<8x32xf32> to vector<1x8x32xf32>
    tpu.vector_store %arg23[%c0_393, %c0_394, %c0_395], %540 {strides = array<i32>} : memref<1x8x32xf32, #tpu.memory_space<vmem>>, vector<1x8x32xf32>,
    %c0_396 = arith.constant 0 : index
    %c0_397 = arith.constant 0 : index
    %541 = vector.load %arg19[%c0_396, %c0_397] : memref<32x32xf32, #tpu.memory_space<vmem>>, vector<32x32xf32>
    %cst_398 = arith.constant dense<0.000000e+00> : vector<1x32xf32>
    %542 = tpu.matmul %515, %541, %cst_398 {dimension_numbers = #tpu.dot_dimension_numbers<[1], [0], [0], [1], [0, 0, 1, 1], [], []>} : vector<1x32xf32>, vector<32x32xf32>, vector<1x32xf32> -> vector<1x32xf32>
    %c0_399 = arith.constant 0 : index
    %c0_400 = arith.constant 0 : index
    %543 = vector.load %arg20[%c0_399, %c0_400] : memref<1x32xf32, #tpu.memory_space<vmem>>, vector<1x32xf32>
    %544 = arith.addf %542, %543 : vector<1x32xf32>
    %cst_401 = arith.constant 0.000000e+00 : f32
    %545 = vector.broadcast %cst_401 : f32 to vector<1x32xf32>
    %546 = arith.maximumf %544, %545 : vector<1x32xf32>
    %c0_402 = arith.constant 0 : index
    %c0_403 = arith.constant 0 : index
    %547 = vector.load %arg21[%c0_402, %c0_403] : memref<32x32xf32, #tpu.memory_space<vmem>>, vector<32x32xf32>
    %cst_404 = arith.constant dense<0.000000e+00> : vector<1x32xf32>
    %548 = tpu.matmul %546, %547, %cst_404 {dimension_numbers = #tpu.dot_dimension_numbers<[1], [0], [0], [1], [0, 0, 1, 1], [], []>} : vector<1x32xf32>, vector<32x32xf32>, vector<1x32xf32> -> vector<1x32xf32>
    %c0_405 = arith.constant 0 : index
    %c0_406 = arith.constant 0 : index
    %549 = vector.load %arg22[%c0_405, %c0_406] : memref<1x32xf32, #tpu.memory_space<vmem>>, vector<1x32xf32>
    %550 = arith.addf %548, %549 : vector<1x32xf32>
    %551 = arith.mulf %550, %550 : vector<1x32xf32>
    %cst_407 = arith.constant dense<0.000000e+00> : vector<1xf32>
    %552 = vector.multi_reduction <add>, %551, %cst_407 [1] : vector<1x32xf32> to vector<1xf32>
    %553 = vector.shape_cast %552 : vector<1xf32> to vector<1x1xf32>
    %cst_408 = arith.constant 1.000000e-24 : f32
    %554 = vector.broadcast %cst_408 : f32 to vector<1x1xf32>
    %555 = arith.maximumf %553, %554 : vector<1x1xf32>
    %556 = math.rsqrt %555 : vector<1x1xf32>
    %557 = vector.broadcast %556 : vector<1x1xf32> to vector<1x32xf32>
    %558 = arith.mulf %550, %557 : vector<1x32xf32>
    %c0_409 = arith.constant 0 : index
    %c0_410 = arith.constant 0 : index
    %c0_411 = arith.constant 0 : index
    %559 = vector.load %arg24[%c0_409, %c0_410, %c0_411] : memref<1x1x32xf32, #tpu.memory_space<vmem>>, vector<1x1x32xf32>
    %560 = vector.shape_cast %559 : vector<1x1x32xf32> to vector<1x32xf32>
    %561 = vector.shape_cast %558 : vector<1x32xf32> to vector<1x1x32xf32>
    tpu.vector_store %arg24[%c0_409, %c0_410, %c0_411], %561 {strides = array<i32>} : memref<1x1x32xf32, #tpu.memory_space<vmem>>, vector<1x1x32xf32>,
    return
  }
  func.func @transform_0(%arg0: i32) -> (i32, i32, i32) {
    %c0_i32 = arith.constant 0 : i32
    %c0_i32_0 = arith.constant 0 : i32
    %c0_i32_1 = arith.constant 0 : i32
    return %arg0, %c0_i32, %c0_i32_0 : i32, i32, i32
  }
  func.func @transform_1(%arg0: i32) -> (i32, i32, i32) {
    %c0_i32 = arith.constant 0 : i32
    %c0_i32_0 = arith.constant 0 : i32
    %c0_i32_1 = arith.constant 0 : i32
    return %arg0, %c0_i32, %c0_i32_0 : i32, i32, i32
  }
  func.func @transform_2(%arg0: i32) -> (i32, i32) {
    %c0_i32 = arith.constant 0 : i32
    %c0_i32_0 = arith.constant 0 : i32
    %c0_i32_1 = arith.constant 0 : i32
    return %c0_i32, %c0_i32_0 : i32, i32
  }
  func.func @transform_3(%arg0: i32) -> (i32, i32, i32, i32) {
    %c0_i32 = arith.constant 0 : i32
    %c0_i32_0 = arith.constant 0 : i32
    %c0_i32_1 = arith.constant 0 : i32
    %c0_i32_2 = arith.constant 0 : i32
    %c0_i32_3 = arith.constant 0 : i32
    return %c0_i32, %c0_i32_0, %c0_i32_1, %c0_i32_2 : i32, i32, i32, i32
  }
  func.func @transform_4(%arg0: i32) -> (i32, i32, i32, i32) {
    %c0_i32 = arith.constant 0 : i32
    %c0_i32_0 = arith.constant 0 : i32
    %c0_i32_1 = arith.constant 0 : i32
    %c0_i32_2 = arith.constant 0 : i32
    %c0_i32_3 = arith.constant 0 : i32
    return %c0_i32, %c0_i32_0, %c0_i32_1, %c0_i32_2 : i32, i32, i32, i32
  }
  func.func @transform_5(%arg0: i32) -> (i32, i32, i32, i32) {
    %c0_i32 = arith.constant 0 : i32
    %c0_i32_0 = arith.constant 0 : i32
    %c0_i32_1 = arith.constant 0 : i32
    %c0_i32_2 = arith.constant 0 : i32
    %c0_i32_3 = arith.constant 0 : i32
    return %c0_i32, %c0_i32_0, %c0_i32_1, %c0_i32_2 : i32, i32, i32, i32
  }
  func.func @transform_6(%arg0: i32) -> (i32, i32, i32, i32) {
    %c0_i32 = arith.constant 0 : i32
    %c0_i32_0 = arith.constant 0 : i32
    %c0_i32_1 = arith.constant 0 : i32
    %c0_i32_2 = arith.constant 0 : i32
    %c0_i32_3 = arith.constant 0 : i32
    return %c0_i32, %c0_i32_0, %c0_i32_1, %c0_i32_2 : i32, i32, i32, i32
  }
  func.func @transform_7(%arg0: i32) -> (i32, i32, i32, i32) {
    %c0_i32 = arith.constant 0 : i32
    %c0_i32_0 = arith.constant 0 : i32
    %c0_i32_1 = arith.constant 0 : i32
    %c0_i32_2 = arith.constant 0 : i32
    %c0_i32_3 = arith.constant 0 : i32
    return %c0_i32, %c0_i32_0, %c0_i32_1, %c0_i32_2 : i32, i32, i32, i32
  }
  func.func @transform_8(%arg0: i32) -> (i32, i32, i32, i32) {
    %c0_i32 = arith.constant 0 : i32
    %c0_i32_0 = arith.constant 0 : i32
    %c0_i32_1 = arith.constant 0 : i32
    %c0_i32_2 = arith.constant 0 : i32
    %c0_i32_3 = arith.constant 0 : i32
    return %c0_i32, %c0_i32_0, %c0_i32_1, %c0_i32_2 : i32, i32, i32, i32
  }
  func.func @transform_9(%arg0: i32) -> (i32, i32, i32, i32) {
    %c0_i32 = arith.constant 0 : i32
    %c0_i32_0 = arith.constant 0 : i32
    %c0_i32_1 = arith.constant 0 : i32
    %c0_i32_2 = arith.constant 0 : i32
    %c0_i32_3 = arith.constant 0 : i32
    return %c0_i32, %c0_i32_0, %c0_i32_1, %c0_i32_2 : i32, i32, i32, i32
  }
  func.func @transform_10(%arg0: i32) -> (i32, i32, i32) {
    %c0_i32 = arith.constant 0 : i32
    %c0_i32_0 = arith.constant 0 : i32
    %c0_i32_1 = arith.constant 0 : i32
    %c0_i32_2 = arith.constant 0 : i32
    return %c0_i32, %c0_i32_0, %c0_i32_1 : i32, i32, i32
  }
  func.func @transform_11(%arg0: i32) -> (i32, i32, i32) {
    %c0_i32 = arith.constant 0 : i32
    %c0_i32_0 = arith.constant 0 : i32
    %c0_i32_1 = arith.constant 0 : i32
    %c0_i32_2 = arith.constant 0 : i32
    return %c0_i32, %c0_i32_0, %c0_i32_1 : i32, i32, i32
  }
  func.func @transform_12(%arg0: i32) -> (i32, i32, i32) {
    %c0_i32 = arith.constant 0 : i32
    %c0_i32_0 = arith.constant 0 : i32
    %c0_i32_1 = arith.constant 0 : i32
    %c0_i32_2 = arith.constant 0 : i32
    return %c0_i32, %c0_i32_0, %c0_i32_1 : i32, i32, i32
  }
  func.func @transform_13(%arg0: i32) -> (i32, i32, i32) {
    %c0_i32 = arith.constant 0 : i32
    %c0_i32_0 = arith.constant 0 : i32
    %c0_i32_1 = arith.constant 0 : i32
    %c0_i32_2 = arith.constant 0 : i32
    return %c0_i32, %c0_i32_0, %c0_i32_1 : i32, i32, i32
  }
  func.func @transform_14(%arg0: i32) -> (i32, i32, i32) {
    %c0_i32 = arith.constant 0 : i32
    %c0_i32_0 = arith.constant 0 : i32
    %c0_i32_1 = arith.constant 0 : i32
    %c0_i32_2 = arith.constant 0 : i32
    return %c0_i32, %c0_i32_0, %c0_i32_1 : i32, i32, i32
  }
  func.func @transform_15(%arg0: i32) -> (i32, i32, i32) {
    %c0_i32 = arith.constant 0 : i32
    %c0_i32_0 = arith.constant 0 : i32
    %c0_i32_1 = arith.constant 0 : i32
    %c0_i32_2 = arith.constant 0 : i32
    return %c0_i32, %c0_i32_0, %c0_i32_1 : i32, i32, i32
  }
  func.func @transform_16(%arg0: i32) -> (i32, i32) {
    %c0_i32 = arith.constant 0 : i32
    %c0_i32_0 = arith.constant 0 : i32
    %c0_i32_1 = arith.constant 0 : i32
    return %c0_i32, %c0_i32_0 : i32, i32
  }
  func.func @transform_17(%arg0: i32) -> (i32, i32) {
    %c0_i32 = arith.constant 0 : i32
    %c0_i32_0 = arith.constant 0 : i32
    %c0_i32_1 = arith.constant 0 : i32
    return %c0_i32, %c0_i32_0 : i32, i32
  }
  func.func @transform_18(%arg0: i32) -> (i32, i32) {
    %c0_i32 = arith.constant 0 : i32
    %c0_i32_0 = arith.constant 0 : i32
    %c0_i32_1 = arith.constant 0 : i32
    return %c0_i32, %c0_i32_0 : i32, i32
  }
  func.func @transform_19(%arg0: i32) -> (i32, i32) {
    %c0_i32 = arith.constant 0 : i32
    %c0_i32_0 = arith.constant 0 : i32
    %c0_i32_1 = arith.constant 0 : i32
    return %c0_i32, %c0_i32_0 : i32, i32
  }
  func.func @transform_20(%arg0: i32) -> (i32, i32) {
    %c0_i32 = arith.constant 0 : i32
    %c0_i32_0 = arith.constant 0 : i32
    %c0_i32_1 = arith.constant 0 : i32
    return %c0_i32, %c0_i32_0 : i32, i32
  }
  func.func @transform_21(%arg0: i32) -> (i32, i32) {
    %c0_i32 = arith.constant 0 : i32
    %c0_i32_0 = arith.constant 0 : i32
    %c0_i32_1 = arith.constant 0 : i32
    return %c0_i32, %c0_i32_0 : i32, i32
  }
  func.func @transform_22(%arg0: i32) -> (i32, i32, i32) {
    %c0_i32 = arith.constant 0 : i32
    %c0_i32_0 = arith.constant 0 : i32
    %c0_i32_1 = arith.constant 0 : i32
    return %arg0, %c0_i32, %c0_i32_0 : i32, i32, i32
  }
  func.func @transform_23(%arg0: i32) -> (i32, i32, i32) {
    %c0_i32 = arith.constant 0 : i32
    %c0_i32_0 = arith.constant 0 : i32
    %c0_i32_1 = arith.constant 0 : i32
    return %arg0, %c0_i32, %c0_i32_0 : i32, i32, i32
  }
}

</mosaic_0001>

<llo_original>
// kernel: pretrain_bert_moco_forward.1
$region0: #{pretrain_bert_moco_forward.1}
  #allocation0 [shape = 'u32[]', space=smem, size = 0x4, offset = 0x4, fixed_abs, tag = 'smem constant byte address 0x4 - core index']
  #allocation1 [shape = 'u32[144,128]{1,0:T(1,128)}', space=vmem, size = 0x12000, scoped, tag = 'internal scratch']
  %s0 = inlined_call_operand.vmem [shape: f32[2,8,32], index: 0, kind: input, shape index: {}]
  %s1 = inlined_call_operand.vmem [shape: f32[2,1,8], index: 1, kind: input, shape index: {}]
  %s2 = inlined_call_operand.vmem [shape: f32[2,32], index: 2, kind: input, shape index: {}]
  %s3 = inlined_call_operand.vmem [shape: f32[2,4,32,8], index: 3, kind: input, shape index: {}]
  %s4 = inlined_call_operand.vmem [shape: f32[2,4,1,8], index: 4, kind: input, shape index: {}]
  %s5 = inlined_call_operand.vmem [shape: f32[2,4,32,8], index: 5, kind: input, shape index: {}]
  %s6 = inlined_call_operand.vmem [shape: f32[2,4,1,8], index: 6, kind: input, shape index: {}]
  %s7 = inlined_call_operand.vmem [shape: f32[2,4,32,8], index: 7, kind: input, shape index: {}]
  %s8 = inlined_call_operand.vmem [shape: f32[2,4,1,8], index: 8, kind: input, shape index: {}]
  %s9 = inlined_call_operand.vmem [shape: f32[2,4,8,32], index: 9, kind: input, shape index: {}]
  %s10 = inlined_call_operand.vmem [shape: f32[2,1,32], index: 10, kind: input, shape index: {}]
  %s11 = inlined_call_operand.vmem [shape: f32[2,4,32], index: 11, kind: input, shape index: {}]
  %s12 = inlined_call_operand.vmem [shape: f32[2,32,64], index: 12, kind: input, shape index: {}]
  %s13 = inlined_call_operand.vmem [shape: f32[2,1,64], index: 13, kind: input, shape index: {}]
  %s14 = inlined_call_operand.vmem [shape: f32[2,64,32], index: 14, kind: input, shape index: {}]
  %s15 = inlined_call_operand.vmem [shape: f32[2,1,32], index: 15, kind: input, shape index: {}]
  %s16 = inlined_call_operand.vmem [shape: f32[32,32], index: 16, kind: input, shape index: {}]
  %s17 = inlined_call_operand.vmem [shape: f32[1,32], index: 17, kind: input, shape index: {}]
  %s18 = inlined_call_operand.vmem [shape: f32[32,32], index: 18, kind: input, shape index: {}]
  %s19 = inlined_call_operand.vmem [shape: f32[1,32], index: 19, kind: input, shape index: {}]
  %s20 = inlined_call_operand.vmem [shape: f32[32,32], index: 20, kind: input, shape index: {}]
  %s21 = inlined_call_operand.vmem [shape: f32[1,32], index: 21, kind: input, shape index: {}]
  %s22 = inlined_call_operand.vmem [shape: f32[2,8,32], index: 22, kind: output, shape index: {0}]
  %s23 = inlined_call_operand.hbm [shape: f32[2,1,32], index: 23, kind: output, shape index: {1}]
  %24 = xla_tuple %s22, %s23
  %s25 = sld [smem:[#allocation0]]
  $region129: #{pretrain_bert_moco_forward.1} parent=0
    _
  %s27 = ssub.s32 1, %s25
  %s28 = scalar_select 0, %s27, %s25
  $region1: #{pretrain_bert_moco_forward.1} parent=0
    #allocation2 [shape = 'u8[1024]{0}', space=vmem, size = 0x400, scoped, tag = 'output window, operand 1']
    #allocation3 [shape = 's32[2]{0}', space=sflag, size = 0x8, scoped, tag = 'scoped memory for pretrain_bert_moco_forward.1']
    %29 = vsyncpa [#allocation3], 0
    %s30 = scalar_lea.sflag [#allocation3], 1
    %31 = vsyncpa %s30, 0
    loop: start=0, step=1, limit=4
    $region2: #{pretrain_bert_moco_forward.1} parent=1 // loop_pre_header
      _
    $region3: #{pretrain_bert_moco_forward.1} parent=1 // loop_header
      %s33 = sphi 0, %s37
      %p34 = scmp.ge.s32.totalorder %s33, 4
      %s43 = sphi 0, %s45
      %s46 = sphi 0, %s43
      %s47 = sphi 0, %s46
      %s63 = sphi 0, %s47
      %s69 = sphi 0, %s71
      %s72 = sphi 0, %s69
      %s73 = sphi 0, %s72
      %s89 = sphi 0, %s73
      %s93 = sphi 0, %s93
      %s95 = sphi 0, %s93
      %s96 = sphi 0, %s95
      %s110 = sphi 0, %s96
      %s114 = sphi 0, %s114
      %s116 = sphi 0, %s114
      %s117 = sphi 0, %s116
      %s131 = sphi 0, %s117
      %s135 = sphi 0, %s135
      %s137 = sphi 0, %s135
      %s138 = sphi 0, %s137
      %s152 = sphi 0, %s138
      %s156 = sphi 0, %s156
      %s158 = sphi 0, %s156
      %s159 = sphi 0, %s158
      %s173 = sphi 0, %s159
      %s177 = sphi 0, %s177
      %s179 = sphi 0, %s177
      %s180 = sphi 0, %s179
      %s194 = sphi 0, %s180
      %s198 = sphi 0, %s198
      %s200 = sphi 0, %s198
      %s201 = sphi 0, %s200
      %s215 = sphi 0, %s201
      %s219 = sphi 0, %s219
      %s221 = sphi 0, %s219
      %s222 = sphi 0, %s221
      %s236 = sphi 0, %s222
      %s240 = sphi 0, %s240
      %s242 = sphi 0, %s240
      %s243 = sphi 0, %s242
      %s257 = sphi 0, %s243
      %s261 = sphi 0, %s261
      %s263 = sphi 0, %s261
      %s264 = sphi 0, %s263
      %s278 = sphi 0, %s264
      %s282 = sphi 0, %s282
      %s284 = sphi 0, %s282
      %s285 = sphi 0, %s284
      %s299 = sphi 0, %s285
      %s303 = sphi 0, %s303
      %s305 = sphi 0, %s303
      %s306 = sphi 0, %s305
      %s320 = sphi 0, %s306
      %s324 = sphi 0, %s324
      %s326 = sphi 0, %s324
      %s327 = sphi 0, %s326
      %s341 = sphi 0, %s327
      %s345 = sphi 0, %s345
      %s347 = sphi 0, %s345
      %s348 = sphi 0, %s347
      %s362 = sphi 0, %s348
      %s366 = sphi 0, %s366
      %s368 = sphi 0, %s366
      %s369 = sphi 0, %s368
      %s383 = sphi 0, %s369
      %s387 = sphi 0, %s387
      %s389 = sphi 0, %s387
      %s390 = sphi 0, %s389
      %s404 = sphi 0, %s390
      %s408 = sphi 0, %s408
      %s410 = sphi 0, %s408
      %s411 = sphi 0, %s410
      %s425 = sphi 0, %s411
      %s429 = sphi 0, %s429
      %s431 = sphi 0, %s429
      %s432 = sphi 0, %s431
      %s446 = sphi 0, %s432
      %s450 = sphi 0, %s450
      %s452 = sphi 0, %s450
      %s453 = sphi 0, %s452
      %s467 = sphi 0, %s453
      %s471 = sphi 0, %s471
      %s473 = sphi 0, %s471
      %s474 = sphi 0, %s473
      %s488 = sphi 0, %s474
      %s492 = sphi 0, %s492
      %s494 = sphi 0, %s492
      %s495 = sphi 0, %s494
      %s509 = sphi 0, %s495
      %s515 = sphi 0, %s517
      %s518 = sphi 0, %s515
      %s519 = sphi 0, %s518
      %s535 = sphi 0, %s519
      %s541 = sphi 0, %s543
      %s544 = sphi 0, %s541
      %s545 = sphi 0, %s544
      %s561 = sphi 0, %s545
    $region4: #{pretrain_bert_moco_forward.1} parent=1 // loop_header_branch
      %36 = sbr.rel (%p34) target = $region8
    $region5: #{pretrain_bert_moco_forward.1} parent=1 // loop_body
      %s38 = ssub.s32 %s33, 1
      %s39 = ssub.s32 %s33, 2
      %s40 = sadd.s32 %s33, 1
      %s41 = ssub.s32 %s33, %s40
      %p42 = scmp.eq.s32.totalorder %s41, 0
      %s44 = sadd.s32 %s43, 1
      %s45 = scalar_select %p42, %s43, %s44
      %p48 = pneg %p42
      %p49 = scmp.eq.s32.totalorder %s33, 1
      %p50 = por %p48, %p49
      %p51 = scmp.ne.s32.totalorder %s43, %s46
      %p52 = scmp.eq.s32.totalorder %s33, 0
      %p53 = por %p51, %p52
      %p54 = scmp.ne.s32.totalorder %s43, %s46
      %p55 = scmp.eq.s32.totalorder %s38, 1
      %p56 = por %p54, %p55
      %p57 = scmp.ne.s32.totalorder %s46, %s47
      %p58 = scmp.eq.s32.totalorder %s38, 0
      %p59 = por %p57, %p58
      %p60 = scmp.ne.s32.totalorder %s46, %s47
      %p61 = scmp.eq.s32.totalorder %s39, 1
      %p62 = por %p60, %p61
      %p64 = scmp.ne.s32.totalorder %s47, %s63
      %p65 = scmp.eq.s32.totalorder %s39, 0
      %p66 = por %p64, %p65
      %s67 = ssub.s32 %s33, %s40
      %p68 = scmp.eq.s32.totalorder %s67, 0
      %s70 = sadd.s32 %s69, 1
      %s71 = scalar_select %p68, %s69, %s70
      %p74 = pneg %p68
      %p75 = scmp.eq.s32.totalorder %s33, 1
      %p76 = por %p74, %p75
      %p77 = scmp.ne.s32.totalorder %s69, %s72
      %p78 = scmp.eq.s32.totalorder %s33, 0
      %p79 = por %p77, %p78
      %p80 = scmp.ne.s32.totalorder %s69, %s72
      %p81 = scmp.eq.s32.totalorder %s38, 1
      %p82 = por %p80, %p81
      %p83 = scmp.ne.s32.totalorder %s72, %s73
      %p84 = scmp.eq.s32.totalorder %s38, 0
      %p85 = por %p83, %p84
      %p86 = scmp.ne.s32.totalorder %s72, %s73
      %p87 = scmp.eq.s32.totalorder %s39, 1
      %p88 = por %p86, %p87
      %p90 = scmp.ne.s32.totalorder %s73, %s89
      %p91 = scmp.eq.s32.totalorder %s39, 0
      %p92 = por %p90, %p91
      %s94 = sadd.s32 %s93, 1
      %p97 = scmp.eq.s32.totalorder %s33, 1
      %p98 = scmp.ne.s32.totalorder %s93, %s95
      %p99 = scmp.eq.s32.totalorder %s33, 0
      %p100 = por %p98, %p99
      %p101 = scmp.ne.s32.totalorder %s93, %s95
      %p102 = scmp.eq.s32.totalorder %s38, 1
      %p103 = por %p101, %p102
      %p104 = scmp.ne.s32.totalorder %s95, %s96
      %p105 = scmp.eq.s32.totalorder %s38, 0
      %p106 = por %p104, %p105
      %p107 = scmp.ne.s32.totalorder %s95, %s96
      %p108 = scmp.eq.s32.totalorder %s39, 1
      %p109 = por %p107, %p108
      %p111 = scmp.ne.s32.totalorder %s96, %s110
      %p112 = scmp.eq.s32.totalorder %s39, 0
      %p113 = por %p111, %p112
      %s115 = sadd.s32 %s114, 1
      %p118 = scmp.eq.s32.totalorder %s33, 1
      %p119 = scmp.ne.s32.totalorder %s114, %s116
      %p120 = scmp.eq.s32.totalorder %s33, 0
      %p121 = por %p119, %p120
      %p122 = scmp.ne.s32.totalorder %s114, %s116
      %p123 = scmp.eq.s32.totalorder %s38, 1
      %p124 = por %p122, %p123
      %p125 = scmp.ne.s32.totalorder %s116, %s117
      %p126 = scmp.eq.s32.totalorder %s38, 0
      %p127 = por %p125, %p126
      %p128 = scmp.ne.s32.totalorder %s116, %s117
      %p129 = scmp.eq.s32.totalorder %s39, 1
      %p130 = por %p128, %p129
      %p132 = scmp.ne.s32.totalorder %s117, %s131
      %p133 = scmp.eq.s32.totalorder %s39, 0
      %p134 = por %p132, %p133
      %s136 = sadd.s32 %s135, 1
      %p139 = scmp.eq.s32.totalorder %s33, 1
      %p140 = scmp.ne.s32.totalorder %s135, %s137
      %p141 = scmp.eq.s32.totalorder %s33, 0
      %p142 = por %p140, %p141
      %p143 = scmp.ne.s32.totalorder %s135, %s137
      %p144 = scmp.eq.s32.totalorder %s38, 1
      %p145 = por %p143, %p144
      %p146 = scmp.ne.s32.totalorder %s137, %s138
      %p147 = scmp.eq.s32.totalorder %s38, 0
      %p148 = por %p146, %p147
      %p149 = scmp.ne.s32.totalorder %s137, %s138
      %p150 = scmp.eq.s32.totalorder %s39, 1
      %p151 = por %p149, %p150
      %p153 = scmp.ne.s32.totalorder %s138, %s152
      %p154 = scmp.eq.s32.totalorder %s39, 0
      %p155 = por %p153, %p154
      %s157 = sadd.s32 %s156, 1
      %p160 = scmp.eq.s32.totalorder %s33, 1
      %p161 = scmp.ne.s32.totalorder %s156, %s158
      %p162 = scmp.eq.s32.totalorder %s33, 0
      %p163 = por %p161, %p162
      %p164 = scmp.ne.s32.totalorder %s156, %s158
      %p165 = scmp.eq.s32.totalorder %s38, 1
      %p166 = por %p164, %p165
      %p167 = scmp.ne.s32.totalorder %s158, %s159
      %p168 = scmp.eq.s32.totalorder %s38, 0
      %p169 = por %p167, %p168
      %p170 = scmp.ne.s32.totalorder %s158, %s159
      %p171 = scmp.eq.s32.totalorder %s39, 1
      %p172 = por %p170, %p171
      %p174 = scmp.ne.s32.totalorder %s159, %s173
      %p175 = scmp.eq.s32.totalorder %s39, 0
      %p176 = por %p174, %p175
      %s178 = sadd.s32 %s177, 1
      %p181 = scmp.eq.s32.totalorder %s33, 1
      %p182 = scmp.ne.s32.totalorder %s177, %s179
      %p183 = scmp.eq.s32.totalorder %s33, 0
      %p184 = por %p182, %p183
      %p185 = scmp.ne.s32.totalorder %s177, %s179
      %p186 = scmp.eq.s32.totalorder %s38, 1
      %p187 = por %p185, %p186
      %p188 = scmp.ne.s32.totalorder %s179, %s180
      %p189 = scmp.eq.s32.totalorder %s38, 0
      %p190 = por %p188, %p189
      %p191 = scmp.ne.s32.totalorder %s179, %s180
      %p192 = scmp.eq.s32.totalorder %s39, 1
      %p193 = por %p191, %p192
      %p195 = scmp.ne.s32.totalorder %s180, %s194
      %p196 = scmp.eq.s32.totalorder %s39, 0
      %p197 = por %p195, %p196
      %s199 = sadd.s32 %s198, 1
      %p202 = scmp.eq.s32.totalorder %s33, 1
      %p203 = scmp.ne.s32.totalorder %s198, %s200
      %p204 = scmp.eq.s32.totalorder %s33, 0
      %p205 = por %p203, %p204
      %p206 = scmp.ne.s32.totalorder %s198, %s200
      %p207 = scmp.eq.s32.totalorder %s38, 1
      %p208 = por %p206, %p207
      %p209 = scmp.ne.s32.totalorder %s200, %s201
      %p210 = scmp.eq.s32.totalorder %s38, 0
      %p211 = por %p209, %p210
      %p212 = scmp.ne.s32.totalorder %s200, %s201
      %p213 = scmp.eq.s32.totalorder %s39, 1
      %p214 = por %p212, %p213
      %p216 = scmp.ne.s32.totalorder %s201, %s215
      %p217 = scmp.eq.s32.totalorder %s39, 0
      %p218 = por %p216, %p217
      %s220 = sadd.s32 %s219, 1
      %p223 = scmp.eq.s32.totalorder %s33, 1
      %p224 = scmp.ne.s32.totalorder %s219, %s221
      %p225 = scmp.eq.s32.totalorder %s33, 0
      %p226 = por %p224, %p225
      %p227 = scmp.ne.s32.totalorder %s219, %s221
      %p228 = scmp.eq.s32.totalorder %s38, 1
      %p229 = por %p227, %p228
      %p230 = scmp.ne.s32.totalorder %s221, %s222
      %p231 = scmp.eq.s32.totalorder %s38, 0
      %p232 = por %p230, %p231
      %p233 = scmp.ne.s32.totalorder %s221, %s222
      %p234 = scmp.eq.s32.totalorder %s39, 1
      %p235 = por %p233, %p234
      %p237 = scmp.ne.s32.totalorder %s222, %s236
      %p238 = scmp.eq.s32.totalorder %s39, 0
      %p239 = por %p237, %p238
      %s241 = sadd.s32 %s240, 1
      %p244 = scmp.eq.s32.totalorder %s33, 1
      %p245 = scmp.ne.s32.totalorder %s240, %s242
      %p246 = scmp.eq.s32.totalorder %s33, 0
      %p247 = por %p245, %p246
      %p248 = scmp.ne.s32.totalorder %s240, %s242
      %p249 = scmp.eq.s32.totalorder %s38, 1
      %p250 = por %p248, %p249
      %p251 = scmp.ne.s32.totalorder %s242, %s243
      %p252 = scmp.eq.s32.totalorder %s38, 0
      %p253 = por %p251, %p252
      %p254 = scmp.ne.s32.totalorder %s242, %s243
      %p255 = scmp.eq.s32.totalorder %s39, 1
      %p256 = por %p254, %p255
      %p258 = scmp.ne.s32.totalorder %s243, %s257
      %p259 = scmp.eq.s32.totalorder %s39, 0
      %p260 = por %p258, %p259
      %s262 = sadd.s32 %s261, 1
      %p265 = scmp.eq.s32.totalorder %s33, 1
      %p266 = scmp.ne.s32.totalorder %s261, %s263
      %p267 = scmp.eq.s32.totalorder %s33, 0
      %p268 = por %p266, %p267
      %p269 = scmp.ne.s32.totalorder %s261, %s263
      %p270 = scmp.eq.s32.totalorder %s38, 1
      %p271 = por %p269, %p270
      %p272 = scmp.ne.s32.totalorder %s263, %s264
      %p273 = scmp.eq.s32.totalorder %s38, 0
      %p274 = por %p272, %p273
      %p275 = scmp.ne.s32.totalorder %s263, %s264
      %p276 = scmp.eq.s32.totalorder %s39, 1
      %p277 = por %p275, %p276
      %p279 = scmp.ne.s32.totalorder %s264, %s278
      %p280 = scmp.eq.s32.totalorder %s39, 0
      %p281 = por %p279, %p280
      %s283 = sadd.s32 %s282, 1
      %p286 = scmp.eq.s32.totalorder %s33, 1
      %p287 = scmp.ne.s32.totalorder %s282, %s284
      %p288 = scmp.eq.s32.totalorder %s33, 0
      %p289 = por %p287, %p288
      %p290 = scmp.ne.s32.totalorder %s282, %s284
      %p291 = scmp.eq.s32.totalorder %s38, 1
      %p292 = por %p290, %p291
      %p293 = scmp.ne.s32.totalorder %s284, %s285
      %p294 = scmp.eq.s32.totalorder %s38, 0
      %p295 = por %p293, %p294
      %p296 = scmp.ne.s32.totalorder %s284, %s285
      %p297 = scmp.eq.s32.totalorder %s39, 1
      %p298 = por %p296, %p297
      %p300 = scmp.ne.s32.totalorder %s285, %s299
      %p301 = scmp.eq.s32.totalorder %s39, 0
      %p302 = por %p300, %p301
      %s304 = sadd.s32 %s303, 1
      %p307 = scmp.eq.s32.totalorder %s33, 1
      %p308 = scmp.ne.s32.totalorder %s303, %s305
      %p309 = scmp.eq.s32.totalorder %s33, 0
      %p310 = por %p308, %p309
      %p311 = scmp.ne.s32.totalorder %s303, %s305
      %p312 = scmp.eq.s32.totalorder %s38, 1
      %p313 = por %p311, %p312
      %p314 = scmp.ne.s32.totalorder %s305, %s306
      %p315 = scmp.eq.s32.totalorder %s38, 0
      %p316 = por %p314, %p315
      %p317 = scmp.ne.s32.totalorder %s305, %s306
      %p318 = scmp.eq.s32.totalorder %s39, 1
      %p319 = por %p317, %p318
      %p321 = scmp.ne.s32.totalorder %s306, %s320
      %p322 = scmp.eq.s32.totalorder %s39, 0
      %p323 = por %p321, %p322
      %s325 = sadd.s32 %s324, 1
      %p328 = scmp.eq.s32.totalorder %s33, 1
      %p329 = scmp.ne.s32.totalorder %s324, %s326
      %p330 = scmp.eq.s32.totalorder %s33, 0
      %p331 = por %p329, %p330
      %p332 = scmp.ne.s32.totalorder %s324, %s326
      %p333 = scmp.eq.s32.totalorder %s38, 1
      %p334 = por %p332, %p333
      %p335 = scmp.ne.s32.totalorder %s326, %s327
      %p336 = scmp.eq.s32.totalorder %s38, 0
      %p337 = por %p335, %p336
      %p338 = scmp.ne.s32.totalorder %s326, %s327
      %p339 = scmp.eq.s32.totalorder %s39, 1
      %p340 = por %p338, %p339
      %p342 = scmp.ne.s32.totalorder %s327, %s341
      %p343 = scmp.eq.s32.totalorder %s39, 0
      %p344 = por %p342, %p343
      %s346 = sadd.s32 %s345, 1
      %p349 = scmp.eq.s32.totalorder %s33, 1
      %p350 = scmp.ne.s32.totalorder %s345, %s347
      %p351 = scmp.eq.s32.totalorder %s33, 0
      %p352 = por %p350, %p351
      %p353 = scmp.ne.s32.totalorder %s345, %s347
      %p354 = scmp.eq.s32.totalorder %s38, 1
      %p355 = por %p353, %p354
      %p356 = scmp.ne.s32.totalorder %s347, %s348
      %p357 = scmp.eq.s32.totalorder %s38, 0
      %p358 = por %p356, %p357
      %p359 = scmp.ne.s32.totalorder %s347, %s348
      %p360 = scmp.eq.s32.totalorder %s39, 1
      %p361 = por %p359, %p360
      %p363 = scmp.ne.s32.totalorder %s348, %s362
      %p364 = scmp.eq.s32.totalorder %s39, 0
      %p365 = por %p363, %p364
      %s367 = sadd.s32 %s366, 1
      %p370 = scmp.eq.s32.totalorder %s33, 1
      %p371 = scmp.ne.s32.totalorder %s366, %s368
      %p372 = scmp.eq.s32.totalorder %s33, 0
      %p373 = por %p371, %p372
      %p374 = scmp.ne.s32.totalorder %s366, %s368
      %p375 = scmp.eq.s32.totalorder %s38, 1
      %p376 = por %p374, %p375
      %p377 = scmp.ne.s32.totalorder %s368, %s369
      %p378 = scmp.eq.s32.totalorder %s38, 0
      %p379 = por %p377, %p378
      %p380 = scmp.ne.s32.totalorder %s368, %s369
      %p381 = scmp.eq.s32.totalorder %s39, 1
      %p382 = por %p380, %p381
      %p384 = scmp.ne.s32.totalorder %s369, %s383
      %p385 = scmp.eq.s32.totalorder %s39, 0
      %p386 = por %p384, %p385
      %s388 = sadd.s32 %s387, 1
      %p391 = scmp.eq.s32.totalorder %s33, 1
      %p392 = scmp.ne.s32.totalorder %s387, %s389
      %p393 = scmp.eq.s32.totalorder %s33, 0
      %p394 = por %p392, %p393
      %p395 = scmp.ne.s32.totalorder %s387, %s389
      %p396 = scmp.eq.s32.totalorder %s38, 1
      %p397 = por %p395, %p396
      %p398 = scmp.ne.s32.totalorder %s389, %s390
      %p399 = scmp.eq.s32.totalorder %s38, 0
      %p400 = por %p398, %p399
      %p401 = scmp.ne.s32.totalorder %s389, %s390
      %p402 = scmp.eq.s32.totalorder %s39, 1
      %p403 = por %p401, %p402
      %p405 = scmp.ne.s32.totalorder %s390, %s404
      %p406 = scmp.eq.s32.totalorder %s39, 0
      %p407 = por %p405, %p406
      %s409 = sadd.s32 %s408, 1
      %p412 = scmp.eq.s32.totalorder %s33, 1
      %p413 = scmp.ne.s32.totalorder %s408, %s410
      %p414 = scmp.eq.s32.totalorder %s33, 0
      %p415 = por %p413, %p414
      %p416 = scmp.ne.s32.totalorder %s408, %s410
      %p417 = scmp.eq.s32.totalorder %s38, 1
      %p418 = por %p416, %p417
      %p419 = scmp.ne.s32.totalorder %s410, %s411
      %p420 = scmp.eq.s32.totalorder %s38, 0
      %p421 = por %p419, %p420
      %p422 = scmp.ne.s32.totalorder %s410, %s411
      %p423 = scmp.eq.s32.totalorder %s39, 1
      %p424 = por %p422, %p423
      %p426 = scmp.ne.s32.totalorder %s411, %s425
      %p427 = scmp.eq.s32.totalorder %s39, 0
      %p428 = por %p426, %p427
      %s430 = sadd.s32 %s429, 1
      %p433 = scmp.eq.s32.totalorder %s33, 1
      %p434 = scmp.ne.s32.totalorder %s429, %s431
      %p435 = scmp.eq.s32.totalorder %s33, 0
      %p436 = por %p434, %p435
      %p437 = scmp.ne.s32.totalorder %s429, %s431
      %p438 = scmp.eq.s32.totalorder %s38, 1
      %p439 = por %p437, %p438
      %p440 = scmp.ne.s32.totalorder %s431, %s432
      %p441 = scmp.eq.s32.totalorder %s38, 0
      %p442 = por %p440, %p441
      %p443 = scmp.ne.s32.totalorder %s431, %s432
      %p444 = scmp.eq.s32.totalorder %s39, 1
      %p445 = por %p443, %p444
      %p447 = scmp.ne.s32.totalorder %s432, %s446
      %p448 = scmp.eq.s32.totalorder %s39, 0
      %p449 = por %p447, %p448
      %s451 = sadd.s32 %s450, 1
      %p454 = scmp.eq.s32.totalorder %s33, 1
      %p455 = scmp.ne.s32.totalorder %s450, %s452
      %p456 = scmp.eq.s32.totalorder %s33, 0
      %p457 = por %p455, %p456
      %p458 = scmp.ne.s32.totalorder %s450, %s452
      %p459 = scmp.eq.s32.totalorder %s38, 1
      %p460 = por %p458, %p459
      %p461 = scmp.ne.s32.totalorder %s452, %s453
      %p462 = scmp.eq.s32.totalorder %s38, 0
      %p463 = por %p461, %p462
      %p464 = scmp.ne.s32.totalorder %s452, %s453
      %p465 = scmp.eq.s32.totalorder %s39, 1
      %p466 = por %p464, %p465
      %p468 = scmp.ne.s32.totalorder %s453, %s467
      %p469 = scmp.eq.s32.totalorder %s39, 0
      %p470 = por %p468, %p469
      %s472 = sadd.s32 %s471, 1
      %p475 = scmp.eq.s32.totalorder %s33, 1
      %p476 = scmp.ne.s32.totalorder %s471, %s473
      %p477 = scmp.eq.s32.totalorder %s33, 0
      %p478 = por %p476, %p477
      %p479 = scmp.ne.s32.totalorder %s471, %s473
      %p480 = scmp.eq.s32.totalorder %s38, 1
      %p481 = por %p479, %p480
      %p482 = scmp.ne.s32.totalorder %s473, %s474
      %p483 = scmp.eq.s32.totalorder %s38, 0
      %p484 = por %p482, %p483
      %p485 = scmp.ne.s32.totalorder %s473, %s474
      %p486 = scmp.eq.s32.totalorder %s39, 1
      %p487 = por %p485, %p486
      %p489 = scmp.ne.s32.totalorder %s474, %s488
      %p490 = scmp.eq.s32.totalorder %s39, 0
      %p491 = por %p489, %p490
      %s493 = sadd.s32 %s492, 1
      %p496 = scmp.eq.s32.totalorder %s33, 1
      %p497 = scmp.ne.s32.totalorder %s492, %s494
      %p498 = scmp.eq.s32.totalorder %s33, 0
      %p499 = por %p497, %p498
      %p500 = scmp.ne.s32.totalorder %s492, %s494
      %p501 = scmp.eq.s32.totalorder %s38, 1
      %p502 = por %p500, %p501
      %p503 = scmp.ne.s32.totalorder %s494, %s495
      %p504 = scmp.eq.s32.totalorder %s38, 0
      %p505 = por %p503, %p504
      %p506 = scmp.ne.s32.totalorder %s494, %s495
      %p507 = scmp.eq.s32.totalorder %s39, 1
      %p508 = por %p506, %p507
      %p510 = scmp.ne.s32.totalorder %s495, %s509
      %p511 = scmp.eq.s32.totalorder %s39, 0
      %p512 = por %p510, %p511
      %s513 = ssub.s32 %s33, %s40
      %p514 = scmp.eq.s32.totalorder %s513, 0
      %s516 = sadd.s32 %s515, 1
      %s517 = scalar_select %p514, %s515, %s516
      %p520 = pneg %p514
      %p521 = scmp.eq.s32.totalorder %s33, 1
      %p522 = por %p520, %p521
      %p523 = scmp.ne.s32.totalorder %s515, %s518
      %p524 = scmp.eq.s32.totalorder %s33, 0
      %p525 = por %p523, %p524
      %p526 = scmp.ne.s32.totalorder %s515, %s518
      %p527 = scmp.eq.s32.totalorder %s38, 1
      %p528 = por %p526, %p527
      %p529 = scmp.ne.s32.totalorder %s518, %s519
      %p530 = scmp.eq.s32.totalorder %s38, 0
      %p531 = por %p529, %p530
      %p532 = scmp.ne.s32.totalorder %s518, %s519
      %p533 = scmp.eq.s32.totalorder %s39, 1
      %p534 = por %p532, %p533
      %p536 = scmp.ne.s32.totalorder %s519, %s535
      %p537 = scmp.eq.s32.totalorder %s39, 0
      %p538 = por %p536, %p537
      %s539 = ssub.s32 %s33, %s40
      %p540 = scmp.eq.s32.totalorder %s539, 0
      %s542 = sadd.s32 %s541, 1
      %s543 = scalar_select %p540, %s541, %s542
      %p546 = pneg %p540
      %p547 = scmp.eq.s32.totalorder %s33, 1
      %p548 = por %p546, %p547
      %p549 = scmp.ne.s32.totalorder %s541, %s544
      %p550 = scmp.eq.s32.totalorder %s33, 0
      %p551 = por %p549, %p550
      %p552 = scmp.ne.s32.totalorder %s541, %s544
      %p553 = scmp.eq.s32.totalorder %s38, 1
      %p554 = por %p552, %p553
      %p555 = scmp.ne.s32.totalorder %s544, %s545
      %p556 = scmp.eq.s32.totalorder %s38, 0
      %p557 = por %p555, %p556
      %p558 = scmp.ne.s32.totalorder %s544, %s545
      %p559 = scmp.eq.s32.totalorder %s39, 1
      %p560 = por %p558, %p559
      %p562 = scmp.ne.s32.totalorder %s545, %s561
      %p563 = scmp.eq.s32.totalorder %s39, 0
      %p564 = por %p562, %p563
      %p565 = scmp.le.s32.totalorder 1, %s33
      %p566 = scmp.lt.s32.totalorder %s33, 3
      %p567 = pnand %p565, %p566
      %p568 = pneg %p567
      // Predicated region
      $region9: #{pretrain_bert_moco_forward.1} parent=5 // pred_check
        _
      $region10: #{pretrain_bert_moco_forward.1} parent=5 // pred_check_branch
        %570 = sbr.rel (%p567) target = $region12
      $region11: #{pretrain_bert_moco_forward.1} parent=5 // pred_region
        %s571 = ssub.s32 %s33, 1
        // Predicated region
        $region13: #{pretrain_bert_moco_forward.1} parent=11 // pred_check
          %p572 = pneg %p106
        $region14: #{pretrain_bert_moco_forward.1} parent=11 // pred_check_branch
          %574 = sbr.rel (%p572) target = $region16
        $region15: #{pretrain_bert_moco_forward.1} parent=11 // pred_region
          _
        $region16: #{pretrain_bert_moco_forward.1} parent=11 // pred_fallthru
          _
        // Predicated region
        $region17: #{pretrain_bert_moco_forward.1} parent=11 // pred_check
          %p575 = pneg %p127
        $region18: #{pretrain_bert_moco_forward.1} parent=11 // pred_check_branch
          %577 = sbr.rel (%p575) target = $region20
        $region19: #{pretrain_bert_moco_forward.1} parent=11 // pred_region
          _
        $region20: #{pretrain_bert_moco_forward.1} parent=11 // pred_fallthru
          _
        // Predicated region
        $region21: #{pretrain_bert_moco_forward.1} parent=11 // pred_check
          %p578 = pneg %p148
        $region22: #{pretrain_bert_moco_forward.1} parent=11 // pred_check_branch
          %580 = sbr.rel (%p578) target = $region24
        $region23: #{pretrain_bert_moco_forward.1} parent=11 // pred_region
          _
        $region24: #{pretrain_bert_moco_forward.1} parent=11 // pred_fallthru
          _
        // Predicated region
        $region25: #{pretrain_bert_moco_forward.1} parent=11 // pred_check
          %p581 = pneg %p169
        $region26: #{pretrain_bert_moco_forward.1} parent=11 // pred_check_branch
          %583 = sbr.rel (%p581) target = $region28
        $region27: #{pretrain_bert_moco_forward.1} parent=11 // pred_region
          _
        $region28: #{pretrain_bert_moco_forward.1} parent=11 // pred_fallthru
          _
        // Predicated region
        $region29: #{pretrain_bert_moco_forward.1} parent=11 // pred_check
          %p584 = pneg %p190
        $region30: #{pretrain_bert_moco_forward.1} parent=11 // pred_check_branch
          %586 = sbr.rel (%p584) target = $region32
        $region31: #{pretrain_bert_moco_forward.1} parent=11 // pred_region
          _
        $region32: #{pretrain_bert_moco_forward.1} parent=11 // pred_fallthru
          _
        // Predicated region
        $region33: #{pretrain_bert_moco_forward.1} parent=11 // pred_check
          %p587 = pneg %p211
        $region34: #{pretrain_bert_moco_forward.1} parent=11 // pred_check_branch
          %589 = sbr.rel (%p587) target = $region36
        $region35: #{pretrain_bert_moco_forward.1} parent=11 // pred_region
          _
        $region36: #{pretrain_bert_moco_forward.1} parent=11 // pred_fallthru
          _
        // Predicated region
        $region37: #{pretrain_bert_moco_forward.1} parent=11 // pred_check
          %p590 = pneg %p232
        $region38: #{pretrain_bert_moco_forward.1} parent=11 // pred_check_branch
          %592 = sbr.rel (%p590) target = $region40
        $region39: #{pretrain_bert_moco_forward.1} parent=11 // pred_region
          _
        $region40: #{pretrain_bert_moco_forward.1} parent=11 // pred_fallthru
          _
        // Predicated region
        $region41: #{pretrain_bert_moco_forward.1} parent=11 // pred_check
          %p593 = pneg %p253
        $region42: #{pretrain_bert_moco_forward.1} parent=11 // pred_check_branch
          %595 = sbr.rel (%p593) target = $region44
        $region43: #{pretrain_bert_moco_forward.1} parent=11 // pred_region
          _
        $region44: #{pretrain_bert_moco_forward.1} parent=11 // pred_fallthru
          _
        // Predicated region
        $region45: #{pretrain_bert_moco_forward.1} parent=11 // pred_check
          %p596 = pneg %p274
        $region46: #{pretrain_bert_moco_forward.1} parent=11 // pred_check_branch
          %598 = sbr.rel (%p596) target = $region48
        $region47: #{pretrain_bert_moco_forward.1} parent=11 // pred_region
          _
        $region48: #{pretrain_bert_moco_forward.1} parent=11 // pred_fallthru
          _
        // Predicated region
        $region49: #{pretrain_bert_moco_forward.1} parent=11 // pred_check
          %p599 = pneg %p295
        $region50: #{pretrain_bert_moco_forward.1} parent=11 // pred_check_branch
          %601 = sbr.rel (%p599) target = $region52
        $region51: #{pretrain_bert_moco_forward.1} parent=11 // pred_region
          _
        $region52: #{pretrain_bert_moco_forward.1} parent=11 // pred_fallthru
          _
        // Predicated region
        $region53: #{pretrain_bert_moco_forward.1} parent=11 // pred_check
          %p602 = pneg %p316
        $region54: #{pretrain_bert_moco_forward.1} parent=11 // pred_check_branch
          %604 = sbr.rel (%p602) target = $region56
        $region55: #{pretrain_bert_moco_forward.1} parent=11 // pred_region
          _
        $region56: #{pretrain_bert_moco_forward.1} parent=11 // pred_fallthru
          _
        // Predicated region
        $region57: #{pretrain_bert_moco_forward.1} parent=11 // pred_check
          %p605 = pneg %p337
        $region58: #{pretrain_bert_moco_forward.1} parent=11 // pred_check_branch
          %607 = sbr.rel (%p605) target = $region60
        $region59: #{pretrain_bert_moco_forward.1} parent=11 // pred_region
          _
        $region60: #{pretrain_bert_moco_forward.1} parent=11 // pred_fallthru
          _
        // Predicated region
        $region61: #{pretrain_bert_moco_forward.1} parent=11 // pred_check
          %p608 = pneg %p358
        $region62: #{pretrain_bert_moco_forward.1} parent=11 // pred_check_branch
          %610 = sbr.rel (%p608) target = $region64
        $region63: #{pretrain_bert_moco_forward.1} parent=11 // pred_region
          _
        $region64: #{pretrain_bert_moco_forward.1} parent=11 // pred_fallthru
          _
        // Predicated region
        $region65: #{pretrain_bert_moco_forward.1} parent=11 // pred_check
          %p611 = pneg %p379
        $region66: #{pretrain_bert_moco_forward.1} parent=11 // pred_check_branch
          %613 = sbr.rel (%p611) target = $region68
        $region67: #{pretrain_bert_moco_forward.1} parent=11 // pred_region
          _
        $region68: #{pretrain_bert_moco_forward.1} parent=11 // pred_fallthru
          _
        // Predicated region
        $region69: #{pretrain_bert_moco_forward.1} parent=11 // pred_check
          %p614 = pneg %p400
        $region70: #{pretrain_bert_moco_forward.1} parent=11 // pred_check_branch
          %616 = sbr.rel (%p614) target = $region72
        $region71: #{pretrain_bert_moco_forward.1} parent=11 // pred_region
          _
        $region72: #{pretrain_bert_moco_forward.1} parent=11 // pred_fallthru
          _
        // Predicated region
        $region73: #{pretrain_bert_moco_forward.1} parent=11 // pred_check
          %p617 = pneg %p421
        $region74: #{pretrain_bert_moco_forward.1} parent=11 // pred_check_branch
          %619 = sbr.rel (%p617) target = $region76
        $region75: #{pretrain_bert_moco_forward.1} parent=11 // pred_region
          _
        $region76: #{pretrain_bert_moco_forward.1} parent=11 // pred_fallthru
          _
        // Predicated region
        $region77: #{pretrain_bert_moco_forward.1} parent=11 // pred_check
          %p620 = pneg %p442
        $region78: #{pretrain_bert_moco_forward.1} parent=11 // pred_check_branch
          %622 = sbr.rel (%p620) target = $region80
        $region79: #{pretrain_bert_moco_forward.1} parent=11 // pred_region
          _
        $region80: #{pretrain_bert_moco_forward.1} parent=11 // pred_fallthru
          _
        // Predicated region
        $region81: #{pretrain_bert_moco_forward.1} parent=11 // pred_check
          %p623 = pneg %p463
        $region82: #{pretrain_bert_moco_forward.1} parent=11 // pred_check_branch
          %625 = sbr.rel (%p623) target = $region84
        $region83: #{pretrain_bert_moco_forward.1} parent=11 // pred_region
          _
        $region84: #{pretrain_bert_moco_forward.1} parent=11 // pred_fallthru
          _
        // Predicated region
        $region85: #{pretrain_bert_moco_forward.1} parent=11 // pred_check
          %p626 = pneg %p484
        $region86: #{pretrain_bert_moco_forward.1} parent=11 // pred_check_branch
          %628 = sbr.rel (%p626) target = $region88
        $region87: #{pretrain_bert_moco_forward.1} parent=11 // pred_region
          _
        $region88: #{pretrain_bert_moco_forward.1} parent=11 // pred_fallthru
          _
        // Predicated region
        $region89: #{pretrain_bert_moco_forward.1} parent=11 // pred_check
          %p629 = pneg %p505
        $region90: #{pretrain_bert_moco_forward.1} parent=11 // pred_check_branch
          %631 = sbr.rel (%p629) target = $region92
        $region91: #{pretrain_bert_moco_forward.1} parent=11 // pred_region
          _
        $region92: #{pretrain_bert_moco_forward.1} parent=11 // pred_fallthru
          _
      $region12: #{pretrain_bert_moco_forward.1} parent=5 // pred_fallthru
        _
      %p632 = scmp.lt.s32.totalorder %s33, 2
      // Predicated region
      $region93: #{pretrain_bert_moco_forward.1} parent=5 // pred_check
        %p633 = pneg %p632
      $region94: #{pretrain_bert_moco_forward.1} parent=5 // pred_check_branch
        %635 = sbr.rel (%p633) target = $region96
      $region95: #{pretrain_bert_moco_forward.1} parent=5 // pred_region
        // Predicated region
        $region97: #{pretrain_bert_moco_forward.1} parent=95 // pred_check
          %p636 = pneg %p53
        $region98: #{pretrain_bert_moco_forward.1} parent=95 // pred_check_branch
          %638 = sbr.rel (%p636) target = $region100
        $region99: #{pretrain_bert_moco_forward.1} parent=95 // pred_region
          %p639 = scmp.lt.s32.totalorder %s33, 1
          %s640 = scalar_select %p639, %s33, 1
          %s641 = smul.addr %s640, 8
          %s642 = scalar_lea.vmem %s0, %s641
        $region100: #{pretrain_bert_moco_forward.1} parent=95 // pred_fallthru
          _
        // Predicated region
        $region101: #{pretrain_bert_moco_forward.1} parent=95 // pred_check
          %p643 = pneg %p79
        $region102: #{pretrain_bert_moco_forward.1} parent=95 // pred_check_branch
          %645 = sbr.rel (%p643) target = $region104
        $region103: #{pretrain_bert_moco_forward.1} parent=95 // pred_region
          %p646 = scmp.lt.s32.totalorder %s33, 1
          %s647 = scalar_select %p646, %s33, 1
          %s648 = scalar_lea.vmem %s1, %s647
        $region104: #{pretrain_bert_moco_forward.1} parent=95 // pred_fallthru
          _
      $region96: #{pretrain_bert_moco_forward.1} parent=5 // pred_fallthru
        _
      %p649 = scmp.le.s32.totalorder 1, %s33
      %p650 = scmp.lt.s32.totalorder %s33, 3
      %p651 = pnand %p649, %p650
      %p652 = pneg %p651
      // Predicated region
      $region105: #{pretrain_bert_moco_forward.1} parent=5 // pred_check
        _
      $region106: #{pretrain_bert_moco_forward.1} parent=5 // pred_check_branch
        %654 = sbr.rel (%p651) target = $region108
      $region107: #{pretrain_bert_moco_forward.1} parent=5 // pred_region
        %s655 = ssub.s32 %s33, 1
        %p656 = scmp.lt.s32.totalorder %s38, 1
        %s657 = scalar_select %p656, %s38, 1
        %s658 = smul.addr %s657, 8
        %s659 = scalar_lea.vmem %s0, %s658
        %p660 = pneg %p59
        %p661 = pneg %p56
        %p662 = scmp.lt.s32.totalorder %s38, 1
        %s663 = scalar_select %p662, %s38, 1
        %s664 = scalar_lea.vmem %s1, %s663
        %p665 = pneg %p85
        %p666 = pneg %p82
        %p667 = pneg %p106
        %p668 = pneg %p103
        %p669 = pneg %p127
        %p670 = pneg %p124
        %p671 = pneg %p148
        %p672 = pneg %p145
        %p673 = pneg %p169
        %p674 = pneg %p166
        %p675 = pneg %p190
        %p676 = pneg %p187
        %p677 = pneg %p211
        %p678 = pneg %p208
        %p679 = pneg %p232
        %p680 = pneg %p229
        %p681 = pneg %p253
        %p682 = pneg %p250
        %p683 = pneg %p274
        %p684 = pneg %p271
        %p685 = pneg %p295
        %p686 = pneg %p292
        %p687 = pneg %p316
        %p688 = pneg %p313
        %p689 = pneg %p337
        %p690 = pneg %p334
        %p691 = pneg %p358
        %p692 = pneg %p355
        %p693 = pneg %p379
        %p694 = pneg %p376
        %p695 = pneg %p400
        %p696 = pneg %p397
        %p697 = pneg %p421
        %p698 = pneg %p418
        %p699 = pneg %p442
        %p700 = pneg %p439
        %p701 = pneg %p463
        %p702 = pneg %p460
        %p703 = pneg %p484
        %p704 = pneg %p481
        %p705 = pneg %p505
        %p706 = pneg %p502
        %p707 = pneg %p531
        %p708 = pneg %p528
        %p709 = scmp.lt.s32.totalorder %s38, 1
        %s710 = scalar_select %p709, %s38, 1
        %s711 = smul.addr %s710, 8
        %s712 = scalar_lea.vmem %s22, %s711
        %p713 = pneg %p557
        %p714 = pneg %p554
        %s715 = sand.u32 %s544, 1
        %s716 = scalar_lea.sflag [#allocation3], %s715
        %s717 = sand.u32 %s544, 1
        %s718 = scalar_lea.vmem [#allocation2], %s717
        %p719 = scmp.lt.s32.totalorder %s38, 1
        %s720 = scalar_select %p719, %s38, 1
        %s721 = smul.addr %s720, 8
        %s722 = scalar_lea.vmem %s0, %s721
        %p723 = scmp.lt.s32.totalorder %s38, 1
        %s724 = scalar_select %p723, %s38, 1
        %s725 = scalar_lea.vmem %s1, %s724
        %p726 = scmp.lt.s32.totalorder %s38, 1
        %s727 = scalar_select %p726, %s38, 1
        %s728 = smul.addr %s727, 8
        %s729 = scalar_lea.vmem %s22, %s728
        %v730 = vld [vmem:[%s725] sm:$0x1]
        %v731 = vld [vmem:[%s722] sm:$0xff]
        %v732 = vld [vmem:[%s2] sm:$0x1]
        %v733 = vld [vmem:[%s2 + $0x1] sm:$0x1]
        %vm734 = vcmask 261120
        %v735 = vsel %vm734, %v731, 0.0
        %736 = vadd.xlane.f32.xlu0 %v735
        %v737 = vpop.xlane.xlu0 %736
        %v738 = vrcp.pop 32.0
        %v739 = vmul.f32 %v737, %v738
        %v740 = vsub.f32 %v731, %v739
        %v741 = vmul.f32 %v740, %v740
        %v742 = vsel %vm734, %v741, 0.0
        %743 = vadd.xlane.f32.xlu0 %v742
        %v744 = vpop.xlane.xlu0 %743
        %v745 = vmul.f32 %v744, %v738
        %v746 = vadd.f32 %v745, 1e-12
        %v747 = vrsqrt.pop %v746
        %v748 = vmul.f32 %v740, %v747
        %v749 = vlaneseq
        %v750 = vshrl.u32 %v749, 7
        %v751 = vsub.s32 0, %v750
        %v752 = vrot.slane %v732, %v751
        %v753 = vmul.f32 %v748, %v752
        %v754 = vlaneseq
        %v755 = vshrl.u32 %v754, 7
        %v756 = vsub.s32 0, %v755
        %v757 = vrot.slane %v733, %v756
        %v758 = vadd.f32 %v753, %v757
        %v759 = vld [vmem:[%s11] sm:$0xf]
        %v760 = vld [vmem:[%s3] sm:$0xff]
        %v761 = vld [vmem:[%s3 + $0x8] sm:$0xff]
        %v762 = vld [vmem:[%s3 + $0x10] sm:$0xff]
        %v763 = vld [vmem:[%s3 + $0x18] sm:$0xff]
        %v764 = vld [vmem:[%s4] sm:$0x1]
        %v766 = vlaneseq
        %v767 = vshrl.u32 %v766, 7
        %v768 = vsub.s32 0, %v767
        %v769 = vrot.slane %v764, %v768
        %v772 = vsel %vm734, %v758, 0
        %774 = vmatprep.subr.mxu0 0.0
        %775 = vmatpush1.msra.mxu0 %v760
        %776 = vmatprep.subr.mxu0 0.0
        %777 = vmatpush1.msra.mxu0 %v761
        %778 = vmatprep.subr.mxu0 0.0
        %779 = vmatpush1.msra.mxu0 %v762
        %780 = vmatprep.subr.mxu0 0.0
        %781 = vmatpush1.msra.mxu0 %v763
        %782 = vmatprep.subr.mxu0 0.0
        %783 = vmatpush1.msra.mxu0 0.0
        %784 = vmatprep.subr.mxu0 0.0
        %785 = vmatpush1.msra.mxu0 0.0
        %786 = vmatprep.subr.mxu0 0.0
        %787 = vmatpush1.msra.mxu0 0.0
        %788 = vmatprep.subr.mxu0 0.0
        %789 = vmatpush1.msra.mxu0 0.0
        %790 = vmatprep.subr.mxu0 0.0
        %791 = vmatpush1.msra.mxu0 0.0
        %792 = vmatprep.subr.mxu0 0.0
        %793 = vmatpush1.msra.mxu0 0.0
        %794 = vmatprep.subr.mxu0 0.0
        %795 = vmatpush1.msra.mxu0 0.0
        %796 = vmatprep.subr.mxu0 0.0
        %797 = vmatpush1.msra.mxu0 0.0
        %798 = vmatprep.subr.mxu0 0.0
        %799 = vmatpush1.msra.mxu0 0.0
        %800 = vmatprep.subr.mxu0 0.0
        %801 = vmatpush1.msra.mxu0 0.0
        %802 = vmatprep.subr.mxu0 0.0
        %803 = vmatpush1.msra.mxu0 0.0
        %804 = vmatprep.subr.mxu0 0.0
        %805 = vmatpush1.msra.mxu0 0.0
        %806 = vmatprep.subr.mxu0 0.0
        %807 = vmatpush1.msra.mxu0 0.0
        %808 = vmatprep.subr.mxu0 0.0
        %809 = vmatpush1.msra.mxu0 0.0
        %810 = vmatprep.subr.mxu0 0.0
        %811 = vmatpush1.msra.mxu0 0.0
        %812 = vmatprep.subr.mxu0 0.0
        %813 = vmatpush1.msra.mxu0 0.0
        %814 = vmatprep.subr.mxu0 0.0
        %815 = vmatpush1.msra.mxu0 0.0
        %816 = vmatprep.subr.mxu0 0.0
        %817 = vmatpush1.msra.mxu0 0.0
        %818 = vmatprep.subr.mxu0 0.0
        %819 = vmatpush1.msra.mxu0 0.0
        %820 = vmatprep.subr.mxu0 0.0
        %821 = vmatpush1.msra.mxu0 0.0
        %822 = vmatprep.subr.mxu0 0.0
        %823 = vmatpush1.msra.mxu0 0.0
        %824 = vmatprep.subr.mxu0 0.0
        %825 = vmatpush1.msra.mxu0 0.0
        %826 = vmatprep.subr.mxu0 0.0
        %827 = vmatpush1.msra.mxu0 0.0
        %828 = vmatprep.subr.mxu0 0.0
        %829 = vmatpush1.msra.mxu0 0.0
        %830 = vmatprep.subr.mxu0 0.0
        %831 = vmatpush1.msra.mxu0 0.0
        %832 = vmatprep.subr.mxu0 0.0
        %833 = vmatpush1.msra.mxu0 0.0
        %834 = vmatprep.subr.mxu0 0.0
        %835 = vmatpush1.msra.mxu0 0.0
        %836 = vmatprep.subr.mxu0 0.0
        %837 = vmatpush1.msra.mxu0 0.0
        %838 = vmatprep.mubr.f32.mxu0 0.0
        %839 = vmatmul.mubr.f32.gmra.mrb[0].mxu0 %v772
        %v840 = vpop.f32.mrb[0].mxu0
        %v841 = vadd.f32 %v769, %v840
        %v842 = vpop.f32.mrb[0].mxu0
        %843 = vdwg.mxu0
        %v844 = vld [vmem:[%s5] sm:$0xff]
        %v845 = vld [vmem:[%s5 + $0x8] sm:$0xff]
        %v846 = vld [vmem:[%s5 + $0x10] sm:$0xff]
        %v847 = vld [vmem:[%s5 + $0x18] sm:$0xff]
        %v848 = vld [vmem:[%s6] sm:$0x1]
        %v850 = vlaneseq
        %v851 = vshrl.u32 %v850, 7
        %v852 = vsub.s32 0, %v851
        %v853 = vrot.slane %v848, %v852
        %855 = vmatprep.subr.mxu0 0.0
        %856 = vmatpush1.msra.mxu0 %v844
        %857 = vmatprep.subr.mxu0 0.0
        %858 = vmatpush1.msra.mxu0 %v845
        %859 = vmatprep.subr.mxu0 0.0
        %860 = vmatpush1.msra.mxu0 %v846
        %861 = vmatprep.subr.mxu0 0.0
        %862 = vmatpush1.msra.mxu0 %v847
        %863 = vmatprep.subr.mxu0 0.0
        %864 = vmatpush1.msra.mxu0 0.0
        %865 = vmatprep.subr.mxu0 0.0
        %866 = vmatpush1.msra.mxu0 0.0
        %867 = vmatprep.subr.mxu0 0.0
        %868 = vmatpush1.msra.mxu0 0.0
        %869 = vmatprep.subr.mxu0 0.0
        %870 = vmatpush1.msra.mxu0 0.0
        %871 = vmatprep.subr.mxu0 0.0
        %872 = vmatpush1.msra.mxu0 0.0
        %873 = vmatprep.subr.mxu0 0.0
        %874 = vmatpush1.msra.mxu0 0.0
        %875 = vmatprep.subr.mxu0 0.0
        %876 = vmatpush1.msra.mxu0 0.0
        %877 = vmatprep.subr.mxu0 0.0
        %878 = vmatpush1.msra.mxu0 0.0
        %879 = vmatprep.subr.mxu0 0.0
        %880 = vmatpush1.msra.mxu0 0.0
        %881 = vmatprep.subr.mxu0 0.0
        %882 = vmatpush1.msra.mxu0 0.0
        %883 = vmatprep.subr.mxu0 0.0
        %884 = vmatpush1.msra.mxu0 0.0
        %885 = vmatprep.subr.mxu0 0.0
        %886 = vmatpush1.msra.mxu0 0.0
        %887 = vmatprep.subr.mxu0 0.0
        %888 = vmatpush1.msra.mxu0 0.0
        %889 = vmatprep.subr.mxu0 0.0
        %890 = vmatpush1.msra.mxu0 0.0
        %891 = vmatprep.subr.mxu0 0.0
        %892 = vmatpush1.msra.mxu0 0.0
        %893 = vmatprep.subr.mxu0 0.0
        %894 = vmatpush1.msra.mxu0 0.0
        %895 = vmatprep.subr.mxu0 0.0
        %896 = vmatpush1.msra.mxu0 0.0
        %897 = vmatprep.subr.mxu0 0.0
        %898 = vmatpush1.msra.mxu0 0.0
        %899 = vmatprep.subr.mxu0 0.0
        %900 = vmatpush1.msra.mxu0 0.0
        %901 = vmatprep.subr.mxu0 0.0
        %902 = vmatpush1.msra.mxu0 0.0
        %903 = vmatprep.subr.mxu0 0.0
        %904 = vmatpush1.msra.mxu0 0.0
        %905 = vmatprep.subr.mxu0 0.0
        %906 = vmatpush1.msra.mxu0 0.0
        %907 = vmatprep.subr.mxu0 0.0
        %908 = vmatpush1.msra.mxu0 0.0
        %909 = vmatprep.subr.mxu0 0.0
        %910 = vmatpush1.msra.mxu0 0.0
        %911 = vmatprep.subr.mxu0 0.0
        %912 = vmatpush1.msra.mxu0 0.0
        %913 = vmatprep.subr.mxu0 0.0
        %914 = vmatpush1.msra.mxu0 0.0
        %915 = vmatprep.subr.mxu0 0.0
        %916 = vmatpush1.msra.mxu0 0.0
        %917 = vmatprep.subr.mxu0 0.0
        %918 = vmatpush1.msra.mxu0 0.0
        %919 = vmatprep.mubr.f32.mxu0 0.0
        %920 = vmatmul.mubr.f32.gmra.mrb[0].mxu0 %v772
        %v921 = vpop.f32.mrb[0].mxu0
        %v922 = vadd.f32 %v853, %v921
        %v923 = vpop.f32.mrb[0].mxu0
        %924 = vdwg.mxu0
        %v925 = vld [vmem:[%s7] sm:$0xff]
        %v926 = vld [vmem:[%s7 + $0x8] sm:$0xff]
        %v927 = vld [vmem:[%s7 + $0x10] sm:$0xff]
        %v928 = vld [vmem:[%s7 + $0x18] sm:$0xff]
        %v929 = vld [vmem:[%s8] sm:$0x1]
        %v931 = vlaneseq
        %v932 = vshrl.u32 %v931, 7
        %v933 = vsub.s32 0, %v932
        %v934 = vrot.slane %v929, %v933
        %936 = vmatprep.subr.mxu0 0.0
        %937 = vmatpush1.msra.mxu0 %v925
        %938 = vmatprep.subr.mxu0 0.0
        %939 = vmatpush1.msra.mxu0 %v926
        %940 = vmatprep.subr.mxu0 0.0
        %941 = vmatpush1.msra.mxu0 %v927
        %942 = vmatprep.subr.mxu0 0.0
        %943 = vmatpush1.msra.mxu0 %v928
        %944 = vmatprep.subr.mxu0 0.0
        %945 = vmatpush1.msra.mxu0 0.0
        %946 = vmatprep.subr.mxu0 0.0
        %947 = vmatpush1.msra.mxu0 0.0
        %948 = vmatprep.subr.mxu0 0.0
        %949 = vmatpush1.msra.mxu0 0.0
        %950 = vmatprep.subr.mxu0 0.0
        %951 = vmatpush1.msra.mxu0 0.0
        %952 = vmatprep.subr.mxu0 0.0
        %953 = vmatpush1.msra.mxu0 0.0
        %954 = vmatprep.subr.mxu0 0.0
        %955 = vmatpush1.msra.mxu0 0.0
        %956 = vmatprep.subr.mxu0 0.0
        %957 = vmatpush1.msra.mxu0 0.0
        %958 = vmatprep.subr.mxu0 0.0
        %959 = vmatpush1.msra.mxu0 0.0
        %960 = vmatprep.subr.mxu0 0.0
        %961 = vmatpush1.msra.mxu0 0.0
        %962 = vmatprep.subr.mxu0 0.0
        %963 = vmatpush1.msra.mxu0 0.0
        %964 = vmatprep.subr.mxu0 0.0
        %965 = vmatpush1.msra.mxu0 0.0
        %966 = vmatprep.subr.mxu0 0.0
        %967 = vmatpush1.msra.mxu0 0.0
        %968 = vmatprep.subr.mxu0 0.0
        %969 = vmatpush1.msra.mxu0 0.0
        %970 = vmatprep.subr.mxu0 0.0
        %971 = vmatpush1.msra.mxu0 0.0
        %972 = vmatprep.subr.mxu0 0.0
        %973 = vmatpush1.msra.mxu0 0.0
        %974 = vmatprep.subr.mxu0 0.0
        %975 = vmatpush1.msra.mxu0 0.0
        %976 = vmatprep.subr.mxu0 0.0
        %977 = vmatpush1.msra.mxu0 0.0
        %978 = vmatprep.subr.mxu0 0.0
        %979 = vmatpush1.msra.mxu0 0.0
        %980 = vmatprep.subr.mxu0 0.0
        %981 = vmatpush1.msra.mxu0 0.0
        %982 = vmatprep.subr.mxu0 0.0
        %983 = vmatpush1.msra.mxu0 0.0
        %984 = vmatprep.subr.mxu0 0.0
        %985 = vmatpush1.msra.mxu0 0.0
        %986 = vmatprep.subr.mxu0 0.0
        %987 = vmatpush1.msra.mxu0 0.0
        %988 = vmatprep.subr.mxu0 0.0
        %989 = vmatpush1.msra.mxu0 0.0
        %990 = vmatprep.subr.mxu0 0.0
        %991 = vmatpush1.msra.mxu0 0.0
        %992 = vmatprep.subr.mxu0 0.0
        %993 = vmatpush1.msra.mxu0 0.0
        %994 = vmatprep.subr.mxu0 0.0
        %995 = vmatpush1.msra.mxu0 0.0
        %996 = vmatprep.subr.mxu0 0.0
        %997 = vmatpush1.msra.mxu0 0.0
        %998 = vmatprep.subr.mxu0 0.0
        %999 = vmatpush1.msra.mxu0 0.0
        %1000 = vmatprep.mubr.f32.mxu0 0.0
        %1001 = vmatmul.mubr.f32.gmra.mrb[0].mxu0 %v772
        %v1002 = vpop.f32.mrb[0].mxu0
        %v1003 = vadd.f32 %v934, %v1002
        %v1004 = vpop.f32.mrb[0].mxu0
        %1005 = vdwg.mxu0
        %vm1006 = vcmask 64512
        %v1008 = vsel %vm1006, %v841, 0
        %v1011 = vsel %vm1006, %v922, 0
        %1013 = vmatprep.subr.mxu0 0.0
        %1014 = vmatpush1.xpose.msra.mxu0 %v1011
        %1015 = vmatprep.subr.mxu0 0.0
        %1016 = vmatpush1.xpose.msra.mxu0 0.0
        %1017 = vmatprep.subr.mxu0 0.0
        %1018 = vmatpush1.xpose.msra.mxu0 0.0
        %1019 = vmatprep.subr.mxu0 0.0
        %1020 = vmatpush1.xpose.msra.mxu0 0.0
        %1021 = vmatprep.subr.mxu0 0.0
        %1022 = vmatpush1.xpose.msra.mxu0 0.0
        %1023 = vmatprep.subr.mxu0 0.0
        %1024 = vmatpush1.xpose.msra.mxu0 0.0
        %1025 = vmatprep.subr.mxu0 0.0
        %1026 = vmatpush1.xpose.msra.mxu0 0.0
        %1027 = vmatprep.subr.mxu0 0.0
        %1028 = vmatpush1.xpose.msra.mxu0 0.0
        %1029 = vmatprep.subr.mxu0 0.0
        %1030 = vmatpush1.xpose.msra.mxu0 0.0
        %1031 = vmatprep.subr.mxu0 0.0
        %1032 = vmatpush1.xpose.msra.mxu0 0.0
        %1033 = vmatprep.subr.mxu0 0.0
        %1034 = vmatpush1.xpose.msra.mxu0 0.0
        %1035 = vmatprep.subr.mxu0 0.0
        %1036 = vmatpush1.xpose.msra.mxu0 0.0
        %1037 = vmatprep.subr.mxu0 0.0
        %1038 = vmatpush1.xpose.msra.mxu0 0.0
        %1039 = vmatprep.subr.mxu0 0.0
        %1040 = vmatpush1.xpose.msra.mxu0 0.0
        %1041 = vmatprep.subr.mxu0 0.0
        %1042 = vmatpush1.xpose.msra.mxu0 0.0
        %1043 = vmatprep.subr.mxu0 0.0
        %1044 = vmatpush1.xpose.msra.mxu0 0.0
        %1045 = vmatprep.subr.mxu0 0.0
        %1046 = vmatpush1.xpose.msra.mxu0 0.0
        %1047 = vmatprep.subr.mxu0 0.0
        %1048 = vmatpush1.xpose.msra.mxu0 0.0
        %1049 = vmatprep.subr.mxu0 0.0
        %1050 = vmatpush1.xpose.msra.mxu0 0.0
        %1051 = vmatprep.subr.mxu0 0.0
        %1052 = vmatpush1.xpose.msra.mxu0 0.0
        %1053 = vmatprep.subr.mxu0 0.0
        %1054 = vmatpush1.xpose.msra.mxu0 0.0
        %1055 = vmatprep.subr.mxu0 0.0
        %1056 = vmatpush1.xpose.msra.mxu0 0.0
        %1057 = vmatprep.subr.mxu0 0.0
        %1058 = vmatpush1.xpose.msra.mxu0 0.0
        %1059 = vmatprep.subr.mxu0 0.0
        %1060 = vmatpush1.xpose.msra.mxu0 0.0
        %1061 = vmatprep.subr.mxu0 0.0
        %1062 = vmatpush1.xpose.msra.mxu0 0.0
        %1063 = vmatprep.subr.mxu0 0.0
        %1064 = vmatpush1.xpose.msra.mxu0 0.0
        %1065 = vmatprep.subr.mxu0 0.0
        %1066 = vmatpush1.xpose.msra.mxu0 0.0
        %1067 = vmatprep.subr.mxu0 0.0
        %1068 = vmatpush1.xpose.msra.mxu0 0.0
        %1069 = vmatprep.subr.mxu0 0.0
        %1070 = vmatpush1.xpose.msra.mxu0 0.0
        %1071 = vmatprep.subr.mxu0 0.0
        %1072 = vmatpush1.xpose.msra.mxu0 0.0
        %1073 = vmatprep.subr.mxu0 0.0
        %1074 = vmatpush1.xpose.msra.mxu0 0.0
        %1075 = vmatprep.subr.mxu0 0.0
        %1076 = vmatpush1.xpose.msra.mxu0 0.0
        %1077 = vmatprep.mubr.f32.mxu0 0.0
        %1078 = vmatmul.mubr.f32.gmra.mrb[0].mxu0 %v1008
        %v1079 = vpop.f32.mrb[0].mxu0
        %v1080 = vadd.f32 0.0, %v1079
        %v1081 = vpop.f32.mrb[0].mxu0
        %1082 = vdwg.mxu0
        %v1083 = vmul.f32 %v1080, 0.35355338
        %v1085 = vlaneseq
        %v1086 = vshrl.u32 %v1085, 7
        %v1087 = vsub.s32 0, %v1086
        %v1088 = vrot.slane %v730, %v1087
        %v1090 = vadd.f32 %v1083, %v1088
        %v1091 = vsel %vm1006, %v1090, -inf
        %1092 = vmax.xlane.f32.xlu0 %v1091
        %v1093 = vpop.xlane.xlu0 %1092
        %v1094 = vsub.f32 %v1090, %v1093
        %v1095 = vmul.f32 %v1094, 1.442695
        %v1096 = vpow.pop %v1095
        %v1097 = vsel %vm1006, %v1096, 0.0
        %1098 = vadd.xlane.f32.xlu0 %v1097
        %v1099 = vpop.xlane.xlu0 %1098
        %v1100 = vrcp.pop %v1099
        %v1101 = vmul.f32 %v1096, %v1100
        %v1103 = vsel %vm1006, %v1101, 0
        %1105 = vmatprep.subr.mxu0 0.0
        %1106 = vmatpush1.msra.mxu0 %v1003
        %1107 = vmatprep.subr.mxu0 0.0
        %1108 = vmatpush1.msra.mxu0 0.0
        %1109 = vmatprep.subr.mxu0 0.0
        %1110 = vmatpush1.msra.mxu0 0.0
        %1111 = vmatprep.subr.mxu0 0.0
        %1112 = vmatpush1.msra.mxu0 0.0
        %1113 = vmatprep.subr.mxu0 0.0
        %1114 = vmatpush1.msra.mxu0 0.0
        %1115 = vmatprep.subr.mxu0 0.0
        %1116 = vmatpush1.msra.mxu0 0.0
        %1117 = vmatprep.subr.mxu0 0.0
        %1118 = vmatpush1.msra.mxu0 0.0
        %1119 = vmatprep.subr.mxu0 0.0
        %1120 = vmatpush1.msra.mxu0 0.0
        %1121 = vmatprep.subr.mxu0 0.0
        %1122 = vmatpush1.msra.mxu0 0.0
        %1123 = vmatprep.subr.mxu0 0.0
        %1124 = vmatpush1.msra.mxu0 0.0
        %1125 = vmatprep.subr.mxu0 0.0
        %1126 = vmatpush1.msra.mxu0 0.0
        %1127 = vmatprep.subr.mxu0 0.0
        %1128 = vmatpush1.msra.mxu0 0.0
        %1129 = vmatprep.subr.mxu0 0.0
        %1130 = vmatpush1.msra.mxu0 0.0
        %1131 = vmatprep.subr.mxu0 0.0
        %1132 = vmatpush1.msra.mxu0 0.0
        %1133 = vmatprep.subr.mxu0 0.0
        %1134 = vmatpush1.msra.mxu0 0.0
        %1135 = vmatprep.subr.mxu0 0.0
        %1136 = vmatpush1.msra.mxu0 0.0
        %1137 = vmatprep.subr.mxu0 0.0
        %1138 = vmatpush1.msra.mxu0 0.0
        %1139 = vmatprep.subr.mxu0 0.0
        %1140 = vmatpush1.msra.mxu0 0.0
        %1141 = vmatprep.subr.mxu0 0.0
        %1142 = vmatpush1.msra.mxu0 0.0
        %1143 = vmatprep.subr.mxu0 0.0
        %1144 = vmatpush1.msra.mxu0 0.0
        %1145 = vmatprep.subr.mxu0 0.0
        %1146 = vmatpush1.msra.mxu0 0.0
        %1147 = vmatprep.subr.mxu0 0.0
        %1148 = vmatpush1.msra.mxu0 0.0
        %1149 = vmatprep.subr.mxu0 0.0
        %1150 = vmatpush1.msra.mxu0 0.0
        %1151 = vmatprep.subr.mxu0 0.0
        %1152 = vmatpush1.msra.mxu0 0.0
        %1153 = vmatprep.subr.mxu0 0.0
        %1154 = vmatpush1.msra.mxu0 0.0
        %1155 = vmatprep.subr.mxu0 0.0
        %1156 = vmatpush1.msra.mxu0 0.0
        %1157 = vmatprep.subr.mxu0 0.0
        %1158 = vmatpush1.msra.mxu0 0.0
        %1159 = vmatprep.subr.mxu0 0.0
        %1160 = vmatpush1.msra.mxu0 0.0
        %1161 = vmatprep.subr.mxu0 0.0
        %1162 = vmatpush1.msra.mxu0 0.0
        %1163 = vmatprep.subr.mxu0 0.0
        %1164 = vmatpush1.msra.mxu0 0.0
        %1165 = vmatprep.subr.mxu0 0.0
        %1166 = vmatpush1.msra.mxu0 0.0
        %1167 = vmatprep.subr.mxu0 0.0
        %1168 = vmatpush1.msra.mxu0 0.0
        %1169 = vmatprep.mubr.f32.mxu0 0.0
        %1170 = vmatmul.mubr.f32.gmra.mrb[0].mxu0 %v1103
        %v1171 = vpop.f32.mrb[0].mxu0
        %v1172 = vadd.f32 0.0, %v1171
        %v1173 = vpop.f32.mrb[0].mxu0
        %1174 = vdwg.mxu0
        %v1175 = vld [vmem:[%s9] sm:$0xff]
        %s1176 = scalar_lea.vmem %s3, 32
        %v1177 = vld [vmem:[%s1176] sm:$0xff]
        %v1178 = vld [vmem:[%s1176 + $0x8] sm:$0xff]
        %v1179 = vld [vmem:[%s1176 + $0x10] sm:$0xff]
        %v1180 = vld [vmem:[%s1176 + $0x18] sm:$0xff]
        %s1181 = scalar_lea.vmem %s4, 1
        %v1182 = vld [vmem:[%s1181] sm:$0x1]
        %v1184 = vlaneseq
        %v1185 = vshrl.u32 %v1184, 7
        %v1186 = vsub.s32 0, %v1185
        %v1187 = vrot.slane %v1182, %v1186
        %1189 = vmatprep.subr.mxu0 0.0
        %1190 = vmatpush1.msra.mxu0 %v1177
        %1191 = vmatprep.subr.mxu0 0.0
        %1192 = vmatpush1.msra.mxu0 %v1178
        %1193 = vmatprep.subr.mxu0 0.0
        %1194 = vmatpush1.msra.mxu0 %v1179
        %1195 = vmatprep.subr.mxu0 0.0
        %1196 = vmatpush1.msra.mxu0 %v1180
        %1197 = vmatprep.subr.mxu0 0.0
        %1198 = vmatpush1.msra.mxu0 0.0
        %1199 = vmatprep.subr.mxu0 0.0
        %1200 = vmatpush1.msra.mxu0 0.0
        %1201 = vmatprep.subr.mxu0 0.0
        %1202 = vmatpush1.msra.mxu0 0.0
        %1203 = vmatprep.subr.mxu0 0.0
        %1204 = vmatpush1.msra.mxu0 0.0
        %1205 = vmatprep.subr.mxu0 0.0
        %1206 = vmatpush1.msra.mxu0 0.0
        %1207 = vmatprep.subr.mxu0 0.0
        %1208 = vmatpush1.msra.mxu0 0.0
        %1209 = vmatprep.subr.mxu0 0.0
        %1210 = vmatpush1.msra.mxu0 0.0
        %1211 = vmatprep.subr.mxu0 0.0
        %1212 = vmatpush1.msra.mxu0 0.0
        %1213 = vmatprep.subr.mxu0 0.0
        %1214 = vmatpush1.msra.mxu0 0.0
        %1215 = vmatprep.subr.mxu0 0.0
        %1216 = vmatpush1.msra.mxu0 0.0
        %1217 = vmatprep.subr.mxu0 0.0
        %1218 = vmatpush1.msra.mxu0 0.0
        %1219 = vmatprep.subr.mxu0 0.0
        %1220 = vmatpush1.msra.mxu0 0.0
        %1221 = vmatprep.subr.mxu0 0.0
        %1222 = vmatpush1.msra.mxu0 0.0
        %1223 = vmatprep.subr.mxu0 0.0
        %1224 = vmatpush1.msra.mxu0 0.0
        %1225 = vmatprep.subr.mxu0 0.0
        %1226 = vmatpush1.msra.mxu0 0.0
        %1227 = vmatprep.subr.mxu0 0.0
        %1228 = vmatpush1.msra.mxu0 0.0
        %1229 = vmatprep.subr.mxu0 0.0
        %1230 = vmatpush1.msra.mxu0 0.0
        %1231 = vmatprep.subr.mxu0 0.0
        %1232 = vmatpush1.msra.mxu0 0.0
        %1233 = vmatprep.subr.mxu0 0.0
        %1234 = vmatpush1.msra.mxu0 0.0
        %1235 = vmatprep.subr.mxu0 0.0
        %1236 = vmatpush1.msra.mxu0 0.0
        %1237 = vmatprep.subr.mxu0 0.0
        %1238 = vmatpush1.msra.mxu0 0.0
        %1239 = vmatprep.subr.mxu0 0.0
        %1240 = vmatpush1.msra.mxu0 0.0
        %1241 = vmatprep.subr.mxu0 0.0
        %1242 = vmatpush1.msra.mxu0 0.0
        %1243 = vmatprep.subr.mxu0 0.0
        %1244 = vmatpush1.msra.mxu0 0.0
        %1245 = vmatprep.subr.mxu0 0.0
        %1246 = vmatpush1.msra.mxu0 0.0
        %1247 = vmatprep.subr.mxu0 0.0
        %1248 = vmatpush1.msra.mxu0 0.0
        %1249 = vmatprep.subr.mxu0 0.0
        %1250 = vmatpush1.msra.mxu0 0.0
        %1251 = vmatprep.subr.mxu0 0.0
        %1252 = vmatpush1.msra.mxu0 0.0
        %1253 = vmatprep.mubr.f32.mxu0 0.0
        %1254 = vmatmul.mubr.f32.gmra.mrb[0].mxu0 %v772
        %v1255 = vpop.f32.mrb[0].mxu0
        %v1256 = vadd.f32 %v1187, %v1255
        %v1257 = vpop.f32.mrb[0].mxu0
        %1258 = vdwg.mxu0
        %s1259 = scalar_lea.vmem %s5, 32
        %v1260 = vld [vmem:[%s1259] sm:$0xff]
        %v1261 = vld [vmem:[%s1259 + $0x8] sm:$0xff]
        %v1262 = vld [vmem:[%s1259 + $0x10] sm:$0xff]
        %v1263 = vld [vmem:[%s1259 + $0x18] sm:$0xff]
        %s1264 = scalar_lea.vmem %s6, 1
        %v1265 = vld [vmem:[%s1264] sm:$0x1]
        %v1267 = vlaneseq
        %v1268 = vshrl.u32 %v1267, 7
        %v1269 = vsub.s32 0, %v1268
        %v1270 = vrot.slane %v1265, %v1269
        %1272 = vmatprep.subr.mxu0 0.0
        %1273 = vmatpush1.msra.mxu0 %v1260
        %1274 = vmatprep.subr.mxu0 0.0
        %1275 = vmatpush1.msra.mxu0 %v1261
        %1276 = vmatprep.subr.mxu0 0.0
        %1277 = vmatpush1.msra.mxu0 %v1262
        %1278 = vmatprep.subr.mxu0 0.0
        %1279 = vmatpush1.msra.mxu0 %v1263
        %1280 = vmatprep.subr.mxu0 0.0
        %1281 = vmatpush1.msra.mxu0 0.0
        %1282 = vmatprep.subr.mxu0 0.0
        %1283 = vmatpush1.msra.mxu0 0.0
        %1284 = vmatprep.subr.mxu0 0.0
        %1285 = vmatpush1.msra.mxu0 0.0
        %1286 = vmatprep.subr.mxu0 0.0
        %1287 = vmatpush1.msra.mxu0 0.0
        %1288 = vmatprep.subr.mxu0 0.0
        %1289 = vmatpush1.msra.mxu0 0.0
        %1290 = vmatprep.subr.mxu0 0.0
        %1291 = vmatpush1.msra.mxu0 0.0
        %1292 = vmatprep.subr.mxu0 0.0
        %1293 = vmatpush1.msra.mxu0 0.0
        %1294 = vmatprep.subr.mxu0 0.0
        %1295 = vmatpush1.msra.mxu0 0.0
        %1296 = vmatprep.subr.mxu0 0.0
        %1297 = vmatpush1.msra.mxu0 0.0
        %1298 = vmatprep.subr.mxu0 0.0
        %1299 = vmatpush1.msra.mxu0 0.0
        %1300 = vmatprep.subr.mxu0 0.0
        %1301 = vmatpush1.msra.mxu0 0.0
        %1302 = vmatprep.subr.mxu0 0.0
        %1303 = vmatpush1.msra.mxu0 0.0
        %1304 = vmatprep.subr.mxu0 0.0
        %1305 = vmatpush1.msra.mxu0 0.0
        %1306 = vmatprep.subr.mxu0 0.0
        %1307 = vmatpush1.msra.mxu0 0.0
        %1308 = vmatprep.subr.mxu0 0.0
        %1309 = vmatpush1.msra.mxu0 0.0
        %1310 = vmatprep.subr.mxu0 0.0
        %1311 = vmatpush1.msra.mxu0 0.0
        %1312 = vmatprep.subr.mxu0 0.0
        %1313 = vmatpush1.msra.mxu0 0.0
        %1314 = vmatprep.subr.mxu0 0.0
        %1315 = vmatpush1.msra.mxu0 0.0
        %1316 = vmatprep.subr.mxu0 0.0
        %1317 = vmatpush1.msra.mxu0 0.0
        %1318 = vmatprep.subr.mxu0 0.0
        %1319 = vmatpush1.msra.mxu0 0.0
        %1320 = vmatprep.subr.mxu0 0.0
        %1321 = vmatpush1.msra.mxu0 0.0
        %1322 = vmatprep.subr.mxu0 0.0
        %1323 = vmatpush1.msra.mxu0 0.0
        %1324 = vmatprep.subr.mxu0 0.0
        %1325 = vmatpush1.msra.mxu0 0.0
        %1326 = vmatprep.subr.mxu0 0.0
        %1327 = vmatpush1.msra.mxu0 0.0
        %1328 = vmatprep.subr.mxu0 0.0
        %1329 = vmatpush1.msra.mxu0 0.0
        %1330 = vmatprep.subr.mxu0 0.0
        %1331 = vmatpush1.msra.mxu0 0.0
        %1332 = vmatprep.subr.mxu0 0.0
        %1333 = vmatpush1.msra.mxu0 0.0
        %1334 = vmatprep.subr.mxu0 0.0
        %1335 = vmatpush1.msra.mxu0 0.0
        %1336 = vmatprep.mubr.f32.mxu0 0.0
        %1337 = vmatmul.mubr.f32.gmra.mrb[0].mxu0 %v772
        %v1338 = vpop.f32.mrb[0].mxu0
        %v1339 = vadd.f32 %v1270, %v1338
        %v1340 = vpop.f32.mrb[0].mxu0
        %1341 = vdwg.mxu0
        %s1342 = scalar_lea.vmem %s7, 32
        %v1343 = vld [vmem:[%s1342] sm:$0xff]
        %v1344 = vld [vmem:[%s1342 + $0x8] sm:$0xff]
        %v1345 = vld [vmem:[%s1342 + $0x10] sm:$0xff]
        %v1346 = vld [vmem:[%s1342 + $0x18] sm:$0xff]
        %s1347 = scalar_lea.vmem %s8, 1
        %v1348 = vld [vmem:[%s1347] sm:$0x1]
        %v1350 = vlaneseq
        %v1351 = vshrl.u32 %v1350, 7
        %v1352 = vsub.s32 0, %v1351
        %v1353 = vrot.slane %v1348, %v1352
        %1355 = vmatprep.subr.mxu0 0.0
        %1356 = vmatpush1.msra.mxu0 %v1343
        %1357 = vmatprep.subr.mxu0 0.0
        %1358 = vmatpush1.msra.mxu0 %v1344
        %1359 = vmatprep.subr.mxu0 0.0
        %1360 = vmatpush1.msra.mxu0 %v1345
        %1361 = vmatprep.subr.mxu0 0.0
        %1362 = vmatpush1.msra.mxu0 %v1346
        %1363 = vmatprep.subr.mxu0 0.0
        %1364 = vmatpush1.msra.mxu0 0.0
        %1365 = vmatprep.subr.mxu0 0.0
        %1366 = vmatpush1.msra.mxu0 0.0
        %1367 = vmatprep.subr.mxu0 0.0
        %1368 = vmatpush1.msra.mxu0 0.0
        %1369 = vmatprep.subr.mxu0 0.0
        %1370 = vmatpush1.msra.mxu0 0.0
        %1371 = vmatprep.subr.mxu0 0.0
        %1372 = vmatpush1.msra.mxu0 0.0
        %1373 = vmatprep.subr.mxu0 0.0
        %1374 = vmatpush1.msra.mxu0 0.0
        %1375 = vmatprep.subr.mxu0 0.0
        %1376 = vmatpush1.msra.mxu0 0.0
        %1377 = vmatprep.subr.mxu0 0.0
        %1378 = vmatpush1.msra.mxu0 0.0
        %1379 = vmatprep.subr.mxu0 0.0
        %1380 = vmatpush1.msra.mxu0 0.0
        %1381 = vmatprep.subr.mxu0 0.0
        %1382 = vmatpush1.msra.mxu0 0.0
        %1383 = vmatprep.subr.mxu0 0.0
        %1384 = vmatpush1.msra.mxu0 0.0
        %1385 = vmatprep.subr.mxu0 0.0
        %1386 = vmatpush1.msra.mxu0 0.0
        %1387 = vmatprep.subr.mxu0 0.0
        %1388 = vmatpush1.msra.mxu0 0.0
        %1389 = vmatprep.subr.mxu0 0.0
        %1390 = vmatpush1.msra.mxu0 0.0
        %1391 = vmatprep.subr.mxu0 0.0
        %1392 = vmatpush1.msra.mxu0 0.0
        %1393 = vmatprep.subr.mxu0 0.0
        %1394 = vmatpush1.msra.mxu0 0.0
        %1395 = vmatprep.subr.mxu0 0.0
        %1396 = vmatpush1.msra.mxu0 0.0
        %1397 = vmatprep.subr.mxu0 0.0
        %1398 = vmatpush1.msra.mxu0 0.0
        %1399 = vmatprep.subr.mxu0 0.0
        %1400 = vmatpush1.msra.mxu0 0.0
        %1401 = vmatprep.subr.mxu0 0.0
        %1402 = vmatpush1.msra.mxu0 0.0
        %1403 = vmatprep.subr.mxu0 0.0
        %1404 = vmatpush1.msra.mxu0 0.0
        %1405 = vmatprep.subr.mxu0 0.0
        %1406 = vmatpush1.msra.mxu0 0.0
        %1407 = vmatprep.subr.mxu0 0.0
        %1408 = vmatpush1.msra.mxu0 0.0
        %1409 = vmatprep.subr.mxu0 0.0
        %1410 = vmatpush1.msra.mxu0 0.0
        %1411 = vmatprep.subr.mxu0 0.0
        %1412 = vmatpush1.msra.mxu0 0.0
        %1413 = vmatprep.subr.mxu0 0.0
        %1414 = vmatpush1.msra.mxu0 0.0
        %1415 = vmatprep.subr.mxu0 0.0
        %1416 = vmatpush1.msra.mxu0 0.0
        %1417 = vmatprep.subr.mxu0 0.0
        %1418 = vmatpush1.msra.mxu0 0.0
        %1419 = vmatprep.mubr.f32.mxu0 0.0
        %1420 = vmatmul.mubr.f32.gmra.mrb[0].mxu0 %v772
        %v1421 = vpop.f32.mrb[0].mxu0
        %v1422 = vadd.f32 %v1353, %v1421
        %v1423 = vpop.f32.mrb[0].mxu0
        %1424 = vdwg.mxu0
        %v1426 = vsel %vm1006, %v1256, 0
        %v1429 = vsel %vm1006, %v1339, 0
        %1431 = vmatprep.subr.mxu0 0.0
        %1432 = vmatpush1.xpose.msra.mxu0 %v1429
        %1433 = vmatprep.subr.mxu0 0.0
        %1434 = vmatpush1.xpose.msra.mxu0 0.0
        %1435 = vmatprep.subr.mxu0 0.0
        %1436 = vmatpush1.xpose.msra.mxu0 0.0
        %1437 = vmatprep.subr.mxu0 0.0
        %1438 = vmatpush1.xpose.msra.mxu0 0.0
        %1439 = vmatprep.subr.mxu0 0.0
        %1440 = vmatpush1.xpose.msra.mxu0 0.0
        %1441 = vmatprep.subr.mxu0 0.0
        %1442 = vmatpush1.xpose.msra.mxu0 0.0
        %1443 = vmatprep.subr.mxu0 0.0
        %1444 = vmatpush1.xpose.msra.mxu0 0.0
        %1445 = vmatprep.subr.mxu0 0.0
        %1446 = vmatpush1.xpose.msra.mxu0 0.0
        %1447 = vmatprep.subr.mxu0 0.0
        %1448 = vmatpush1.xpose.msra.mxu0 0.0
        %1449 = vmatprep.subr.mxu0 0.0
        %1450 = vmatpush1.xpose.msra.mxu0 0.0
        %1451 = vmatprep.subr.mxu0 0.0
        %1452 = vmatpush1.xpose.msra.mxu0 0.0
        %1453 = vmatprep.subr.mxu0 0.0
        %1454 = vmatpush1.xpose.msra.mxu0 0.0
        %1455 = vmatprep.subr.mxu0 0.0
        %1456 = vmatpush1.xpose.msra.mxu0 0.0
        %1457 = vmatprep.subr.mxu0 0.0
        %1458 = vmatpush1.xpose.msra.mxu0 0.0
        %1459 = vmatprep.subr.mxu0 0.0
        %1460 = vmatpush1.xpose.msra.mxu0 0.0
        %1461 = vmatprep.subr.mxu0 0.0
        %1462 = vmatpush1.xpose.msra.mxu0 0.0
        %1463 = vmatprep.subr.mxu0 0.0
        %1464 = vmatpush1.xpose.msra.mxu0 0.0
        %1465 = vmatprep.subr.mxu0 0.0
        %1466 = vmatpush1.xpose.msra.mxu0 0.0
        %1467 = vmatprep.subr.mxu0 0.0
        %1468 = vmatpush1.xpose.msra.mxu0 0.0
        %1469 = vmatprep.subr.mxu0 0.0
        %1470 = vmatpush1.xpose.msra.mxu0 0.0
        %1471 = vmatprep.subr.mxu0 0.0
        %1472 = vmatpush1.xpose.msra.mxu0 0.0
        %1473 = vmatprep.subr.mxu0 0.0
        %1474 = vmatpush1.xpose.msra.mxu0 0.0
        %1475 = vmatprep.subr.mxu0 0.0
        %1476 = vmatpush1.xpose.msra.mxu0 0.0
        %1477 = vmatprep.subr.mxu0 0.0
        %1478 = vmatpush1.xpose.msra.mxu0 0.0
        %1479 = vmatprep.subr.mxu0 0.0
        %1480 = vmatpush1.xpose.msra.mxu0 0.0
        %1481 = vmatprep.subr.mxu0 0.0
        %1482 = vmatpush1.xpose.msra.mxu0 0.0
        %1483 = vmatprep.subr.mxu0 0.0
        %1484 = vmatpush1.xpose.msra.mxu0 0.0
        %1485 = vmatprep.subr.mxu0 0.0
        %1486 = vmatpush1.xpose.msra.mxu0 0.0
        %1487 = vmatprep.subr.mxu0 0.0
        %1488 = vmatpush1.xpose.msra.mxu0 0.0
        %1489 = vmatprep.subr.mxu0 0.0
        %1490 = vmatpush1.xpose.msra.mxu0 0.0
        %1491 = vmatprep.subr.mxu0 0.0
        %1492 = vmatpush1.xpose.msra.mxu0 0.0
        %1493 = vmatprep.subr.mxu0 0.0
        %1494 = vmatpush1.xpose.msra.mxu0 0.0
        %1495 = vmatprep.mubr.f32.mxu0 0.0
        %1496 = vmatmul.mubr.f32.gmra.mrb[0].mxu0 %v1426
        %v1497 = vpop.f32.mrb[0].mxu0
        %v1498 = vadd.f32 0.0, %v1497
        %v1499 = vpop.f32.mrb[0].mxu0
        %1500 = vdwg.mxu0
        %v1501 = vmul.f32 %v1498, 0.35355338
        %v1502 = vadd.f32 %v1501, %v1088
        %v1503 = vsel %vm1006, %v1502, -inf
        %1504 = vmax.xlane.f32.xlu0 %v1503
        %v1505 = vpop.xlane.xlu0 %1504
        %v1506 = vsub.f32 %v1502, %v1505
        %v1507 = vmul.f32 %v1506, 1.442695
        %v1508 = vpow.pop %v1507
        %v1509 = vsel %vm1006, %v1508, 0.0
        %1510 = vadd.xlane.f32.xlu0 %v1509
        %v1511 = vpop.xlane.xlu0 %1510
        %v1512 = vrcp.pop %v1511
        %v1513 = vmul.f32 %v1508, %v1512
        %v1515 = vsel %vm1006, %v1513, 0
        %1517 = vmatprep.subr.mxu0 0.0
        %1518 = vmatpush1.msra.mxu0 %v1422
        %1519 = vmatprep.subr.mxu0 0.0
        %1520 = vmatpush1.msra.mxu0 0.0
        %1521 = vmatprep.subr.mxu0 0.0
        %1522 = vmatpush1.msra.mxu0 0.0
        %1523 = vmatprep.subr.mxu0 0.0
        %1524 = vmatpush1.msra.mxu0 0.0
        %1525 = vmatprep.subr.mxu0 0.0
        %1526 = vmatpush1.msra.mxu0 0.0
        %1527 = vmatprep.subr.mxu0 0.0
        %1528 = vmatpush1.msra.mxu0 0.0
        %1529 = vmatprep.subr.mxu0 0.0
        %1530 = vmatpush1.msra.mxu0 0.0
        %1531 = vmatprep.subr.mxu0 0.0
        %1532 = vmatpush1.msra.mxu0 0.0
        %1533 = vmatprep.subr.mxu0 0.0
        %1534 = vmatpush1.msra.mxu0 0.0
        %1535 = vmatprep.subr.mxu0 0.0
        %1536 = vmatpush1.msra.mxu0 0.0
        %1537 = vmatprep.subr.mxu0 0.0
        %1538 = vmatpush1.msra.mxu0 0.0
        %1539 = vmatprep.subr.mxu0 0.0
        %1540 = vmatpush1.msra.mxu0 0.0
        %1541 = vmatprep.subr.mxu0 0.0
        %1542 = vmatpush1.msra.mxu0 0.0
        %1543 = vmatprep.subr.mxu0 0.0
        %1544 = vmatpush1.msra.mxu0 0.0
        %1545 = vmatprep.subr.mxu0 0.0
        %1546 = vmatpush1.msra.mxu0 0.0
        %1547 = vmatprep.subr.mxu0 0.0
        %1548 = vmatpush1.msra.mxu0 0.0
        %1549 = vmatprep.subr.mxu0 0.0
        %1550 = vmatpush1.msra.mxu0 0.0
        %1551 = vmatprep.subr.mxu0 0.0
        %1552 = vmatpush1.msra.mxu0 0.0
        %1553 = vmatprep.subr.mxu0 0.0
        %1554 = vmatpush1.msra.mxu0 0.0
        %1555 = vmatprep.subr.mxu0 0.0
        %1556 = vmatpush1.msra.mxu0 0.0
        %1557 = vmatprep.subr.mxu0 0.0
        %1558 = vmatpush1.msra.mxu0 0.0
        %1559 = vmatprep.subr.mxu0 0.0
        %1560 = vmatpush1.msra.mxu0 0.0
        %1561 = vmatprep.subr.mxu0 0.0
        %1562 = vmatpush1.msra.mxu0 0.0
        %1563 = vmatprep.subr.mxu0 0.0
        %1564 = vmatpush1.msra.mxu0 0.0
        %1565 = vmatprep.subr.mxu0 0.0
        %1566 = vmatpush1.msra.mxu0 0.0
        %1567 = vmatprep.subr.mxu0 0.0
        %1568 = vmatpush1.msra.mxu0 0.0
        %1569 = vmatprep.subr.mxu0 0.0
        %1570 = vmatpush1.msra.mxu0 0.0
        %1571 = vmatprep.subr.mxu0 0.0
        %1572 = vmatpush1.msra.mxu0 0.0
        %1573 = vmatprep.subr.mxu0 0.0
        %1574 = vmatpush1.msra.mxu0 0.0
        %1575 = vmatprep.subr.mxu0 0.0
        %1576 = vmatpush1.msra.mxu0 0.0
        %1577 = vmatprep.subr.mxu0 0.0
        %1578 = vmatpush1.msra.mxu0 0.0
        %1579 = vmatprep.subr.mxu0 0.0
        %1580 = vmatpush1.msra.mxu0 0.0
        %1581 = vmatprep.mubr.f32.mxu0 0.0
        %1582 = vmatmul.mubr.f32.gmra.mrb[0].mxu0 %v1515
        %v1583 = vpop.f32.mrb[0].mxu0
        %v1584 = vadd.f32 0.0, %v1583
        %v1585 = vpop.f32.mrb[0].mxu0
        %1586 = vdwg.mxu0
        %s1587 = scalar_lea.vmem %s9, 8
        %v1588 = vld [vmem:[%s1587] sm:$0xff]
        %v1590 = vsel %vm1006, %v1584, 0
        %1592 = vmatprep.subr.mxu0 0.0
        %1593 = vmatpush1.msra.mxu0 %v1588
        %1594 = vmatprep.subr.mxu0 0.0
        %1595 = vmatpush1.msra.mxu0 0.0
        %1596 = vmatprep.subr.mxu0 0.0
        %1597 = vmatpush1.msra.mxu0 0.0
        %1598 = vmatprep.subr.mxu0 0.0
        %1599 = vmatpush1.msra.mxu0 0.0
        %1600 = vmatprep.subr.mxu0 0.0
        %1601 = vmatpush1.msra.mxu0 0.0
        %1602 = vmatprep.subr.mxu0 0.0
        %1603 = vmatpush1.msra.mxu0 0.0
        %1604 = vmatprep.subr.mxu0 0.0
        %1605 = vmatpush1.msra.mxu0 0.0
        %1606 = vmatprep.subr.mxu0 0.0
        %1607 = vmatpush1.msra.mxu0 0.0
        %1608 = vmatprep.subr.mxu0 0.0
        %1609 = vmatpush1.msra.mxu0 0.0
        %1610 = vmatprep.subr.mxu0 0.0
        %1611 = vmatpush1.msra.mxu0 0.0
        %1612 = vmatprep.subr.mxu0 0.0
        %1613 = vmatpush1.msra.mxu0 0.0
        %1614 = vmatprep.subr.mxu0 0.0
        %1615 = vmatpush1.msra.mxu0 0.0
        %1616 = vmatprep.subr.mxu0 0.0
        %1617 = vmatpush1.msra.mxu0 0.0
        %1618 = vmatprep.subr.mxu0 0.0
        %1619 = vmatpush1.msra.mxu0 0.0
        %1620 = vmatprep.subr.mxu0 0.0
        %1621 = vmatpush1.msra.mxu0 0.0
        %1622 = vmatprep.subr.mxu0 0.0
        %1623 = vmatpush1.msra.mxu0 0.0
        %1624 = vmatprep.subr.mxu0 0.0
        %1625 = vmatpush1.msra.mxu0 0.0
        %1626 = vmatprep.subr.mxu0 0.0
        %1627 = vmatpush1.msra.mxu0 0.0
        %1628 = vmatprep.subr.mxu0 0.0
        %1629 = vmatpush1.msra.mxu0 0.0
        %1630 = vmatprep.subr.mxu0 0.0
        %1631 = vmatpush1.msra.mxu0 0.0
        %1632 = vmatprep.subr.mxu0 0.0
        %1633 = vmatpush1.msra.mxu0 0.0
        %1634 = vmatprep.subr.mxu0 0.0
        %1635 = vmatpush1.msra.mxu0 0.0
        %1636 = vmatprep.subr.mxu0 0.0
        %1637 = vmatpush1.msra.mxu0 0.0
        %1638 = vmatprep.subr.mxu0 0.0
        %1639 = vmatpush1.msra.mxu0 0.0
        %1640 = vmatprep.subr.mxu0 0.0
        %1641 = vmatpush1.msra.mxu0 0.0
        %1642 = vmatprep.subr.mxu0 0.0
        %1643 = vmatpush1.msra.mxu0 0.0
        %1644 = vmatprep.subr.mxu0 0.0
        %1645 = vmatpush1.msra.mxu0 0.0
        %1646 = vmatprep.subr.mxu0 0.0
        %1647 = vmatpush1.msra.mxu0 0.0
        %1648 = vmatprep.subr.mxu0 0.0
        %1649 = vmatpush1.msra.mxu0 0.0
        %1650 = vmatprep.subr.mxu0 0.0
        %1651 = vmatpush1.msra.mxu0 0.0
        %1652 = vmatprep.subr.mxu0 0.0
        %1653 = vmatpush1.msra.mxu0 0.0
        %1654 = vmatprep.subr.mxu0 0.0
        %1655 = vmatpush1.msra.mxu0 0.0
        %1656 = vmatprep.mubr.f32.mxu0 0.0
        %1657 = vmatmul.mubr.f32.gmra.mrb[0].mxu0 %v1590
        %v1658 = vpop.f32.mrb[0].mxu0
        %v1659 = vadd.f32 0.0, %v1658
        %v1660 = vpop.f32.mrb[0].mxu0
        %1661 = vdwg.mxu0
        %v1663 = vsel %vm1006, %v1172, 0
        %1665 = vmatprep.subr.mxu0 0.0
        %1666 = vmatpush1.msra.mxu0 %v1175
        %1667 = vmatprep.subr.mxu0 0.0
        %1668 = vmatpush1.msra.mxu0 0.0
        %1669 = vmatprep.subr.mxu0 0.0
        %1670 = vmatpush1.msra.mxu0 0.0
        %1671 = vmatprep.subr.mxu0 0.0
        %1672 = vmatpush1.msra.mxu0 0.0
        %1673 = vmatprep.subr.mxu0 0.0
        %1674 = vmatpush1.msra.mxu0 0.0
        %1675 = vmatprep.subr.mxu0 0.0
        %1676 = vmatpush1.msra.mxu0 0.0
        %1677 = vmatprep.subr.mxu0 0.0
        %1678 = vmatpush1.msra.mxu0 0.0
        %1679 = vmatprep.subr.mxu0 0.0
        %1680 = vmatpush1.msra.mxu0 0.0
        %1681 = vmatprep.subr.mxu0 0.0
        %1682 = vmatpush1.msra.mxu0 0.0
        %1683 = vmatprep.subr.mxu0 0.0
        %1684 = vmatpush1.msra.mxu0 0.0
        %1685 = vmatprep.subr.mxu0 0.0
        %1686 = vmatpush1.msra.mxu0 0.0
        %1687 = vmatprep.subr.mxu0 0.0
        %1688 = vmatpush1.msra.mxu0 0.0
        %1689 = vmatprep.subr.mxu0 0.0
        %1690 = vmatpush1.msra.mxu0 0.0
        %1691 = vmatprep.subr.mxu0 0.0
        %1692 = vmatpush1.msra.mxu0 0.0
        %1693 = vmatprep.subr.mxu0 0.0
        %1694 = vmatpush1.msra.mxu0 0.0
        %1695 = vmatprep.subr.mxu0 0.0
        %1696 = vmatpush1.msra.mxu0 0.0
        %1697 = vmatprep.subr.mxu0 0.0
        %1698 = vmatpush1.msra.mxu0 0.0
        %1699 = vmatprep.subr.mxu0 0.0
        %1700 = vmatpush1.msra.mxu0 0.0
        %1701 = vmatprep.subr.mxu0 0.0
        %1702 = vmatpush1.msra.mxu0 0.0
        %1703 = vmatprep.subr.mxu0 0.0
        %1704 = vmatpush1.msra.mxu0 0.0
        %1705 = vmatprep.subr.mxu0 0.0
        %1706 = vmatpush1.msra.mxu0 0.0
        %1707 = vmatprep.subr.mxu0 0.0
        %1708 = vmatpush1.msra.mxu0 0.0
        %1709 = vmatprep.subr.mxu0 0.0
        %1710 = vmatpush1.msra.mxu0 0.0
        %1711 = vmatprep.subr.mxu0 0.0
        %1712 = vmatpush1.msra.mxu0 0.0
        %1713 = vmatprep.subr.mxu0 0.0
        %1714 = vmatpush1.msra.mxu0 0.0
        %1715 = vmatprep.subr.mxu0 0.0
        %1716 = vmatpush1.msra.mxu0 0.0
        %1717 = vmatprep.subr.mxu0 0.0
        %1718 = vmatpush1.msra.mxu0 0.0
        %1719 = vmatprep.subr.mxu0 0.0
        %1720 = vmatpush1.msra.mxu0 0.0
        %1721 = vmatprep.subr.mxu0 0.0
        %1722 = vmatpush1.msra.mxu0 0.0
        %1723 = vmatprep.subr.mxu0 0.0
        %1724 = vmatpush1.msra.mxu0 0.0
        %1725 = vmatprep.subr.mxu0 0.0
        %1726 = vmatpush1.msra.mxu0 0.0
        %1727 = vmatprep.subr.mxu0 0.0
        %1728 = vmatpush1.msra.mxu0 0.0
        %1729 = vmatprep.mubr.f32.mxu0 0.0
        %1730 = vmatmul.mubr.f32.gmra.mrb[0].mxu0 %v1663
        %v1731 = vpop.f32.mrb[0].mxu0
        %v1732 = vadd.f32 %v1659, %v1731
        %v1733 = vpop.f32.mrb[0].mxu0
        %1734 = vdwg.mxu0
        %s1735 = scalar_lea.vmem %s3, 64
        %v1736 = vld [vmem:[%s1735] sm:$0xff]
        %v1737 = vld [vmem:[%s1735 + $0x8] sm:$0xff]
        %v1738 = vld [vmem:[%s1735 + $0x10] sm:$0xff]
        %v1739 = vld [vmem:[%s1735 + $0x18] sm:$0xff]
        %s1740 = scalar_lea.vmem %s4, 2
        %v1741 = vld [vmem:[%s1740] sm:$0x1]
        %v1743 = vlaneseq
        %v1744 = vshrl.u32 %v1743, 7
        %v1745 = vsub.s32 0, %v1744
        %v1746 = vrot.slane %v1741, %v1745
        %1748 = vmatprep.subr.mxu0 0.0
        %1749 = vmatpush1.msra.mxu0 %v1736
        %1750 = vmatprep.subr.mxu0 0.0
        %1751 = vmatpush1.msra.mxu0 %v1737
        %1752 = vmatprep.subr.mxu0 0.0
        %1753 = vmatpush1.msra.mxu0 %v1738
        %1754 = vmatprep.subr.mxu0 0.0
        %1755 = vmatpush1.msra.mxu0 %v1739
        %1756 = vmatprep.subr.mxu0 0.0
        %1757 = vmatpush1.msra.mxu0 0.0
        %1758 = vmatprep.subr.mxu0 0.0
        %1759 = vmatpush1.msra.mxu0 0.0
        %1760 = vmatprep.subr.mxu0 0.0
        %1761 = vmatpush1.msra.mxu0 0.0
        %1762 = vmatprep.subr.mxu0 0.0
        %1763 = vmatpush1.msra.mxu0 0.0
        %1764 = vmatprep.subr.mxu0 0.0
        %1765 = vmatpush1.msra.mxu0 0.0
        %1766 = vmatprep.subr.mxu0 0.0
        %1767 = vmatpush1.msra.mxu0 0.0
        %1768 = vmatprep.subr.mxu0 0.0
        %1769 = vmatpush1.msra.mxu0 0.0
        %1770 = vmatprep.subr.mxu0 0.0
        %1771 = vmatpush1.msra.mxu0 0.0
        %1772 = vmatprep.subr.mxu0 0.0
        %1773 = vmatpush1.msra.mxu0 0.0
        %1774 = vmatprep.subr.mxu0 0.0
        %1775 = vmatpush1.msra.mxu0 0.0
        %1776 = vmatprep.subr.mxu0 0.0
        %1777 = vmatpush1.msra.mxu0 0.0
        %1778 = vmatprep.subr.mxu0 0.0
        %1779 = vmatpush1.msra.mxu0 0.0
        %1780 = vmatprep.subr.mxu0 0.0
        %1781 = vmatpush1.msra.mxu0 0.0
        %1782 = vmatprep.subr.mxu0 0.0
        %1783 = vmatpush1.msra.mxu0 0.0
        %1784 = vmatprep.subr.mxu0 0.0
        %1785 = vmatpush1.msra.mxu0 0.0
        %1786 = vmatprep.subr.mxu0 0.0
        %1787 = vmatpush1.msra.mxu0 0.0
        %1788 = vmatprep.subr.mxu0 0.0
        %1789 = vmatpush1.msra.mxu0 0.0
        %1790 = vmatprep.subr.mxu0 0.0
        %1791 = vmatpush1.msra.mxu0 0.0
        %1792 = vmatprep.subr.mxu0 0.0
        %1793 = vmatpush1.msra.mxu0 0.0
        %1794 = vmatprep.subr.mxu0 0.0
        %1795 = vmatpush1.msra.mxu0 0.0
        %1796 = vmatprep.subr.mxu0 0.0
        %1797 = vmatpush1.msra.mxu0 0.0
        %1798 = vmatprep.subr.mxu0 0.0
        %1799 = vmatpush1.msra.mxu0 0.0
        %1800 = vmatprep.subr.mxu0 0.0
        %1801 = vmatpush1.msra.mxu0 0.0
        %1802 = vmatprep.subr.mxu0 0.0
        %1803 = vmatpush1.msra.mxu0 0.0
        %1804 = vmatprep.subr.mxu0 0.0
        %1805 = vmatpush1.msra.mxu0 0.0
        %1806 = vmatprep.subr.mxu0 0.0
        %1807 = vmatpush1.msra.mxu0 0.0
        %1808 = vmatprep.subr.mxu0 0.0
        %1809 = vmatpush1.msra.mxu0 0.0
        %1810 = vmatprep.subr.mxu0 0.0
        %1811 = vmatpush1.msra.mxu0 0.0
        %1812 = vmatprep.mubr.f32.mxu0 0.0
        %1813 = vmatmul.mubr.f32.gmra.mrb[0].mxu0 %v772
        %v1814 = vpop.f32.mrb[0].mxu0
        %v1815 = vadd.f32 %v1746, %v1814
        %v1816 = vpop.f32.mrb[0].mxu0
        %1817 = vdwg.mxu0
        %s1818 = scalar_lea.vmem %s5, 64
        %v1819 = vld [vmem:[%s1818] sm:$0xff]
        %v1820 = vld [vmem:[%s1818 + $0x8] sm:$0xff]
        %v1821 = vld [vmem:[%s1818 + $0x10] sm:$0xff]
        %v1822 = vld [vmem:[%s1818 + $0x18] sm:$0xff]
        %s1823 = scalar_lea.vmem %s6, 2
        %v1824 = vld [vmem:[%s1823] sm:$0x1]
        %v1826 = vlaneseq
        %v1827 = vshrl.u32 %v1826, 7
        %v1828 = vsub.s32 0, %v1827
        %v1829 = vrot.slane %v1824, %v1828
        %1831 = vmatprep.subr.mxu0 0.0
        %1832 = vmatpush1.msra.mxu0 %v1819
        %1833 = vmatprep.subr.mxu0 0.0
        %1834 = vmatpush1.msra.mxu0 %v1820
        %1835 = vmatprep.subr.mxu0 0.0
        %1836 = vmatpush1.msra.mxu0 %v1821
        %1837 = vmatprep.subr.mxu0 0.0
        %1838 = vmatpush1.msra.mxu0 %v1822
        %1839 = vmatprep.subr.mxu0 0.0
        %1840 = vmatpush1.msra.mxu0 0.0
        %1841 = vmatprep.subr.mxu0 0.0
        %1842 = vmatpush1.msra.mxu0 0.0
        %1843 = vmatprep.subr.mxu0 0.0
        %1844 = vmatpush1.msra.mxu0 0.0
        %1845 = vmatprep.subr.mxu0 0.0
        %1846 = vmatpush1.msra.mxu0 0.0
        %1847 = vmatprep.subr.mxu0 0.0
        %1848 = vmatpush1.msra.mxu0 0.0
        %1849 = vmatprep.subr.mxu0 0.0
        %1850 = vmatpush1.msra.mxu0 0.0
        %1851 = vmatprep.subr.mxu0 0.0
        %1852 = vmatpush1.msra.mxu0 0.0
        %1853 = vmatprep.subr.mxu0 0.0
        %1854 = vmatpush1.msra.mxu0 0.0
        %1855 = vmatprep.subr.mxu0 0.0
        %1856 = vmatpush1.msra.mxu0 0.0
        %1857 = vmatprep.subr.mxu0 0.0
        %1858 = vmatpush1.msra.mxu0 0.0
        %1859 = vmatprep.subr.mxu0 0.0
        %1860 = vmatpush1.msra.mxu0 0.0
        %1861 = vmatprep.subr.mxu0 0.0
        %1862 = vmatpush1.msra.mxu0 0.0
        %1863 = vmatprep.subr.mxu0 0.0
        %1864 = vmatpush1.msra.mxu0 0.0
        %1865 = vmatprep.subr.mxu0 0.0
        %1866 = vmatpush1.msra.mxu0 0.0
        %1867 = vmatprep.subr.mxu0 0.0
        %1868 = vmatpush1.msra.mxu0 0.0
        %1869 = vmatprep.subr.mxu0 0.0
        %1870 = vmatpush1.msra.mxu0 0.0
        %1871 = vmatprep.subr.mxu0 0.0
        %1872 = vmatpush1.msra.mxu0 0.0
        %1873 = vmatprep.subr.mxu0 0.0
        %1874 = vmatpush1.msra.mxu0 0.0
        %1875 = vmatprep.subr.mxu0 0.0
        %1876 = vmatpush1.msra.mxu0 0.0
        %1877 = vmatprep.subr.mxu0 0.0
        %1878 = vmatpush1.msra.mxu0 0.0
        %1879 = vmatprep.subr.mxu0 0.0
        %1880 = vmatpush1.msra.mxu0 0.0
        %1881 = vmatprep.subr.mxu0 0.0
        %1882 = vmatpush1.msra.mxu0 0.0
        %1883 = vmatprep.subr.mxu0 0.0
        %1884 = vmatpush1.msra.mxu0 0.0
        %1885 = vmatprep.subr.mxu0 0.0
        %1886 = vmatpush1.msra.mxu0 0.0
        %1887 = vmatprep.subr.mxu0 0.0
        %1888 = vmatpush1.msra.mxu0 0.0
        %1889 = vmatprep.subr.mxu0 0.0
        %1890 = vmatpush1.msra.mxu0 0.0
        %1891 = vmatprep.subr.mxu0 0.0
        %1892 = vmatpush1.msra.mxu0 0.0
        %1893 = vmatprep.subr.mxu0 0.0
        %1894 = vmatpush1.msra.mxu0 0.0
        %1895 = vmatprep.mubr.f32.mxu0 0.0
        %1896 = vmatmul.mubr.f32.gmra.mrb[0].mxu0 %v772
        %v1897 = vpop.f32.mrb[0].mxu0
        %v1898 = vadd.f32 %v1829, %v1897
        %v1899 = vpop.f32.mrb[0].mxu0
        %1900 = vdwg.mxu0
        %s1901 = scalar_lea.vmem %s7, 64
        %v1902 = vld [vmem:[%s1901] sm:$0xff]
        %v1903 = vld [vmem:[%s1901 + $0x8] sm:$0xff]
        %v1904 = vld [vmem:[%s1901 + $0x10] sm:$0xff]
        %v1905 = vld [vmem:[%s1901 + $0x18] sm:$0xff]
        %s1906 = scalar_lea.vmem %s8, 2
        %v1907 = vld [vmem:[%s1906] sm:$0x1]
        %v1909 = vlaneseq
        %v1910 = vshrl.u32 %v1909, 7
        %v1911 = vsub.s32 0, %v1910
        %v1912 = vrot.slane %v1907, %v1911
        %1914 = vmatprep.subr.mxu0 0.0
        %1915 = vmatpush1.msra.mxu0 %v1902
        %1916 = vmatprep.subr.mxu0 0.0
        %1917 = vmatpush1.msra.mxu0 %v1903
        %1918 = vmatprep.subr.mxu0 0.0
        %1919 = vmatpush1.msra.mxu0 %v1904
        %1920 = vmatprep.subr.mxu0 0.0
        %1921 = vmatpush1.msra.mxu0 %v1905
        %1922 = vmatprep.subr.mxu0 0.0
        %1923 = vmatpush1.msra.mxu0 0.0
        %1924 = vmatprep.subr.mxu0 0.0
        %1925 = vmatpush1.msra.mxu0 0.0
        %1926 = vmatprep.subr.mxu0 0.0
        %1927 = vmatpush1.msra.mxu0 0.0
        %1928 = vmatprep.subr.mxu0 0.0
        %1929 = vmatpush1.msra.mxu0 0.0
        %1930 = vmatprep.subr.mxu0 0.0
        %1931 = vmatpush1.msra.mxu0 0.0
        %1932 = vmatprep.subr.mxu0 0.0
        %1933 = vmatpush1.msra.mxu0 0.0
        %1934 = vmatprep.subr.mxu0 0.0
        %1935 = vmatpush1.msra.mxu0 0.0
        %1936 = vmatprep.subr.mxu0 0.0
        %1937 = vmatpush1.msra.mxu0 0.0
        %1938 = vmatprep.subr.mxu0 0.0
        %1939 = vmatpush1.msra.mxu0 0.0
        %1940 = vmatprep.subr.mxu0 0.0
        %1941 = vmatpush1.msra.mxu0 0.0
        %1942 = vmatprep.subr.mxu0 0.0
        %1943 = vmatpush1.msra.mxu0 0.0
        %1944 = vmatprep.subr.mxu0 0.0
        %1945 = vmatpush1.msra.mxu0 0.0
        %1946 = vmatprep.subr.mxu0 0.0
        %1947 = vmatpush1.msra.mxu0 0.0
        %1948 = vmatprep.subr.mxu0 0.0
        %1949 = vmatpush1.msra.mxu0 0.0
        %1950 = vmatprep.subr.mxu0 0.0
        %1951 = vmatpush1.msra.mxu0 0.0
        %1952 = vmatprep.subr.mxu0 0.0
        %1953 = vmatpush1.msra.mxu0 0.0
        %1954 = vmatprep.subr.mxu0 0.0
        %1955 = vmatpush1.msra.mxu0 0.0
        %1956 = vmatprep.subr.mxu0 0.0
        %1957 = vmatpush1.msra.mxu0 0.0
        %1958 = vmatprep.subr.mxu0 0.0
        %1959 = vmatpush1.msra.mxu0 0.0
        %1960 = vmatprep.subr.mxu0 0.0
        %1961 = vmatpush1.msra.mxu0 0.0
        %1962 = vmatprep.subr.mxu0 0.0
        %1963 = vmatpush1.msra.mxu0 0.0
        %1964 = vmatprep.subr.mxu0 0.0
        %1965 = vmatpush1.msra.mxu0 0.0
        %1966 = vmatprep.subr.mxu0 0.0
        %1967 = vmatpush1.msra.mxu0 0.0
        %1968 = vmatprep.subr.mxu0 0.0
        %1969 = vmatpush1.msra.mxu0 0.0
        %1970 = vmatprep.subr.mxu0 0.0
        %1971 = vmatpush1.msra.mxu0 0.0
        %1972 = vmatprep.subr.mxu0 0.0
        %1973 = vmatpush1.msra.mxu0 0.0
        %1974 = vmatprep.subr.mxu0 0.0
        %1975 = vmatpush1.msra.mxu0 0.0
        %1976 = vmatprep.subr.mxu0 0.0
        %1977 = vmatpush1.msra.mxu0 0.0
        %1978 = vmatprep.mubr.f32.mxu0 0.0
        %1979 = vmatmul.mubr.f32.gmra.mrb[0].mxu0 %v772
        %v1980 = vpop.f32.mrb[0].mxu0
        %v1981 = vadd.f32 %v1912, %v1980
        %v1982 = vpop.f32.mrb[0].mxu0
        %1983 = vdwg.mxu0
        %v1985 = vsel %vm1006, %v1815, 0
        %v1988 = vsel %vm1006, %v1898, 0
        %1990 = vmatprep.subr.mxu0 0.0
        %1991 = vmatpush1.xpose.msra.mxu0 %v1988
        %1992 = vmatprep.subr.mxu0 0.0
        %1993 = vmatpush1.xpose.msra.mxu0 0.0
        %1994 = vmatprep.subr.mxu0 0.0
        %1995 = vmatpush1.xpose.msra.mxu0 0.0
        %1996 = vmatprep.subr.mxu0 0.0
        %1997 = vmatpush1.xpose.msra.mxu0 0.0
        %1998 = vmatprep.subr.mxu0 0.0
        %1999 = vmatpush1.xpose.msra.mxu0 0.0
        %2000 = vmatprep.subr.mxu0 0.0
        %2001 = vmatpush1.xpose.msra.mxu0 0.0
        %2002 = vmatprep.subr.mxu0 0.0
        %2003 = vmatpush1.xpose.msra.mxu0 0.0
        %2004 = vmatprep.subr.mxu0 0.0
        %2005 = vmatpush1.xpose.msra.mxu0 0.0
        %2006 = vmatprep.subr.mxu0 0.0
        %2007 = vmatpush1.xpose.msra.mxu0 0.0
        %2008 = vmatprep.subr.mxu0 0.0
        %2009 = vmatpush1.xpose.msra.mxu0 0.0
        %2010 = vmatprep.subr.mxu0 0.0
        %2011 = vmatpush1.xpose.msra.mxu0 0.0
        %2012 = vmatprep.subr.mxu0 0.0
        %2013 = vmatpush1.xpose.msra.mxu0 0.0
        %2014 = vmatprep.subr.mxu0 0.0
        %2015 = vmatpush1.xpose.msra.mxu0 0.0
        %2016 = vmatprep.subr.mxu0 0.0
        %2017 = vmatpush1.xpose.msra.mxu0 0.0
        %2018 = vmatprep.subr.mxu0 0.0
        %2019 = vmatpush1.xpose.msra.mxu0 0.0
        %2020 = vmatprep.subr.mxu0 0.0
        %2021 = vmatpush1.xpose.msra.mxu0 0.0
        %2022 = vmatprep.subr.mxu0 0.0
        %2023 = vmatpush1.xpose.msra.mxu0 0.0
        %2024 = vmatprep.subr.mxu0 0.0
        %2025 = vmatpush1.xpose.msra.mxu0 0.0
        %2026 = vmatprep.subr.mxu0 0.0
        %2027 = vmatpush1.xpose.msra.mxu0 0.0
        %2028 = vmatprep.subr.mxu0 0.0
        %2029 = vmatpush1.xpose.msra.mxu0 0.0
        %2030 = vmatprep.subr.mxu0 0.0
        %2031 = vmatpush1.xpose.msra.mxu0 0.0
        %2032 = vmatprep.subr.mxu0 0.0
        %2033 = vmatpush1.xpose.msra.mxu0 0.0
        %2034 = vmatprep.subr.mxu0 0.0
        %2035 = vmatpush1.xpose.msra.mxu0 0.0
        %2036 = vmatprep.subr.mxu0 0.0
        %2037 = vmatpush1.xpose.msra.mxu0 0.0
        %2038 = vmatprep.subr.mxu0 0.0
        %2039 = vmatpush1.xpose.msra.mxu0 0.0
        %2040 = vmatprep.subr.mxu0 0.0
        %2041 = vmatpush1.xpose.msra.mxu0 0.0
        %2042 = vmatprep.subr.mxu0 0.0
        %2043 = vmatpush1.xpose.msra.mxu0 0.0
        %2044 = vmatprep.subr.mxu0 0.0
        %2045 = vmatpush1.xpose.msra.mxu0 0.0
        %2046 = vmatprep.subr.mxu0 0.0
        %2047 = vmatpush1.xpose.msra.mxu0 0.0
        %2048 = vmatprep.subr.mxu0 0.0
        %2049 = vmatpush1.xpose.msra.mxu0 0.0
        %2050 = vmatprep.subr.mxu0 0.0
        %2051 = vmatpush1.xpose.msra.mxu0 0.0
        %2052 = vmatprep.subr.mxu0 0.0
        %2053 = vmatpush1.xpose.msra.mxu0 0.0
        %2054 = vmatprep.mubr.f32.mxu0 0.0
        %2055 = vmatmul.mubr.f32.gmra.mrb[0].mxu0 %v1985
        %v2056 = vpop.f32.mrb[0].mxu0
        %v2057 = vadd.f32 0.0, %v2056
        %v2058 = vpop.f32.mrb[0].mxu0
        %2059 = vdwg.mxu0
        %v2060 = vmul.f32 %v2057, 0.35355338
        %v2061 = vadd.f32 %v2060, %v1088
        %v2062 = vsel %vm1006, %v2061, -inf
        %2063 = vmax.xlane.f32.xlu0 %v2062
        %v2064 = vpop.xlane.xlu0 %2063
        %v2065 = vsub.f32 %v2061, %v2064
        %v2066 = vmul.f32 %v2065, 1.442695
        %v2067 = vpow.pop %v2066
        %v2068 = vsel %vm1006, %v2067, 0.0
        %2069 = vadd.xlane.f32.xlu0 %v2068
        %v2070 = vpop.xlane.xlu0 %2069
        %v2071 = vrcp.pop %v2070
        %v2072 = vmul.f32 %v2067, %v2071
        %v2074 = vsel %vm1006, %v2072, 0
        %2076 = vmatprep.subr.mxu0 0.0
        %2077 = vmatpush1.msra.mxu0 %v1981
        %2078 = vmatprep.subr.mxu0 0.0
        %2079 = vmatpush1.msra.mxu0 0.0
        %2080 = vmatprep.subr.mxu0 0.0
        %2081 = vmatpush1.msra.mxu0 0.0
        %2082 = vmatprep.subr.mxu0 0.0
        %2083 = vmatpush1.msra.mxu0 0.0
        %2084 = vmatprep.subr.mxu0 0.0
        %2085 = vmatpush1.msra.mxu0 0.0
        %2086 = vmatprep.subr.mxu0 0.0
        %2087 = vmatpush1.msra.mxu0 0.0
        %2088 = vmatprep.subr.mxu0 0.0
        %2089 = vmatpush1.msra.mxu0 0.0
        %2090 = vmatprep.subr.mxu0 0.0
        %2091 = vmatpush1.msra.mxu0 0.0
        %2092 = vmatprep.subr.mxu0 0.0
        %2093 = vmatpush1.msra.mxu0 0.0
        %2094 = vmatprep.subr.mxu0 0.0
        %2095 = vmatpush1.msra.mxu0 0.0
        %2096 = vmatprep.subr.mxu0 0.0
        %2097 = vmatpush1.msra.mxu0 0.0
        %2098 = vmatprep.subr.mxu0 0.0
        %2099 = vmatpush1.msra.mxu0 0.0
        %2100 = vmatprep.subr.mxu0 0.0
        %2101 = vmatpush1.msra.mxu0 0.0
        %2102 = vmatprep.subr.mxu0 0.0
        %2103 = vmatpush1.msra.mxu0 0.0
        %2104 = vmatprep.subr.mxu0 0.0
        %2105 = vmatpush1.msra.mxu0 0.0
        %2106 = vmatprep.subr.mxu0 0.0
        %2107 = vmatpush1.msra.mxu0 0.0
        %2108 = vmatprep.subr.mxu0 0.0
        %2109 = vmatpush1.msra.mxu0 0.0
        %2110 = vmatprep.subr.mxu0 0.0
        %2111 = vmatpush1.msra.mxu0 0.0
        %2112 = vmatprep.subr.mxu0 0.0
        %2113 = vmatpush1.msra.mxu0 0.0
        %2114 = vmatprep.subr.mxu0 0.0
        %2115 = vmatpush1.msra.mxu0 0.0
        %2116 = vmatprep.subr.mxu0 0.0
        %2117 = vmatpush1.msra.mxu0 0.0
        %2118 = vmatprep.subr.mxu0 0.0
        %2119 = vmatpush1.msra.mxu0 0.0
        %2120 = vmatprep.subr.mxu0 0.0
        %2121 = vmatpush1.msra.mxu0 0.0
        %2122 = vmatprep.subr.mxu0 0.0
        %2123 = vmatpush1.msra.mxu0 0.0
        %2124 = vmatprep.subr.mxu0 0.0
        %2125 = vmatpush1.msra.mxu0 0.0
        %2126 = vmatprep.subr.mxu0 0.0
        %2127 = vmatpush1.msra.mxu0 0.0
        %2128 = vmatprep.subr.mxu0 0.0
        %2129 = vmatpush1.msra.mxu0 0.0
        %2130 = vmatprep.subr.mxu0 0.0
        %2131 = vmatpush1.msra.mxu0 0.0
        %2132 = vmatprep.subr.mxu0 0.0
        %2133 = vmatpush1.msra.mxu0 0.0
        %2134 = vmatprep.subr.mxu0 0.0
        %2135 = vmatpush1.msra.mxu0 0.0
        %2136 = vmatprep.subr.mxu0 0.0
        %2137 = vmatpush1.msra.mxu0 0.0
        %2138 = vmatprep.subr.mxu0 0.0
        %2139 = vmatpush1.msra.mxu0 0.0
        %2140 = vmatprep.mubr.f32.mxu0 0.0
        %2141 = vmatmul.mubr.f32.gmra.mrb[0].mxu0 %v2074
        %v2142 = vpop.f32.mrb[0].mxu0
        %v2143 = vadd.f32 0.0, %v2142
        %v2144 = vpop.f32.mrb[0].mxu0
        %2145 = vdwg.mxu0
        %s2146 = scalar_lea.vmem %s9, 16
        %v2147 = vld [vmem:[%s2146] sm:$0xff]
        %v2149 = vsel %vm1006, %v2143, 0
        %2151 = vmatprep.subr.mxu0 0.0
        %2152 = vmatpush1.msra.mxu0 %v2147
        %2153 = vmatprep.subr.mxu0 0.0
        %2154 = vmatpush1.msra.mxu0 0.0
        %2155 = vmatprep.subr.mxu0 0.0
        %2156 = vmatpush1.msra.mxu0 0.0
        %2157 = vmatprep.subr.mxu0 0.0
        %2158 = vmatpush1.msra.mxu0 0.0
        %2159 = vmatprep.subr.mxu0 0.0
        %2160 = vmatpush1.msra.mxu0 0.0
        %2161 = vmatprep.subr.mxu0 0.0
        %2162 = vmatpush1.msra.mxu0 0.0
        %2163 = vmatprep.subr.mxu0 0.0
        %2164 = vmatpush1.msra.mxu0 0.0
        %2165 = vmatprep.subr.mxu0 0.0
        %2166 = vmatpush1.msra.mxu0 0.0
        %2167 = vmatprep.subr.mxu0 0.0
        %2168 = vmatpush1.msra.mxu0 0.0
        %2169 = vmatprep.subr.mxu0 0.0
        %2170 = vmatpush1.msra.mxu0 0.0
        %2171 = vmatprep.subr.mxu0 0.0
        %2172 = vmatpush1.msra.mxu0 0.0
        %2173 = vmatprep.subr.mxu0 0.0
        %2174 = vmatpush1.msra.mxu0 0.0
        %2175 = vmatprep.subr.mxu0 0.0
        %2176 = vmatpush1.msra.mxu0 0.0
        %2177 = vmatprep.subr.mxu0 0.0
        %2178 = vmatpush1.msra.mxu0 0.0
        %2179 = vmatprep.subr.mxu0 0.0
        %2180 = vmatpush1.msra.mxu0 0.0
        %2181 = vmatprep.subr.mxu0 0.0
        %2182 = vmatpush1.msra.mxu0 0.0
        %2183 = vmatprep.subr.mxu0 0.0
        %2184 = vmatpush1.msra.mxu0 0.0
        %2185 = vmatprep.subr.mxu0 0.0
        %2186 = vmatpush1.msra.mxu0 0.0
        %2187 = vmatprep.subr.mxu0 0.0
        %2188 = vmatpush1.msra.mxu0 0.0
        %2189 = vmatprep.subr.mxu0 0.0
        %2190 = vmatpush1.msra.mxu0 0.0
        %2191 = vmatprep.subr.mxu0 0.0
        %2192 = vmatpush1.msra.mxu0 0.0
        %2193 = vmatprep.subr.mxu0 0.0
        %2194 = vmatpush1.msra.mxu0 0.0
        %2195 = vmatprep.subr.mxu0 0.0
        %2196 = vmatpush1.msra.mxu0 0.0
        %2197 = vmatprep.subr.mxu0 0.0
        %2198 = vmatpush1.msra.mxu0 0.0
        %2199 = vmatprep.subr.mxu0 0.0
        %2200 = vmatpush1.msra.mxu0 0.0
        %2201 = vmatprep.subr.mxu0 0.0
        %2202 = vmatpush1.msra.mxu0 0.0
        %2203 = vmatprep.subr.mxu0 0.0
        %2204 = vmatpush1.msra.mxu0 0.0
        %2205 = vmatprep.subr.mxu0 0.0
        %2206 = vmatpush1.msra.mxu0 0.0
        %2207 = vmatprep.subr.mxu0 0.0
        %2208 = vmatpush1.msra.mxu0 0.0
        %2209 = vmatprep.subr.mxu0 0.0
        %2210 = vmatpush1.msra.mxu0 0.0
        %2211 = vmatprep.subr.mxu0 0.0
        %2212 = vmatpush1.msra.mxu0 0.0
        %2213 = vmatprep.subr.mxu0 0.0
        %2214 = vmatpush1.msra.mxu0 0.0
        %2215 = vmatprep.mubr.f32.mxu0 0.0
        %2216 = vmatmul.mubr.f32.gmra.mrb[0].mxu0 %v2149
        %v2217 = vpop.f32.mrb[0].mxu0
        %v2218 = vadd.f32 0.0, %v2217
        %v2219 = vpop.f32.mrb[0].mxu0
        %2220 = vdwg.mxu0
        %v2221 = vadd.f32 %v1732, %v2218
        %s2222 = scalar_lea.vmem %s3, 96
        %v2223 = vld [vmem:[%s2222] sm:$0xff]
        %v2224 = vld [vmem:[%s2222 + $0x8] sm:$0xff]
        %v2225 = vld [vmem:[%s2222 + $0x10] sm:$0xff]
        %v2226 = vld [vmem:[%s2222 + $0x18] sm:$0xff]
        %s2227 = scalar_lea.vmem %s4, 3
        %v2228 = vld [vmem:[%s2227] sm:$0x1]
        %v2230 = vlaneseq
        %v2231 = vshrl.u32 %v2230, 7
        %v2232 = vsub.s32 0, %v2231
        %v2233 = vrot.slane %v2228, %v2232
        %2235 = vmatprep.subr.mxu0 0.0
        %2236 = vmatpush1.msra.mxu0 %v2223
        %2237 = vmatprep.subr.mxu0 0.0
        %2238 = vmatpush1.msra.mxu0 %v2224
        %2239 = vmatprep.subr.mxu0 0.0
        %2240 = vmatpush1.msra.mxu0 %v2225
        %2241 = vmatprep.subr.mxu0 0.0
        %2242 = vmatpush1.msra.mxu0 %v2226
        %2243 = vmatprep.subr.mxu0 0.0
        %2244 = vmatpush1.msra.mxu0 0.0
        %2245 = vmatprep.subr.mxu0 0.0
        %2246 = vmatpush1.msra.mxu0 0.0
        %2247 = vmatprep.subr.mxu0 0.0
        %2248 = vmatpush1.msra.mxu0 0.0
        %2249 = vmatprep.subr.mxu0 0.0
        %2250 = vmatpush1.msra.mxu0 0.0
        %2251 = vmatprep.subr.mxu0 0.0
        %2252 = vmatpush1.msra.mxu0 0.0
        %2253 = vmatprep.subr.mxu0 0.0
        %2254 = vmatpush1.msra.mxu0 0.0
        %2255 = vmatprep.subr.mxu0 0.0
        %2256 = vmatpush1.msra.mxu0 0.0
        %2257 = vmatprep.subr.mxu0 0.0
        %2258 = vmatpush1.msra.mxu0 0.0
        %2259 = vmatprep.subr.mxu0 0.0
        %2260 = vmatpush1.msra.mxu0 0.0
        %2261 = vmatprep.subr.mxu0 0.0
        %2262 = vmatpush1.msra.mxu0 0.0
        %2263 = vmatprep.subr.mxu0 0.0
        %2264 = vmatpush1.msra.mxu0 0.0
        %2265 = vmatprep.subr.mxu0 0.0
        %2266 = vmatpush1.msra.mxu0 0.0
        %2267 = vmatprep.subr.mxu0 0.0
        %2268 = vmatpush1.msra.mxu0 0.0
        %2269 = vmatprep.subr.mxu0 0.0
        %2270 = vmatpush1.msra.mxu0 0.0
        %2271 = vmatprep.subr.mxu0 0.0
        %2272 = vmatpush1.msra.mxu0 0.0
        %2273 = vmatprep.subr.mxu0 0.0
        %2274 = vmatpush1.msra.mxu0 0.0
        %2275 = vmatprep.subr.mxu0 0.0
        %2276 = vmatpush1.msra.mxu0 0.0
        %2277 = vmatprep.subr.mxu0 0.0
        %2278 = vmatpush1.msra.mxu0 0.0
        %2279 = vmatprep.subr.mxu0 0.0
        %2280 = vmatpush1.msra.mxu0 0.0
        %2281 = vmatprep.subr.mxu0 0.0
        %2282 = vmatpush1.msra.mxu0 0.0
        %2283 = vmatprep.subr.mxu0 0.0
        %2284 = vmatpush1.msra.mxu0 0.0
        %2285 = vmatprep.subr.mxu0 0.0
        %2286 = vmatpush1.msra.mxu0 0.0
        %2287 = vmatprep.subr.mxu0 0.0
        %2288 = vmatpush1.msra.mxu0 0.0
        %2289 = vmatprep.subr.mxu0 0.0
        %2290 = vmatpush1.msra.mxu0 0.0
        %2291 = vmatprep.subr.mxu0 0.0
        %2292 = vmatpush1.msra.mxu0 0.0
        %2293 = vmatprep.subr.mxu0 0.0
        %2294 = vmatpush1.msra.mxu0 0.0
        %2295 = vmatprep.subr.mxu0 0.0
        %2296 = vmatpush1.msra.mxu0 0.0
        %2297 = vmatprep.subr.mxu0 0.0
        %2298 = vmatpush1.msra.mxu0 0.0
        %2299 = vmatprep.mubr.f32.mxu0 0.0
        %2300 = vmatmul.mubr.f32.gmra.mrb[0].mxu0 %v772
        %v2301 = vpop.f32.mrb[0].mxu0
        %v2302 = vadd.f32 %v2233, %v2301
        %v2303 = vpop.f32.mrb[0].mxu0
        %2304 = vdwg.mxu0
        %s2305 = scalar_lea.vmem %s5, 96
        %v2306 = vld [vmem:[%s2305] sm:$0xff]
        %v2307 = vld [vmem:[%s2305 + $0x8] sm:$0xff]
        %v2308 = vld [vmem:[%s2305 + $0x10] sm:$0xff]
        %v2309 = vld [vmem:[%s2305 + $0x18] sm:$0xff]
        %s2310 = scalar_lea.vmem %s6, 3
        %v2311 = vld [vmem:[%s2310] sm:$0x1]
        %v2313 = vlaneseq
        %v2314 = vshrl.u32 %v2313, 7
        %v2315 = vsub.s32 0, %v2314
        %v2316 = vrot.slane %v2311, %v2315
        %2318 = vmatprep.subr.mxu0 0.0
        %2319 = vmatpush1.msra.mxu0 %v2306
        %2320 = vmatprep.subr.mxu0 0.0
        %2321 = vmatpush1.msra.mxu0 %v2307
        %2322 = vmatprep.subr.mxu0 0.0
        %2323 = vmatpush1.msra.mxu0 %v2308
        %2324 = vmatprep.subr.mxu0 0.0
        %2325 = vmatpush1.msra.mxu0 %v2309
        %2326 = vmatprep.subr.mxu0 0.0
        %2327 = vmatpush1.msra.mxu0 0.0
        %2328 = vmatprep.subr.mxu0 0.0
        %2329 = vmatpush1.msra.mxu0 0.0
        %2330 = vmatprep.subr.mxu0 0.0
        %2331 = vmatpush1.msra.mxu0 0.0
        %2332 = vmatprep.subr.mxu0 0.0
        %2333 = vmatpush1.msra.mxu0 0.0
        %2334 = vmatprep.subr.mxu0 0.0
        %2335 = vmatpush1.msra.mxu0 0.0
        %2336 = vmatprep.subr.mxu0 0.0
        %2337 = vmatpush1.msra.mxu0 0.0
        %2338 = vmatprep.subr.mxu0 0.0
        %2339 = vmatpush1.msra.mxu0 0.0
        %2340 = vmatprep.subr.mxu0 0.0
        %2341 = vmatpush1.msra.mxu0 0.0
        %2342 = vmatprep.subr.mxu0 0.0
        %2343 = vmatpush1.msra.mxu0 0.0
        %2344 = vmatprep.subr.mxu0 0.0
        %2345 = vmatpush1.msra.mxu0 0.0
        %2346 = vmatprep.subr.mxu0 0.0
        %2347 = vmatpush1.msra.mxu0 0.0
        %2348 = vmatprep.subr.mxu0 0.0
        %2349 = vmatpush1.msra.mxu0 0.0
        %2350 = vmatprep.subr.mxu0 0.0
        %2351 = vmatpush1.msra.mxu0 0.0
        %2352 = vmatprep.subr.mxu0 0.0
        %2353 = vmatpush1.msra.mxu0 0.0
        %2354 = vmatprep.subr.mxu0 0.0
        %2355 = vmatpush1.msra.mxu0 0.0
        %2356 = vmatprep.subr.mxu0 0.0
        %2357 = vmatpush1.msra.mxu0 0.0
        %2358 = vmatprep.subr.mxu0 0.0
        %2359 = vmatpush1.msra.mxu0 0.0
        %2360 = vmatprep.subr.mxu0 0.0
        %2361 = vmatpush1.msra.mxu0 0.0
        %2362 = vmatprep.subr.mxu0 0.0
        %2363 = vmatpush1.msra.mxu0 0.0
        %2364 = vmatprep.subr.mxu0 0.0
        %2365 = vmatpush1.msra.mxu0 0.0
        %2366 = vmatprep.subr.mxu0 0.0
        %2367 = vmatpush1.msra.mxu0 0.0
        %2368 = vmatprep.subr.mxu0 0.0
        %2369 = vmatpush1.msra.mxu0 0.0
        %2370 = vmatprep.subr.mxu0 0.0
        %2371 = vmatpush1.msra.mxu0 0.0
        %2372 = vmatprep.subr.mxu0 0.0
        %2373 = vmatpush1.msra.mxu0 0.0
        %2374 = vmatprep.subr.mxu0 0.0
        %2375 = vmatpush1.msra.mxu0 0.0
        %2376 = vmatprep.subr.mxu0 0.0
        %2377 = vmatpush1.msra.mxu0 0.0
        %2378 = vmatprep.subr.mxu0 0.0
        %2379 = vmatpush1.msra.mxu0 0.0
        %2380 = vmatprep.subr.mxu0 0.0
        %2381 = vmatpush1.msra.mxu0 0.0
        %2382 = vmatprep.mubr.f32.mxu0 0.0
        %2383 = vmatmul.mubr.f32.gmra.mrb[0].mxu0 %v772
        %v2384 = vpop.f32.mrb[0].mxu0
        %v2385 = vadd.f32 %v2316, %v2384
        %v2386 = vpop.f32.mrb[0].mxu0
        %2387 = vdwg.mxu0
        %s2388 = scalar_lea.vmem %s7, 96
        %v2389 = vld [vmem:[%s2388] sm:$0xff]
        %v2390 = vld [vmem:[%s2388 + $0x8] sm:$0xff]
        %v2391 = vld [vmem:[%s2388 + $0x10] sm:$0xff]
        %v2392 = vld [vmem:[%s2388 + $0x18] sm:$0xff]
        %s2393 = scalar_lea.vmem %s8, 3
        %v2394 = vld [vmem:[%s2393] sm:$0x1]
        %v2396 = vlaneseq
        %v2397 = vshrl.u32 %v2396, 7
        %v2398 = vsub.s32 0, %v2397
        %v2399 = vrot.slane %v2394, %v2398
        %2401 = vmatprep.subr.mxu0 0.0
        %2402 = vmatpush1.msra.mxu0 %v2389
        %2403 = vmatprep.subr.mxu0 0.0
        %2404 = vmatpush1.msra.mxu0 %v2390
        %2405 = vmatprep.subr.mxu0 0.0
        %2406 = vmatpush1.msra.mxu0 %v2391
        %2407 = vmatprep.subr.mxu0 0.0
        %2408 = vmatpush1.msra.mxu0 %v2392
        %2409 = vmatprep.subr.mxu0 0.0
        %2410 = vmatpush1.msra.mxu0 0.0
        %2411 = vmatprep.subr.mxu0 0.0
        %2412 = vmatpush1.msra.mxu0 0.0
        %2413 = vmatprep.subr.mxu0 0.0
        %2414 = vmatpush1.msra.mxu0 0.0
        %2415 = vmatprep.subr.mxu0 0.0
        %2416 = vmatpush1.msra.mxu0 0.0
        %2417 = vmatprep.subr.mxu0 0.0
        %2418 = vmatpush1.msra.mxu0 0.0
        %2419 = vmatprep.subr.mxu0 0.0
        %2420 = vmatpush1.msra.mxu0 0.0
        %2421 = vmatprep.subr.mxu0 0.0
        %2422 = vmatpush1.msra.mxu0 0.0
        %2423 = vmatprep.subr.mxu0 0.0
        %2424 = vmatpush1.msra.mxu0 0.0
        %2425 = vmatprep.subr.mxu0 0.0
        %2426 = vmatpush1.msra.mxu0 0.0
        %2427 = vmatprep.subr.mxu0 0.0
        %2428 = vmatpush1.msra.mxu0 0.0
        %2429 = vmatprep.subr.mxu0 0.0
        %2430 = vmatpush1.msra.mxu0 0.0
        %2431 = vmatprep.subr.mxu0 0.0
        %2432 = vmatpush1.msra.mxu0 0.0
        %2433 = vmatprep.subr.mxu0 0.0
        %2434 = vmatpush1.msra.mxu0 0.0
        %2435 = vmatprep.subr.mxu0 0.0
        %2436 = vmatpush1.msra.mxu0 0.0
        %2437 = vmatprep.subr.mxu0 0.0
        %2438 = vmatpush1.msra.mxu0 0.0
        %2439 = vmatprep.subr.mxu0 0.0
        %2440 = vmatpush1.msra.mxu0 0.0
        %2441 = vmatprep.subr.mxu0 0.0
        %2442 = vmatpush1.msra.mxu0 0.0
        %2443 = vmatprep.subr.mxu0 0.0
        %2444 = vmatpush1.msra.mxu0 0.0
        %2445 = vmatprep.subr.mxu0 0.0
        %2446 = vmatpush1.msra.mxu0 0.0
        %2447 = vmatprep.subr.mxu0 0.0
        %2448 = vmatpush1.msra.mxu0 0.0
        %2449 = vmatprep.subr.mxu0 0.0
        %2450 = vmatpush1.msra.mxu0 0.0
        %2451 = vmatprep.subr.mxu0 0.0
        %2452 = vmatpush1.msra.mxu0 0.0
        %2453 = vmatprep.subr.mxu0 0.0
        %2454 = vmatpush1.msra.mxu0 0.0
        %2455 = vmatprep.subr.mxu0 0.0
        %2456 = vmatpush1.msra.mxu0 0.0
        %2457 = vmatprep.subr.mxu0 0.0
        %2458 = vmatpush1.msra.mxu0 0.0
        %2459 = vmatprep.subr.mxu0 0.0
        %2460 = vmatpush1.msra.mxu0 0.0
        %2461 = vmatprep.subr.mxu0 0.0
        %2462 = vmatpush1.msra.mxu0 0.0
        %2463 = vmatprep.subr.mxu0 0.0
        %2464 = vmatpush1.msra.mxu0 0.0
        %2465 = vmatprep.mubr.f32.mxu0 0.0
        %2466 = vmatmul.mubr.f32.gmra.mrb[0].mxu0 %v772
        %v2467 = vpop.f32.mrb[0].mxu0
        %v2468 = vadd.f32 %v2399, %v2467
        %v2469 = vpop.f32.mrb[0].mxu0
        %2470 = vdwg.mxu0
        %v2472 = vsel %vm1006, %v2302, 0
        %v2475 = vsel %vm1006, %v2385, 0
        %2477 = vmatprep.subr.mxu0 0.0
        %2478 = vmatpush1.xpose.msra.mxu0 %v2475
        %2479 = vmatprep.subr.mxu0 0.0
        %2480 = vmatpush1.xpose.msra.mxu0 0.0
        %2481 = vmatprep.subr.mxu0 0.0
        %2482 = vmatpush1.xpose.msra.mxu0 0.0
        %2483 = vmatprep.subr.mxu0 0.0
        %2484 = vmatpush1.xpose.msra.mxu0 0.0
        %2485 = vmatprep.subr.mxu0 0.0
        %2486 = vmatpush1.xpose.msra.mxu0 0.0
        %2487 = vmatprep.subr.mxu0 0.0
        %2488 = vmatpush1.xpose.msra.mxu0 0.0
        %2489 = vmatprep.subr.mxu0 0.0
        %2490 = vmatpush1.xpose.msra.mxu0 0.0
        %2491 = vmatprep.subr.mxu0 0.0
        %2492 = vmatpush1.xpose.msra.mxu0 0.0
        %2493 = vmatprep.subr.mxu0 0.0
        %2494 = vmatpush1.xpose.msra.mxu0 0.0
        %2495 = vmatprep.subr.mxu0 0.0
        %2496 = vmatpush1.xpose.msra.mxu0 0.0
        %2497 = vmatprep.subr.mxu0 0.0
        %2498 = vmatpush1.xpose.msra.mxu0 0.0
        %2499 = vmatprep.subr.mxu0 0.0
        %2500 = vmatpush1.xpose.msra.mxu0 0.0
        %2501 = vmatprep.subr.mxu0 0.0
        %2502 = vmatpush1.xpose.msra.mxu0 0.0
        %2503 = vmatprep.subr.mxu0 0.0
        %2504 = vmatpush1.xpose.msra.mxu0 0.0
        %2505 = vmatprep.subr.mxu0 0.0
        %2506 = vmatpush1.xpose.msra.mxu0 0.0
        %2507 = vmatprep.subr.mxu0 0.0
        %2508 = vmatpush1.xpose.msra.mxu0 0.0
        %2509 = vmatprep.subr.mxu0 0.0
        %2510 = vmatpush1.xpose.msra.mxu0 0.0
        %2511 = vmatprep.subr.mxu0 0.0
        %2512 = vmatpush1.xpose.msra.mxu0 0.0
        %2513 = vmatprep.subr.mxu0 0.0
        %2514 = vmatpush1.xpose.msra.mxu0 0.0
        %2515 = vmatprep.subr.mxu0 0.0
        %2516 = vmatpush1.xpose.msra.mxu0 0.0
        %2517 = vmatprep.subr.mxu0 0.0
        %2518 = vmatpush1.xpose.msra.mxu0 0.0
        %2519 = vmatprep.subr.mxu0 0.0
        %2520 = vmatpush1.xpose.msra.mxu0 0.0
        %2521 = vmatprep.subr.mxu0 0.0
        %2522 = vmatpush1.xpose.msra.mxu0 0.0
        %2523 = vmatprep.subr.mxu0 0.0
        %2524 = vmatpush1.xpose.msra.mxu0 0.0
        %2525 = vmatprep.subr.mxu0 0.0
        %2526 = vmatpush1.xpose.msra.mxu0 0.0
        %2527 = vmatprep.subr.mxu0 0.0
        %2528 = vmatpush1.xpose.msra.mxu0 0.0
        %2529 = vmatprep.subr.mxu0 0.0
        %2530 = vmatpush1.xpose.msra.mxu0 0.0
        %2531 = vmatprep.subr.mxu0 0.0
        %2532 = vmatpush1.xpose.msra.mxu0 0.0
        %2533 = vmatprep.subr.mxu0 0.0
        %2534 = vmatpush1.xpose.msra.mxu0 0.0
        %2535 = vmatprep.subr.mxu0 0.0
        %2536 = vmatpush1.xpose.msra.mxu0 0.0
        %2537 = vmatprep.subr.mxu0 0.0
        %2538 = vmatpush1.xpose.msra.mxu0 0.0
        %2539 = vmatprep.subr.mxu0 0.0
        %2540 = vmatpush1.xpose.msra.mxu0 0.0
        %2541 = vmatprep.mubr.f32.mxu0 0.0
        %2542 = vmatmul.mubr.f32.gmra.mrb[0].mxu0 %v2472
        %v2543 = vpop.f32.mrb[0].mxu0
        %v2544 = vadd.f32 0.0, %v2543
        %v2545 = vpop.f32.mrb[0].mxu0
        %2546 = vdwg.mxu0
        %v2547 = vmul.f32 %v2544, 0.35355338
        %v2548 = vadd.f32 %v2547, %v1088
        %v2549 = vsel %vm1006, %v2548, -inf
        %2550 = vmax.xlane.f32.xlu0 %v2549
        %v2551 = vpop.xlane.xlu0 %2550
        %v2552 = vsub.f32 %v2548, %v2551
        %v2553 = vmul.f32 %v2552, 1.442695
        %v2554 = vpow.pop %v2553
        %v2555 = vsel %vm1006, %v2554, 0.0
        %2556 = vadd.xlane.f32.xlu0 %v2555
        %v2557 = vpop.xlane.xlu0 %2556
        %v2558 = vrcp.pop %v2557
        %v2559 = vmul.f32 %v2554, %v2558
        %v2561 = vsel %vm1006, %v2559, 0
        %2563 = vmatprep.subr.mxu0 0.0
        %2564 = vmatpush1.msra.mxu0 %v2468
        %2565 = vmatprep.subr.mxu0 0.0
        %2566 = vmatpush1.msra.mxu0 0.0
        %2567 = vmatprep.subr.mxu0 0.0
        %2568 = vmatpush1.msra.mxu0 0.0
        %2569 = vmatprep.subr.mxu0 0.0
        %2570 = vmatpush1.msra.mxu0 0.0
        %2571 = vmatprep.subr.mxu0 0.0
        %2572 = vmatpush1.msra.mxu0 0.0
        %2573 = vmatprep.subr.mxu0 0.0
        %2574 = vmatpush1.msra.mxu0 0.0
        %2575 = vmatprep.subr.mxu0 0.0
        %2576 = vmatpush1.msra.mxu0 0.0
        %2577 = vmatprep.subr.mxu0 0.0
        %2578 = vmatpush1.msra.mxu0 0.0
        %2579 = vmatprep.subr.mxu0 0.0
        %2580 = vmatpush1.msra.mxu0 0.0
        %2581 = vmatprep.subr.mxu0 0.0
        %2582 = vmatpush1.msra.mxu0 0.0
        %2583 = vmatprep.subr.mxu0 0.0
        %2584 = vmatpush1.msra.mxu0 0.0
        %2585 = vmatprep.subr.mxu0 0.0
        %2586 = vmatpush1.msra.mxu0 0.0
        %2587 = vmatprep.subr.mxu0 0.0
        %2588 = vmatpush1.msra.mxu0 0.0
        %2589 = vmatprep.subr.mxu0 0.0
        %2590 = vmatpush1.msra.mxu0 0.0
        %2591 = vmatprep.subr.mxu0 0.0
        %2592 = vmatpush1.msra.mxu0 0.0
        %2593 = vmatprep.subr.mxu0 0.0
        %2594 = vmatpush1.msra.mxu0 0.0
        %2595 = vmatprep.subr.mxu0 0.0
        %2596 = vmatpush1.msra.mxu0 0.0
        %2597 = vmatprep.subr.mxu0 0.0
        %2598 = vmatpush1.msra.mxu0 0.0
        %2599 = vmatprep.subr.mxu0 0.0
        %2600 = vmatpush1.msra.mxu0 0.0
        %2601 = vmatprep.subr.mxu0 0.0
        %2602 = vmatpush1.msra.mxu0 0.0
        %2603 = vmatprep.subr.mxu0 0.0
        %2604 = vmatpush1.msra.mxu0 0.0
        %2605 = vmatprep.subr.mxu0 0.0
        %2606 = vmatpush1.msra.mxu0 0.0
        %2607 = vmatprep.subr.mxu0 0.0
        %2608 = vmatpush1.msra.mxu0 0.0
        %2609 = vmatprep.subr.mxu0 0.0
        %2610 = vmatpush1.msra.mxu0 0.0
        %2611 = vmatprep.subr.mxu0 0.0
        %2612 = vmatpush1.msra.mxu0 0.0
        %2613 = vmatprep.subr.mxu0 0.0
        %2614 = vmatpush1.msra.mxu0 0.0
        %2615 = vmatprep.subr.mxu0 0.0
        %2616 = vmatpush1.msra.mxu0 0.0
        %2617 = vmatprep.subr.mxu0 0.0
        %2618 = vmatpush1.msra.mxu0 0.0
        %2619 = vmatprep.subr.mxu0 0.0
        %2620 = vmatpush1.msra.mxu0 0.0
        %2621 = vmatprep.subr.mxu0 0.0
        %2622 = vmatpush1.msra.mxu0 0.0
        %2623 = vmatprep.subr.mxu0 0.0
        %2624 = vmatpush1.msra.mxu0 0.0
        %2625 = vmatprep.subr.mxu0 0.0
        %2626 = vmatpush1.msra.mxu0 0.0
        %2627 = vmatprep.mubr.f32.mxu0 0.0
        %2628 = vmatmul.mubr.f32.gmra.mrb[0].mxu0 %v2561
        %v2629 = vpop.f32.mrb[0].mxu0
        %v2630 = vadd.f32 0.0, %v2629
        %v2631 = vpop.f32.mrb[0].mxu0
        %2632 = vdwg.mxu0
        %s2633 = scalar_lea.vmem %s9, 24
        %v2634 = vld [vmem:[%s2633] sm:$0xff]
        %v2636 = vsel %vm1006, %v2630, 0
        %2638 = vmatprep.subr.mxu0 0.0
        %2639 = vmatpush1.msra.mxu0 %v2634
        %2640 = vmatprep.subr.mxu0 0.0
        %2641 = vmatpush1.msra.mxu0 0.0
        %2642 = vmatprep.subr.mxu0 0.0
        %2643 = vmatpush1.msra.mxu0 0.0
        %2644 = vmatprep.subr.mxu0 0.0
        %2645 = vmatpush1.msra.mxu0 0.0
        %2646 = vmatprep.subr.mxu0 0.0
        %2647 = vmatpush1.msra.mxu0 0.0
        %2648 = vmatprep.subr.mxu0 0.0
        %2649 = vmatpush1.msra.mxu0 0.0
        %2650 = vmatprep.subr.mxu0 0.0
        %2651 = vmatpush1.msra.mxu0 0.0
        %2652 = vmatprep.subr.mxu0 0.0
        %2653 = vmatpush1.msra.mxu0 0.0
        %2654 = vmatprep.subr.mxu0 0.0
        %2655 = vmatpush1.msra.mxu0 0.0
        %2656 = vmatprep.subr.mxu0 0.0
        %2657 = vmatpush1.msra.mxu0 0.0
        %2658 = vmatprep.subr.mxu0 0.0
        %2659 = vmatpush1.msra.mxu0 0.0
        %2660 = vmatprep.subr.mxu0 0.0
        %2661 = vmatpush1.msra.mxu0 0.0
        %2662 = vmatprep.subr.mxu0 0.0
        %2663 = vmatpush1.msra.mxu0 0.0
        %2664 = vmatprep.subr.mxu0 0.0
        %2665 = vmatpush1.msra.mxu0 0.0
        %2666 = vmatprep.subr.mxu0 0.0
        %2667 = vmatpush1.msra.mxu0 0.0
        %2668 = vmatprep.subr.mxu0 0.0
        %2669 = vmatpush1.msra.mxu0 0.0
        %2670 = vmatprep.subr.mxu0 0.0
        %2671 = vmatpush1.msra.mxu0 0.0
        %2672 = vmatprep.subr.mxu0 0.0
        %2673 = vmatpush1.msra.mxu0 0.0
        %2674 = vmatprep.subr.mxu0 0.0
        %2675 = vmatpush1.msra.mxu0 0.0
        %2676 = vmatprep.subr.mxu0 0.0
        %2677 = vmatpush1.msra.mxu0 0.0
        %2678 = vmatprep.subr.mxu0 0.0
        %2679 = vmatpush1.msra.mxu0 0.0
        %2680 = vmatprep.subr.mxu0 0.0
        %2681 = vmatpush1.msra.mxu0 0.0
        %2682 = vmatprep.subr.mxu0 0.0
        %2683 = vmatpush1.msra.mxu0 0.0
        %2684 = vmatprep.subr.mxu0 0.0
        %2685 = vmatpush1.msra.mxu0 0.0
        %2686 = vmatprep.subr.mxu0 0.0
        %2687 = vmatpush1.msra.mxu0 0.0
        %2688 = vmatprep.subr.mxu0 0.0
        %2689 = vmatpush1.msra.mxu0 0.0
        %2690 = vmatprep.subr.mxu0 0.0
        %2691 = vmatpush1.msra.mxu0 0.0
        %2692 = vmatprep.subr.mxu0 0.0
        %2693 = vmatpush1.msra.mxu0 0.0
        %2694 = vmatprep.subr.mxu0 0.0
        %2695 = vmatpush1.msra.mxu0 0.0
        %2696 = vmatprep.subr.mxu0 0.0
        %2697 = vmatpush1.msra.mxu0 0.0
        %2698 = vmatprep.subr.mxu0 0.0
        %2699 = vmatpush1.msra.mxu0 0.0
        %2700 = vmatprep.subr.mxu0 0.0
        %2701 = vmatpush1.msra.mxu0 0.0
        %2702 = vmatprep.mubr.f32.mxu0 0.0
        %2703 = vmatmul.mubr.f32.gmra.mrb[0].mxu0 %v2636
        %v2704 = vpop.f32.mrb[0].mxu0
        %v2705 = vadd.f32 0.0, %v2704
        %v2706 = vpop.f32.mrb[0].mxu0
        %2707 = vdwg.mxu0
        %v2708 = vadd.f32 %v2221, %v2705
        %v2709 = vld [vmem:[%s10] sm:$0x1]
        %v2711 = vlaneseq
        %v2712 = vshrl.u32 %v2711, 7
        %v2713 = vsub.s32 0, %v2712
        %v2714 = vrot.slane %v2709, %v2713
        %v2716 = vadd.f32 %v2708, %v2714
        %v2717 = vadd.f32 %v758, %v2716
        %v2718 = vsel %vm734, %v2717, 0.0
        %2719 = vadd.xlane.f32.xlu0 %v2718
        %v2720 = vpop.xlane.xlu0 %2719
        %v2721 = vmul.f32 %v2720, %v738
        %v2722 = vsub.f32 %v2717, %v2721
        %v2723 = vmul.f32 %v2722, %v2722
        %v2724 = vsel %vm734, %v2723, 0.0
        %2725 = vadd.xlane.f32.xlu0 %v2724
        %v2726 = vpop.xlane.xlu0 %2725
        %v2727 = vmul.f32 %v2726, %v738
        %v2728 = vadd.f32 %v2727, 1e-12
        %v2729 = vrsqrt.pop %v2728
        %v2730 = vmul.f32 %v2722, %v2729
        %v2731 = vlaneseq
        %v2732 = vshrl.u32 %v2731, 7
        %v2733 = vsub.s32 0, %v2732
        %v2734 = vrot.slane %v759, %v2733
        %v2735 = vmul.f32 %v2730, %v2734
        %v2736 = vlaneseq
        %v2737 = vshrl.u32 %v2736, 7
        %v2738 = vsub.s32 1, %v2737
        %v2739 = vrot.slane %v759, %v2738
        %v2740 = vadd.f32 %v2735, %v2739
        %v2741 = vld [vmem:[%s12] sm:$0xff]
        %v2742 = vld [vmem:[%s12 + $0x8] sm:$0xff]
        %v2743 = vld [vmem:[%s12 + $0x10] sm:$0xff]
        %v2744 = vld [vmem:[%s12 + $0x18] sm:$0xff]
        %v2745 = vld [vmem:[%s13] sm:$0x1]
        %v2747 = vlaneseq
        %v2748 = vshrl.u32 %v2747, 7
        %v2749 = vsub.s32 0, %v2748
        %v2750 = vrot.slane %v2745, %v2749
        %v2753 = vsel %vm734, %v2740, 0
        %2755 = vmatprep.subr.mxu0 0.0
        %2756 = vmatpush1.msra.mxu0 %v2741
        %2757 = vmatprep.subr.mxu0 0.0
        %2758 = vmatpush1.msra.mxu0 %v2742
        %2759 = vmatprep.subr.mxu0 0.0
        %2760 = vmatpush1.msra.mxu0 %v2743
        %2761 = vmatprep.subr.mxu0 0.0
        %2762 = vmatpush1.msra.mxu0 %v2744
        %2763 = vmatprep.subr.mxu0 0.0
        %2764 = vmatpush1.msra.mxu0 0.0
        %2765 = vmatprep.subr.mxu0 0.0
        %2766 = vmatpush1.msra.mxu0 0.0
        %2767 = vmatprep.subr.mxu0 0.0
        %2768 = vmatpush1.msra.mxu0 0.0
        %2769 = vmatprep.subr.mxu0 0.0
        %2770 = vmatpush1.msra.mxu0 0.0
        %2771 = vmatprep.subr.mxu0 0.0
        %2772 = vmatpush1.msra.mxu0 0.0
        %2773 = vmatprep.subr.mxu0 0.0
        %2774 = vmatpush1.msra.mxu0 0.0
        %2775 = vmatprep.subr.mxu0 0.0
        %2776 = vmatpush1.msra.mxu0 0.0
        %2777 = vmatprep.subr.mxu0 0.0
        %2778 = vmatpush1.msra.mxu0 0.0
        %2779 = vmatprep.subr.mxu0 0.0
        %2780 = vmatpush1.msra.mxu0 0.0
        %2781 = vmatprep.subr.mxu0 0.0
        %2782 = vmatpush1.msra.mxu0 0.0
        %2783 = vmatprep.subr.mxu0 0.0
        %2784 = vmatpush1.msra.mxu0 0.0
        %2785 = vmatprep.subr.mxu0 0.0
        %2786 = vmatpush1.msra.mxu0 0.0
        %2787 = vmatprep.subr.mxu0 0.0
        %2788 = vmatpush1.msra.mxu0 0.0
        %2789 = vmatprep.subr.mxu0 0.0
        %2790 = vmatpush1.msra.mxu0 0.0
        %2791 = vmatprep.subr.mxu0 0.0
        %2792 = vmatpush1.msra.mxu0 0.0
        %2793 = vmatprep.subr.mxu0 0.0
        %2794 = vmatpush1.msra.mxu0 0.0
        %2795 = vmatprep.subr.mxu0 0.0
        %2796 = vmatpush1.msra.mxu0 0.0
        %2797 = vmatprep.subr.mxu0 0.0
        %2798 = vmatpush1.msra.mxu0 0.0
        %2799 = vmatprep.subr.mxu0 0.0
        %2800 = vmatpush1.msra.mxu0 0.0
        %2801 = vmatprep.subr.mxu0 0.0
        %2802 = vmatpush1.msra.mxu0 0.0
        %2803 = vmatprep.subr.mxu0 0.0
        %2804 = vmatpush1.msra.mxu0 0.0
        %2805 = vmatprep.subr.mxu0 0.0
        %2806 = vmatpush1.msra.mxu0 0.0
        %2807 = vmatprep.subr.mxu0 0.0
        %2808 = vmatpush1.msra.mxu0 0.0
        %2809 = vmatprep.subr.mxu0 0.0
        %2810 = vmatpush1.msra.mxu0 0.0
        %2811 = vmatprep.subr.mxu0 0.0
        %2812 = vmatpush1.msra.mxu0 0.0
        %2813 = vmatprep.subr.mxu0 0.0
        %2814 = vmatpush1.msra.mxu0 0.0
        %2815 = vmatprep.subr.mxu0 0.0
        %2816 = vmatpush1.msra.mxu0 0.0
        %2817 = vmatprep.subr.mxu0 0.0
        %2818 = vmatpush1.msra.mxu0 0.0
        %2819 = vmatprep.mubr.f32.mxu0 0.0
        %2820 = vmatmul.mubr.f32.gmra.mrb[0].mxu0 %v2753
        %v2821 = vpop.f32.mrb[0].mxu0
        %v2822 = vadd.f32 %v2750, %v2821
        %v2823 = vpop.f32.mrb[0].mxu0
        %2824 = vdwg.mxu0
        %v2825 = vmul.f32 %v2822, 0.5
        %v2826 = vmul.f32 %v2822, 0.044715
        %v2827 = vmul.f32 %v2826, %v2822
        %v2828 = vmul.f32 %v2827, %v2822
        %v2829 = vadd.f32 %v2822, %v2828
        %v2830 = vmul.f32 %v2829, 0.7978846
        %v2831 = vtanh.pop %v2830
        %v2832 = vadd.f32 %v2831, 1.0
        %v2833 = vmul.f32 %v2825, %v2832
        %v2834 = vld [vmem:[%s14] sm:$0xff]
        %v2835 = vld [vmem:[%s14 + $0x8] sm:$0xff]
        %v2836 = vld [vmem:[%s14 + $0x10] sm:$0xff]
        %v2837 = vld [vmem:[%s14 + $0x18] sm:$0xff]
        %v2838 = vld [vmem:[%s14 + $0x20] sm:$0xff]
        %v2839 = vld [vmem:[%s14 + $0x28] sm:$0xff]
        %v2840 = vld [vmem:[%s14 + $0x30] sm:$0xff]
        %v2841 = vld [vmem:[%s14 + $0x38] sm:$0xff]
        %v2842 = vld [vmem:[%s15] sm:$0x1]
        %v2844 = vlaneseq
        %v2845 = vshrl.u32 %v2844, 7
        %v2846 = vsub.s32 0, %v2845
        %v2847 = vrot.slane %v2842, %v2846
        %vm2849 = vcmask 523264
        %v2851 = vsel %vm2849, %v2833, 0
        %2853 = vmatprep.subr.mxu0 0.0
        %2854 = vmatpush1.msra.mxu0 %v2834
        %2855 = vmatprep.subr.mxu0 0.0
        %2856 = vmatpush1.msra.mxu0 %v2835
        %2857 = vmatprep.subr.mxu0 0.0
        %2858 = vmatpush1.msra.mxu0 %v2836
        %2859 = vmatprep.subr.mxu0 0.0
        %2860 = vmatpush1.msra.mxu0 %v2837
        %2861 = vmatprep.subr.mxu0 0.0
        %2862 = vmatpush1.msra.mxu0 %v2838
        %2863 = vmatprep.subr.mxu0 0.0
        %2864 = vmatpush1.msra.mxu0 %v2839
        %2865 = vmatprep.subr.mxu0 0.0
        %2866 = vmatpush1.msra.mxu0 %v2840
        %2867 = vmatprep.subr.mxu0 0.0
        %2868 = vmatpush1.msra.mxu0 %v2841
        %2869 = vmatprep.subr.mxu0 0.0
        %2870 = vmatpush1.msra.mxu0 0.0
        %2871 = vmatprep.subr.mxu0 0.0
        %2872 = vmatpush1.msra.mxu0 0.0
        %2873 = vmatprep.subr.mxu0 0.0
        %2874 = vmatpush1.msra.mxu0 0.0
        %2875 = vmatprep.subr.mxu0 0.0
        %2876 = vmatpush1.msra.mxu0 0.0
        %2877 = vmatprep.subr.mxu0 0.0
        %2878 = vmatpush1.msra.mxu0 0.0
        %2879 = vmatprep.subr.mxu0 0.0
        %2880 = vmatpush1.msra.mxu0 0.0
        %2881 = vmatprep.subr.mxu0 0.0
        %2882 = vmatpush1.msra.mxu0 0.0
        %2883 = vmatprep.subr.mxu0 0.0
        %2884 = vmatpush1.msra.mxu0 0.0
        %2885 = vmatprep.subr.mxu0 0.0
        %2886 = vmatpush1.msra.mxu0 0.0
        %2887 = vmatprep.subr.mxu0 0.0
        %2888 = vmatpush1.msra.mxu0 0.0
        %2889 = vmatprep.subr.mxu0 0.0
        %2890 = vmatpush1.msra.mxu0 0.0
        %2891 = vmatprep.subr.mxu0 0.0
        %2892 = vmatpush1.msra.mxu0 0.0
        %2893 = vmatprep.subr.mxu0 0.0
        %2894 = vmatpush1.msra.mxu0 0.0
        %2895 = vmatprep.subr.mxu0 0.0
        %2896 = vmatpush1.msra.mxu0 0.0
        %2897 = vmatprep.subr.mxu0 0.0
        %2898 = vmatpush1.msra.mxu0 0.0
        %2899 = vmatprep.subr.mxu0 0.0
        %2900 = vmatpush1.msra.mxu0 0.0
        %2901 = vmatprep.subr.mxu0 0.0
        %2902 = vmatpush1.msra.mxu0 0.0
        %2903 = vmatprep.subr.mxu0 0.0
        %2904 = vmatpush1.msra.mxu0 0.0
        %2905 = vmatprep.subr.mxu0 0.0
        %2906 = vmatpush1.msra.mxu0 0.0
        %2907 = vmatprep.subr.mxu0 0.0
        %2908 = vmatpush1.msra.mxu0 0.0
        %2909 = vmatprep.subr.mxu0 0.0
        %2910 = vmatpush1.msra.mxu0 0.0
        %2911 = vmatprep.subr.mxu0 0.0
        %2912 = vmatpush1.msra.mxu0 0.0
        %2913 = vmatprep.subr.mxu0 0.0
        %2914 = vmatpush1.msra.mxu0 0.0
        %2915 = vmatprep.subr.mxu0 0.0
        %2916 = vmatpush1.msra.mxu0 0.0
        %2917 = vmatprep.mubr.f32.mxu0 0.0
        %2918 = vmatmul.mubr.f32.gmra.mrb[0].mxu0 %v2851
        %v2919 = vpop.f32.mrb[0].mxu0
        %v2920 = vadd.f32 %v2847, %v2919
        %v2921 = vpop.f32.mrb[0].mxu0
        %2922 = vdwg.mxu0
        %v2923 = vadd.f32 %v2740, %v2920
        %v2924 = vsel %vm734, %v2923, 0.0
        %2925 = vadd.xlane.f32.xlu0 %v2924
        %v2926 = vpop.xlane.xlu0 %2925
        %v2927 = vmul.f32 %v2926, %v738
        %v2928 = vsub.f32 %v2923, %v2927
        %v2929 = vmul.f32 %v2928, %v2928
        %v2930 = vsel %vm734, %v2929, 0.0
        %2931 = vadd.xlane.f32.xlu0 %v2930
        %v2932 = vpop.xlane.xlu0 %2931
        %v2933 = vmul.f32 %v2932, %v738
        %v2934 = vadd.f32 %v2933, 1e-12
        %v2935 = vrsqrt.pop %v2934
        %v2936 = vmul.f32 %v2928, %v2935
        %v2937 = vlaneseq
        %v2938 = vshrl.u32 %v2937, 7
        %v2939 = vsub.s32 2, %v2938
        %v2940 = vrot.slane %v759, %v2939
        %v2941 = vmul.f32 %v2936, %v2940
        %v2942 = vlaneseq
        %v2943 = vshrl.u32 %v2942, 7
        %v2944 = vsub.s32 3, %v2943
        %v2945 = vrot.slane %v759, %v2944
        %v2946 = vadd.f32 %v2941, %v2945
        %s2947 = scalar_lea.vmem %s11, 4
        %v2948 = vld [vmem:[%s2947] sm:$0xf]
        %s2949 = scalar_lea.vmem %s3, 128
        %v2950 = vld [vmem:[%s2949] sm:$0xff]
        %v2951 = vld [vmem:[%s2949 + $0x8] sm:$0xff]
        %v2952 = vld [vmem:[%s2949 + $0x10] sm:$0xff]
        %v2953 = vld [vmem:[%s2949 + $0x18] sm:$0xff]
        %s2954 = scalar_lea.vmem %s4, 4
        %v2955 = vld [vmem:[%s2954] sm:$0x1]
        %v2957 = vlaneseq
        %v2958 = vshrl.u32 %v2957, 7
        %v2959 = vsub.s32 0, %v2958
        %v2960 = vrot.slane %v2955, %v2959
        %v2963 = vsel %vm734, %v2946, 0
        %2965 = vmatprep.subr.mxu0 0.0
        %2966 = vmatpush1.msra.mxu0 %v2950
        %2967 = vmatprep.subr.mxu0 0.0
        %2968 = vmatpush1.msra.mxu0 %v2951
        %2969 = vmatprep.subr.mxu0 0.0
        %2970 = vmatpush1.msra.mxu0 %v2952
        %2971 = vmatprep.subr.mxu0 0.0
        %2972 = vmatpush1.msra.mxu0 %v2953
        %2973 = vmatprep.subr.mxu0 0.0
        %2974 = vmatpush1.msra.mxu0 0.0
        %2975 = vmatprep.subr.mxu0 0.0
        %2976 = vmatpush1.msra.mxu0 0.0
        %2977 = vmatprep.subr.mxu0 0.0
        %2978 = vmatpush1.msra.mxu0 0.0
        %2979 = vmatprep.subr.mxu0 0.0
        %2980 = vmatpush1.msra.mxu0 0.0
        %2981 = vmatprep.subr.mxu0 0.0
        %2982 = vmatpush1.msra.mxu0 0.0
        %2983 = vmatprep.subr.mxu0 0.0
        %2984 = vmatpush1.msra.mxu0 0.0
        %2985 = vmatprep.subr.mxu0 0.0
        %2986 = vmatpush1.msra.mxu0 0.0
        %2987 = vmatprep.subr.mxu0 0.0
        %2988 = vmatpush1.msra.mxu0 0.0
        %2989 = vmatprep.subr.mxu0 0.0
        %2990 = vmatpush1.msra.mxu0 0.0
        %2991 = vmatprep.subr.mxu0 0.0
        %2992 = vmatpush1.msra.mxu0 0.0
        %2993 = vmatprep.subr.mxu0 0.0
        %2994 = vmatpush1.msra.mxu0 0.0
        %2995 = vmatprep.subr.mxu0 0.0
        %2996 = vmatpush1.msra.mxu0 0.0
        %2997 = vmatprep.subr.mxu0 0.0
        %2998 = vmatpush1.msra.mxu0 0.0
        %2999 = vmatprep.subr.mxu0 0.0
        %3000 = vmatpush1.msra.mxu0 0.0
        %3001 = vmatprep.subr.mxu0 0.0
        %3002 = vmatpush1.msra.mxu0 0.0
        %3003 = vmatprep.subr.mxu0 0.0
        %3004 = vmatpush1.msra.mxu0 0.0
        %3005 = vmatprep.subr.mxu0 0.0
        %3006 = vmatpush1.msra.mxu0 0.0
        %3007 = vmatprep.subr.mxu0 0.0
        %3008 = vmatpush1.msra.mxu0 0.0
        %3009 = vmatprep.subr.mxu0 0.0
        %3010 = vmatpush1.msra.mxu0 0.0
        %3011 = vmatprep.subr.mxu0 0.0
        %3012 = vmatpush1.msra.mxu0 0.0
        %3013 = vmatprep.subr.mxu0 0.0
        %3014 = vmatpush1.msra.mxu0 0.0
        %3015 = vmatprep.subr.mxu0 0.0
        %3016 = vmatpush1.msra.mxu0 0.0
        %3017 = vmatprep.subr.mxu0 0.0
        %3018 = vmatpush1.msra.mxu0 0.0
        %3019 = vmatprep.subr.mxu0 0.0
        %3020 = vmatpush1.msra.mxu0 0.0
        %3021 = vmatprep.subr.mxu0 0.0
        %3022 = vmatpush1.msra.mxu0 0.0
        %3023 = vmatprep.subr.mxu0 0.0
        %3024 = vmatpush1.msra.mxu0 0.0
        %3025 = vmatprep.subr.mxu0 0.0
        %3026 = vmatpush1.msra.mxu0 0.0
        %3027 = vmatprep.subr.mxu0 0.0
        %3028 = vmatpush1.msra.mxu0 0.0
        %3029 = vmatprep.mubr.f32.mxu0 0.0
        %3030 = vmatmul.mubr.f32.gmra.mrb[0].mxu0 %v2963
        %v3031 = vpop.f32.mrb[0].mxu0
        %v3032 = vadd.f32 %v2960, %v3031
        %v3033 = vpop.f32.mrb[0].mxu0
        %3034 = vdwg.mxu0
        %s3035 = scalar_lea.vmem %s5, 128
        %v3036 = vld [vmem:[%s3035] sm:$0xff]
        %v3037 = vld [vmem:[%s3035 + $0x8] sm:$0xff]
        %v3038 = vld [vmem:[%s3035 + $0x10] sm:$0xff]
        %v3039 = vld [vmem:[%s3035 + $0x18] sm:$0xff]
        %s3040 = scalar_lea.vmem %s6, 4
        %v3041 = vld [vmem:[%s3040] sm:$0x1]
        %v3043 = vlaneseq
        %v3044 = vshrl.u32 %v3043, 7
        %v3045 = vsub.s32 0, %v3044
        %v3046 = vrot.slane %v3041, %v3045
        %3048 = vmatprep.subr.mxu0 0.0
        %3049 = vmatpush1.msra.mxu0 %v3036
        %3050 = vmatprep.subr.mxu0 0.0
        %3051 = vmatpush1.msra.mxu0 %v3037
        %3052 = vmatprep.subr.mxu0 0.0
        %3053 = vmatpush1.msra.mxu0 %v3038
        %3054 = vmatprep.subr.mxu0 0.0
        %3055 = vmatpush1.msra.mxu0 %v3039
        %3056 = vmatprep.subr.mxu0 0.0
        %3057 = vmatpush1.msra.mxu0 0.0
        %3058 = vmatprep.subr.mxu0 0.0
        %3059 = vmatpush1.msra.mxu0 0.0
        %3060 = vmatprep.subr.mxu0 0.0
        %3061 = vmatpush1.msra.mxu0 0.0
        %3062 = vmatprep.subr.mxu0 0.0
        %3063 = vmatpush1.msra.mxu0 0.0
        %3064 = vmatprep.subr.mxu0 0.0
        %3065 = vmatpush1.msra.mxu0 0.0
        %3066 = vmatprep.subr.mxu0 0.0
        %3067 = vmatpush1.msra.mxu0 0.0
        %3068 = vmatprep.subr.mxu0 0.0
        %3069 = vmatpush1.msra.mxu0 0.0
        %3070 = vmatprep.subr.mxu0 0.0
        %3071 = vmatpush1.msra.mxu0 0.0
        %3072 = vmatprep.subr.mxu0 0.0
        %3073 = vmatpush1.msra.mxu0 0.0
        %3074 = vmatprep.subr.mxu0 0.0
        %3075 = vmatpush1.msra.mxu0 0.0
        %3076 = vmatprep.subr.mxu0 0.0
        %3077 = vmatpush1.msra.mxu0 0.0
        %3078 = vmatprep.subr.mxu0 0.0
        %3079 = vmatpush1.msra.mxu0 0.0
        %3080 = vmatprep.subr.mxu0 0.0
        %3081 = vmatpush1.msra.mxu0 0.0
        %3082 = vmatprep.subr.mxu0 0.0
        %3083 = vmatpush1.msra.mxu0 0.0
        %3084 = vmatprep.subr.mxu0 0.0
        %3085 = vmatpush1.msra.mxu0 0.0
        %3086 = vmatprep.subr.mxu0 0.0
        %3087 = vmatpush1.msra.mxu0 0.0
        %3088 = vmatprep.subr.mxu0 0.0
        %3089 = vmatpush1.msra.mxu0 0.0
        %3090 = vmatprep.subr.mxu0 0.0
        %3091 = vmatpush1.msra.mxu0 0.0
        %3092 = vmatprep.subr.mxu0 0.0
        %3093 = vmatpush1.msra.mxu0 0.0
        %3094 = vmatprep.subr.mxu0 0.0
        %3095 = vmatpush1.msra.mxu0 0.0
        %3096 = vmatprep.subr.mxu0 0.0
        %3097 = vmatpush1.msra.mxu0 0.0
        %3098 = vmatprep.subr.mxu0 0.0
        %3099 = vmatpush1.msra.mxu0 0.0
        %3100 = vmatprep.subr.mxu0 0.0
        %3101 = vmatpush1.msra.mxu0 0.0
        %3102 = vmatprep.subr.mxu0 0.0
        %3103 = vmatpush1.msra.mxu0 0.0
        %3104 = vmatprep.subr.mxu0 0.0
        %3105 = vmatpush1.msra.mxu0 0.0
        %3106 = vmatprep.subr.mxu0 0.0
        %3107 = vmatpush1.msra.mxu0 0.0
        %3108 = vmatprep.subr.mxu0 0.0
        %3109 = vmatpush1.msra.mxu0 0.0
        %3110 = vmatprep.subr.mxu0 0.0
        %3111 = vmatpush1.msra.mxu0 0.0
        %3112 = vmatprep.mubr.f32.mxu0 0.0
        %3113 = vmatmul.mubr.f32.gmra.mrb[0].mxu0 %v2963
        %v3114 = vpop.f32.mrb[0].mxu0
        %v3115 = vadd.f32 %v3046, %v3114
        %v3116 = vpop.f32.mrb[0].mxu0
        %3117 = vdwg.mxu0
        %s3118 = scalar_lea.vmem %s7, 128
        %v3119 = vld [vmem:[%s3118] sm:$0xff]
        %v3120 = vld [vmem:[%s3118 + $0x8] sm:$0xff]
        %v3121 = vld [vmem:[%s3118 + $0x10] sm:$0xff]
        %v3122 = vld [vmem:[%s3118 + $0x18] sm:$0xff]
        %s3123 = scalar_lea.vmem %s8, 4
        %v3124 = vld [vmem:[%s3123] sm:$0x1]
        %v3126 = vlaneseq
        %v3127 = vshrl.u32 %v3126, 7
        %v3128 = vsub.s32 0, %v3127
        %v3129 = vrot.slane %v3124, %v3128
        %3131 = vmatprep.subr.mxu0 0.0
        %3132 = vmatpush1.msra.mxu0 %v3119
        %3133 = vmatprep.subr.mxu0 0.0
        %3134 = vmatpush1.msra.mxu0 %v3120
        %3135 = vmatprep.subr.mxu0 0.0
        %3136 = vmatpush1.msra.mxu0 %v3121
        %3137 = vmatprep.subr.mxu0 0.0
        %3138 = vmatpush1.msra.mxu0 %v3122
        %3139 = vmatprep.subr.mxu0 0.0
        %3140 = vmatpush1.msra.mxu0 0.0
        %3141 = vmatprep.subr.mxu0 0.0
        %3142 = vmatpush1.msra.mxu0 0.0
        %3143 = vmatprep.subr.mxu0 0.0
        %3144 = vmatpush1.msra.mxu0 0.0
        %3145 = vmatprep.subr.mxu0 0.0
        %3146 = vmatpush1.msra.mxu0 0.0
        %3147 = vmatprep.subr.mxu0 0.0
        %3148 = vmatpush1.msra.mxu0 0.0
        %3149 = vmatprep.subr.mxu0 0.0
        %3150 = vmatpush1.msra.mxu0 0.0
        %3151 = vmatprep.subr.mxu0 0.0
        %3152 = vmatpush1.msra.mxu0 0.0
        %3153 = vmatprep.subr.mxu0 0.0
        %3154 = vmatpush1.msra.mxu0 0.0
        %3155 = vmatprep.subr.mxu0 0.0
        %3156 = vmatpush1.msra.mxu0 0.0
        %3157 = vmatprep.subr.mxu0 0.0
        %3158 = vmatpush1.msra.mxu0 0.0
        %3159 = vmatprep.subr.mxu0 0.0
        %3160 = vmatpush1.msra.mxu0 0.0
        %3161 = vmatprep.subr.mxu0 0.0
        %3162 = vmatpush1.msra.mxu0 0.0
        %3163 = vmatprep.subr.mxu0 0.0
        %3164 = vmatpush1.msra.mxu0 0.0
        %3165 = vmatprep.subr.mxu0 0.0
        %3166 = vmatpush1.msra.mxu0 0.0
        %3167 = vmatprep.subr.mxu0 0.0
        %3168 = vmatpush1.msra.mxu0 0.0
        %3169 = vmatprep.subr.mxu0 0.0
        %3170 = vmatpush1.msra.mxu0 0.0
        %3171 = vmatprep.subr.mxu0 0.0
        %3172 = vmatpush1.msra.mxu0 0.0
        %3173 = vmatprep.subr.mxu0 0.0
        %3174 = vmatpush1.msra.mxu0 0.0
        %3175 = vmatprep.subr.mxu0 0.0
        %3176 = vmatpush1.msra.mxu0 0.0
        %3177 = vmatprep.subr.mxu0 0.0
        %3178 = vmatpush1.msra.mxu0 0.0
        %3179 = vmatprep.subr.mxu0 0.0
        %3180 = vmatpush1.msra.mxu0 0.0
        %3181 = vmatprep.subr.mxu0 0.0
        %3182 = vmatpush1.msra.mxu0 0.0
        %3183 = vmatprep.subr.mxu0 0.0
        %3184 = vmatpush1.msra.mxu0 0.0
        %3185 = vmatprep.subr.mxu0 0.0
        %3186 = vmatpush1.msra.mxu0 0.0
        %3187 = vmatprep.subr.mxu0 0.0
        %3188 = vmatpush1.msra.mxu0 0.0
        %3189 = vmatprep.subr.mxu0 0.0
        %3190 = vmatpush1.msra.mxu0 0.0
        %3191 = vmatprep.subr.mxu0 0.0
        %3192 = vmatpush1.msra.mxu0 0.0
        %3193 = vmatprep.subr.mxu0 0.0
        %3194 = vmatpush1.msra.mxu0 0.0
        %3195 = vmatprep.mubr.f32.mxu0 0.0
        %3196 = vmatmul.mubr.f32.gmra.mrb[0].mxu0 %v2963
        %v3197 = vpop.f32.mrb[0].mxu0
        %v3198 = vadd.f32 %v3129, %v3197
        %v3199 = vpop.f32.mrb[0].mxu0
        %3200 = vdwg.mxu0
        %v3202 = vsel %vm1006, %v3032, 0
        %v3205 = vsel %vm1006, %v3115, 0
        %3207 = vmatprep.subr.mxu0 0.0
        %3208 = vmatpush1.xpose.msra.mxu0 %v3205
        %3209 = vmatprep.subr.mxu0 0.0
        %3210 = vmatpush1.xpose.msra.mxu0 0.0
        %3211 = vmatprep.subr.mxu0 0.0
        %3212 = vmatpush1.xpose.msra.mxu0 0.0
        %3213 = vmatprep.subr.mxu0 0.0
        %3214 = vmatpush1.xpose.msra.mxu0 0.0
        %3215 = vmatprep.subr.mxu0 0.0
        %3216 = vmatpush1.xpose.msra.mxu0 0.0
        %3217 = vmatprep.subr.mxu0 0.0
        %3218 = vmatpush1.xpose.msra.mxu0 0.0
        %3219 = vmatprep.subr.mxu0 0.0
        %3220 = vmatpush1.xpose.msra.mxu0 0.0
        %3221 = vmatprep.subr.mxu0 0.0
        %3222 = vmatpush1.xpose.msra.mxu0 0.0
        %3223 = vmatprep.subr.mxu0 0.0
        %3224 = vmatpush1.xpose.msra.mxu0 0.0
        %3225 = vmatprep.subr.mxu0 0.0
        %3226 = vmatpush1.xpose.msra.mxu0 0.0
        %3227 = vmatprep.subr.mxu0 0.0
        %3228 = vmatpush1.xpose.msra.mxu0 0.0
        %3229 = vmatprep.subr.mxu0 0.0
        %3230 = vmatpush1.xpose.msra.mxu0 0.0
        %3231 = vmatprep.subr.mxu0 0.0
        %3232 = vmatpush1.xpose.msra.mxu0 0.0
        %3233 = vmatprep.subr.mxu0 0.0
        %3234 = vmatpush1.xpose.msra.mxu0 0.0
        %3235 = vmatprep.subr.mxu0 0.0
        %3236 = vmatpush1.xpose.msra.mxu0 0.0
        %3237 = vmatprep.subr.mxu0 0.0
        %3238 = vmatpush1.xpose.msra.mxu0 0.0
        %3239 = vmatprep.subr.mxu0 0.0
        %3240 = vmatpush1.xpose.msra.mxu0 0.0
        %3241 = vmatprep.subr.mxu0 0.0
        %3242 = vmatpush1.xpose.msra.mxu0 0.0
        %3243 = vmatprep.subr.mxu0 0.0
        %3244 = vmatpush1.xpose.msra.mxu0 0.0
        %3245 = vmatprep.subr.mxu0 0.0
        %3246 = vmatpush1.xpose.msra.mxu0 0.0
        %3247 = vmatprep.subr.mxu0 0.0
        %3248 = vmatpush1.xpose.msra.mxu0 0.0
        %3249 = vmatprep.subr.mxu0 0.0
        %3250 = vmatpush1.xpose.msra.mxu0 0.0
        %3251 = vmatprep.subr.mxu0 0.0
        %3252 = vmatpush1.xpose.msra.mxu0 0.0
        %3253 = vmatprep.subr.mxu0 0.0
        %3254 = vmatpush1.xpose.msra.mxu0 0.0
        %3255 = vmatprep.subr.mxu0 0.0
        %3256 = vmatpush1.xpose.msra.mxu0 0.0
        %3257 = vmatprep.subr.mxu0 0.0
        %3258 = vmatpush1.xpose.msra.mxu0 0.0
        %3259 = vmatprep.subr.mxu0 0.0
        %3260 = vmatpush1.xpose.msra.mxu0 0.0
        %3261 = vmatprep.subr.mxu0 0.0
        %3262 = vmatpush1.xpose.msra.mxu0 0.0
        %3263 = vmatprep.subr.mxu0 0.0
        %3264 = vmatpush1.xpose.msra.mxu0 0.0
        %3265 = vmatprep.subr.mxu0 0.0
        %3266 = vmatpush1.xpose.msra.mxu0 0.0
        %3267 = vmatprep.subr.mxu0 0.0
        %3268 = vmatpush1.xpose.msra.mxu0 0.0
        %3269 = vmatprep.subr.mxu0 0.0
        %3270 = vmatpush1.xpose.msra.mxu0 0.0
        %3271 = vmatprep.mubr.f32.mxu0 0.0
        %3272 = vmatmul.mubr.f32.gmra.mrb[0].mxu0 %v3202
        %v3273 = vpop.f32.mrb[0].mxu0
        %v3274 = vadd.f32 0.0, %v3273
        %v3275 = vpop.f32.mrb[0].mxu0
        %3276 = vdwg.mxu0
        %v3277 = vmul.f32 %v3274, 0.35355338
        %v3278 = vadd.f32 %v3277, %v1088
        %v3279 = vsel %vm1006, %v3278, -inf
        %3280 = vmax.xlane.f32.xlu0 %v3279
        %v3281 = vpop.xlane.xlu0 %3280
        %v3282 = vsub.f32 %v3278, %v3281
        %v3283 = vmul.f32 %v3282, 1.442695
        %v3284 = vpow.pop %v3283
        %v3285 = vsel %vm1006, %v3284, 0.0
        %3286 = vadd.xlane.f32.xlu0 %v3285
        %v3287 = vpop.xlane.xlu0 %3286
        %v3288 = vrcp.pop %v3287
        %v3289 = vmul.f32 %v3284, %v3288
        %v3291 = vsel %vm1006, %v3289, 0
        %3293 = vmatprep.subr.mxu0 0.0
        %3294 = vmatpush1.msra.mxu0 %v3198
        %3295 = vmatprep.subr.mxu0 0.0
        %3296 = vmatpush1.msra.mxu0 0.0
        %3297 = vmatprep.subr.mxu0 0.0
        %3298 = vmatpush1.msra.mxu0 0.0
        %3299 = vmatprep.subr.mxu0 0.0
        %3300 = vmatpush1.msra.mxu0 0.0
        %3301 = vmatprep.subr.mxu0 0.0
        %3302 = vmatpush1.msra.mxu0 0.0
        %3303 = vmatprep.subr.mxu0 0.0
        %3304 = vmatpush1.msra.mxu0 0.0
        %3305 = vmatprep.subr.mxu0 0.0
        %3306 = vmatpush1.msra.mxu0 0.0
        %3307 = vmatprep.subr.mxu0 0.0
        %3308 = vmatpush1.msra.mxu0 0.0
        %3309 = vmatprep.subr.mxu0 0.0
        %3310 = vmatpush1.msra.mxu0 0.0
        %3311 = vmatprep.subr.mxu0 0.0
        %3312 = vmatpush1.msra.mxu0 0.0
        %3313 = vmatprep.subr.mxu0 0.0
        %3314 = vmatpush1.msra.mxu0 0.0
        %3315 = vmatprep.subr.mxu0 0.0
        %3316 = vmatpush1.msra.mxu0 0.0
        %3317 = vmatprep.subr.mxu0 0.0
        %3318 = vmatpush1.msra.mxu0 0.0
        %3319 = vmatprep.subr.mxu0 0.0
        %3320 = vmatpush1.msra.mxu0 0.0
        %3321 = vmatprep.subr.mxu0 0.0
        %3322 = vmatpush1.msra.mxu0 0.0
        %3323 = vmatprep.subr.mxu0 0.0
        %3324 = vmatpush1.msra.mxu0 0.0
        %3325 = vmatprep.subr.mxu0 0.0
        %3326 = vmatpush1.msra.mxu0 0.0
        %3327 = vmatprep.subr.mxu0 0.0
        %3328 = vmatpush1.msra.mxu0 0.0
        %3329 = vmatprep.subr.mxu0 0.0
        %3330 = vmatpush1.msra.mxu0 0.0
        %3331 = vmatprep.subr.mxu0 0.0
        %3332 = vmatpush1.msra.mxu0 0.0
        %3333 = vmatprep.subr.mxu0 0.0
        %3334 = vmatpush1.msra.mxu0 0.0
        %3335 = vmatprep.subr.mxu0 0.0
        %3336 = vmatpush1.msra.mxu0 0.0
        %3337 = vmatprep.subr.mxu0 0.0
        %3338 = vmatpush1.msra.mxu0 0.0
        %3339 = vmatprep.subr.mxu0 0.0
        %3340 = vmatpush1.msra.mxu0 0.0
        %3341 = vmatprep.subr.mxu0 0.0
        %3342 = vmatpush1.msra.mxu0 0.0
        %3343 = vmatprep.subr.mxu0 0.0
        %3344 = vmatpush1.msra.mxu0 0.0
        %3345 = vmatprep.subr.mxu0 0.0
        %3346 = vmatpush1.msra.mxu0 0.0
        %3347 = vmatprep.subr.mxu0 0.0
        %3348 = vmatpush1.msra.mxu0 0.0
        %3349 = vmatprep.subr.mxu0 0.0
        %3350 = vmatpush1.msra.mxu0 0.0
        %3351 = vmatprep.subr.mxu0 0.0
        %3352 = vmatpush1.msra.mxu0 0.0
        %3353 = vmatprep.subr.mxu0 0.0
        %3354 = vmatpush1.msra.mxu0 0.0
        %3355 = vmatprep.subr.mxu0 0.0
        %3356 = vmatpush1.msra.mxu0 0.0
        %3357 = vmatprep.mubr.f32.mxu0 0.0
        %3358 = vmatmul.mubr.f32.gmra.mrb[0].mxu0 %v3291
        %v3359 = vpop.f32.mrb[0].mxu0
        %v3360 = vadd.f32 0.0, %v3359
        %v3361 = vpop.f32.mrb[0].mxu0
        %3362 = vdwg.mxu0
        %s3363 = scalar_lea.vmem %s9, 32
        %v3364 = vld [vmem:[%s3363] sm:$0xff]
        %s3365 = scalar_lea.vmem %s3, 160
        %v3366 = vld [vmem:[%s3365] sm:$0xff]
        %v3367 = vld [vmem:[%s3365 + $0x8] sm:$0xff]
        %v3368 = vld [vmem:[%s3365 + $0x10] sm:$0xff]
        %v3369 = vld [vmem:[%s3365 + $0x18] sm:$0xff]
        %s3370 = scalar_lea.vmem %s4, 5
        %v3371 = vld [vmem:[%s3370] sm:$0x1]
        %v3373 = vlaneseq
        %v3374 = vshrl.u32 %v3373, 7
        %v3375 = vsub.s32 0, %v3374
        %v3376 = vrot.slane %v3371, %v3375
        %3378 = vmatprep.subr.mxu0 0.0
        %3379 = vmatpush1.msra.mxu0 %v3366
        %3380 = vmatprep.subr.mxu0 0.0
        %3381 = vmatpush1.msra.mxu0 %v3367
        %3382 = vmatprep.subr.mxu0 0.0
        %3383 = vmatpush1.msra.mxu0 %v3368
        %3384 = vmatprep.subr.mxu0 0.0
        %3385 = vmatpush1.msra.mxu0 %v3369
        %3386 = vmatprep.subr.mxu0 0.0
        %3387 = vmatpush1.msra.mxu0 0.0
        %3388 = vmatprep.subr.mxu0 0.0
        %3389 = vmatpush1.msra.mxu0 0.0
        %3390 = vmatprep.subr.mxu0 0.0
        %3391 = vmatpush1.msra.mxu0 0.0
        %3392 = vmatprep.subr.mxu0 0.0
        %3393 = vmatpush1.msra.mxu0 0.0
        %3394 = vmatprep.subr.mxu0 0.0
        %3395 = vmatpush1.msra.mxu0 0.0
        %3396 = vmatprep.subr.mxu0 0.0
        %3397 = vmatpush1.msra.mxu0 0.0
        %3398 = vmatprep.subr.mxu0 0.0
        %3399 = vmatpush1.msra.mxu0 0.0
        %3400 = vmatprep.subr.mxu0 0.0
        %3401 = vmatpush1.msra.mxu0 0.0
        %3402 = vmatprep.subr.mxu0 0.0
        %3403 = vmatpush1.msra.mxu0 0.0
        %3404 = vmatprep.subr.mxu0 0.0
        %3405 = vmatpush1.msra.mxu0 0.0
        %3406 = vmatprep.subr.mxu0 0.0
        %3407 = vmatpush1.msra.mxu0 0.0
        %3408 = vmatprep.subr.mxu0 0.0
        %3409 = vmatpush1.msra.mxu0 0.0
        %3410 = vmatprep.subr.mxu0 0.0
        %3411 = vmatpush1.msra.mxu0 0.0
        %3412 = vmatprep.subr.mxu0 0.0
        %3413 = vmatpush1.msra.mxu0 0.0
        %3414 = vmatprep.subr.mxu0 0.0
        %3415 = vmatpush1.msra.mxu0 0.0
        %3416 = vmatprep.subr.mxu0 0.0
        %3417 = vmatpush1.msra.mxu0 0.0
        %3418 = vmatprep.subr.mxu0 0.0
        %3419 = vmatpush1.msra.mxu0 0.0
        %3420 = vmatprep.subr.mxu0 0.0
        %3421 = vmatpush1.msra.mxu0 0.0
        %3422 = vmatprep.subr.mxu0 0.0
        %3423 = vmatpush1.msra.mxu0 0.0
        %3424 = vmatprep.subr.mxu0 0.0
        %3425 = vmatpush1.msra.mxu0 0.0
        %3426 = vmatprep.subr.mxu0 0.0
        %3427 = vmatpush1.msra.mxu0 0.0
        %3428 = vmatprep.subr.mxu0 0.0
        %3429 = vmatpush1.msra.mxu0 0.0
        %3430 = vmatprep.subr.mxu0 0.0
        %3431 = vmatpush1.msra.mxu0 0.0
        %3432 = vmatprep.subr.mxu0 0.0
        %3433 = vmatpush1.msra.mxu0 0.0
        %3434 = vmatprep.subr.mxu0 0.0
        %3435 = vmatpush1.msra.mxu0 0.0
        %3436 = vmatprep.subr.mxu0 0.0
        %3437 = vmatpush1.msra.mxu0 0.0
        %3438 = vmatprep.subr.mxu0 0.0
        %3439 = vmatpush1.msra.mxu0 0.0
        %3440 = vmatprep.subr.mxu0 0.0
        %3441 = vmatpush1.msra.mxu0 0.0
        %3442 = vmatprep.mubr.f32.mxu0 0.0
        %3443 = vmatmul.mubr.f32.gmra.mrb[0].mxu0 %v2963
        %v3444 = vpop.f32.mrb[0].mxu0
        %v3445 = vadd.f32 %v3376, %v3444
        %v3446 = vpop.f32.mrb[0].mxu0
        %3447 = vdwg.mxu0
        %s3448 = scalar_lea.vmem %s5, 160
        %v3449 = vld [vmem:[%s3448] sm:$0xff]
        %v3450 = vld [vmem:[%s3448 + $0x8] sm:$0xff]
        %v3451 = vld [vmem:[%s3448 + $0x10] sm:$0xff]
        %v3452 = vld [vmem:[%s3448 + $0x18] sm:$0xff]
        %s3453 = scalar_lea.vmem %s6, 5
        %v3454 = vld [vmem:[%s3453] sm:$0x1]
        %v3456 = vlaneseq
        %v3457 = vshrl.u32 %v3456, 7
        %v3458 = vsub.s32 0, %v3457
        %v3459 = vrot.slane %v3454, %v3458
        %3461 = vmatprep.subr.mxu0 0.0
        %3462 = vmatpush1.msra.mxu0 %v3449
        %3463 = vmatprep.subr.mxu0 0.0
        %3464 = vmatpush1.msra.mxu0 %v3450
        %3465 = vmatprep.subr.mxu0 0.0
        %3466 = vmatpush1.msra.mxu0 %v3451
        %3467 = vmatprep.subr.mxu0 0.0
        %3468 = vmatpush1.msra.mxu0 %v3452
        %3469 = vmatprep.subr.mxu0 0.0
        %3470 = vmatpush1.msra.mxu0 0.0
        %3471 = vmatprep.subr.mxu0 0.0
        %3472 = vmatpush1.msra.mxu0 0.0
        %3473 = vmatprep.subr.mxu0 0.0
        %3474 = vmatpush1.msra.mxu0 0.0
        %3475 = vmatprep.subr.mxu0 0.0
        %3476 = vmatpush1.msra.mxu0 0.0
        %3477 = vmatprep.subr.mxu0 0.0
        %3478 = vmatpush1.msra.mxu0 0.0
        %3479 = vmatprep.subr.mxu0 0.0
        %3480 = vmatpush1.msra.mxu0 0.0
        %3481 = vmatprep.subr.mxu0 0.0
        %3482 = vmatpush1.msra.mxu0 0.0
        %3483 = vmatprep.subr.mxu0 0.0
        %3484 = vmatpush1.msra.mxu0 0.0
        %3485 = vmatprep.subr.mxu0 0.0
        %3486 = vmatpush1.msra.mxu0 0.0
        %3487 = vmatprep.subr.mxu0 0.0
        %3488 = vmatpush1.msra.mxu0 0.0
        %3489 = vmatprep.subr.mxu0 0.0
        %3490 = vmatpush1.msra.mxu0 0.0
        %3491 = vmatprep.subr.mxu0 0.0
        %3492 = vmatpush1.msra.mxu0 0.0
        %3493 = vmatprep.subr.mxu0 0.0
        %3494 = vmatpush1.msra.mxu0 0.0
        %3495 = vmatprep.subr.mxu0 0.0
        %3496 = vmatpush1.msra.mxu0 0.0
        %3497 = vmatprep.subr.mxu0 0.0
        %3498 = vmatpush1.msra.mxu0 0.0
        %3499 = vmatprep.subr.mxu0 0.0
        %3500 = vmatpush1.msra.mxu0 0.0
        %3501 = vmatprep.subr.mxu0 0.0
        %3502 = vmatpush1.msra.mxu0 0.0
        %3503 = vmatprep.subr.mxu0 0.0
        %3504 = vmatpush1.msra.mxu0 0.0
        %3505 = vmatprep.subr.mxu0 0.0
        %3506 = vmatpush1.msra.mxu0 0.0
        %3507 = vmatprep.subr.mxu0 0.0
        %3508 = vmatpush1.msra.mxu0 0.0
        %3509 = vmatprep.subr.mxu0 0.0
        %3510 = vmatpush1.msra.mxu0 0.0
        %3511 = vmatprep.subr.mxu0 0.0
        %3512 = vmatpush1.msra.mxu0 0.0
        %3513 = vmatprep.subr.mxu0 0.0
        %3514 = vmatpush1.msra.mxu0 0.0
        %3515 = vmatprep.subr.mxu0 0.0
        %3516 = vmatpush1.msra.mxu0 0.0
        %3517 = vmatprep.subr.mxu0 0.0
        %3518 = vmatpush1.msra.mxu0 0.0
        %3519 = vmatprep.subr.mxu0 0.0
        %3520 = vmatpush1.msra.mxu0 0.0
        %3521 = vmatprep.subr.mxu0 0.0
        %3522 = vmatpush1.msra.mxu0 0.0
        %3523 = vmatprep.subr.mxu0 0.0
        %3524 = vmatpush1.msra.mxu0 0.0
        %3525 = vmatprep.mubr.f32.mxu0 0.0
        %3526 = vmatmul.mubr.f32.gmra.mrb[0].mxu0 %v2963
        %v3527 = vpop.f32.mrb[0].mxu0
        %v3528 = vadd.f32 %v3459, %v3527
        %v3529 = vpop.f32.mrb[0].mxu0
        %3530 = vdwg.mxu0
        %s3531 = scalar_lea.vmem %s7, 160
        %v3532 = vld [vmem:[%s3531] sm:$0xff]
        %v3533 = vld [vmem:[%s3531 + $0x8] sm:$0xff]
        %v3534 = vld [vmem:[%s3531 + $0x10] sm:$0xff]
        %v3535 = vld [vmem:[%s3531 + $0x18] sm:$0xff]
        %s3536 = scalar_lea.vmem %s8, 5
        %v3537 = vld [vmem:[%s3536] sm:$0x1]
        %v3539 = vlaneseq
        %v3540 = vshrl.u32 %v3539, 7
        %v3541 = vsub.s32 0, %v3540
        %v3542 = vrot.slane %v3537, %v3541
        %3544 = vmatprep.subr.mxu0 0.0
        %3545 = vmatpush1.msra.mxu0 %v3532
        %3546 = vmatprep.subr.mxu0 0.0
        %3547 = vmatpush1.msra.mxu0 %v3533
        %3548 = vmatprep.subr.mxu0 0.0
        %3549 = vmatpush1.msra.mxu0 %v3534
        %3550 = vmatprep.subr.mxu0 0.0
        %3551 = vmatpush1.msra.mxu0 %v3535
        %3552 = vmatprep.subr.mxu0 0.0
        %3553 = vmatpush1.msra.mxu0 0.0
        %3554 = vmatprep.subr.mxu0 0.0
        %3555 = vmatpush1.msra.mxu0 0.0
        %3556 = vmatprep.subr.mxu0 0.0
        %3557 = vmatpush1.msra.mxu0 0.0
        %3558 = vmatprep.subr.mxu0 0.0
        %3559 = vmatpush1.msra.mxu0 0.0
        %3560 = vmatprep.subr.mxu0 0.0
        %3561 = vmatpush1.msra.mxu0 0.0
        %3562 = vmatprep.subr.mxu0 0.0
        %3563 = vmatpush1.msra.mxu0 0.0
        %3564 = vmatprep.subr.mxu0 0.0
        %3565 = vmatpush1.msra.mxu0 0.0
        %3566 = vmatprep.subr.mxu0 0.0
        %3567 = vmatpush1.msra.mxu0 0.0
        %3568 = vmatprep.subr.mxu0 0.0
        %3569 = vmatpush1.msra.mxu0 0.0
        %3570 = vmatprep.subr.mxu0 0.0
        %3571 = vmatpush1.msra.mxu0 0.0
        %3572 = vmatprep.subr.mxu0 0.0
        %3573 = vmatpush1.msra.mxu0 0.0
        %3574 = vmatprep.subr.mxu0 0.0
        %3575 = vmatpush1.msra.mxu0 0.0
        %3576 = vmatprep.subr.mxu0 0.0
        %3577 = vmatpush1.msra.mxu0 0.0
        %3578 = vmatprep.subr.mxu0 0.0
        %3579 = vmatpush1.msra.mxu0 0.0
        %3580 = vmatprep.subr.mxu0 0.0
        %3581 = vmatpush1.msra.mxu0 0.0
        %3582 = vmatprep.subr.mxu0 0.0
        %3583 = vmatpush1.msra.mxu0 0.0
        %3584 = vmatprep.subr.mxu0 0.0
        %3585 = vmatpush1.msra.mxu0 0.0
        %3586 = vmatprep.subr.mxu0 0.0
        %3587 = vmatpush1.msra.mxu0 0.0
        %3588 = vmatprep.subr.mxu0 0.0
        %3589 = vmatpush1.msra.mxu0 0.0
        %3590 = vmatprep.subr.mxu0 0.0
        %3591 = vmatpush1.msra.mxu0 0.0
        %3592 = vmatprep.subr.mxu0 0.0
        %3593 = vmatpush1.msra.mxu0 0.0
        %3594 = vmatprep.subr.mxu0 0.0
        %3595 = vmatpush1.msra.mxu0 0.0
        %3596 = vmatprep.subr.mxu0 0.0
        %3597 = vmatpush1.msra.mxu0 0.0
        %3598 = vmatprep.subr.mxu0 0.0
        %3599 = vmatpush1.msra.mxu0 0.0
        %3600 = vmatprep.subr.mxu0 0.0
        %3601 = vmatpush1.msra.mxu0 0.0
        %3602 = vmatprep.subr.mxu0 0.0
        %3603 = vmatpush1.msra.mxu0 0.0
        %3604 = vmatprep.subr.mxu0 0.0
        %3605 = vmatpush1.msra.mxu0 0.0
        %3606 = vmatprep.subr.mxu0 0.0
        %3607 = vmatpush1.msra.mxu0 0.0
        %3608 = vmatprep.mubr.f32.mxu0 0.0
        %3609 = vmatmul.mubr.f32.gmra.mrb[0].mxu0 %v2963
        %v3610 = vpop.f32.mrb[0].mxu0
        %v3611 = vadd.f32 %v3542, %v3610
        %v3612 = vpop.f32.mrb[0].mxu0
        %3613 = vdwg.mxu0
        %v3615 = vsel %vm1006, %v3445, 0
        %v3618 = vsel %vm1006, %v3528, 0
        %3620 = vmatprep.subr.mxu0 0.0
        %3621 = vmatpush1.xpose.msra.mxu0 %v3618
        %3622 = vmatprep.subr.mxu0 0.0
        %3623 = vmatpush1.xpose.msra.mxu0 0.0
        %3624 = vmatprep.subr.mxu0 0.0
        %3625 = vmatpush1.xpose.msra.mxu0 0.0
        %3626 = vmatprep.subr.mxu0 0.0
        %3627 = vmatpush1.xpose.msra.mxu0 0.0
        %3628 = vmatprep.subr.mxu0 0.0
        %3629 = vmatpush1.xpose.msra.mxu0 0.0
        %3630 = vmatprep.subr.mxu0 0.0
        %3631 = vmatpush1.xpose.msra.mxu0 0.0
        %3632 = vmatprep.subr.mxu0 0.0
        %3633 = vmatpush1.xpose.msra.mxu0 0.0
        %3634 = vmatprep.subr.mxu0 0.0
        %3635 = vmatpush1.xpose.msra.mxu0 0.0
        %3636 = vmatprep.subr.mxu0 0.0
        %3637 = vmatpush1.xpose.msra.mxu0 0.0
        %3638 = vmatprep.subr.mxu0 0.0
        %3639 = vmatpush1.xpose.msra.mxu0 0.0
        %3640 = vmatprep.subr.mxu0 0.0
        %3641 = vmatpush1.xpose.msra.mxu0 0.0
        %3642 = vmatprep.subr.mxu0 0.0
        %3643 = vmatpush1.xpose.msra.mxu0 0.0
        %3644 = vmatprep.subr.mxu0 0.0
        %3645 = vmatpush1.xpose.msra.mxu0 0.0
        %3646 = vmatprep.subr.mxu0 0.0
        %3647 = vmatpush1.xpose.msra.mxu0 0.0
        %3648 = vmatprep.subr.mxu0 0.0
        %3649 = vmatpush1.xpose.msra.mxu0 0.0
        %3650 = vmatprep.subr.mxu0 0.0
        %3651 = vmatpush1.xpose.msra.mxu0 0.0
        %3652 = vmatprep.subr.mxu0 0.0
        %3653 = vmatpush1.xpose.msra.mxu0 0.0
        %3654 = vmatprep.subr.mxu0 0.0
        %3655 = vmatpush1.xpose.msra.mxu0 0.0
        %3656 = vmatprep.subr.mxu0 0.0
        %3657 = vmatpush1.xpose.msra.mxu0 0.0
        %3658 = vmatprep.subr.mxu0 0.0
        %3659 = vmatpush1.xpose.msra.mxu0 0.0
        %3660 = vmatprep.subr.mxu0 0.0
        %3661 = vmatpush1.xpose.msra.mxu0 0.0
        %3662 = vmatprep.subr.mxu0 0.0
        %3663 = vmatpush1.xpose.msra.mxu0 0.0
        %3664 = vmatprep.subr.mxu0 0.0
        %3665 = vmatpush1.xpose.msra.mxu0 0.0
        %3666 = vmatprep.subr.mxu0 0.0
        %3667 = vmatpush1.xpose.msra.mxu0 0.0
        %3668 = vmatprep.subr.mxu0 0.0
        %3669 = vmatpush1.xpose.msra.mxu0 0.0
        %3670 = vmatprep.subr.mxu0 0.0
        %3671 = vmatpush1.xpose.msra.mxu0 0.0
        %3672 = vmatprep.subr.mxu0 0.0
        %3673 = vmatpush1.xpose.msra.mxu0 0.0
        %3674 = vmatprep.subr.mxu0 0.0
        %3675 = vmatpush1.xpose.msra.mxu0 0.0
        %3676 = vmatprep.subr.mxu0 0.0
        %3677 = vmatpush1.xpose.msra.mxu0 0.0
        %3678 = vmatprep.subr.mxu0 0.0
        %3679 = vmatpush1.xpose.msra.mxu0 0.0
        %3680 = vmatprep.subr.mxu0 0.0
        %3681 = vmatpush1.xpose.msra.mxu0 0.0
        %3682 = vmatprep.subr.mxu0 0.0
        %3683 = vmatpush1.xpose.msra.mxu0 0.0
        %3684 = vmatprep.mubr.f32.mxu0 0.0
        %3685 = vmatmul.mubr.f32.gmra.mrb[0].mxu0 %v3615
        %v3686 = vpop.f32.mrb[0].mxu0
        %v3687 = vadd.f32 0.0, %v3686
        %v3688 = vpop.f32.mrb[0].mxu0
        %3689 = vdwg.mxu0
        %v3690 = vmul.f32 %v3687, 0.35355338
        %v3691 = vadd.f32 %v3690, %v1088
        %v3692 = vsel %vm1006, %v3691, -inf
        %3693 = vmax.xlane.f32.xlu0 %v3692
        %v3694 = vpop.xlane.xlu0 %3693
        %v3695 = vsub.f32 %v3691, %v3694
        %v3696 = vmul.f32 %v3695, 1.442695
        %v3697 = vpow.pop %v3696
        %v3698 = vsel %vm1006, %v3697, 0.0
        %3699 = vadd.xlane.f32.xlu0 %v3698
        %v3700 = vpop.xlane.xlu0 %3699
        %v3701 = vrcp.pop %v3700
        %v3702 = vmul.f32 %v3697, %v3701
        %v3704 = vsel %vm1006, %v3702, 0
        %3706 = vmatprep.subr.mxu0 0.0
        %3707 = vmatpush1.msra.mxu0 %v3611
        %3708 = vmatprep.subr.mxu0 0.0
        %3709 = vmatpush1.msra.mxu0 0.0
        %3710 = vmatprep.subr.mxu0 0.0
        %3711 = vmatpush1.msra.mxu0 0.0
        %3712 = vmatprep.subr.mxu0 0.0
        %3713 = vmatpush1.msra.mxu0 0.0
        %3714 = vmatprep.subr.mxu0 0.0
        %3715 = vmatpush1.msra.mxu0 0.0
        %3716 = vmatprep.subr.mxu0 0.0
        %3717 = vmatpush1.msra.mxu0 0.0
        %3718 = vmatprep.subr.mxu0 0.0
        %3719 = vmatpush1.msra.mxu0 0.0
        %3720 = vmatprep.subr.mxu0 0.0
        %3721 = vmatpush1.msra.mxu0 0.0
        %3722 = vmatprep.subr.mxu0 0.0
        %3723 = vmatpush1.msra.mxu0 0.0
        %3724 = vmatprep.subr.mxu0 0.0
        %3725 = vmatpush1.msra.mxu0 0.0
        %3726 = vmatprep.subr.mxu0 0.0
        %3727 = vmatpush1.msra.mxu0 0.0
        %3728 = vmatprep.subr.mxu0 0.0
        %3729 = vmatpush1.msra.mxu0 0.0
        %3730 = vmatprep.subr.mxu0 0.0
        %3731 = vmatpush1.msra.mxu0 0.0
        %3732 = vmatprep.subr.mxu0 0.0
        %3733 = vmatpush1.msra.mxu0 0.0
        %3734 = vmatprep.subr.mxu0 0.0
        %3735 = vmatpush1.msra.mxu0 0.0
        %3736 = vmatprep.subr.mxu0 0.0
        %3737 = vmatpush1.msra.mxu0 0.0
        %3738 = vmatprep.subr.mxu0 0.0
        %3739 = vmatpush1.msra.mxu0 0.0
        %3740 = vmatprep.subr.mxu0 0.0
        %3741 = vmatpush1.msra.mxu0 0.0
        %3742 = vmatprep.subr.mxu0 0.0
        %3743 = vmatpush1.msra.mxu0 0.0
        %3744 = vmatprep.subr.mxu0 0.0
        %3745 = vmatpush1.msra.mxu0 0.0
        %3746 = vmatprep.subr.mxu0 0.0
        %3747 = vmatpush1.msra.mxu0 0.0
        %3748 = vmatprep.subr.mxu0 0.0
        %3749 = vmatpush1.msra.mxu0 0.0
        %3750 = vmatprep.subr.mxu0 0.0
        %3751 = vmatpush1.msra.mxu0 0.0
        %3752 = vmatprep.subr.mxu0 0.0
        %3753 = vmatpush1.msra.mxu0 0.0
        %3754 = vmatprep.subr.mxu0 0.0
        %3755 = vmatpush1.msra.mxu0 0.0
        %3756 = vmatprep.subr.mxu0 0.0
        %3757 = vmatpush1.msra.mxu0 0.0
        %3758 = vmatprep.subr.mxu0 0.0
        %3759 = vmatpush1.msra.mxu0 0.0
        %3760 = vmatprep.subr.mxu0 0.0
        %3761 = vmatpush1.msra.mxu0 0.0
        %3762 = vmatprep.subr.mxu0 0.0
        %3763 = vmatpush1.msra.mxu0 0.0
        %3764 = vmatprep.subr.mxu0 0.0
        %3765 = vmatpush1.msra.mxu0 0.0
        %3766 = vmatprep.subr.mxu0 0.0
        %3767 = vmatpush1.msra.mxu0 0.0
        %3768 = vmatprep.subr.mxu0 0.0
        %3769 = vmatpush1.msra.mxu0 0.0
        %3770 = vmatprep.mubr.f32.mxu0 0.0
        %3771 = vmatmul.mubr.f32.gmra.mrb[0].mxu0 %v3704
        %v3772 = vpop.f32.mrb[0].mxu0
        %v3773 = vadd.f32 0.0, %v3772
        %v3774 = vpop.f32.mrb[0].mxu0
        %3775 = vdwg.mxu0
        %s3776 = scalar_lea.vmem %s9, 40
        %v3777 = vld [vmem:[%s3776] sm:$0xff]
        %v3779 = vsel %vm1006, %v3773, 0
        %3781 = vmatprep.subr.mxu0 0.0
        %3782 = vmatpush1.msra.mxu0 %v3777
        %3783 = vmatprep.subr.mxu0 0.0
        %3784 = vmatpush1.msra.mxu0 0.0
        %3785 = vmatprep.subr.mxu0 0.0
        %3786 = vmatpush1.msra.mxu0 0.0
        %3787 = vmatprep.subr.mxu0 0.0
        %3788 = vmatpush1.msra.mxu0 0.0
        %3789 = vmatprep.subr.mxu0 0.0
        %3790 = vmatpush1.msra.mxu0 0.0
        %3791 = vmatprep.subr.mxu0 0.0
        %3792 = vmatpush1.msra.mxu0 0.0
        %3793 = vmatprep.subr.mxu0 0.0
        %3794 = vmatpush1.msra.mxu0 0.0
        %3795 = vmatprep.subr.mxu0 0.0
        %3796 = vmatpush1.msra.mxu0 0.0
        %3797 = vmatprep.subr.mxu0 0.0
        %3798 = vmatpush1.msra.mxu0 0.0
        %3799 = vmatprep.subr.mxu0 0.0
        %3800 = vmatpush1.msra.mxu0 0.0
        %3801 = vmatprep.subr.mxu0 0.0
        %3802 = vmatpush1.msra.mxu0 0.0
        %3803 = vmatprep.subr.mxu0 0.0
        %3804 = vmatpush1.msra.mxu0 0.0
        %3805 = vmatprep.subr.mxu0 0.0
        %3806 = vmatpush1.msra.mxu0 0.0
        %3807 = vmatprep.subr.mxu0 0.0
        %3808 = vmatpush1.msra.mxu0 0.0
        %3809 = vmatprep.subr.mxu0 0.0
        %3810 = vmatpush1.msra.mxu0 0.0
        %3811 = vmatprep.subr.mxu0 0.0
        %3812 = vmatpush1.msra.mxu0 0.0
        %3813 = vmatprep.subr.mxu0 0.0
        %3814 = vmatpush1.msra.mxu0 0.0
        %3815 = vmatprep.subr.mxu0 0.0
        %3816 = vmatpush1.msra.mxu0 0.0
        %3817 = vmatprep.subr.mxu0 0.0
        %3818 = vmatpush1.msra.mxu0 0.0
        %3819 = vmatprep.subr.mxu0 0.0
        %3820 = vmatpush1.msra.mxu0 0.0
        %3821 = vmatprep.subr.mxu0 0.0
        %3822 = vmatpush1.msra.mxu0 0.0
        %3823 = vmatprep.subr.mxu0 0.0
        %3824 = vmatpush1.msra.mxu0 0.0
        %3825 = vmatprep.subr.mxu0 0.0
        %3826 = vmatpush1.msra.mxu0 0.0
        %3827 = vmatprep.subr.mxu0 0.0
        %3828 = vmatpush1.msra.mxu0 0.0
        %3829 = vmatprep.subr.mxu0 0.0
        %3830 = vmatpush1.msra.mxu0 0.0
        %3831 = vmatprep.subr.mxu0 0.0
        %3832 = vmatpush1.msra.mxu0 0.0
        %3833 = vmatprep.subr.mxu0 0.0
        %3834 = vmatpush1.msra.mxu0 0.0
        %3835 = vmatprep.subr.mxu0 0.0
        %3836 = vmatpush1.msra.mxu0 0.0
        %3837 = vmatprep.subr.mxu0 0.0
        %3838 = vmatpush1.msra.mxu0 0.0
        %3839 = vmatprep.subr.mxu0 0.0
        %3840 = vmatpush1.msra.mxu0 0.0
        %3841 = vmatprep.subr.mxu0 0.0
        %3842 = vmatpush1.msra.mxu0 0.0
        %3843 = vmatprep.subr.mxu0 0.0
        %3844 = vmatpush1.msra.mxu0 0.0
        %3845 = vmatprep.mubr.f32.mxu0 0.0
        %3846 = vmatmul.mubr.f32.gmra.mrb[0].mxu0 %v3779
        %v3847 = vpop.f32.mrb[0].mxu0
        %v3848 = vadd.f32 0.0, %v3847
        %v3849 = vpop.f32.mrb[0].mxu0
        %3850 = vdwg.mxu0
        %v3852 = vsel %vm1006, %v3360, 0
        %3854 = vmatprep.subr.mxu0 0.0
        %3855 = vmatpush1.msra.mxu0 %v3364
        %3856 = vmatprep.subr.mxu0 0.0
        %3857 = vmatpush1.msra.mxu0 0.0
        %3858 = vmatprep.subr.mxu0 0.0
        %3859 = vmatpush1.msra.mxu0 0.0
        %3860 = vmatprep.subr.mxu0 0.0
        %3861 = vmatpush1.msra.mxu0 0.0
        %3862 = vmatprep.subr.mxu0 0.0
        %3863 = vmatpush1.msra.mxu0 0.0
        %3864 = vmatprep.subr.mxu0 0.0
        %3865 = vmatpush1.msra.mxu0 0.0
        %3866 = vmatprep.subr.mxu0 0.0
        %3867 = vmatpush1.msra.mxu0 0.0
        %3868 = vmatprep.subr.mxu0 0.0
        %3869 = vmatpush1.msra.mxu0 0.0
        %3870 = vmatprep.subr.mxu0 0.0
        %3871 = vmatpush1.msra.mxu0 0.0
        %3872 = vmatprep.subr.mxu0 0.0
        %3873 = vmatpush1.msra.mxu0 0.0
        %3874 = vmatprep.subr.mxu0 0.0
        %3875 = vmatpush1.msra.mxu0 0.0
        %3876 = vmatprep.subr.mxu0 0.0
        %3877 = vmatpush1.msra.mxu0 0.0
        %3878 = vmatprep.subr.mxu0 0.0
        %3879 = vmatpush1.msra.mxu0 0.0
        %3880 = vmatprep.subr.mxu0 0.0
        %3881 = vmatpush1.msra.mxu0 0.0
        %3882 = vmatprep.subr.mxu0 0.0
        %3883 = vmatpush1.msra.mxu0 0.0
        %3884 = vmatprep.subr.mxu0 0.0
        %3885 = vmatpush1.msra.mxu0 0.0
        %3886 = vmatprep.subr.mxu0 0.0
        %3887 = vmatpush1.msra.mxu0 0.0
        %3888 = vmatprep.subr.mxu0 0.0
        %3889 = vmatpush1.msra.mxu0 0.0
        %3890 = vmatprep.subr.mxu0 0.0
        %3891 = vmatpush1.msra.mxu0 0.0
        %3892 = vmatprep.subr.mxu0 0.0
        %3893 = vmatpush1.msra.mxu0 0.0
        %3894 = vmatprep.subr.mxu0 0.0
        %3895 = vmatpush1.msra.mxu0 0.0
        %3896 = vmatprep.subr.mxu0 0.0
        %3897 = vmatpush1.msra.mxu0 0.0
        %3898 = vmatprep.subr.mxu0 0.0
        %3899 = vmatpush1.msra.mxu0 0.0
        %3900 = vmatprep.subr.mxu0 0.0
        %3901 = vmatpush1.msra.mxu0 0.0
        %3902 = vmatprep.subr.mxu0 0.0
        %3903 = vmatpush1.msra.mxu0 0.0
        %3904 = vmatprep.subr.mxu0 0.0
        %3905 = vmatpush1.msra.mxu0 0.0
        %3906 = vmatprep.subr.mxu0 0.0
        %3907 = vmatpush1.msra.mxu0 0.0
        %3908 = vmatprep.subr.mxu0 0.0
        %3909 = vmatpush1.msra.mxu0 0.0
        %3910 = vmatprep.subr.mxu0 0.0
        %3911 = vmatpush1.msra.mxu0 0.0
        %3912 = vmatprep.subr.mxu0 0.0
        %3913 = vmatpush1.msra.mxu0 0.0
        %3914 = vmatprep.subr.mxu0 0.0
        %3915 = vmatpush1.msra.mxu0 0.0
        %3916 = vmatprep.subr.mxu0 0.0
        %3917 = vmatpush1.msra.mxu0 0.0
        %3918 = vmatprep.mubr.f32.mxu0 0.0
        %3919 = vmatmul.mubr.f32.gmra.mrb[0].mxu0 %v3852
        %v3920 = vpop.f32.mrb[0].mxu0
        %v3921 = vadd.f32 %v3848, %v3920
        %v3922 = vpop.f32.mrb[0].mxu0
        %3923 = vdwg.mxu0
        %s3924 = scalar_lea.vmem %s3, 192
        %v3925 = vld [vmem:[%s3924] sm:$0xff]
        %v3926 = vld [vmem:[%s3924 + $0x8] sm:$0xff]
        %v3927 = vld [vmem:[%s3924 + $0x10] sm:$0xff]
        %v3928 = vld [vmem:[%s3924 + $0x18] sm:$0xff]
        %s3929 = scalar_lea.vmem %s4, 6
        %v3930 = vld [vmem:[%s3929] sm:$0x1]
        %v3932 = vlaneseq
        %v3933 = vshrl.u32 %v3932, 7
        %v3934 = vsub.s32 0, %v3933
        %v3935 = vrot.slane %v3930, %v3934
        %3937 = vmatprep.subr.mxu0 0.0
        %3938 = vmatpush1.msra.mxu0 %v3925
        %3939 = vmatprep.subr.mxu0 0.0
        %3940 = vmatpush1.msra.mxu0 %v3926
        %3941 = vmatprep.subr.mxu0 0.0
        %3942 = vmatpush1.msra.mxu0 %v3927
        %3943 = vmatprep.subr.mxu0 0.0
        %3944 = vmatpush1.msra.mxu0 %v3928
        %3945 = vmatprep.subr.mxu0 0.0
        %3946 = vmatpush1.msra.mxu0 0.0
        %3947 = vmatprep.subr.mxu0 0.0
        %3948 = vmatpush1.msra.mxu0 0.0
        %3949 = vmatprep.subr.mxu0 0.0
        %3950 = vmatpush1.msra.mxu0 0.0
        %3951 = vmatprep.subr.mxu0 0.0
        %3952 = vmatpush1.msra.mxu0 0.0
        %3953 = vmatprep.subr.mxu0 0.0
        %3954 = vmatpush1.msra.mxu0 0.0
        %3955 = vmatprep.subr.mxu0 0.0
        %3956 = vmatpush1.msra.mxu0 0.0
        %3957 = vmatprep.subr.mxu0 0.0
        %3958 = vmatpush1.msra.mxu0 0.0
        %3959 = vmatprep.subr.mxu0 0.0
        %3960 = vmatpush1.msra.mxu0 0.0
        %3961 = vmatprep.subr.mxu0 0.0
        %3962 = vmatpush1.msra.mxu0 0.0
        %3963 = vmatprep.subr.mxu0 0.0
        %3964 = vmatpush1.msra.mxu0 0.0
        %3965 = vmatprep.subr.mxu0 0.0
        %3966 = vmatpush1.msra.mxu0 0.0
        %3967 = vmatprep.subr.mxu0 0.0
        %3968 = vmatpush1.msra.mxu0 0.0
        %3969 = vmatprep.subr.mxu0 0.0
        %3970 = vmatpush1.msra.mxu0 0.0
        %3971 = vmatprep.subr.mxu0 0.0
        %3972 = vmatpush1.msra.mxu0 0.0
        %3973 = vmatprep.subr.mxu0 0.0
        %3974 = vmatpush1.msra.mxu0 0.0
        %3975 = vmatprep.subr.mxu0 0.0
        %3976 = vmatpush1.msra.mxu0 0.0
        %3977 = vmatprep.subr.mxu0 0.0
        %3978 = vmatpush1.msra.mxu0 0.0
        %3979 = vmatprep.subr.mxu0 0.0
        %3980 = vmatpush1.msra.mxu0 0.0
        %3981 = vmatprep.subr.mxu0 0.0
        %3982 = vmatpush1.msra.mxu0 0.0
        %3983 = vmatprep.subr.mxu0 0.0
        %3984 = vmatpush1.msra.mxu0 0.0
        %3985 = vmatprep.subr.mxu0 0.0
        %3986 = vmatpush1.msra.mxu0 0.0
        %3987 = vmatprep.subr.mxu0 0.0
        %3988 = vmatpush1.msra.mxu0 0.0
        %3989 = vmatprep.subr.mxu0 0.0
        %3990 = vmatpush1.msra.mxu0 0.0
        %3991 = vmatprep.subr.mxu0 0.0
        %3992 = vmatpush1.msra.mxu0 0.0
        %3993 = vmatprep.subr.mxu0 0.0
        %3994 = vmatpush1.msra.mxu0 0.0
        %3995 = vmatprep.subr.mxu0 0.0
        %3996 = vmatpush1.msra.mxu0 0.0
        %3997 = vmatprep.subr.mxu0 0.0
        %3998 = vmatpush1.msra.mxu0 0.0
        %3999 = vmatprep.subr.mxu0 0.0
        %4000 = vmatpush1.msra.mxu0 0.0
        %4001 = vmatprep.mubr.f32.mxu0 0.0
        %4002 = vmatmul.mubr.f32.gmra.mrb[0].mxu0 %v2963
        %v4003 = vpop.f32.mrb[0].mxu0
        %v4004 = vadd.f32 %v3935, %v4003
        %v4005 = vpop.f32.mrb[0].mxu0
        %4006 = vdwg.mxu0
        %s4007 = scalar_lea.vmem %s5, 192
        %v4008 = vld [vmem:[%s4007] sm:$0xff]
        %v4009 = vld [vmem:[%s4007 + $0x8] sm:$0xff]
        %v4010 = vld [vmem:[%s4007 + $0x10] sm:$0xff]
        %v4011 = vld [vmem:[%s4007 + $0x18] sm:$0xff]
        %s4012 = scalar_lea.vmem %s6, 6
        %v4013 = vld [vmem:[%s4012] sm:$0x1]
        %v4015 = vlaneseq
        %v4016 = vshrl.u32 %v4015, 7
        %v4017 = vsub.s32 0, %v4016
        %v4018 = vrot.slane %v4013, %v4017
        %4020 = vmatprep.subr.mxu0 0.0
        %4021 = vmatpush1.msra.mxu0 %v4008
        %4022 = vmatprep.subr.mxu0 0.0
        %4023 = vmatpush1.msra.mxu0 %v4009
        %4024 = vmatprep.subr.mxu0 0.0
        %4025 = vmatpush1.msra.mxu0 %v4010
        %4026 = vmatprep.subr.mxu0 0.0
        %4027 = vmatpush1.msra.mxu0 %v4011
        %4028 = vmatprep.subr.mxu0 0.0
        %4029 = vmatpush1.msra.mxu0 0.0
        %4030 = vmatprep.subr.mxu0 0.0
        %4031 = vmatpush1.msra.mxu0 0.0
        %4032 = vmatprep.subr.mxu0 0.0
        %4033 = vmatpush1.msra.mxu0 0.0
        %4034 = vmatprep.subr.mxu0 0.0
        %4035 = vmatpush1.msra.mxu0 0.0
        %4036 = vmatprep.subr.mxu0 0.0
        %4037 = vmatpush1.msra.mxu0 0.0
        %4038 = vmatprep.subr.mxu0 0.0
        %4039 = vmatpush1.msra.mxu0 0.0
        %4040 = vmatprep.subr.mxu0 0.0
        %4041 = vmatpush1.msra.mxu0 0.0
        %4042 = vmatprep.subr.mxu0 0.0
        %4043 = vmatpush1.msra.mxu0 0.0
        %4044 = vmatprep.subr.mxu0 0.0
        %4045 = vmatpush1.msra.mxu0 0.0
        %4046 = vmatprep.subr.mxu0 0.0
        %4047 = vmatpush1.msra.mxu0 0.0
        %4048 = vmatprep.subr.mxu0 0.0
        %4049 = vmatpush1.msra.mxu0 0.0
        %4050 = vmatprep.subr.mxu0 0.0
        %4051 = vmatpush1.msra.mxu0 0.0
        %4052 = vmatprep.subr.mxu0 0.0
        %4053 = vmatpush1.msra.mxu0 0.0
        %4054 = vmatprep.subr.mxu0 0.0
        %4055 = vmatpush1.msra.mxu0 0.0
        %4056 = vmatprep.subr.mxu0 0.0
        %4057 = vmatpush1.msra.mxu0 0.0
        %4058 = vmatprep.subr.mxu0 0.0
        %4059 = vmatpush1.msra.mxu0 0.0
        %4060 = vmatprep.subr.mxu0 0.0
        %4061 = vmatpush1.msra.mxu0 0.0
        %4062 = vmatprep.subr.mxu0 0.0
        %4063 = vmatpush1.msra.mxu0 0.0
        %4064 = vmatprep.subr.mxu0 0.0
        %4065 = vmatpush1.msra.mxu0 0.0
        %4066 = vmatprep.subr.mxu0 0.0
        %4067 = vmatpush1.msra.mxu0 0.0
        %4068 = vmatprep.subr.mxu0 0.0
        %4069 = vmatpush1.msra.mxu0 0.0
        %4070 = vmatprep.subr.mxu0 0.0
        %4071 = vmatpush1.msra.mxu0 0.0
        %4072 = vmatprep.subr.mxu0 0.0
        %4073 = vmatpush1.msra.mxu0 0.0
        %4074 = vmatprep.subr.mxu0 0.0
        %4075 = vmatpush1.msra.mxu0 0.0
        %4076 = vmatprep.subr.mxu0 0.0
        %4077 = vmatpush1.msra.mxu0 0.0
        %4078 = vmatprep.subr.mxu0 0.0
        %4079 = vmatpush1.msra.mxu0 0.0
        %4080 = vmatprep.subr.mxu0 0.0
        %4081 = vmatpush1.msra.mxu0 0.0
        %4082 = vmatprep.subr.mxu0 0.0
        %4083 = vmatpush1.msra.mxu0 0.0
        %4084 = vmatprep.mubr.f32.mxu0 0.0
        %4085 = vmatmul.mubr.f32.gmra.mrb[0].mxu0 %v2963
        %v4086 = vpop.f32.mrb[0].mxu0
        %v4087 = vadd.f32 %v4018, %v4086
        %v4088 = vpop.f32.mrb[0].mxu0
        %4089 = vdwg.mxu0
        %s4090 = scalar_lea.vmem %s7, 192
        %v4091 = vld [vmem:[%s4090] sm:$0xff]
        %v4092 = vld [vmem:[%s4090 + $0x8] sm:$0xff]
        %v4093 = vld [vmem:[%s4090 + $0x10] sm:$0xff]
        %v4094 = vld [vmem:[%s4090 + $0x18] sm:$0xff]
        %s4095 = scalar_lea.vmem %s8, 6
        %v4096 = vld [vmem:[%s4095] sm:$0x1]
        %v4098 = vlaneseq
        %v4099 = vshrl.u32 %v4098, 7
        %v4100 = vsub.s32 0, %v4099
        %v4101 = vrot.slane %v4096, %v4100
        %4103 = vmatprep.subr.mxu0 0.0
        %4104 = vmatpush1.msra.mxu0 %v4091
        %4105 = vmatprep.subr.mxu0 0.0
        %4106 = vmatpush1.msra.mxu0 %v4092
        %4107 = vmatprep.subr.mxu0 0.0
        %4108 = vmatpush1.msra.mxu0 %v4093
        %4109 = vmatprep.subr.mxu0 0.0
        %4110 = vmatpush1.msra.mxu0 %v4094
        %4111 = vmatprep.subr.mxu0 0.0
        %4112 = vmatpush1.msra.mxu0 0.0
        %4113 = vmatprep.subr.mxu0 0.0
        %4114 = vmatpush1.msra.mxu0 0.0
        %4115 = vmatprep.subr.mxu0 0.0
        %4116 = vmatpush1.msra.mxu0 0.0
        %4117 = vmatprep.subr.mxu0 0.0
        %4118 = vmatpush1.msra.mxu0 0.0
        %4119 = vmatprep.subr.mxu0 0.0
        %4120 = vmatpush1.msra.mxu0 0.0
        %4121 = vmatprep.subr.mxu0 0.0
        %4122 = vmatpush1.msra.mxu0 0.0
        %4123 = vmatprep.subr.mxu0 0.0
        %4124 = vmatpush1.msra.mxu0 0.0
        %4125 = vmatprep.subr.mxu0 0.0
        %4126 = vmatpush1.msra.mxu0 0.0
        %4127 = vmatprep.subr.mxu0 0.0
        %4128 = vmatpush1.msra.mxu0 0.0
        %4129 = vmatprep.subr.mxu0 0.0
        %4130 = vmatpush1.msra.mxu0 0.0
        %4131 = vmatprep.subr.mxu0 0.0
        %4132 = vmatpush1.msra.mxu0 0.0
        %4133 = vmatprep.subr.mxu0 0.0
        %4134 = vmatpush1.msra.mxu0 0.0
        %4135 = vmatprep.subr.mxu0 0.0
        %4136 = vmatpush1.msra.mxu0 0.0
        %4137 = vmatprep.subr.mxu0 0.0
        %4138 = vmatpush1.msra.mxu0 0.0
        %4139 = vmatprep.subr.mxu0 0.0
        %4140 = vmatpush1.msra.mxu0 0.0
        %4141 = vmatprep.subr.mxu0 0.0
        %4142 = vmatpush1.msra.mxu0 0.0
        %4143 = vmatprep.subr.mxu0 0.0
        %4144 = vmatpush1.msra.mxu0 0.0
        %4145 = vmatprep.subr.mxu0 0.0
        %4146 = vmatpush1.msra.mxu0 0.0
        %4147 = vmatprep.subr.mxu0 0.0
        %4148 = vmatpush1.msra.mxu0 0.0
        %4149 = vmatprep.subr.mxu0 0.0
        %4150 = vmatpush1.msra.mxu0 0.0
        %4151 = vmatprep.subr.mxu0 0.0
        %4152 = vmatpush1.msra.mxu0 0.0
        %4153 = vmatprep.subr.mxu0 0.0
        %4154 = vmatpush1.msra.mxu0 0.0
        %4155 = vmatprep.subr.mxu0 0.0
        %4156 = vmatpush1.msra.mxu0 0.0
        %4157 = vmatprep.subr.mxu0 0.0
        %4158 = vmatpush1.msra.mxu0 0.0
        %4159 = vmatprep.subr.mxu0 0.0
        %4160 = vmatpush1.msra.mxu0 0.0
        %4161 = vmatprep.subr.mxu0 0.0
        %4162 = vmatpush1.msra.mxu0 0.0
        %4163 = vmatprep.subr.mxu0 0.0
        %4164 = vmatpush1.msra.mxu0 0.0
        %4165 = vmatprep.subr.mxu0 0.0
        %4166 = vmatpush1.msra.mxu0 0.0
        %4167 = vmatprep.mubr.f32.mxu0 0.0
        %4168 = vmatmul.mubr.f32.gmra.mrb[0].mxu0 %v2963
        %v4169 = vpop.f32.mrb[0].mxu0
        %v4170 = vadd.f32 %v4101, %v4169
        %v4171 = vpop.f32.mrb[0].mxu0
        %4172 = vdwg.mxu0
        %v4174 = vsel %vm1006, %v4004, 0
        %v4177 = vsel %vm1006, %v4087, 0
        %4179 = vmatprep.subr.mxu0 0.0
        %4180 = vmatpush1.xpose.msra.mxu0 %v4177
        %4181 = vmatprep.subr.mxu0 0.0
        %4182 = vmatpush1.xpose.msra.mxu0 0.0
        %4183 = vmatprep.subr.mxu0 0.0
        %4184 = vmatpush1.xpose.msra.mxu0 0.0
        %4185 = vmatprep.subr.mxu0 0.0
        %4186 = vmatpush1.xpose.msra.mxu0 0.0
        %4187 = vmatprep.subr.mxu0 0.0
        %4188 = vmatpush1.xpose.msra.mxu0 0.0
        %4189 = vmatprep.subr.mxu0 0.0
        %4190 = vmatpush1.xpose.msra.mxu0 0.0
        %4191 = vmatprep.subr.mxu0 0.0
        %4192 = vmatpush1.xpose.msra.mxu0 0.0
        %4193 = vmatprep.subr.mxu0 0.0
        %4194 = vmatpush1.xpose.msra.mxu0 0.0
        %4195 = vmatprep.subr.mxu0 0.0
        %4196 = vmatpush1.xpose.msra.mxu0 0.0
        %4197 = vmatprep.subr.mxu0 0.0
        %4198 = vmatpush1.xpose.msra.mxu0 0.0
        %4199 = vmatprep.subr.mxu0 0.0
        %4200 = vmatpush1.xpose.msra.mxu0 0.0
        %4201 = vmatprep.subr.mxu0 0.0
        %4202 = vmatpush1.xpose.msra.mxu0 0.0
        %4203 = vmatprep.subr.mxu0 0.0
        %4204 = vmatpush1.xpose.msra.mxu0 0.0
        %4205 = vmatprep.subr.mxu0 0.0
        %4206 = vmatpush1.xpose.msra.mxu0 0.0
        %4207 = vmatprep.subr.mxu0 0.0
        %4208 = vmatpush1.xpose.msra.mxu0 0.0
        %4209 = vmatprep.subr.mxu0 0.0
        %4210 = vmatpush1.xpose.msra.mxu0 0.0
        %4211 = vmatprep.subr.mxu0 0.0
        %4212 = vmatpush1.xpose.msra.mxu0 0.0
        %4213 = vmatprep.subr.mxu0 0.0
        %4214 = vmatpush1.xpose.msra.mxu0 0.0
        %4215 = vmatprep.subr.mxu0 0.0
        %4216 = vmatpush1.xpose.msra.mxu0 0.0
        %4217 = vmatprep.subr.mxu0 0.0
        %4218 = vmatpush1.xpose.msra.mxu0 0.0
        %4219 = vmatprep.subr.mxu0 0.0
        %4220 = vmatpush1.xpose.msra.mxu0 0.0
        %4221 = vmatprep.subr.mxu0 0.0
        %4222 = vmatpush1.xpose.msra.mxu0 0.0
        %4223 = vmatprep.subr.mxu0 0.0
        %4224 = vmatpush1.xpose.msra.mxu0 0.0
        %4225 = vmatprep.subr.mxu0 0.0
        %4226 = vmatpush1.xpose.msra.mxu0 0.0
        %4227 = vmatprep.subr.mxu0 0.0
        %4228 = vmatpush1.xpose.msra.mxu0 0.0
        %4229 = vmatprep.subr.mxu0 0.0
        %4230 = vmatpush1.xpose.msra.mxu0 0.0
        %4231 = vmatprep.subr.mxu0 0.0
        %4232 = vmatpush1.xpose.msra.mxu0 0.0
        %4233 = vmatprep.subr.mxu0 0.0
        %4234 = vmatpush1.xpose.msra.mxu0 0.0
        %4235 = vmatprep.subr.mxu0 0.0
        %4236 = vmatpush1.xpose.msra.mxu0 0.0
        %4237 = vmatprep.subr.mxu0 0.0
        %4238 = vmatpush1.xpose.msra.mxu0 0.0
        %4239 = vmatprep.subr.mxu0 0.0
        %4240 = vmatpush1.xpose.msra.mxu0 0.0
        %4241 = vmatprep.subr.mxu0 0.0
        %4242 = vmatpush1.xpose.msra.mxu0 0.0
        %4243 = vmatprep.mubr.f32.mxu0 0.0
        %4244 = vmatmul.mubr.f32.gmra.mrb[0].mxu0 %v4174
        %v4245 = vpop.f32.mrb[0].mxu0
        %v4246 = vadd.f32 0.0, %v4245
        %v4247 = vpop.f32.mrb[0].mxu0
        %4248 = vdwg.mxu0
        %v4249 = vmul.f32 %v4246, 0.35355338
        %v4250 = vadd.f32 %v4249, %v1088
        %v4251 = vsel %vm1006, %v4250, -inf
        %4252 = vmax.xlane.f32.xlu0 %v4251
        %v4253 = vpop.xlane.xlu0 %4252
        %v4254 = vsub.f32 %v4250, %v4253
        %v4255 = vmul.f32 %v4254, 1.442695
        %v4256 = vpow.pop %v4255
        %v4257 = vsel %vm1006, %v4256, 0.0
        %4258 = vadd.xlane.f32.xlu0 %v4257
        %v4259 = vpop.xlane.xlu0 %4258
        %v4260 = vrcp.pop %v4259
        %v4261 = vmul.f32 %v4256, %v4260
        %v4263 = vsel %vm1006, %v4261, 0
        %4265 = vmatprep.subr.mxu0 0.0
        %4266 = vmatpush1.msra.mxu0 %v4170
        %4267 = vmatprep.subr.mxu0 0.0
        %4268 = vmatpush1.msra.mxu0 0.0
        %4269 = vmatprep.subr.mxu0 0.0
        %4270 = vmatpush1.msra.mxu0 0.0
        %4271 = vmatprep.subr.mxu0 0.0
        %4272 = vmatpush1.msra.mxu0 0.0
        %4273 = vmatprep.subr.mxu0 0.0
        %4274 = vmatpush1.msra.mxu0 0.0
        %4275 = vmatprep.subr.mxu0 0.0
        %4276 = vmatpush1.msra.mxu0 0.0
        %4277 = vmatprep.subr.mxu0 0.0
        %4278 = vmatpush1.msra.mxu0 0.0
        %4279 = vmatprep.subr.mxu0 0.0
        %4280 = vmatpush1.msra.mxu0 0.0
        %4281 = vmatprep.subr.mxu0 0.0
        %4282 = vmatpush1.msra.mxu0 0.0
        %4283 = vmatprep.subr.mxu0 0.0
        %4284 = vmatpush1.msra.mxu0 0.0
        %4285 = vmatprep.subr.mxu0 0.0
        %4286 = vmatpush1.msra.mxu0 0.0
        %4287 = vmatprep.subr.mxu0 0.0
        %4288 = vmatpush1.msra.mxu0 0.0
        %4289 = vmatprep.subr.mxu0 0.0
        %4290 = vmatpush1.msra.mxu0 0.0
        %4291 = vmatprep.subr.mxu0 0.0
        %4292 = vmatpush1.msra.mxu0 0.0
        %4293 = vmatprep.subr.mxu0 0.0
        %4294 = vmatpush1.msra.mxu0 0.0
        %4295 = vmatprep.subr.mxu0 0.0
        %4296 = vmatpush1.msra.mxu0 0.0
        %4297 = vmatprep.subr.mxu0 0.0
        %4298 = vmatpush1.msra.mxu0 0.0
        %4299 = vmatprep.subr.mxu0 0.0
        %4300 = vmatpush1.msra.mxu0 0.0
        %4301 = vmatprep.subr.mxu0 0.0
        %4302 = vmatpush1.msra.mxu0 0.0
        %4303 = vmatprep.subr.mxu0 0.0
        %4304 = vmatpush1.msra.mxu0 0.0
        %4305 = vmatprep.subr.mxu0 0.0
        %4306 = vmatpush1.msra.mxu0 0.0
        %4307 = vmatprep.subr.mxu0 0.0
        %4308 = vmatpush1.msra.mxu0 0.0
        %4309 = vmatprep.subr.mxu0 0.0
        %4310 = vmatpush1.msra.mxu0 0.0
        %4311 = vmatprep.subr.mxu0 0.0
        %4312 = vmatpush1.msra.mxu0 0.0
        %4313 = vmatprep.subr.mxu0 0.0
        %4314 = vmatpush1.msra.mxu0 0.0
        %4315 = vmatprep.subr.mxu0 0.0
        %4316 = vmatpush1.msra.mxu0 0.0
        %4317 = vmatprep.subr.mxu0 0.0
        %4318 = vmatpush1.msra.mxu0 0.0
        %4319 = vmatprep.subr.mxu0 0.0
        %4320 = vmatpush1.msra.mxu0 0.0
        %4321 = vmatprep.subr.mxu0 0.0
        %4322 = vmatpush1.msra.mxu0 0.0
        %4323 = vmatprep.subr.mxu0 0.0
        %4324 = vmatpush1.msra.mxu0 0.0
        %4325 = vmatprep.subr.mxu0 0.0
        %4326 = vmatpush1.msra.mxu0 0.0
        %4327 = vmatprep.subr.mxu0 0.0
        %4328 = vmatpush1.msra.mxu0 0.0
        %4329 = vmatprep.mubr.f32.mxu0 0.0
        %4330 = vmatmul.mubr.f32.gmra.mrb[0].mxu0 %v4263
        %v4331 = vpop.f32.mrb[0].mxu0
        %v4332 = vadd.f32 0.0, %v4331
        %v4333 = vpop.f32.mrb[0].mxu0
        %4334 = vdwg.mxu0
        %s4335 = scalar_lea.vmem %s9, 48
        %v4336 = vld [vmem:[%s4335] sm:$0xff]
        %v4338 = vsel %vm1006, %v4332, 0
        %4340 = vmatprep.subr.mxu0 0.0
        %4341 = vmatpush1.msra.mxu0 %v4336
        %4342 = vmatprep.subr.mxu0 0.0
        %4343 = vmatpush1.msra.mxu0 0.0
        %4344 = vmatprep.subr.mxu0 0.0
        %4345 = vmatpush1.msra.mxu0 0.0
        %4346 = vmatprep.subr.mxu0 0.0
        %4347 = vmatpush1.msra.mxu0 0.0
        %4348 = vmatprep.subr.mxu0 0.0
        %4349 = vmatpush1.msra.mxu0 0.0
        %4350 = vmatprep.subr.mxu0 0.0
        %4351 = vmatpush1.msra.mxu0 0.0
        %4352 = vmatprep.subr.mxu0 0.0
        %4353 = vmatpush1.msra.mxu0 0.0
        %4354 = vmatprep.subr.mxu0 0.0
        %4355 = vmatpush1.msra.mxu0 0.0
        %4356 = vmatprep.subr.mxu0 0.0
        %4357 = vmatpush1.msra.mxu0 0.0
        %4358 = vmatprep.subr.mxu0 0.0
        %4359 = vmatpush1.msra.mxu0 0.0
        %4360 = vmatprep.subr.mxu0 0.0
        %4361 = vmatpush1.msra.mxu0 0.0
        %4362 = vmatprep.subr.mxu0 0.0
        %4363 = vmatpush1.msra.mxu0 0.0
        %4364 = vmatprep.subr.mxu0 0.0
        %4365 = vmatpush1.msra.mxu0 0.0
        %4366 = vmatprep.subr.mxu0 0.0
        %4367 = vmatpush1.msra.mxu0 0.0
        %4368 = vmatprep.subr.mxu0 0.0
        %4369 = vmatpush1.msra.mxu0 0.0
        %4370 = vmatprep.subr.mxu0 0.0
        %4371 = vmatpush1.msra.mxu0 0.0
        %4372 = vmatprep.subr.mxu0 0.0
        %4373 = vmatpush1.msra.mxu0 0.0
        %4374 = vmatprep.subr.mxu0 0.0
        %4375 = vmatpush1.msra.mxu0 0.0
        %4376 = vmatprep.subr.mxu0 0.0
        %4377 = vmatpush1.msra.mxu0 0.0
        %4378 = vmatprep.subr.mxu0 0.0
        %4379 = vmatpush1.msra.mxu0 0.0
        %4380 = vmatprep.subr.mxu0 0.0
        %4381 = vmatpush1.msra.mxu0 0.0
        %4382 = vmatprep.subr.mxu0 0.0
        %4383 = vmatpush1.msra.mxu0 0.0
        %4384 = vmatprep.subr.mxu0 0.0
        %4385 = vmatpush1.msra.mxu0 0.0
        %4386 = vmatprep.subr.mxu0 0.0
        %4387 = vmatpush1.msra.mxu0 0.0
        %4388 = vmatprep.subr.mxu0 0.0
        %4389 = vmatpush1.msra.mxu0 0.0
        %4390 = vmatprep.subr.mxu0 0.0
        %4391 = vmatpush1.msra.mxu0 0.0
        %4392 = vmatprep.subr.mxu0 0.0
        %4393 = vmatpush1.msra.mxu0 0.0
        %4394 = vmatprep.subr.mxu0 0.0
        %4395 = vmatpush1.msra.mxu0 0.0
        %4396 = vmatprep.subr.mxu0 0.0
        %4397 = vmatpush1.msra.mxu0 0.0
        %4398 = vmatprep.subr.mxu0 0.0
        %4399 = vmatpush1.msra.mxu0 0.0
        %4400 = vmatprep.subr.mxu0 0.0
        %4401 = vmatpush1.msra.mxu0 0.0
        %4402 = vmatprep.subr.mxu0 0.0
        %4403 = vmatpush1.msra.mxu0 0.0
        %4404 = vmatprep.mubr.f32.mxu0 0.0
        %4405 = vmatmul.mubr.f32.gmra.mrb[0].mxu0 %v4338
        %v4406 = vpop.f32.mrb[0].mxu0
        %v4407 = vadd.f32 0.0, %v4406
        %v4408 = vpop.f32.mrb[0].mxu0
        %4409 = vdwg.mxu0
        %v4410 = vadd.f32 %v3921, %v4407
        %s4411 = scalar_lea.vmem %s3, 224
        %v4412 = vld [vmem:[%s4411] sm:$0xff]
        %v4413 = vld [vmem:[%s4411 + $0x8] sm:$0xff]
        %v4414 = vld [vmem:[%s4411 + $0x10] sm:$0xff]
        %v4415 = vld [vmem:[%s4411 + $0x18] sm:$0xff]
        %s4416 = scalar_lea.vmem %s4, 7
        %v4417 = vld [vmem:[%s4416] sm:$0x1]
        %v4419 = vlaneseq
        %v4420 = vshrl.u32 %v4419, 7
        %v4421 = vsub.s32 0, %v4420
        %v4422 = vrot.slane %v4417, %v4421
        %4424 = vmatprep.subr.mxu0 0.0
        %4425 = vmatpush1.msra.mxu0 %v4412
        %4426 = vmatprep.subr.mxu0 0.0
        %4427 = vmatpush1.msra.mxu0 %v4413
        %4428 = vmatprep.subr.mxu0 0.0
        %4429 = vmatpush1.msra.mxu0 %v4414
        %4430 = vmatprep.subr.mxu0 0.0
        %4431 = vmatpush1.msra.mxu0 %v4415
        %4432 = vmatprep.subr.mxu0 0.0
        %4433 = vmatpush1.msra.mxu0 0.0
        %4434 = vmatprep.subr.mxu0 0.0
        %4435 = vmatpush1.msra.mxu0 0.0
        %4436 = vmatprep.subr.mxu0 0.0
        %4437 = vmatpush1.msra.mxu0 0.0
        %4438 = vmatprep.subr.mxu0 0.0
        %4439 = vmatpush1.msra.mxu0 0.0
        %4440 = vmatprep.subr.mxu0 0.0
        %4441 = vmatpush1.msra.mxu0 0.0
        %4442 = vmatprep.subr.mxu0 0.0
        %4443 = vmatpush1.msra.mxu0 0.0
        %4444 = vmatprep.subr.mxu0 0.0
        %4445 = vmatpush1.msra.mxu0 0.0
        %4446 = vmatprep.subr.mxu0 0.0
        %4447 = vmatpush1.msra.mxu0 0.0
        %4448 = vmatprep.subr.mxu0 0.0
        %4449 = vmatpush1.msra.mxu0 0.0
        %4450 = vmatprep.subr.mxu0 0.0
        %4451 = vmatpush1.msra.mxu0 0.0
        %4452 = vmatprep.subr.mxu0 0.0
        %4453 = vmatpush1.msra.mxu0 0.0
        %4454 = vmatprep.subr.mxu0 0.0
        %4455 = vmatpush1.msra.mxu0 0.0
        %4456 = vmatprep.subr.mxu0 0.0
        %4457 = vmatpush1.msra.mxu0 0.0
        %4458 = vmatprep.subr.mxu0 0.0
        %4459 = vmatpush1.msra.mxu0 0.0
        %4460 = vmatprep.subr.mxu0 0.0
        %4461 = vmatpush1.msra.mxu0 0.0
        %4462 = vmatprep.subr.mxu0 0.0
        %4463 = vmatpush1.msra.mxu0 0.0
        %4464 = vmatprep.subr.mxu0 0.0
        %4465 = vmatpush1.msra.mxu0 0.0
        %4466 = vmatprep.subr.mxu0 0.0
        %4467 = vmatpush1.msra.mxu0 0.0
        %4468 = vmatprep.subr.mxu0 0.0
        %4469 = vmatpush1.msra.mxu0 0.0
        %4470 = vmatprep.subr.mxu0 0.0
        %4471 = vmatpush1.msra.mxu0 0.0
        %4472 = vmatprep.subr.mxu0 0.0
        %4473 = vmatpush1.msra.mxu0 0.0
        %4474 = vmatprep.subr.mxu0 0.0
        %4475 = vmatpush1.msra.mxu0 0.0
        %4476 = vmatprep.subr.mxu0 0.0
        %4477 = vmatpush1.msra.mxu0 0.0
        %4478 = vmatprep.subr.mxu0 0.0
        %4479 = vmatpush1.msra.mxu0 0.0
        %4480 = vmatprep.subr.mxu0 0.0
        %4481 = vmatpush1.msra.mxu0 0.0
        %4482 = vmatprep.subr.mxu0 0.0
        %4483 = vmatpush1.msra.mxu0 0.0
        %4484 = vmatprep.subr.mxu0 0.0
        %4485 = vmatpush1.msra.mxu0 0.0
        %4486 = vmatprep.subr.mxu0 0.0
        %4487 = vmatpush1.msra.mxu0 0.0
        %4488 = vmatprep.mubr.f32.mxu0 0.0
        %4489 = vmatmul.mubr.f32.gmra.mrb[0].mxu0 %v2963
        %v4490 = vpop.f32.mrb[0].mxu0
        %v4491 = vadd.f32 %v4422, %v4490
        %v4492 = vpop.f32.mrb[0].mxu0
        %4493 = vdwg.mxu0
        %s4494 = scalar_lea.vmem %s5, 224
        %v4495 = vld [vmem:[%s4494] sm:$0xff]
        %v4496 = vld [vmem:[%s4494 + $0x8] sm:$0xff]
        %v4497 = vld [vmem:[%s4494 + $0x10] sm:$0xff]
        %v4498 = vld [vmem:[%s4494 + $0x18] sm:$0xff]
        %s4499 = scalar_lea.vmem %s6, 7
        %v4500 = vld [vmem:[%s4499] sm:$0x1]
        %v4502 = vlaneseq
        %v4503 = vshrl.u32 %v4502, 7
        %v4504 = vsub.s32 0, %v4503
        %v4505 = vrot.slane %v4500, %v4504
        %4507 = vmatprep.subr.mxu0 0.0
        %4508 = vmatpush1.msra.mxu0 %v4495
        %4509 = vmatprep.subr.mxu0 0.0
        %4510 = vmatpush1.msra.mxu0 %v4496
        %4511 = vmatprep.subr.mxu0 0.0
        %4512 = vmatpush1.msra.mxu0 %v4497
        %4513 = vmatprep.subr.mxu0 0.0
        %4514 = vmatpush1.msra.mxu0 %v4498
        %4515 = vmatprep.subr.mxu0 0.0
        %4516 = vmatpush1.msra.mxu0 0.0
        %4517 = vmatprep.subr.mxu0 0.0
        %4518 = vmatpush1.msra.mxu0 0.0
        %4519 = vmatprep.subr.mxu0 0.0
        %4520 = vmatpush1.msra.mxu0 0.0
        %4521 = vmatprep.subr.mxu0 0.0
        %4522 = vmatpush1.msra.mxu0 0.0
        %4523 = vmatprep.subr.mxu0 0.0
        %4524 = vmatpush1.msra.mxu0 0.0
        %4525 = vmatprep.subr.mxu0 0.0
        %4526 = vmatpush1.msra.mxu0 0.0
        %4527 = vmatprep.subr.mxu0 0.0
        %4528 = vmatpush1.msra.mxu0 0.0
        %4529 = vmatprep.subr.mxu0 0.0
        %4530 = vmatpush1.msra.mxu0 0.0
        %4531 = vmatprep.subr.mxu0 0.0
        %4532 = vmatpush1.msra.mxu0 0.0
        %4533 = vmatprep.subr.mxu0 0.0
        %4534 = vmatpush1.msra.mxu0 0.0
        %4535 = vmatprep.subr.mxu0 0.0
        %4536 = vmatpush1.msra.mxu0 0.0
        %4537 = vmatprep.subr.mxu0 0.0
        %4538 = vmatpush1.msra.mxu0 0.0
        %4539 = vmatprep.subr.mxu0 0.0
        %4540 = vmatpush1.msra.mxu0 0.0
        %4541 = vmatprep.subr.mxu0 0.0
        %4542 = vmatpush1.msra.mxu0 0.0
        %4543 = vmatprep.subr.mxu0 0.0
        %4544 = vmatpush1.msra.mxu0 0.0
        %4545 = vmatprep.subr.mxu0 0.0
        %4546 = vmatpush1.msra.mxu0 0.0
        %4547 = vmatprep.subr.mxu0 0.0
        %4548 = vmatpush1.msra.mxu0 0.0
        %4549 = vmatprep.subr.mxu0 0.0
        %4550 = vmatpush1.msra.mxu0 0.0
        %4551 = vmatprep.subr.mxu0 0.0
        %4552 = vmatpush1.msra.mxu0 0.0
        %4553 = vmatprep.subr.mxu0 0.0
        %4554 = vmatpush1.msra.mxu0 0.0
        %4555 = vmatprep.subr.mxu0 0.0
        %4556 = vmatpush1.msra.mxu0 0.0
        %4557 = vmatprep.subr.mxu0 0.0
        %4558 = vmatpush1.msra.mxu0 0.0
        %4559 = vmatprep.subr.mxu0 0.0
        %4560 = vmatpush1.msra.mxu0 0.0
        %4561 = vmatprep.subr.mxu0 0.0
        %4562 = vmatpush1.msra.mxu0 0.0
        %4563 = vmatprep.subr.mxu0 0.0
        %4564 = vmatpush1.msra.mxu0 0.0
        %4565 = vmatprep.subr.mxu0 0.0
        %4566 = vmatpush1.msra.mxu0 0.0
        %4567 = vmatprep.subr.mxu0 0.0
        %4568 = vmatpush1.msra.mxu0 0.0
        %4569 = vmatprep.subr.mxu0 0.0
        %4570 = vmatpush1.msra.mxu0 0.0
        %4571 = vmatprep.mubr.f32.mxu0 0.0
        %4572 = vmatmul.mubr.f32.gmra.mrb[0].mxu0 %v2963
        %v4573 = vpop.f32.mrb[0].mxu0
        %v4574 = vadd.f32 %v4505, %v4573
        %v4575 = vpop.f32.mrb[0].mxu0
        %4576 = vdwg.mxu0
        %s4577 = scalar_lea.vmem %s7, 224
        %v4578 = vld [vmem:[%s4577] sm:$0xff]
        %v4579 = vld [vmem:[%s4577 + $0x8] sm:$0xff]
        %v4580 = vld [vmem:[%s4577 + $0x10] sm:$0xff]
        %v4581 = vld [vmem:[%s4577 + $0x18] sm:$0xff]
        %s4582 = scalar_lea.vmem %s8, 7
        %v4583 = vld [vmem:[%s4582] sm:$0x1]
        %v4585 = vlaneseq
        %v4586 = vshrl.u32 %v4585, 7
        %v4587 = vsub.s32 0, %v4586
        %v4588 = vrot.slane %v4583, %v4587
        %4590 = vmatprep.subr.mxu0 0.0
        %4591 = vmatpush1.msra.mxu0 %v4578
        %4592 = vmatprep.subr.mxu0 0.0
        %4593 = vmatpush1.msra.mxu0 %v4579
        %4594 = vmatprep.subr.mxu0 0.0
        %4595 = vmatpush1.msra.mxu0 %v4580
        %4596 = vmatprep.subr.mxu0 0.0
        %4597 = vmatpush1.msra.mxu0 %v4581
        %4598 = vmatprep.subr.mxu0 0.0
        %4599 = vmatpush1.msra.mxu0 0.0
        %4600 = vmatprep.subr.mxu0 0.0
        %4601 = vmatpush1.msra.mxu0 0.0
        %4602 = vmatprep.subr.mxu0 0.0
        %4603 = vmatpush1.msra.mxu0 0.0
        %4604 = vmatprep.subr.mxu0 0.0
        %4605 = vmatpush1.msra.mxu0 0.0
        %4606 = vmatprep.subr.mxu0 0.0
        %4607 = vmatpush1.msra.mxu0 0.0
        %4608 = vmatprep.subr.mxu0 0.0
        %4609 = vmatpush1.msra.mxu0 0.0
        %4610 = vmatprep.subr.mxu0 0.0
        %4611 = vmatpush1.msra.mxu0 0.0
        %4612 = vmatprep.subr.mxu0 0.0
        %4613 = vmatpush1.msra.mxu0 0.0
        %4614 = vmatprep.subr.mxu0 0.0
        %4615 = vmatpush1.msra.mxu0 0.0
        %4616 = vmatprep.subr.mxu0 0.0
        %4617 = vmatpush1.msra.mxu0 0.0
        %4618 = vmatprep.subr.mxu0 0.0
        %4619 = vmatpush1.msra.mxu0 0.0
        %4620 = vmatprep.subr.mxu0 0.0
        %4621 = vmatpush1.msra.mxu0 0.0
        %4622 = vmatprep.subr.mxu0 0.0
        %4623 = vmatpush1.msra.mxu0 0.0
        %4624 = vmatprep.subr.mxu0 0.0
        %4625 = vmatpush1.msra.mxu0 0.0
        %4626 = vmatprep.subr.mxu0 0.0
        %4627 = vmatpush1.msra.mxu0 0.0
        %4628 = vmatprep.subr.mxu0 0.0
        %4629 = vmatpush1.msra.mxu0 0.0
        %4630 = vmatprep.subr.mxu0 0.0
        %4631 = vmatpush1.msra.mxu0 0.0
        %4632 = vmatprep.subr.mxu0 0.0
        %4633 = vmatpush1.msra.mxu0 0.0
        %4634 = vmatprep.subr.mxu0 0.0
        %4635 = vmatpush1.msra.mxu0 0.0
        %4636 = vmatprep.subr.mxu0 0.0
        %4637 = vmatpush1.msra.mxu0 0.0
        %4638 = vmatprep.subr.mxu0 0.0
        %4639 = vmatpush1.msra.mxu0 0.0
        %4640 = vmatprep.subr.mxu0 0.0
        %4641 = vmatpush1.msra.mxu0 0.0
        %4642 = vmatprep.subr.mxu0 0.0
        %4643 = vmatpush1.msra.mxu0 0.0
        %4644 = vmatprep.subr.mxu0 0.0
        %4645 = vmatpush1.msra.mxu0 0.0
        %4646 = vmatprep.subr.mxu0 0.0
        %4647 = vmatpush1.msra.mxu0 0.0
        %4648 = vmatprep.subr.mxu0 0.0
        %4649 = vmatpush1.msra.mxu0 0.0
        %4650 = vmatprep.subr.mxu0 0.0
        %4651 = vmatpush1.msra.mxu0 0.0
        %4652 = vmatprep.subr.mxu0 0.0
        %4653 = vmatpush1.msra.mxu0 0.0
        %4654 = vmatprep.mubr.f32.mxu0 0.0
        %4655 = vmatmul.mubr.f32.gmra.mrb[0].mxu0 %v2963
        %v4656 = vpop.f32.mrb[0].mxu0
        %v4657 = vadd.f32 %v4588, %v4656
        %v4658 = vpop.f32.mrb[0].mxu0
        %4659 = vdwg.mxu0
        %v4661 = vsel %vm1006, %v4491, 0
        %v4664 = vsel %vm1006, %v4574, 0
        %4666 = vmatprep.subr.mxu0 0.0
        %4667 = vmatpush1.xpose.msra.mxu0 %v4664
        %4668 = vmatprep.subr.mxu0 0.0
        %4669 = vmatpush1.xpose.msra.mxu0 0.0
        %4670 = vmatprep.subr.mxu0 0.0
        %4671 = vmatpush1.xpose.msra.mxu0 0.0
        %4672 = vmatprep.subr.mxu0 0.0
        %4673 = vmatpush1.xpose.msra.mxu0 0.0
        %4674 = vmatprep.subr.mxu0 0.0
        %4675 = vmatpush1.xpose.msra.mxu0 0.0
        %4676 = vmatprep.subr.mxu0 0.0
        %4677 = vmatpush1.xpose.msra.mxu0 0.0
        %4678 = vmatprep.subr.mxu0 0.0
        %4679 = vmatpush1.xpose.msra.mxu0 0.0
        %4680 = vmatprep.subr.mxu0 0.0
        %4681 = vmatpush1.xpose.msra.mxu0 0.0
        %4682 = vmatprep.subr.mxu0 0.0
        %4683 = vmatpush1.xpose.msra.mxu0 0.0
        %4684 = vmatprep.subr.mxu0 0.0
        %4685 = vmatpush1.xpose.msra.mxu0 0.0
        %4686 = vmatprep.subr.mxu0 0.0
        %4687 = vmatpush1.xpose.msra.mxu0 0.0
        %4688 = vmatprep.subr.mxu0 0.0
        %4689 = vmatpush1.xpose.msra.mxu0 0.0
        %4690 = vmatprep.subr.mxu0 0.0
        %4691 = vmatpush1.xpose.msra.mxu0 0.0
        %4692 = vmatprep.subr.mxu0 0.0
        %4693 = vmatpush1.xpose.msra.mxu0 0.0
        %4694 = vmatprep.subr.mxu0 0.0
        %4695 = vmatpush1.xpose.msra.mxu0 0.0
        %4696 = vmatprep.subr.mxu0 0.0
        %4697 = vmatpush1.xpose.msra.mxu0 0.0
        %4698 = vmatprep.subr.mxu0 0.0
        %4699 = vmatpush1.xpose.msra.mxu0 0.0
        %4700 = vmatprep.subr.mxu0 0.0
        %4701 = vmatpush1.xpose.msra.mxu0 0.0
        %4702 = vmatprep.subr.mxu0 0.0
        %4703 = vmatpush1.xpose.msra.mxu0 0.0
        %4704 = vmatprep.subr.mxu0 0.0
        %4705 = vmatpush1.xpose.msra.mxu0 0.0
        %4706 = vmatprep.subr.mxu0 0.0
        %4707 = vmatpush1.xpose.msra.mxu0 0.0
        %4708 = vmatprep.subr.mxu0 0.0
        %4709 = vmatpush1.xpose.msra.mxu0 0.0
        %4710 = vmatprep.subr.mxu0 0.0
        %4711 = vmatpush1.xpose.msra.mxu0 0.0
        %4712 = vmatprep.subr.mxu0 0.0
        %4713 = vmatpush1.xpose.msra.mxu0 0.0
        %4714 = vmatprep.subr.mxu0 0.0
        %4715 = vmatpush1.xpose.msra.mxu0 0.0
        %4716 = vmatprep.subr.mxu0 0.0
        %4717 = vmatpush1.xpose.msra.mxu0 0.0
        %4718 = vmatprep.subr.mxu0 0.0
        %4719 = vmatpush1.xpose.msra.mxu0 0.0
        %4720 = vmatprep.subr.mxu0 0.0
        %4721 = vmatpush1.xpose.msra.mxu0 0.0
        %4722 = vmatprep.subr.mxu0 0.0
        %4723 = vmatpush1.xpose.msra.mxu0 0.0
        %4724 = vmatprep.subr.mxu0 0.0
        %4725 = vmatpush1.xpose.msra.mxu0 0.0
        %4726 = vmatprep.subr.mxu0 0.0
        %4727 = vmatpush1.xpose.msra.mxu0 0.0
        %4728 = vmatprep.subr.mxu0 0.0
        %4729 = vmatpush1.xpose.msra.mxu0 0.0
        %4730 = vmatprep.mubr.f32.mxu0 0.0
        %4731 = vmatmul.mubr.f32.gmra.mrb[0].mxu0 %v4661
        %v4732 = vpop.f32.mrb[0].mxu0
        %v4733 = vadd.f32 0.0, %v4732
        %v4734 = vpop.f32.mrb[0].mxu0
        %4735 = vdwg.mxu0
        %v4736 = vmul.f32 %v4733, 0.35355338
        %v4737 = vadd.f32 %v4736, %v1088
        %v4738 = vsel %vm1006, %v4737, -inf
        %4739 = vmax.xlane.f32.xlu0 %v4738
        %v4740 = vpop.xlane.xlu0 %4739
        %v4741 = vsub.f32 %v4737, %v4740
        %v4742 = vmul.f32 %v4741, 1.442695
        %v4743 = vpow.pop %v4742
        %v4744 = vsel %vm1006, %v4743, 0.0
        %4745 = vadd.xlane.f32.xlu0 %v4744
        %v4746 = vpop.xlane.xlu0 %4745
        %v4747 = vrcp.pop %v4746
        %v4748 = vmul.f32 %v4743, %v4747
        %v4750 = vsel %vm1006, %v4748, 0
        %4752 = vmatprep.subr.mxu0 0.0
        %4753 = vmatpush1.msra.mxu0 %v4657
        %4754 = vmatprep.subr.mxu0 0.0
        %4755 = vmatpush1.msra.mxu0 0.0
        %4756 = vmatprep.subr.mxu0 0.0
        %4757 = vmatpush1.msra.mxu0 0.0
        %4758 = vmatprep.subr.mxu0 0.0
        %4759 = vmatpush1.msra.mxu0 0.0
        %4760 = vmatprep.subr.mxu0 0.0
        %4761 = vmatpush1.msra.mxu0 0.0
        %4762 = vmatprep.subr.mxu0 0.0
        %4763 = vmatpush1.msra.mxu0 0.0
        %4764 = vmatprep.subr.mxu0 0.0
        %4765 = vmatpush1.msra.mxu0 0.0
        %4766 = vmatprep.subr.mxu0 0.0
        %4767 = vmatpush1.msra.mxu0 0.0
        %4768 = vmatprep.subr.mxu0 0.0
        %4769 = vmatpush1.msra.mxu0 0.0
        %4770 = vmatprep.subr.mxu0 0.0
        %4771 = vmatpush1.msra.mxu0 0.0
        %4772 = vmatprep.subr.mxu0 0.0
        %4773 = vmatpush1.msra.mxu0 0.0
        %4774 = vmatprep.subr.mxu0 0.0
        %4775 = vmatpush1.msra.mxu0 0.0
        %4776 = vmatprep.subr.mxu0 0.0
        %4777 = vmatpush1.msra.mxu0 0.0
        %4778 = vmatprep.subr.mxu0 0.0
        %4779 = vmatpush1.msra.mxu0 0.0
        %4780 = vmatprep.subr.mxu0 0.0
        %4781 = vmatpush1.msra.mxu0 0.0
        %4782 = vmatprep.subr.mxu0 0.0
        %4783 = vmatpush1.msra.mxu0 0.0
        %4784 = vmatprep.subr.mxu0 0.0
        %4785 = vmatpush1.msra.mxu0 0.0
        %4786 = vmatprep.subr.mxu0 0.0
        %4787 = vmatpush1.msra.mxu0 0.0
        %4788 = vmatprep.subr.mxu0 0.0
        %4789 = vmatpush1.msra.mxu0 0.0
        %4790 = vmatprep.subr.mxu0 0.0
        %4791 = vmatpush1.msra.mxu0 0.0
        %4792 = vmatprep.subr.mxu0 0.0
        %4793 = vmatpush1.msra.mxu0 0.0
        %4794 = vmatprep.subr.mxu0 0.0
        %4795 = vmatpush1.msra.mxu0 0.0
        %4796 = vmatprep.subr.mxu0 0.0
        %4797 = vmatpush1.msra.mxu0 0.0
        %4798 = vmatprep.subr.mxu0 0.0
        %4799 = vmatpush1.msra.mxu0 0.0
        %4800 = vmatprep.subr.mxu0 0.0
        %4801 = vmatpush1.msra.mxu0 0.0
        %4802 = vmatprep.subr.mxu0 0.0
        %4803 = vmatpush1.msra.mxu0 0.0
        %4804 = vmatprep.subr.mxu0 0.0
        %4805 = vmatpush1.msra.mxu0 0.0
        %4806 = vmatprep.subr.mxu0 0.0
        %4807 = vmatpush1.msra.mxu0 0.0
        %4808 = vmatprep.subr.mxu0 0.0
        %4809 = vmatpush1.msra.mxu0 0.0
        %4810 = vmatprep.subr.mxu0 0.0
        %4811 = vmatpush1.msra.mxu0 0.0
        %4812 = vmatprep.subr.mxu0 0.0
        %4813 = vmatpush1.msra.mxu0 0.0
        %4814 = vmatprep.subr.mxu0 0.0
        %4815 = vmatpush1.msra.mxu0 0.0
        %4816 = vmatprep.mubr.f32.mxu0 0.0
        %4817 = vmatmul.mubr.f32.gmra.mrb[0].mxu0 %v4750
        %v4818 = vpop.f32.mrb[0].mxu0
        %v4819 = vadd.f32 0.0, %v4818
        %v4820 = vpop.f32.mrb[0].mxu0
        %4821 = vdwg.mxu0
        %s4822 = scalar_lea.vmem %s9, 56
        %v4823 = vld [vmem:[%s4822] sm:$0xff]
        %v4825 = vsel %vm1006, %v4819, 0
        %4827 = vmatprep.subr.mxu0 0.0
        %4828 = vmatpush1.msra.mxu0 %v4823
        %4829 = vmatprep.subr.mxu0 0.0
        %4830 = vmatpush1.msra.mxu0 0.0
        %4831 = vmatprep.subr.mxu0 0.0
        %4832 = vmatpush1.msra.mxu0 0.0
        %4833 = vmatprep.subr.mxu0 0.0
        %4834 = vmatpush1.msra.mxu0 0.0
        %4835 = vmatprep.subr.mxu0 0.0
        %4836 = vmatpush1.msra.mxu0 0.0
        %4837 = vmatprep.subr.mxu0 0.0
        %4838 = vmatpush1.msra.mxu0 0.0
        %4839 = vmatprep.subr.mxu0 0.0
        %4840 = vmatpush1.msra.mxu0 0.0
        %4841 = vmatprep.subr.mxu0 0.0
        %4842 = vmatpush1.msra.mxu0 0.0
        %4843 = vmatprep.subr.mxu0 0.0
        %4844 = vmatpush1.msra.mxu0 0.0
        %4845 = vmatprep.subr.mxu0 0.0
        %4846 = vmatpush1.msra.mxu0 0.0
        %4847 = vmatprep.subr.mxu0 0.0
        %4848 = vmatpush1.msra.mxu0 0.0
        %4849 = vmatprep.subr.mxu0 0.0
        %4850 = vmatpush1.msra.mxu0 0.0
        %4851 = vmatprep.subr.mxu0 0.0
        %4852 = vmatpush1.msra.mxu0 0.0
        %4853 = vmatprep.subr.mxu0 0.0
        %4854 = vmatpush1.msra.mxu0 0.0
        %4855 = vmatprep.subr.mxu0 0.0
        %4856 = vmatpush1.msra.mxu0 0.0
        %4857 = vmatprep.subr.mxu0 0.0
        %4858 = vmatpush1.msra.mxu0 0.0
        %4859 = vmatprep.subr.mxu0 0.0
        %4860 = vmatpush1.msra.mxu0 0.0
        %4861 = vmatprep.subr.mxu0 0.0
        %4862 = vmatpush1.msra.mxu0 0.0
        %4863 = vmatprep.subr.mxu0 0.0
        %4864 = vmatpush1.msra.mxu0 0.0
        %4865 = vmatprep.subr.mxu0 0.0
        %4866 = vmatpush1.msra.mxu0 0.0
        %4867 = vmatprep.subr.mxu0 0.0
        %4868 = vmatpush1.msra.mxu0 0.0
        %4869 = vmatprep.subr.mxu0 0.0
        %4870 = vmatpush1.msra.mxu0 0.0
        %4871 = vmatprep.subr.mxu0 0.0
        %4872 = vmatpush1.msra.mxu0 0.0
        %4873 = vmatprep.subr.mxu0 0.0
        %4874 = vmatpush1.msra.mxu0 0.0
        %4875 = vmatprep.subr.mxu0 0.0
        %4876 = vmatpush1.msra.mxu0 0.0
        %4877 = vmatprep.subr.mxu0 0.0
        %4878 = vmatpush1.msra.mxu0 0.0
        %4879 = vmatprep.subr.mxu0 0.0
        %4880 = vmatpush1.msra.mxu0 0.0
        %4881 = vmatprep.subr.mxu0 0.0
        %4882 = vmatpush1.msra.mxu0 0.0
        %4883 = vmatprep.subr.mxu0 0.0
        %4884 = vmatpush1.msra.mxu0 0.0
        %4885 = vmatprep.subr.mxu0 0.0
        %4886 = vmatpush1.msra.mxu0 0.0
        %4887 = vmatprep.subr.mxu0 0.0
        %4888 = vmatpush1.msra.mxu0 0.0
        %4889 = vmatprep.subr.mxu0 0.0
        %4890 = vmatpush1.msra.mxu0 0.0
        %4891 = vmatprep.mubr.f32.mxu0 0.0
        %4892 = vmatmul.mubr.f32.gmra.mrb[0].mxu0 %v4825
        %v4893 = vpop.f32.mrb[0].mxu0
        %v4894 = vadd.f32 0.0, %v4893
        %v4895 = vpop.f32.mrb[0].mxu0
        %4896 = vdwg.mxu0
        %v4897 = vadd.f32 %v4410, %v4894
        %s4898 = scalar_lea.vmem %s10, 1
        %v4899 = vld [vmem:[%s4898] sm:$0x1]
        %v4901 = vlaneseq
        %v4902 = vshrl.u32 %v4901, 7
        %v4903 = vsub.s32 0, %v4902
        %v4904 = vrot.slane %v4899, %v4903
        %v4906 = vadd.f32 %v4897, %v4904
        %v4907 = vadd.f32 %v2946, %v4906
        %v4908 = vsel %vm734, %v4907, 0.0
        %4909 = vadd.xlane.f32.xlu0 %v4908
        %v4910 = vpop.xlane.xlu0 %4909
        %v4911 = vmul.f32 %v4910, %v738
        %v4912 = vsub.f32 %v4907, %v4911
        %v4913 = vmul.f32 %v4912, %v4912
        %v4914 = vsel %vm734, %v4913, 0.0
        %4915 = vadd.xlane.f32.xlu0 %v4914
        %v4916 = vpop.xlane.xlu0 %4915
        %v4917 = vmul.f32 %v4916, %v738
        %v4918 = vadd.f32 %v4917, 1e-12
        %v4919 = vrsqrt.pop %v4918
        %v4920 = vmul.f32 %v4912, %v4919
        %v4921 = vlaneseq
        %v4922 = vshrl.u32 %v4921, 7
        %v4923 = vsub.s32 0, %v4922
        %v4924 = vrot.slane %v2948, %v4923
        %v4925 = vmul.f32 %v4920, %v4924
        %v4926 = vlaneseq
        %v4927 = vshrl.u32 %v4926, 7
        %v4928 = vsub.s32 1, %v4927
        %v4929 = vrot.slane %v2948, %v4928
        %v4930 = vadd.f32 %v4925, %v4929
        %s4931 = scalar_lea.vmem %s12, 32
        %v4932 = vld [vmem:[%s4931] sm:$0xff]
        %v4933 = vld [vmem:[%s4931 + $0x8] sm:$0xff]
        %v4934 = vld [vmem:[%s4931 + $0x10] sm:$0xff]
        %v4935 = vld [vmem:[%s4931 + $0x18] sm:$0xff]
        %s4936 = scalar_lea.vmem %s13, 1
        %v4937 = vld [vmem:[%s4936] sm:$0x1]
        %v4939 = vlaneseq
        %v4940 = vshrl.u32 %v4939, 7
        %v4941 = vsub.s32 0, %v4940
        %v4942 = vrot.slane %v4937, %v4941
        %v4945 = vsel %vm734, %v4930, 0
        %4947 = vmatprep.subr.mxu0 0.0
        %4948 = vmatpush1.msra.mxu0 %v4932
        %4949 = vmatprep.subr.mxu0 0.0
        %4950 = vmatpush1.msra.mxu0 %v4933
        %4951 = vmatprep.subr.mxu0 0.0
        %4952 = vmatpush1.msra.mxu0 %v4934
        %4953 = vmatprep.subr.mxu0 0.0
        %4954 = vmatpush1.msra.mxu0 %v4935
        %4955 = vmatprep.subr.mxu0 0.0
        %4956 = vmatpush1.msra.mxu0 0.0
        %4957 = vmatprep.subr.mxu0 0.0
        %4958 = vmatpush1.msra.mxu0 0.0
        %4959 = vmatprep.subr.mxu0 0.0
        %4960 = vmatpush1.msra.mxu0 0.0
        %4961 = vmatprep.subr.mxu0 0.0
        %4962 = vmatpush1.msra.mxu0 0.0
        %4963 = vmatprep.subr.mxu0 0.0
        %4964 = vmatpush1.msra.mxu0 0.0
        %4965 = vmatprep.subr.mxu0 0.0
        %4966 = vmatpush1.msra.mxu0 0.0
        %4967 = vmatprep.subr.mxu0 0.0
        %4968 = vmatpush1.msra.mxu0 0.0
        %4969 = vmatprep.subr.mxu0 0.0
        %4970 = vmatpush1.msra.mxu0 0.0
        %4971 = vmatprep.subr.mxu0 0.0
        %4972 = vmatpush1.msra.mxu0 0.0
        %4973 = vmatprep.subr.mxu0 0.0
        %4974 = vmatpush1.msra.mxu0 0.0
        %4975 = vmatprep.subr.mxu0 0.0
        %4976 = vmatpush1.msra.mxu0 0.0
        %4977 = vmatprep.subr.mxu0 0.0
        %4978 = vmatpush1.msra.mxu0 0.0
        %4979 = vmatprep.subr.mxu0 0.0
        %4980 = vmatpush1.msra.mxu0 0.0
        %4981 = vmatprep.subr.mxu0 0.0
        %4982 = vmatpush1.msra.mxu0 0.0
        %4983 = vmatprep.subr.mxu0 0.0
        %4984 = vmatpush1.msra.mxu0 0.0
        %4985 = vmatprep.subr.mxu0 0.0
        %4986 = vmatpush1.msra.mxu0 0.0
        %4987 = vmatprep.subr.mxu0 0.0
        %4988 = vmatpush1.msra.mxu0 0.0
        %4989 = vmatprep.subr.mxu0 0.0
        %4990 = vmatpush1.msra.mxu0 0.0
        %4991 = vmatprep.subr.mxu0 0.0
        %4992 = vmatpush1.msra.mxu0 0.0
        %4993 = vmatprep.subr.mxu0 0.0
        %4994 = vmatpush1.msra.mxu0 0.0
        %4995 = vmatprep.subr.mxu0 0.0
        %4996 = vmatpush1.msra.mxu0 0.0
        %4997 = vmatprep.subr.mxu0 0.0
        %4998 = vmatpush1.msra.mxu0 0.0
        %4999 = vmatprep.subr.mxu0 0.0
        %5000 = vmatpush1.msra.mxu0 0.0
        %5001 = vmatprep.subr.mxu0 0.0
        %5002 = vmatpush1.msra.mxu0 0.0
        %5003 = vmatprep.subr.mxu0 0.0
        %5004 = vmatpush1.msra.mxu0 0.0
        %5005 = vmatprep.subr.mxu0 0.0
        %5006 = vmatpush1.msra.mxu0 0.0
        %5007 = vmatprep.subr.mxu0 0.0
        %5008 = vmatpush1.msra.mxu0 0.0
        %5009 = vmatprep.subr.mxu0 0.0
        %5010 = vmatpush1.msra.mxu0 0.0
        %5011 = vmatprep.mubr.f32.mxu0 0.0
        %5012 = vmatmul.mubr.f32.gmra.mrb[0].mxu0 %v4945
        %v5013 = vpop.f32.mrb[0].mxu0
        %v5014 = vadd.f32 %v4942, %v5013
        %v5015 = vpop.f32.mrb[0].mxu0
        %5016 = vdwg.mxu0
        %v5017 = vmul.f32 %v5014, 0.5
        %v5018 = vmul.f32 %v5014, 0.044715
        %v5019 = vmul.f32 %v5018, %v5014
        %v5020 = vmul.f32 %v5019, %v5014
        %v5021 = vadd.f32 %v5014, %v5020
        %v5022 = vmul.f32 %v5021, 0.7978846
        %v5023 = vtanh.pop %v5022
        %v5024 = vadd.f32 %v5023, 1.0
        %v5025 = vmul.f32 %v5017, %v5024
        %s5026 = scalar_lea.vmem %s14, 64
        %v5027 = vld [vmem:[%s5026] sm:$0xff]
        %v5028 = vld [vmem:[%s5026 + $0x8] sm:$0xff]
        %v5029 = vld [vmem:[%s5026 + $0x10] sm:$0xff]
        %v5030 = vld [vmem:[%s5026 + $0x18] sm:$0xff]
        %v5031 = vld [vmem:[%s5026 + $0x20] sm:$0xff]
        %v5032 = vld [vmem:[%s5026 + $0x28] sm:$0xff]
        %v5033 = vld [vmem:[%s5026 + $0x30] sm:$0xff]
        %v5034 = vld [vmem:[%s5026 + $0x38] sm:$0xff]
        %s5035 = scalar_lea.vmem %s15, 1
        %v5036 = vld [vmem:[%s5035] sm:$0x1]
        %v5038 = vlaneseq
        %v5039 = vshrl.u32 %v5038, 7
        %v5040 = vsub.s32 0, %v5039
        %v5041 = vrot.slane %v5036, %v5040
        %v5044 = vsel %vm2849, %v5025, 0
        %5046 = vmatprep.subr.mxu0 0.0
        %5047 = vmatpush1.msra.mxu0 %v5027
        %5048 = vmatprep.subr.mxu0 0.0
        %5049 = vmatpush1.msra.mxu0 %v5028
        %5050 = vmatprep.subr.mxu0 0.0
        %5051 = vmatpush1.msra.mxu0 %v5029
        %5052 = vmatprep.subr.mxu0 0.0
        %5053 = vmatpush1.msra.mxu0 %v5030
        %5054 = vmatprep.subr.mxu0 0.0
        %5055 = vmatpush1.msra.mxu0 %v5031
        %5056 = vmatprep.subr.mxu0 0.0
        %5057 = vmatpush1.msra.mxu0 %v5032
        %5058 = vmatprep.subr.mxu0 0.0
        %5059 = vmatpush1.msra.mxu0 %v5033
        %5060 = vmatprep.subr.mxu0 0.0
        %5061 = vmatpush1.msra.mxu0 %v5034
        %5062 = vmatprep.subr.mxu0 0.0
        %5063 = vmatpush1.msra.mxu0 0.0
        %5064 = vmatprep.subr.mxu0 0.0
        %5065 = vmatpush1.msra.mxu0 0.0
        %5066 = vmatprep.subr.mxu0 0.0
        %5067 = vmatpush1.msra.mxu0 0.0
        %5068 = vmatprep.subr.mxu0 0.0
        %5069 = vmatpush1.msra.mxu0 0.0
        %5070 = vmatprep.subr.mxu0 0.0
        %5071 = vmatpush1.msra.mxu0 0.0
        %5072 = vmatprep.subr.mxu0 0.0
        %5073 = vmatpush1.msra.mxu0 0.0
        %5074 = vmatprep.subr.mxu0 0.0
        %5075 = vmatpush1.msra.mxu0 0.0
        %5076 = vmatprep.subr.mxu0 0.0
        %5077 = vmatpush1.msra.mxu0 0.0
        %5078 = vmatprep.subr.mxu0 0.0
        %5079 = vmatpush1.msra.mxu0 0.0
        %5080 = vmatprep.subr.mxu0 0.0
        %5081 = vmatpush1.msra.mxu0 0.0
        %5082 = vmatprep.subr.mxu0 0.0
        %5083 = vmatpush1.msra.mxu0 0.0
        %5084 = vmatprep.subr.mxu0 0.0
        %5085 = vmatpush1.msra.mxu0 0.0
        %5086 = vmatprep.subr.mxu0 0.0
        %5087 = vmatpush1.msra.mxu0 0.0
        %5088 = vmatprep.subr.mxu0 0.0
        %5089 = vmatpush1.msra.mxu0 0.0
        %5090 = vmatprep.subr.mxu0 0.0
        %5091 = vmatpush1.msra.mxu0 0.0
        %5092 = vmatprep.subr.mxu0 0.0
        %5093 = vmatpush1.msra.mxu0 0.0
        %5094 = vmatprep.subr.mxu0 0.0
        %5095 = vmatpush1.msra.mxu0 0.0
        %5096 = vmatprep.subr.mxu0 0.0
        %5097 = vmatpush1.msra.mxu0 0.0
        %5098 = vmatprep.subr.mxu0 0.0
        %5099 = vmatpush1.msra.mxu0 0.0
        %5100 = vmatprep.subr.mxu0 0.0
        %5101 = vmatpush1.msra.mxu0 0.0
        %5102 = vmatprep.subr.mxu0 0.0
        %5103 = vmatpush1.msra.mxu0 0.0
        %5104 = vmatprep.subr.mxu0 0.0
        %5105 = vmatpush1.msra.mxu0 0.0
        %5106 = vmatprep.subr.mxu0 0.0
        %5107 = vmatpush1.msra.mxu0 0.0
        %5108 = vmatprep.subr.mxu0 0.0
        %5109 = vmatpush1.msra.mxu0 0.0
        %5110 = vmatprep.mubr.f32.mxu0 0.0
        %5111 = vmatmul.mubr.f32.gmra.mrb[0].mxu0 %v5044
        %v5112 = vpop.f32.mrb[0].mxu0
        %v5113 = vadd.f32 %v5041, %v5112
        %v5114 = vpop.f32.mrb[0].mxu0
        %5115 = vdwg.mxu0
        %v5116 = vadd.f32 %v4930, %v5113
        %v5117 = vsel %vm734, %v5116, 0.0
        %5118 = vadd.xlane.f32.xlu0 %v5117
        %v5119 = vpop.xlane.xlu0 %5118
        %v5120 = vmul.f32 %v5119, %v738
        %v5121 = vsub.f32 %v5116, %v5120
        %v5122 = vmul.f32 %v5121, %v5121
        %v5123 = vsel %vm734, %v5122, 0.0
        %5124 = vadd.xlane.f32.xlu0 %v5123
        %v5125 = vpop.xlane.xlu0 %5124
        %v5126 = vmul.f32 %v5125, %v738
        %v5127 = vadd.f32 %v5126, 1e-12
        %v5128 = vrsqrt.pop %v5127
        %v5129 = vmul.f32 %v5121, %v5128
        %v5130 = vlaneseq
        %v5131 = vshrl.u32 %v5130, 7
        %v5132 = vsub.s32 2, %v5131
        %v5133 = vrot.slane %v2948, %v5132
        %v5134 = vmul.f32 %v5129, %v5133
        %v5135 = vlaneseq
        %v5136 = vshrl.u32 %v5135, 7
        %v5137 = vsub.s32 3, %v5136
        %v5138 = vrot.slane %v2948, %v5137
        %v5139 = vadd.f32 %v5134, %v5138
        %v5140 = vld [vmem:[%s16] sm:$0xff]
        %v5141 = vld [vmem:[%s16 + $0x8] sm:$0xff]
        %v5142 = vld [vmem:[%s16 + $0x10] sm:$0xff]
        %v5143 = vld [vmem:[%s16 + $0x18] sm:$0xff]
        %v5144 = vld [vmem:[%s17] sm:$0x1]
        %v5146 = vsel %vm734, %v5139, 0
        %5148 = vmatprep.subr.mxu0 0.0
        %5149 = vmatpush1.msra.mxu0 %v5140
        %5150 = vmatprep.subr.mxu0 0.0
        %5151 = vmatpush1.msra.mxu0 %v5141
        %5152 = vmatprep.subr.mxu0 0.0
        %5153 = vmatpush1.msra.mxu0 %v5142
        %5154 = vmatprep.subr.mxu0 0.0
        %5155 = vmatpush1.msra.mxu0 %v5143
        %5156 = vmatprep.subr.mxu0 0.0
        %5157 = vmatpush1.msra.mxu0 0.0
        %5158 = vmatprep.subr.mxu0 0.0
        %5159 = vmatpush1.msra.mxu0 0.0
        %5160 = vmatprep.subr.mxu0 0.0
        %5161 = vmatpush1.msra.mxu0 0.0
        %5162 = vmatprep.subr.mxu0 0.0
        %5163 = vmatpush1.msra.mxu0 0.0
        %5164 = vmatprep.subr.mxu0 0.0
        %5165 = vmatpush1.msra.mxu0 0.0
        %5166 = vmatprep.subr.mxu0 0.0
        %5167 = vmatpush1.msra.mxu0 0.0
        %5168 = vmatprep.subr.mxu0 0.0
        %5169 = vmatpush1.msra.mxu0 0.0
        %5170 = vmatprep.subr.mxu0 0.0
        %5171 = vmatpush1.msra.mxu0 0.0
        %5172 = vmatprep.subr.mxu0 0.0
        %5173 = vmatpush1.msra.mxu0 0.0
        %5174 = vmatprep.subr.mxu0 0.0
        %5175 = vmatpush1.msra.mxu0 0.0
        %5176 = vmatprep.subr.mxu0 0.0
        %5177 = vmatpush1.msra.mxu0 0.0
        %5178 = vmatprep.subr.mxu0 0.0
        %5179 = vmatpush1.msra.mxu0 0.0
        %5180 = vmatprep.subr.mxu0 0.0
        %5181 = vmatpush1.msra.mxu0 0.0
        %5182 = vmatprep.subr.mxu0 0.0
        %5183 = vmatpush1.msra.mxu0 0.0
        %5184 = vmatprep.subr.mxu0 0.0
        %5185 = vmatpush1.msra.mxu0 0.0
        %5186 = vmatprep.subr.mxu0 0.0
        %5187 = vmatpush1.msra.mxu0 0.0
        %5188 = vmatprep.subr.mxu0 0.0
        %5189 = vmatpush1.msra.mxu0 0.0
        %5190 = vmatprep.subr.mxu0 0.0
        %5191 = vmatpush1.msra.mxu0 0.0
        %5192 = vmatprep.subr.mxu0 0.0
        %5193 = vmatpush1.msra.mxu0 0.0
        %5194 = vmatprep.subr.mxu0 0.0
        %5195 = vmatpush1.msra.mxu0 0.0
        %5196 = vmatprep.subr.mxu0 0.0
        %5197 = vmatpush1.msra.mxu0 0.0
        %5198 = vmatprep.subr.mxu0 0.0
        %5199 = vmatpush1.msra.mxu0 0.0
        %5200 = vmatprep.subr.mxu0 0.0
        %5201 = vmatpush1.msra.mxu0 0.0
        %5202 = vmatprep.subr.mxu0 0.0
        %5203 = vmatpush1.msra.mxu0 0.0
        %5204 = vmatprep.subr.mxu0 0.0
        %5205 = vmatpush1.msra.mxu0 0.0
        %5206 = vmatprep.subr.mxu0 0.0
        %5207 = vmatpush1.msra.mxu0 0.0
        %5208 = vmatprep.subr.mxu0 0.0
        %5209 = vmatpush1.msra.mxu0 0.0
        %5210 = vmatprep.subr.mxu0 0.0
        %5211 = vmatpush1.msra.mxu0 0.0
        %5212 = vmatprep.mubr.f32.mxu0 0.0
        %5213 = vmatmul.mubr.f32.gmra.mrb[0].mxu0 %v5146
        %v5214 = vpop.f32.mrb[0].mxu0
        %v5215 = vadd.f32 %v5144, %v5214
        %v5216 = vpop.f32.mrb[0].mxu0
        %5217 = vdwg.mxu0
        %v5218 = vtanh.pop %v5215
        %v5219 = vld [vmem:[%s18] sm:$0xff]
        %v5220 = vld [vmem:[%s18 + $0x8] sm:$0xff]
        %v5221 = vld [vmem:[%s18 + $0x10] sm:$0xff]
        %v5222 = vld [vmem:[%s18 + $0x18] sm:$0xff]
        %v5223 = vld [vmem:[%s19] sm:$0x1]
        %v5225 = vlaneseq
        %v5226 = vshrl.u32 %v5225, 7
        %v5227 = vsub.s32 0, %v5226
        %v5228 = vrot.slane %v5223, %v5227
        %5230 = vmatprep.subr.mxu0 0.0
        %5231 = vmatpush1.msra.mxu0 %v5219
        %5232 = vmatprep.subr.mxu0 0.0
        %5233 = vmatpush1.msra.mxu0 %v5220
        %5234 = vmatprep.subr.mxu0 0.0
        %5235 = vmatpush1.msra.mxu0 %v5221
        %5236 = vmatprep.subr.mxu0 0.0
        %5237 = vmatpush1.msra.mxu0 %v5222
        %5238 = vmatprep.subr.mxu0 0.0
        %5239 = vmatpush1.msra.mxu0 0.0
        %5240 = vmatprep.subr.mxu0 0.0
        %5241 = vmatpush1.msra.mxu0 0.0
        %5242 = vmatprep.subr.mxu0 0.0
        %5243 = vmatpush1.msra.mxu0 0.0
        %5244 = vmatprep.subr.mxu0 0.0
        %5245 = vmatpush1.msra.mxu0 0.0
        %5246 = vmatprep.subr.mxu0 0.0
        %5247 = vmatpush1.msra.mxu0 0.0
        %5248 = vmatprep.subr.mxu0 0.0
        %5249 = vmatpush1.msra.mxu0 0.0
        %5250 = vmatprep.subr.mxu0 0.0
        %5251 = vmatpush1.msra.mxu0 0.0
        %5252 = vmatprep.subr.mxu0 0.0
        %5253 = vmatpush1.msra.mxu0 0.0
        %5254 = vmatprep.subr.mxu0 0.0
        %5255 = vmatpush1.msra.mxu0 0.0
        %5256 = vmatprep.subr.mxu0 0.0
        %5257 = vmatpush1.msra.mxu0 0.0
        %5258 = vmatprep.subr.mxu0 0.0
        %5259 = vmatpush1.msra.mxu0 0.0
        %5260 = vmatprep.subr.mxu0 0.0
        %5261 = vmatpush1.msra.mxu0 0.0
        %5262 = vmatprep.subr.mxu0 0.0
        %5263 = vmatpush1.msra.mxu0 0.0
        %5264 = vmatprep.subr.mxu0 0.0
        %5265 = vmatpush1.msra.mxu0 0.0
        %5266 = vmatprep.subr.mxu0 0.0
        %5267 = vmatpush1.msra.mxu0 0.0
        %5268 = vmatprep.subr.mxu0 0.0
        %5269 = vmatpush1.msra.mxu0 0.0
        %5270 = vmatprep.subr.mxu0 0.0
        %5271 = vmatpush1.msra.mxu0 0.0
        %5272 = vmatprep.subr.mxu0 0.0
        %5273 = vmatpush1.msra.mxu0 0.0
        %5274 = vmatprep.subr.mxu0 0.0
        %5275 = vmatpush1.msra.mxu0 0.0
        %5276 = vmatprep.subr.mxu0 0.0
        %5277 = vmatpush1.msra.mxu0 0.0
        %5278 = vmatprep.subr.mxu0 0.0
        %5279 = vmatpush1.msra.mxu0 0.0
        %5280 = vmatprep.subr.mxu0 0.0
        %5281 = vmatpush1.msra.mxu0 0.0
        %5282 = vmatprep.subr.mxu0 0.0
        %5283 = vmatpush1.msra.mxu0 0.0
        %5284 = vmatprep.subr.mxu0 0.0
        %5285 = vmatpush1.msra.mxu0 0.0
        %5286 = vmatprep.subr.mxu0 0.0
        %5287 = vmatpush1.msra.mxu0 0.0
        %5288 = vmatprep.subr.mxu0 0.0
        %5289 = vmatpush1.msra.mxu0 0.0
        %5290 = vmatprep.subr.mxu0 0.0
        %5291 = vmatpush1.msra.mxu0 0.0
        %5292 = vmatprep.subr.mxu0 0.0
        %5293 = vmatpush1.msra.mxu0 0.0
        %5294 = vmatprep.mubr.f32.mxu0 0.0
        %5295 = vmatmul.mubr.f32.gmra.mrb[0].mxu0 %v5146
        %v5296 = vpop.f32.mrb[0].mxu0
        %v5297 = vadd.f32 %v5228, %v5296
        %v5298 = vpop.f32.mrb[0].mxu0
        %5299 = vdwg.mxu0
        %v5300 = vmax.f32 %v5297, 0.0
        %v5301 = vld [vmem:[%s20] sm:$0xff]
        %v5302 = vld [vmem:[%s20 + $0x8] sm:$0xff]
        %v5303 = vld [vmem:[%s20 + $0x10] sm:$0xff]
        %v5304 = vld [vmem:[%s20 + $0x18] sm:$0xff]
        %v5305 = vld [vmem:[%s21] sm:$0x1]
        %v5307 = vlaneseq
        %v5308 = vshrl.u32 %v5307, 7
        %v5309 = vsub.s32 0, %v5308
        %v5310 = vrot.slane %v5305, %v5309
        %v5313 = vsel %vm734, %v5300, 0
        %5315 = vmatprep.subr.mxu0 0.0
        %5316 = vmatpush1.msra.mxu0 %v5301
        %5317 = vmatprep.subr.mxu0 0.0
        %5318 = vmatpush1.msra.mxu0 %v5302
        %5319 = vmatprep.subr.mxu0 0.0
        %5320 = vmatpush1.msra.mxu0 %v5303
        %5321 = vmatprep.subr.mxu0 0.0
        %5322 = vmatpush1.msra.mxu0 %v5304
        %5323 = vmatprep.subr.mxu0 0.0
        %5324 = vmatpush1.msra.mxu0 0.0
        %5325 = vmatprep.subr.mxu0 0.0
        %5326 = vmatpush1.msra.mxu0 0.0
        %5327 = vmatprep.subr.mxu0 0.0
        %5328 = vmatpush1.msra.mxu0 0.0
        %5329 = vmatprep.subr.mxu0 0.0
        %5330 = vmatpush1.msra.mxu0 0.0
        %5331 = vmatprep.subr.mxu0 0.0
        %5332 = vmatpush1.msra.mxu0 0.0
        %5333 = vmatprep.subr.mxu0 0.0
        %5334 = vmatpush1.msra.mxu0 0.0
        %5335 = vmatprep.subr.mxu0 0.0
        %5336 = vmatpush1.msra.mxu0 0.0
        %5337 = vmatprep.subr.mxu0 0.0
        %5338 = vmatpush1.msra.mxu0 0.0
        %5339 = vmatprep.subr.mxu0 0.0
        %5340 = vmatpush1.msra.mxu0 0.0
        %5341 = vmatprep.subr.mxu0 0.0
        %5342 = vmatpush1.msra.mxu0 0.0
        %5343 = vmatprep.subr.mxu0 0.0
        %5344 = vmatpush1.msra.mxu0 0.0
        %5345 = vmatprep.subr.mxu0 0.0
        %5346 = vmatpush1.msra.mxu0 0.0
        %5347 = vmatprep.subr.mxu0 0.0
        %5348 = vmatpush1.msra.mxu0 0.0
        %5349 = vmatprep.subr.mxu0 0.0
        %5350 = vmatpush1.msra.mxu0 0.0
        %5351 = vmatprep.subr.mxu0 0.0
        %5352 = vmatpush1.msra.mxu0 0.0
        %5353 = vmatprep.subr.mxu0 0.0
        %5354 = vmatpush1.msra.mxu0 0.0
        %5355 = vmatprep.subr.mxu0 0.0
        %5356 = vmatpush1.msra.mxu0 0.0
        %5357 = vmatprep.subr.mxu0 0.0
        %5358 = vmatpush1.msra.mxu0 0.0
        %5359 = vmatprep.subr.mxu0 0.0
        %5360 = vmatpush1.msra.mxu0 0.0
        %5361 = vmatprep.subr.mxu0 0.0
        %5362 = vmatpush1.msra.mxu0 0.0
        %5363 = vmatprep.subr.mxu0 0.0
        %5364 = vmatpush1.msra.mxu0 0.0
        %5365 = vmatprep.subr.mxu0 0.0
        %5366 = vmatpush1.msra.mxu0 0.0
        %5367 = vmatprep.subr.mxu0 0.0
        %5368 = vmatpush1.msra.mxu0 0.0
        %5369 = vmatprep.subr.mxu0 0.0
        %5370 = vmatpush1.msra.mxu0 0.0
        %5371 = vmatprep.subr.mxu0 0.0
        %5372 = vmatpush1.msra.mxu0 0.0
        %5373 = vmatprep.subr.mxu0 0.0
        %5374 = vmatpush1.msra.mxu0 0.0
        %5375 = vmatprep.subr.mxu0 0.0
        %5376 = vmatpush1.msra.mxu0 0.0
        %5377 = vmatprep.subr.mxu0 0.0
        %5378 = vmatpush1.msra.mxu0 0.0
        %5379 = vmatprep.mubr.f32.mxu0 0.0
        %5380 = vmatmul.mubr.f32.gmra.mrb[0].mxu0 %v5313
        %v5381 = vpop.f32.mrb[0].mxu0
        %v5382 = vadd.f32 %v5310, %v5381
        %v5383 = vpop.f32.mrb[0].mxu0
        %5384 = vdwg.mxu0
        %v5385 = vmul.f32 %v5382, %v5382
        %v5386 = vsel %vm734, %v5385, 0.0
        %5387 = vadd.xlane.f32.xlu0 %v5386
        %v5388 = vpop.xlane.xlu0 %5387
        %v5389 = vrot.slane %v5388, 4
        %v5390 = vadd.f32 %v5388, %v5389
        %v5391 = vrot.slane %v5390, 2
        %v5392 = vadd.f32 %v5390, %v5391
        %v5393 = vrot.slane %v5392, 1
        %v5394 = vadd.f32 %v5392, %v5393
        %v5395 = vmax.f32 %v5394, 1e-24
        %v5396 = vrsqrt.pop %v5395
        %v5397 = vmul.f32 %v5382, %v5396
        %5398 = vst.msk [vmem:[%s729] sm:$0xff] %vm734, %v5397
        %v5399 = vld [vmem:[%s18] sm:$0xff]
        %v5400 = vld [vmem:[%s18 + $0x8] sm:$0xff]
        %v5401 = vld [vmem:[%s18 + $0x10] sm:$0xff]
        %v5402 = vld [vmem:[%s18 + $0x18] sm:$0xff]
        %v5403 = vld [vmem:[%s19] sm:$0x1]
        %v5405 = vsel %vm734, %v5218, 0
        %5407 = vmatprep.subr.mxu0 0.0
        %5408 = vmatpush1.msra.mxu0 %v5399
        %5409 = vmatprep.subr.mxu0 0.0
        %5410 = vmatpush1.msra.mxu0 %v5400
        %5411 = vmatprep.subr.mxu0 0.0
        %5412 = vmatpush1.msra.mxu0 %v5401
        %5413 = vmatprep.subr.mxu0 0.0
        %5414 = vmatpush1.msra.mxu0 %v5402
        %5415 = vmatprep.subr.mxu0 0.0
        %5416 = vmatpush1.msra.mxu0 0.0
        %5417 = vmatprep.subr.mxu0 0.0
        %5418 = vmatpush1.msra.mxu0 0.0
        %5419 = vmatprep.subr.mxu0 0.0
        %5420 = vmatpush1.msra.mxu0 0.0
        %5421 = vmatprep.subr.mxu0 0.0
        %5422 = vmatpush1.msra.mxu0 0.0
        %5423 = vmatprep.subr.mxu0 0.0
        %5424 = vmatpush1.msra.mxu0 0.0
        %5425 = vmatprep.subr.mxu0 0.0
        %5426 = vmatpush1.msra.mxu0 0.0
        %5427 = vmatprep.subr.mxu0 0.0
        %5428 = vmatpush1.msra.mxu0 0.0
        %5429 = vmatprep.subr.mxu0 0.0
        %5430 = vmatpush1.msra.mxu0 0.0
        %5431 = vmatprep.subr.mxu0 0.0
        %5432 = vmatpush1.msra.mxu0 0.0
        %5433 = vmatprep.subr.mxu0 0.0
        %5434 = vmatpush1.msra.mxu0 0.0
        %5435 = vmatprep.subr.mxu0 0.0
        %5436 = vmatpush1.msra.mxu0 0.0
        %5437 = vmatprep.subr.mxu0 0.0
        %5438 = vmatpush1.msra.mxu0 0.0
        %5439 = vmatprep.subr.mxu0 0.0
        %5440 = vmatpush1.msra.mxu0 0.0
        %5441 = vmatprep.subr.mxu0 0.0
        %5442 = vmatpush1.msra.mxu0 0.0
        %5443 = vmatprep.subr.mxu0 0.0
        %5444 = vmatpush1.msra.mxu0 0.0
        %5445 = vmatprep.subr.mxu0 0.0
        %5446 = vmatpush1.msra.mxu0 0.0
        %5447 = vmatprep.subr.mxu0 0.0
        %5448 = vmatpush1.msra.mxu0 0.0
        %5449 = vmatprep.subr.mxu0 0.0
        %5450 = vmatpush1.msra.mxu0 0.0
        %5451 = vmatprep.subr.mxu0 0.0
        %5452 = vmatpush1.msra.mxu0 0.0
        %5453 = vmatprep.subr.mxu0 0.0
        %5454 = vmatpush1.msra.mxu0 0.0
        %5455 = vmatprep.subr.mxu0 0.0
        %5456 = vmatpush1.msra.mxu0 0.0
        %5457 = vmatprep.subr.mxu0 0.0
        %5458 = vmatpush1.msra.mxu0 0.0
        %5459 = vmatprep.subr.mxu0 0.0
        %5460 = vmatpush1.msra.mxu0 0.0
        %5461 = vmatprep.subr.mxu0 0.0
        %5462 = vmatpush1.msra.mxu0 0.0
        %5463 = vmatprep.subr.mxu0 0.0
        %5464 = vmatpush1.msra.mxu0 0.0
        %5465 = vmatprep.subr.mxu0 0.0
        %5466 = vmatpush1.msra.mxu0 0.0
        %5467 = vmatprep.subr.mxu0 0.0
        %5468 = vmatpush1.msra.mxu0 0.0
        %5469 = vmatprep.subr.mxu0 0.0
        %5470 = vmatpush1.msra.mxu0 0.0
        %5471 = vmatprep.mubr.f32.mxu0 0.0
        %5472 = vmatmul.mubr.f32.gmra.mrb[0].mxu0 %v5405
        %v5473 = vpop.f32.mrb[0].mxu0
        %v5474 = vadd.f32 %v5403, %v5473
        %v5475 = vpop.f32.mrb[0].mxu0
        %5476 = vdwg.mxu0
        %v5477 = vmax.f32 %v5474, 0.0
        %v5478 = vld [vmem:[%s20] sm:$0xff]
        %v5479 = vld [vmem:[%s20 + $0x8] sm:$0xff]
        %v5480 = vld [vmem:[%s20 + $0x10] sm:$0xff]
        %v5481 = vld [vmem:[%s20 + $0x18] sm:$0xff]
        %v5482 = vld [vmem:[%s21] sm:$0x1]
        %v5484 = vsel %vm734, %v5477, 0
        %5486 = vmatprep.subr.mxu0 0.0
        %5487 = vmatpush1.msra.mxu0 %v5478
        %5488 = vmatprep.subr.mxu0 0.0
        %5489 = vmatpush1.msra.mxu0 %v5479
        %5490 = vmatprep.subr.mxu0 0.0
        %5491 = vmatpush1.msra.mxu0 %v5480
        %5492 = vmatprep.subr.mxu0 0.0
        %5493 = vmatpush1.msra.mxu0 %v5481
        %5494 = vmatprep.subr.mxu0 0.0
        %5495 = vmatpush1.msra.mxu0 0.0
        %5496 = vmatprep.subr.mxu0 0.0
        %5497 = vmatpush1.msra.mxu0 0.0
        %5498 = vmatprep.subr.mxu0 0.0
        %5499 = vmatpush1.msra.mxu0 0.0
        %5500 = vmatprep.subr.mxu0 0.0
        %5501 = vmatpush1.msra.mxu0 0.0
        %5502 = vmatprep.subr.mxu0 0.0
        %5503 = vmatpush1.msra.mxu0 0.0
        %5504 = vmatprep.subr.mxu0 0.0
        %5505 = vmatpush1.msra.mxu0 0.0
        %5506 = vmatprep.subr.mxu0 0.0
        %5507 = vmatpush1.msra.mxu0 0.0
        %5508 = vmatprep.subr.mxu0 0.0
        %5509 = vmatpush1.msra.mxu0 0.0
        %5510 = vmatprep.subr.mxu0 0.0
        %5511 = vmatpush1.msra.mxu0 0.0
        %5512 = vmatprep.subr.mxu0 0.0
        %5513 = vmatpush1.msra.mxu0 0.0
        %5514 = vmatprep.subr.mxu0 0.0
        %5515 = vmatpush1.msra.mxu0 0.0
        %5516 = vmatprep.subr.mxu0 0.0
        %5517 = vmatpush1.msra.mxu0 0.0
        %5518 = vmatprep.subr.mxu0 0.0
        %5519 = vmatpush1.msra.mxu0 0.0
        %5520 = vmatprep.subr.mxu0 0.0
        %5521 = vmatpush1.msra.mxu0 0.0
        %5522 = vmatprep.subr.mxu0 0.0
        %5523 = vmatpush1.msra.mxu0 0.0
        %5524 = vmatprep.subr.mxu0 0.0
        %5525 = vmatpush1.msra.mxu0 0.0
        %5526 = vmatprep.subr.mxu0 0.0
        %5527 = vmatpush1.msra.mxu0 0.0
        %5528 = vmatprep.subr.mxu0 0.0
        %5529 = vmatpush1.msra.mxu0 0.0
        %5530 = vmatprep.subr.mxu0 0.0
        %5531 = vmatpush1.msra.mxu0 0.0
        %5532 = vmatprep.subr.mxu0 0.0
        %5533 = vmatpush1.msra.mxu0 0.0
        %5534 = vmatprep.subr.mxu0 0.0
        %5535 = vmatpush1.msra.mxu0 0.0
        %5536 = vmatprep.subr.mxu0 0.0
        %5537 = vmatpush1.msra.mxu0 0.0
        %5538 = vmatprep.subr.mxu0 0.0
        %5539 = vmatpush1.msra.mxu0 0.0
        %5540 = vmatprep.subr.mxu0 0.0
        %5541 = vmatpush1.msra.mxu0 0.0
        %5542 = vmatprep.subr.mxu0 0.0
        %5543 = vmatpush1.msra.mxu0 0.0
        %5544 = vmatprep.subr.mxu0 0.0
        %5545 = vmatpush1.msra.mxu0 0.0
        %5546 = vmatprep.subr.mxu0 0.0
        %5547 = vmatpush1.msra.mxu0 0.0
        %5548 = vmatprep.subr.mxu0 0.0
        %5549 = vmatpush1.msra.mxu0 0.0
        %5550 = vmatprep.mubr.f32.mxu0 0.0
        %5551 = vmatmul.mubr.f32.gmra.mrb[0].mxu0 %v5484
        %v5552 = vpop.f32.mrb[0].mxu0
        %v5553 = vadd.f32 %v5482, %v5552
        %v5554 = vpop.f32.mrb[0].mxu0
        %5555 = vdwg.mxu0
        %v5556 = vmul.f32 %v5553, %v5553
        %vm5557 = vcmask 253952
        %v5558 = vsel %vm5557, %v5556, 0.0
        %5559 = vadd.xlane.f32.xlu0 %v5558
        %v5560 = vpop.xlane.xlu0 %5559
        %v5561 = vmax.f32 %v5560, 1e-24
        %v5562 = vrsqrt.pop %v5561
        %v5563 = vmul.f32 %v5553, %v5562
        %5564 = vst.msk [vmem:[%s718] sm:$0x1] %vm5557, %v5563
        %p5565 = scmp.lt.s32.totalorder %s38, 1
        %s5566 = scalar_select %p5565, %s38, 1
        %s5567 = smul.addr %s5566, 8
        %s5568 = scalar_lea.vmem %s22, %s5567
        %s5569 = sand.u32 %s544, 1
        %s5570 = scalar_lea.sflag [#allocation3], %s5569
        %s5571 = sand.u32 %s544, 1
        %s5572 = scalar_lea.vmem [#allocation2], %s5571
        // Predicated region
        $region109: #{pretrain_bert_moco_forward.1} parent=107 // pred_check
          %p5573 = pneg %p528
        $region110: #{pretrain_bert_moco_forward.1} parent=107 // pred_check_branch
          %5575 = sbr.rel (%p5573) target = $region112
        $region111: #{pretrain_bert_moco_forward.1} parent=107 // pred_region
          _
        $region112: #{pretrain_bert_moco_forward.1} parent=107 // pred_fallthru
          _
        // Predicated region
        $region113: #{pretrain_bert_moco_forward.1} parent=107 // pred_check
          %p5576 = pneg %p554
        $region114: #{pretrain_bert_moco_forward.1} parent=107 // pred_check_branch
          %5578 = sbr.rel (%p5576) target = $region116
        $region115: #{pretrain_bert_moco_forward.1} parent=107 // pred_region
          %s5580 = ssub.s32 16, 16
          %5581 = vsyncadd %s5570, %s5580
          %s5582 = smul.addr %s38, 16
          %s5583 = scalar_lea.hbm %s23, %s5582
          %s5585 = sshll.u32 %s5572, 4
          %s5586 = int_to_ptr.vmem [resolvable:$true] %s5585
          %5588 = dma.vmem_to_hbm [thread:$0]  %s5586, 16, %s5583, %s5570
        $region116: #{pretrain_bert_moco_forward.1} parent=107 // pred_fallthru
          _
      $region108: #{pretrain_bert_moco_forward.1} parent=5 // pred_fallthru
        _
      %p5589 = scmp.le.s32.totalorder 2, %s33
      // Predicated region
      $region117: #{pretrain_bert_moco_forward.1} parent=5 // pred_check
        %p5590 = pneg %p5589
      $region118: #{pretrain_bert_moco_forward.1} parent=5 // pred_check_branch
        %5592 = sbr.rel (%p5590) target = $region120
      $region119: #{pretrain_bert_moco_forward.1} parent=5 // pred_region
        %s5593 = ssub.s32 %s33, 2
        // Predicated region
        $region121: #{pretrain_bert_moco_forward.1} parent=119 // pred_check
          %p5594 = pneg %p534
        $region122: #{pretrain_bert_moco_forward.1} parent=119 // pred_check_branch
          %5596 = sbr.rel (%p5594) target = $region124
        $region123: #{pretrain_bert_moco_forward.1} parent=119 // pred_region
          %p5597 = scmp.lt.s32.totalorder %s39, 1
          %s5598 = scalar_select %p5597, %s39, 1
          %s5599 = smul.addr %s5598, 8
          %s5600 = scalar_lea.vmem %s22, %s5599
        $region124: #{pretrain_bert_moco_forward.1} parent=119 // pred_fallthru
          _
        // Predicated region
        $region125: #{pretrain_bert_moco_forward.1} parent=119 // pred_check
          %p5601 = pneg %p560
        $region126: #{pretrain_bert_moco_forward.1} parent=119 // pred_check_branch
          %5603 = sbr.rel (%p5601) target = $region128
        $region127: #{pretrain_bert_moco_forward.1} parent=119 // pred_region
          %s5604 = sand.u32 %s545, 1
          %s5605 = scalar_lea.sflag [#allocation3], %s5604
          %s5606 = sand.u32 %s545, 1
          %s5607 = scalar_lea.vmem [#allocation2], %s5606
          %5608 = dma.done %s5605, 16
        $region128: #{pretrain_bert_moco_forward.1} parent=119 // pred_fallthru
          _
      $region120: #{pretrain_bert_moco_forward.1} parent=5 // pred_fallthru
        _
    $region6: #{pretrain_bert_moco_forward.1} parent=1 // loop_footer
      %s37 = sadd.s32 1, %s33
    $region7: #{pretrain_bert_moco_forward.1} parent=1 // loop_footer_branch
      %32 = sbr.rel target = $region3
    $region8: #{pretrain_bert_moco_forward.1} parent=1 // loop_exit
      _
    %5609 = vsyncpa [#allocation3], 1
    %s5610 = scalar_lea.sflag [#allocation3], 1
    %5611 = vsyncpa %s5610, 1

</llo_original>
